<compile_context>
chip_gen: v5e
topology: v5e:2x2
jax: 0.10.0
libtpu: 0.0.40
codegen_flags: <defaults>
</compile_context>

<pallas_src>
import functools

import jax
import jax.numpy as jnp
from jax import lax
from jax.experimental import pallas as pl
from jax.experimental.pallas import tpu as pltpu

CODE_RATE = 3
HID = 5  # args.dec_num_unit


def ae_kernel(
    info_ref, fwd_ref, fb_ref,                      # (L,B,1), (L,B,3), (L,B,3)
    e_ref, k_ref, linb_ref,                         # SMEM: (2,), (4,), (1,)
    pos_ref, chan_ref,                              # (L,1,1), (1,1,3)
    g1_wih_ref, g1_whh_ref, g1_bih_ref, g1_bhh_ref,  # (2,3,15),(2,5,15),(2,1,15),(2,1,15)
    g2_wih_ref, g2_whh_ref, g2_bih_ref, g2_bhh_ref,  # (2,10,15),(2,5,15),(2,1,15),(2,1,15)
    bn1_g_ref, bn1_b_ref, bn2_g_ref, bn2_b_ref,      # (1,1,10) each
    lin_w_ref,                                       # (1,1,10)
    cw_ref, dec_ref,                                 # outputs: (L,B,3), (L,B,1)
    gi_f_ref, gi_b_ref,                              # VMEM scratch: (L,B,3H) hoisted projections
    h1f_ref, h1b_ref, h2f_ref, h2b_ref,              # VMEM scratch: (L,B,H) hidden states
):
  L, B, _ = info_ref.shape
  H = HID
  G = 3 * H
  f32 = jnp.float32

  e0 = e_ref[0]
  e1 = e_ref[1]
  k0 = k_ref[0]
  k1 = k_ref[1]
  k2 = k_ref[2]
  k3 = k_ref[3]

  info = info_ref[...]
  fwd = fwd_ref[...]
  fb = fb_ref[...]

  # ------------------------- encoder (phase 2) ------------------------------
  b_all = info[:, :, 0:1]                               # (L,B,1)
  n1_all = fwd[:, :, 0:1] + fb[:, :, 0:1]               # current-step noise, col 0

  # cols 1,2 come from the PREVIOUS step (zeros at t=0)
  cur23 = fwd[:, :, 1:3] + fb[:, :, 1:3]
  prev23 = jnp.concatenate([jnp.zeros((1, B, 2), f32), cur23[:L - 1]], axis=0)
  n2_all = prev23[:, :, 0:1]
  n3_all = prev23[:, :, 1:2]

  zeros1 = jnp.zeros((1, B, 1), f32)
  prev_b = jnp.concatenate([zeros1, b_all[:L - 1]], axis=0)
  prev_n1f = jnp.concatenate([zeros1, fwd[:L - 1, :, 0:1]], axis=0)

  ind = ((-(2.0 * b_all - 1.0) * n1_all) > 0.0).astype(f32)
  p1_lin = e0 * n1_all * ind

  lin_arg = -k0 * prev_n1f + k1 * n2_all - k2 * n3_all
  vh4 = jnp.where(prev_b == 0.0, jnp.tanh(lin_arg + k3), 1.0)
  vh5 = jnp.where(prev_b == 1.0, jnp.tanh(lin_arg - k3), -1.0)

  row_idx = lax.broadcasted_iota(jnp.int32, (L, B, 1), 0)
  is_first = row_idx == 0
  vh4 = jnp.where(is_first, 1.0, vh4)
  vh5 = jnp.where(is_first, -1.0, vh5)

  h45 = e1 * vh4 + e1 * vh5
  p1 = p1_lin - h45
  p2 = -p1_lin - h45

  # normalize(): batch mean / unbiased std (torch.std) over the batch axis.
  # (Matches torch semantics: no epsilon; degenerate columns would give inf/nan
  #  exactly like the reference module.)
  def batch_normalize(x):
    mean = jnp.mean(x, axis=1, keepdims=True)
    var = jnp.sum((x - mean) ** 2, axis=1, keepdims=True) / (B - 1)
    return (x - mean) / jnp.sqrt(var)

  norm_p1 = batch_normalize(p1)
  norm_p2 = batch_normalize(p2)

  col0 = 2.0 * b_all - 1.0                               # codewords_phase_1

  # power allocation (per-position / per-channel scales, global factor folded in)
  pos = pos_ref[...]                                     # (L,1,1)
  chan = chan_ref[...]                                   # (1,1,3)
  cw = jnp.concatenate([col0, norm_p1, norm_p2], axis=-1) * (pos * chan)
  cw_ref[...] = cw                                       # single full-block store

  x1 = cw + fwd                                          # noisy codewords, in-register

  # ------------------------- decoder --------------------------------------
  def cell(gi, ghm, bhh_n, h):
    # gi already contains b_ih (all gates) + b_hh (r/z gates only); ghm is the
    # raw h @ Whh matmul; bhh_n is the n-gate recurrent bias (must stay inside
    # the r-multiply, per the torch GRU formula).
    r = jax.nn.sigmoid(gi[:, 0:H] + ghm[:, 0:H])
    z = jax.nn.sigmoid(gi[:, H:2 * H] + ghm[:, H:2 * H])
    n = jnp.tanh(gi[:, 2 * H:3 * H] + r * (ghm[:, 2 * H:3 * H] + bhh_n))
    return (1.0 - z) * n + z * h

  def run_bidir_gru(whh_f, bhhn_f, whh_b, bhhn_b, out_f_ref, out_b_ref):
    """Fused fwd+bwd recurrence; input projections already in gi_f/gi_b scratch."""
    h_f = jnp.zeros((B, H), f32)
    h_b = jnp.zeros((B, H), f32)
    for s in range(L):                                   # fully unrolled (L static)
      t_b = L - 1 - s
      ghm_f = jnp.dot(h_f, whh_f, preferred_element_type=f32)
      ghm_b = jnp.dot(h_b, whh_b, preferred_element_type=f32)
      h_f = cell(gi_f_ref[s], ghm_f, bhhn_f, h_f)
      h_b = cell(gi_b_ref[t_b], ghm_b, bhhn_b, h_b)
      out_f_ref[s] = h_f
      out_b_ref[t_b] = h_b

  zeros_h = jnp.zeros((1, H), f32)

  def fold_rz_bias(bih, bhh):
    # Fold the r/z recurrent biases into the hoisted projection bias; the
    # n-gate recurrent bias is handled per-step inside the cell.
    return bih + jnp.concatenate([bhh[:, 0:2 * H], zeros_h], axis=-1)

  # --- GRU #1 (input 3 -> hidden 5 per direction) ---
  # Hoisted input projection: one (L*B,3)@(3,3H) matmul per direction.
  x1_flat = x1.reshape(L * B, CODE_RATE)
  g1_bhh0 = g1_bhh_ref[0]
  g1_bhh1 = g1_bhh_ref[1]
  gi_f_ref[...] = (jnp.dot(x1_flat, g1_wih_ref[0], preferred_element_type=f32)
                   + fold_rz_bias(g1_bih_ref[0], g1_bhh0)).reshape(L, B, G)
  gi_b_ref[...] = (jnp.dot(x1_flat, g1_wih_ref[1], preferred_element_type=f32)
                   + fold_rz_bias(g1_bih_ref[1], g1_bhh1)).reshape(L, B, G)

  run_bidir_gru(g1_whh_ref[0], g1_bhh0[:, 2 * H:3 * H],
                g1_whh_ref[1], g1_bhh1[:, 2 * H:3 * H],
                h1f_ref, h1b_ref)

  # BatchNorm1d (training-mode batch stats, biased variance, eps=1e-3),
  # applied per feature -> decomposes over the two direction halves.
  def bn(x, gamma, beta):
    mean = jnp.mean(x, axis=(0, 1), keepdims=True)
    var = jnp.mean((x - mean) ** 2, axis=(0, 1), keepdims=True)
    return (x - mean) * lax.rsqrt(var + 1e-3) * gamma + beta

  bn1_g = bn1_g_ref[...]
  bn1_b = bn1_b_ref[...]
  x2f = bn(h1f_ref[...], bn1_g[:, :, 0:H], bn1_b[:, :, 0:H])
  x2b = bn(h1b_ref[...], bn1_g[:, :, H:2 * H], bn1_b[:, :, H:2 * H])

  # --- GRU #2 (input 10 = [fwd half, bwd half] -> hidden 5 per direction) ---
  # Hoisted input projection: two (L*B,5)@(5,3H) matmuls per direction.
  x2f_flat = x2f.reshape(L * B, H)
  x2b_flat = x2b.reshape(L * B, H)
  w2f = g2_wih_ref[0]                                    # (2H, 3H)
  w2b = g2_wih_ref[1]
  g2_bhh0 = g2_bhh_ref[0]
  g2_bhh1 = g2_bhh_ref[1]
  gi_f_ref[...] = (jnp.dot(x2f_flat, w2f[0:H], preferred_element_type=f32)
                   + jnp.dot(x2b_flat, w2f[H:2 * H], preferred_element_type=f32)
                   + fold_rz_bias(g2_bih_ref[0], g2_bhh0)).reshape(L, B, G)
  gi_b_ref[...] = (jnp.dot(x2f_flat, w2b[0:H], preferred_element_type=f32)
                   + jnp.dot(x2b_flat, w2b[H:2 * H], preferred_element_type=f32)
                   + fold_rz_bias(g2_bih_ref[1], g2_bhh1)).reshape(L, B, G)

  run_bidir_gru(g2_whh_ref[0], g2_bhh0[:, 2 * H:3 * H],
                g2_whh_ref[1], g2_bhh1[:, 2 * H:3 * H],
                h2f_ref, h2b_ref)

  bn2_g = bn2_g_ref[...]
  bn2_b = bn2_b_ref[...]
  y_f = bn(h2f_ref[...], bn2_g[:, :, 0:H], bn2_b[:, :, 0:H])
  y_b = bn(h2b_ref[...], bn2_g[:, :, H:2 * H], bn2_b[:, :, H:2 * H])

  # Linear(10 -> 1) + sigmoid
  w = lin_w_ref[...]                                     # (1,1,10)
  logits = (jnp.sum(y_f * w[:, :, 0:H], axis=-1, keepdims=True)
            + jnp.sum(y_b * w[:, :, H:2 * H], axis=-1, keepdims=True)
            + linb_ref[0])
  dec_ref[...] = jax.nn.sigmoid(logits)


@functools.partial(jax.jit, static_argnames=("block_len",))
def ae_forward(params, information_bits, forward_noise, feedback_noise, block_len=9):
  B, L, _ = information_bits.shape
  assert L == block_len + 1
  H = HID
  G = 3 * H

  # --- glue: power-allocation scale factors (scalar math on a few params) ---
  wall = params["weight_all"]
  wf4 = params["weight_first_4"]
  wl5 = params["weight_last_5"]
  idx_start = block_len + 1 - 1 - 5 + 1
  rem = block_len + 1 - 4 - 5
  den = (rem + jnp.sum(wf4 ** 2) + jnp.sum(wl5 ** 2)) * jnp.sum(wall ** 2)
  glob = jnp.sqrt(CODE_RATE * (block_len + 1) / den)
  pos = jnp.ones((L,), jnp.float32)
  pos = pos.at[0:4].multiply(wf4)
  pos = pos.at[idx_start:idx_start + 5].multiply(wl5)
  pos_scale = pos.reshape(L, 1, 1)
  chan_scale = (wall * glob).reshape(1, 1, 3).astype(jnp.float32)

  # --- glue: transpose to the kernel's time-major (L, B, F) layout ---
  info_t = jnp.transpose(information_bits, (1, 0, 2)).astype(jnp.float32)
  fwd_t = jnp.transpose(forward_noise, (1, 0, 2)).astype(jnp.float32)
  fb_t = jnp.transpose(feedback_noise, (1, 0, 2)).astype(jnp.float32)

  vmem = pl.BlockSpec(memory_space=pltpu.MemorySpace.VMEM)
  smem = pl.BlockSpec(memory_space=pltpu.MemorySpace.SMEM)

  # advisory cost estimate (tiny kernel; helps the XLA scheduler around it)
  flops = int(2 * 2 * L * B * 3 * G          # GRU1 hoisted input projections
              + 2 * 2 * 2 * L * B * H * G    # GRU2 hoisted input projections
              + 2 * 2 * 2 * L * B * H * G    # recurrent h @ Whh (2 GRUs x 2 dirs)
              + 64 * L * B)                  # encoder / BN / gates (rough)
  transcendentals = int(4 * 3 * L * B * H + 3 * L * B)
  bytes_accessed = int(4 * (L * B * 11 + 600))

  cw_lbf, dec_lbf = pl.pallas_call(
      ae_kernel,
      out_shape=(jax.ShapeDtypeStruct((L, B, 3), jnp.float32),
                 jax.ShapeDtypeStruct((L, B, 1), jnp.float32)),
      in_specs=[vmem, vmem, vmem,          # info, fwd noise, fb noise
                smem, smem, smem,          # e, k, linear bias
                vmem, vmem,                # pos_scale, chan_scale
                vmem, vmem, vmem, vmem,    # GRU1 params
                vmem, vmem, vmem, vmem,    # GRU2 params
                vmem, vmem, vmem, vmem,    # BN1/BN2 gamma, beta
                vmem],                     # linear weight
      out_specs=(vmem, vmem),
      scratch_shapes=[
          pltpu.VMEM((L, B, G), jnp.float32),   # hoisted input proj, fwd dir
          pltpu.VMEM((L, B, G), jnp.float32),   # hoisted input proj, bwd dir
          pltpu.VMEM((L, B, H), jnp.float32),   # GRU1 fwd hidden
          pltpu.VMEM((L, B, H), jnp.float32),   # GRU1 bwd hidden
          pltpu.VMEM((L, B, H), jnp.float32),   # GRU2 fwd hidden
          pltpu.VMEM((L, B, H), jnp.float32),   # GRU2 bwd hidden
      ],
      compiler_params=pltpu.CompilerParams(vmem_limit_bytes=8 * 1024 * 1024),
      cost_estimate=pl.CostEstimate(flops=flops,
                                    transcendentals=transcendentals,
                                    bytes_accessed=bytes_accessed),
  )(info_t, fwd_t, fb_t,
    params["e"], params["k"], params["lin_b"],
    pos_scale, chan_scale,
    params["g1_wih"], params["g1_whh"], params["g1_bih"], params["g1_bhh"],
    params["g2_wih"], params["g2_whh"], params["g2_bih"], params["g2_bhh"],
    params["bn1_gamma"], params["bn1_beta"], params["bn2_gamma"], params["bn2_beta"],
    params["lin_w"])

  codewords = jnp.transpose(cw_lbf, (1, 0, 2))
  decoder_output = jnp.transpose(dec_lbf, (1, 0, 2))
  all_hidden_states = []   # the torch module returns an empty list here
  return all_hidden_states, codewords, decoder_output


def init_params(key):
  """Deterministic synthetic parameters matching the shapes in AE.__init__."""
  H = HID
  ks = jax.random.split(key, 12)
  s_gru = float(H) ** -0.5
  s_lin = float(2 * H) ** -0.5

  def u(k, shape, s):
    return jax.random.uniform(k, shape, jnp.float32, -s, s)

  return dict(
      e=jax.random.uniform(ks[0], (2,), jnp.float32),
      k=jax.random.uniform(ks[1], (4,), jnp.float32),
      weight_all=jnp.ones((3,), jnp.float32),
      weight_first_4=jnp.ones((4,), jnp.float32),
      weight_last_5=jnp.ones((5,), jnp.float32),
      # GRU weights stored pre-transposed (in_features, 3H); index 0 = fwd dir, 1 = reverse
      g1_wih=u(ks[2], (2, CODE_RATE, 3 * H), s_gru),
      g1_whh=u(ks[3], (2, H, 3 * H), s_gru),
      g1_bih=u(ks[4], (2, 1, 3 * H), s_gru),
      g1_bhh=u(ks[5], (2, 1, 3 * H), s_gru),
      g2_wih=u(ks[6], (2, 2 * H, 3 * H), s_gru),
      g2_whh=u(ks[7], (2, H, 3 * H), s_gru),
      g2_bih=u(ks[8], (2, 1, 3 * H), s_gru),
      g2_bhh=u(ks[9], (2, 1, 3 * H), s_gru),
      bn1_gamma=jnp.ones((1, 1, 2 * H), jnp.float32),
      bn1_beta=jnp.zeros((1, 1, 2 * H), jnp.float32),
      bn2_gamma=jnp.ones((1, 1, 2 * H), jnp.float32),
      bn2_beta=jnp.zeros((1, 1, 2 * H), jnp.float32),
      lin_w=u(ks[10], (1, 1, 2 * H), s_lin),
      lin_b=u(ks[11], (1,), s_lin),
  )


if __name__ == "__main__":
  key = jax.random.PRNGKey(0)
  kp, kb, kf, kfb = jax.random.split(key, 4)

  block_len = 9                 # small, consistent with the module (L = block_len + 1)
  B, L = 8, block_len + 1

  params = init_params(kp)
  information_bits = jax.random.bernoulli(kb, 0.5, (B, L, 1)).astype(jnp.float32)
  forward_noise = 0.7 * jax.random.normal(kf, (B, L, 3), jnp.float32)
  feedback_noise = 0.1 * jax.random.normal(kfb, (B, L, 3), jnp.float32)
  # make the batch normalization at t=0 deterministically non-degenerate
  information_bits = information_bits.at[0, 0, 0].set(1.0)
  forward_noise = forward_noise.at[0, 0, 0].set(-0.5)
  feedback_noise = feedback_noise.at[0, 0, 0].set(-0.3)

  hidden, codewords, dec_out = ae_forward(
      params, information_bits, forward_noise, feedback_noise, block_len=block_len)
  jax.block_until_ready((codewords, dec_out))
  assert codewords.shape == (B, L, 3)
  assert dec_out.shape == (B, L, 1)
  print("KERNEL_OK")
</pallas_src>

<mosaic_0001>
module attributes {stable_mosaic.version = 11 : i64} {
  func.func @ae_kernel(%arg0: memref<10x8x1xf32, #tpu.memory_space<vmem>>, %arg1: memref<10x8x3xf32, #tpu.memory_space<vmem>>, %arg2: memref<10x8x3xf32, #tpu.memory_space<vmem>>, %arg3: memref<2xf32, #tpu.memory_space<smem>>, %arg4: memref<4xf32, #tpu.memory_space<smem>>, %arg5: memref<1xf32, #tpu.memory_space<smem>>, %arg6: memref<10x1x1xf32, #tpu.memory_space<vmem>>, %arg7: memref<1x1x3xf32, #tpu.memory_space<vmem>>, %arg8: memref<2x3x15xf32, #tpu.memory_space<vmem>>, %arg9: memref<2x5x15xf32, #tpu.memory_space<vmem>>, %arg10: memref<2x1x15xf32, #tpu.memory_space<vmem>>, %arg11: memref<2x1x15xf32, #tpu.memory_space<vmem>>, %arg12: memref<2x10x15xf32, #tpu.memory_space<vmem>>, %arg13: memref<2x5x15xf32, #tpu.memory_space<vmem>>, %arg14: memref<2x1x15xf32, #tpu.memory_space<vmem>>, %arg15: memref<2x1x15xf32, #tpu.memory_space<vmem>>, %arg16: memref<1x1x10xf32, #tpu.memory_space<vmem>>, %arg17: memref<1x1x10xf32, #tpu.memory_space<vmem>>, %arg18: memref<1x1x10xf32, #tpu.memory_space<vmem>>, %arg19: memref<1x1x10xf32, #tpu.memory_space<vmem>>, %arg20: memref<1x1x10xf32, #tpu.memory_space<vmem>>, %arg21: memref<10x8x3xf32, #tpu.memory_space<vmem>>, %arg22: memref<10x8x1xf32, #tpu.memory_space<vmem>>, %arg23: memref<10x8x15xf32, #tpu.memory_space<vmem>>, %arg24: memref<10x8x15xf32, #tpu.memory_space<vmem>>, %arg25: memref<10x8x5xf32, #tpu.memory_space<vmem>>, %arg26: memref<10x8x5xf32, #tpu.memory_space<vmem>>, %arg27: memref<10x8x5xf32, #tpu.memory_space<vmem>>, %arg28: memref<10x8x5xf32, #tpu.memory_space<vmem>>) attributes {dimension_semantics = [], scalar_prefetch = 0 : i64, scratch_operands = 6 : i64, tpu.core_type = #tpu.core_type<tc>} {
    %c0 = arith.constant 0 : index
    %0 = memref.load %arg3[%c0] : memref<2xf32, #tpu.memory_space<smem>>
    %c1 = arith.constant 1 : index
    %1 = memref.load %arg3[%c1] : memref<2xf32, #tpu.memory_space<smem>>
    %c0_0 = arith.constant 0 : index
    %2 = memref.load %arg4[%c0_0] : memref<4xf32, #tpu.memory_space<smem>>
    %c1_1 = arith.constant 1 : index
    %3 = memref.load %arg4[%c1_1] : memref<4xf32, #tpu.memory_space<smem>>
    %c2 = arith.constant 2 : index
    %4 = memref.load %arg4[%c2] : memref<4xf32, #tpu.memory_space<smem>>
    %c3 = arith.constant 3 : index
    %5 = memref.load %arg4[%c3] : memref<4xf32, #tpu.memory_space<smem>>
    %c0_2 = arith.constant 0 : index
    %c0_3 = arith.constant 0 : index
    %c0_4 = arith.constant 0 : index
    %6 = vector.load %arg0[%c0_2, %c0_3, %c0_4] : memref<10x8x1xf32, #tpu.memory_space<vmem>>, vector<10x8x1xf32>
    %c0_5 = arith.constant 0 : index
    %c0_6 = arith.constant 0 : index
    %c0_7 = arith.constant 0 : index
    %7 = vector.load %arg1[%c0_5, %c0_6, %c0_7] : memref<10x8x3xf32, #tpu.memory_space<vmem>>, vector<10x8x3xf32>
    %c0_8 = arith.constant 0 : index
    %c0_9 = arith.constant 0 : index
    %c0_10 = arith.constant 0 : index
    %8 = vector.load %arg2[%c0_8, %c0_9, %c0_10] : memref<10x8x3xf32, #tpu.memory_space<vmem>>, vector<10x8x3xf32>
    %9 = vector.extract_strided_slice %7 {offsets = [0, 0, 0], sizes = [10, 8, 1], strides = [1, 1, 1]} : vector<10x8x3xf32> to vector<10x8x1xf32>
    %10 = vector.extract_strided_slice %8 {offsets = [0, 0, 0], sizes = [10, 8, 1], strides = [1, 1, 1]} : vector<10x8x3xf32> to vector<10x8x1xf32>
    %11 = arith.addf %9, %10 : vector<10x8x1xf32>
    %12 = vector.extract_strided_slice %7 {offsets = [0, 0, 1], sizes = [10, 8, 2], strides = [1, 1, 1]} : vector<10x8x3xf32> to vector<10x8x2xf32>
    %13 = vector.extract_strided_slice %8 {offsets = [0, 0, 1], sizes = [10, 8, 2], strides = [1, 1, 1]} : vector<10x8x3xf32> to vector<10x8x2xf32>
    %14 = arith.addf %12, %13 : vector<10x8x2xf32>
    %cst = arith.constant 0.000000e+00 : f32
    %15 = vector.broadcast %cst : f32 to vector<1x8x2xf32>
    %16 = vector.extract_strided_slice %14 {offsets = [0, 0, 0], sizes = [9, 8, 2], strides = [1, 1, 1]} : vector<10x8x2xf32> to vector<9x8x2xf32>
    %17 = tpu.concatenate %15, %16 in 0 : vector<1x8x2xf32>, vector<9x8x2xf32> -> vector<10x8x2xf32>
    %18 = vector.extract_strided_slice %17 {offsets = [0, 0, 0], sizes = [10, 8, 1], strides = [1, 1, 1]} : vector<10x8x2xf32> to vector<10x8x1xf32>
    %19 = vector.extract_strided_slice %17 {offsets = [0, 0, 1], sizes = [10, 8, 1], strides = [1, 1, 1]} : vector<10x8x2xf32> to vector<10x8x1xf32>
    %cst_11 = arith.constant 0.000000e+00 : f32
    %20 = vector.broadcast %cst_11 : f32 to vector<1x8x1xf32>
    %21 = vector.extract_strided_slice %6 {offsets = [0, 0, 0], sizes = [9, 8, 1], strides = [1, 1, 1]} : vector<10x8x1xf32> to vector<9x8x1xf32>
    %22 = tpu.concatenate %20, %21 in 0 : vector<1x8x1xf32>, vector<9x8x1xf32> -> vector<10x8x1xf32>
    %23 = vector.extract_strided_slice %7 {offsets = [0, 0, 0], sizes = [9, 8, 1], strides = [1, 1, 1]} : vector<10x8x3xf32> to vector<9x8x1xf32>
    %24 = tpu.concatenate %20, %23 in 0 : vector<1x8x1xf32>, vector<9x8x1xf32> -> vector<10x8x1xf32>
    %cst_12 = arith.constant 2.000000e+00 : f32
    %25 = vector.broadcast %cst_12 : f32 to vector<10x8x1xf32>
    %26 = arith.mulf %25, %6 : vector<10x8x1xf32>
    %cst_13 = arith.constant 1.000000e+00 : f32
    %27 = vector.broadcast %cst_13 : f32 to vector<10x8x1xf32>
    %28 = arith.subf %26, %27 : vector<10x8x1xf32>
    %cst_14 = arith.constant 0.000000e+00 : f32
    %29 = vector.broadcast %cst_14 : f32 to vector<10x8x1xf32>
    %30 = arith.subf %29, %28 : vector<10x8x1xf32>
    %31 = arith.mulf %30, %11 : vector<10x8x1xf32>
    %cst_15 = arith.constant 0.000000e+00 : f32
    %32 = vector.broadcast %cst_15 : f32 to vector<10x8x1xf32>
    %33 = arith.cmpf ogt, %31, %32 : vector<10x8x1xf32>
    %34 = arith.extui %33 : vector<10x8x1xi1> to vector<10x8x1xi32>
    %35 = arith.sitofp %34 : vector<10x8x1xi32> to vector<10x8x1xf32>
    %36 = vector.broadcast %0 : f32 to vector<10x8x1xf32>
    %37 = arith.mulf %36, %11 : vector<10x8x1xf32>
    %38 = arith.mulf %37, %35 : vector<10x8x1xf32>
    %cst_16 = arith.constant 0.000000e+00 : f32
    %39 = arith.subf %cst_16, %2 : f32
    %40 = vector.broadcast %39 : f32 to vector<10x8x1xf32>
    %41 = arith.mulf %40, %24 : vector<10x8x1xf32>
    %42 = vector.broadcast %3 : f32 to vector<10x8x1xf32>
    %43 = arith.mulf %42, %18 : vector<10x8x1xf32>
    %44 = arith.addf %41, %43 : vector<10x8x1xf32>
    %45 = vector.broadcast %4 : f32 to vector<10x8x1xf32>
    %46 = arith.mulf %45, %19 : vector<10x8x1xf32>
    %47 = arith.subf %44, %46 : vector<10x8x1xf32>
    %cst_17 = arith.constant 0.000000e+00 : f32
    %48 = vector.broadcast %cst_17 : f32 to vector<10x8x1xf32>
    %49 = arith.cmpf oeq, %22, %48 : vector<10x8x1xf32>
    %50 = vector.broadcast %5 : f32 to vector<10x8x1xf32>
    %51 = arith.addf %47, %50 : vector<10x8x1xf32>
    %52 = math.tanh %51 : vector<10x8x1xf32>
    %cst_18 = arith.constant 1.000000e+00 : f32
    %53 = vector.broadcast %cst_18 : f32 to vector<10x8x1xf32>
    %54 = arith.select %49, %52, %53 : vector<10x8x1xi1>, vector<10x8x1xf32>
    %cst_19 = arith.constant 1.000000e+00 : f32
    %55 = vector.broadcast %cst_19 : f32 to vector<10x8x1xf32>
    %56 = arith.cmpf oeq, %22, %55 : vector<10x8x1xf32>
    %57 = vector.broadcast %5 : f32 to vector<10x8x1xf32>
    %58 = arith.subf %47, %57 : vector<10x8x1xf32>
    %59 = math.tanh %58 : vector<10x8x1xf32>
    %cst_20 = arith.constant -1.000000e+00 : f32
    %60 = vector.broadcast %cst_20 : f32 to vector<10x8x1xf32>
    %61 = arith.select %56, %59, %60 : vector<10x8x1xi1>, vector<10x8x1xf32>
    %62 = tpu.iota {dimensions = array<i32: 0>} : vector<10x8x1xi32>
    %c0_i32 = arith.constant 0 : i32
    %63 = vector.broadcast %c0_i32 : i32 to vector<10x8x1xi32>
    %64 = arith.cmpi eq, %62, %63 : vector<10x8x1xi32>
    %cst_21 = arith.constant 1.000000e+00 : f32
    %65 = vector.broadcast %cst_21 : f32 to vector<10x8x1xf32>
    %66 = arith.select %64, %65, %54 : vector<10x8x1xi1>, vector<10x8x1xf32>
    %cst_22 = arith.constant -1.000000e+00 : f32
    %67 = vector.broadcast %cst_22 : f32 to vector<10x8x1xf32>
    %68 = arith.select %64, %67, %61 : vector<10x8x1xi1>, vector<10x8x1xf32>
    %69 = vector.broadcast %1 : f32 to vector<10x8x1xf32>
    %70 = arith.mulf %69, %66 : vector<10x8x1xf32>
    %71 = vector.broadcast %1 : f32 to vector<10x8x1xf32>
    %72 = arith.mulf %71, %68 : vector<10x8x1xf32>
    %73 = arith.addf %70, %72 : vector<10x8x1xf32>
    %74 = arith.subf %38, %73 : vector<10x8x1xf32>
    %cst_23 = arith.constant 0.000000e+00 : f32
    %75 = vector.broadcast %cst_23 : f32 to vector<10x8x1xf32>
    %76 = arith.subf %75, %38 : vector<10x8x1xf32>
    %77 = arith.subf %76, %73 : vector<10x8x1xf32>
    %cst_24 = arith.constant dense<0.000000e+00> : vector<10x1xf32>
    %78 = vector.multi_reduction <add>, %74, %cst_24 [1] : vector<10x8x1xf32> to vector<10x1xf32>
    %79 = vector.shape_cast %78 : vector<10x1xf32> to vector<10x1x1xf32>
    %cst_25 = arith.constant 8.000000e+00 : f32
    %80 = vector.broadcast %cst_25 : f32 to vector<10x1x1xf32>
    %81 = arith.divf %79, %80 : vector<10x1x1xf32>
    %82 = vector.broadcast %81 : vector<10x1x1xf32> to vector<10x8x1xf32>
    %83 = arith.subf %74, %82 : vector<10x8x1xf32>
    %84 = arith.mulf %83, %83 : vector<10x8x1xf32>
    %cst_26 = arith.constant dense<0.000000e+00> : vector<10x1xf32>
    %85 = vector.multi_reduction <add>, %84, %cst_26 [1] : vector<10x8x1xf32> to vector<10x1xf32>
    %86 = vector.shape_cast %85 : vector<10x1xf32> to vector<10x1x1xf32>
    %cst_27 = arith.constant 7.000000e+00 : f32
    %87 = vector.broadcast %cst_27 : f32 to vector<10x1x1xf32>
    %88 = arith.divf %86, %87 : vector<10x1x1xf32>
    %89 = vector.broadcast %81 : vector<10x1x1xf32> to vector<10x8x1xf32>
    %90 = arith.subf %74, %89 : vector<10x8x1xf32>
    %91 = math.sqrt %88 : vector<10x1x1xf32>
    %92 = vector.broadcast %91 : vector<10x1x1xf32> to vector<10x8x1xf32>
    %93 = arith.divf %90, %92 : vector<10x8x1xf32>
    %cst_28 = arith.constant dense<0.000000e+00> : vector<10x1xf32>
    %94 = vector.multi_reduction <add>, %77, %cst_28 [1] : vector<10x8x1xf32> to vector<10x1xf32>
    %95 = vector.shape_cast %94 : vector<10x1xf32> to vector<10x1x1xf32>
    %cst_29 = arith.constant 8.000000e+00 : f32
    %96 = vector.broadcast %cst_29 : f32 to vector<10x1x1xf32>
    %97 = arith.divf %95, %96 : vector<10x1x1xf32>
    %98 = vector.broadcast %97 : vector<10x1x1xf32> to vector<10x8x1xf32>
    %99 = arith.subf %77, %98 : vector<10x8x1xf32>
    %100 = arith.mulf %99, %99 : vector<10x8x1xf32>
    %cst_30 = arith.constant dense<0.000000e+00> : vector<10x1xf32>
    %101 = vector.multi_reduction <add>, %100, %cst_30 [1] : vector<10x8x1xf32> to vector<10x1xf32>
    %102 = vector.shape_cast %101 : vector<10x1xf32> to vector<10x1x1xf32>
    %cst_31 = arith.constant 7.000000e+00 : f32
    %103 = vector.broadcast %cst_31 : f32 to vector<10x1x1xf32>
    %104 = arith.divf %102, %103 : vector<10x1x1xf32>
    %105 = vector.broadcast %97 : vector<10x1x1xf32> to vector<10x8x1xf32>
    %106 = arith.subf %77, %105 : vector<10x8x1xf32>
    %107 = math.sqrt %104 : vector<10x1x1xf32>
    %108 = vector.broadcast %107 : vector<10x1x1xf32> to vector<10x8x1xf32>
    %109 = arith.divf %106, %108 : vector<10x8x1xf32>
    %cst_32 = arith.constant 2.000000e+00 : f32
    %110 = vector.broadcast %cst_32 : f32 to vector<10x8x1xf32>
    %111 = arith.mulf %110, %6 : vector<10x8x1xf32>
    %cst_33 = arith.constant 1.000000e+00 : f32
    %112 = vector.broadcast %cst_33 : f32 to vector<10x8x1xf32>
    %113 = arith.subf %111, %112 : vector<10x8x1xf32>
    %c0_34 = arith.constant 0 : index
    %c0_35 = arith.constant 0 : index
    %c0_36 = arith.constant 0 : index
    %114 = vector.load %arg6[%c0_34, %c0_35, %c0_36] : memref<10x1x1xf32, #tpu.memory_space<vmem>>, vector<10x1x1xf32>
    %c0_37 = arith.constant 0 : index
    %c0_38 = arith.constant 0 : index
    %c0_39 = arith.constant 0 : index
    %115 = vector.load %arg7[%c0_37, %c0_38, %c0_39] : memref<1x1x3xf32, #tpu.memory_space<vmem>>, vector<1x1x3xf32>
    %116 = tpu.concatenate %113, %93, %109 in 2 : vector<10x8x1xf32>, vector<10x8x1xf32>, vector<10x8x1xf32> -> vector<10x8x3xf32>
    %117 = vector.broadcast %114 : vector<10x1x1xf32> to vector<10x1x3xf32>
    %118 = vector.broadcast %115 : vector<1x1x3xf32> to vector<10x1x3xf32>
    %119 = arith.mulf %117, %118 : vector<10x1x3xf32>
    %120 = vector.broadcast %119 : vector<10x1x3xf32> to vector<10x8x3xf32>
    %121 = arith.mulf %116, %120 : vector<10x8x3xf32>
    %c0_40 = arith.constant 0 : index
    %c0_41 = arith.constant 0 : index
    %c0_42 = arith.constant 0 : index
    %122 = vector.load %arg21[%c0_40, %c0_41, %c0_42] : memref<10x8x3xf32, #tpu.memory_space<vmem>>, vector<10x8x3xf32>
    tpu.vector_store %arg21[%c0_40, %c0_41, %c0_42], %121 {strides = array<i32>} : memref<10x8x3xf32, #tpu.memory_space<vmem>>, vector<10x8x3xf32>,
    %123 = arith.addf %121, %7 : vector<10x8x3xf32>
    %cst_43 = arith.constant 0.000000e+00 : f32
    %124 = vector.broadcast %cst_43 : f32 to vector<1x5xf32>
    %125 = vector.shape_cast %123 : vector<10x8x3xf32> to vector<80x3xf32>
    %c0_44 = arith.constant 0 : index
    %c0_45 = arith.constant 0 : index
    %c0_46 = arith.constant 0 : index
    %126 = vector.load %arg11[%c0_44, %c0_45, %c0_46] : memref<2x1x15xf32, #tpu.memory_space<vmem>>, vector<1x1x15xf32>
    %127 = vector.shape_cast %126 : vector<1x1x15xf32> to vector<1x15xf32>
    %c1_47 = arith.constant 1 : index
    %c0_48 = arith.constant 0 : index
    %c0_49 = arith.constant 0 : index
    %128 = vector.load %arg11[%c1_47, %c0_48, %c0_49] : memref<2x1x15xf32, #tpu.memory_space<vmem>>, vector<1x1x15xf32>
    %129 = vector.shape_cast %128 : vector<1x1x15xf32> to vector<1x15xf32>
    %c0_50 = arith.constant 0 : index
    %c0_51 = arith.constant 0 : index
    %c0_52 = arith.constant 0 : index
    %130 = vector.load %arg8[%c0_50, %c0_51, %c0_52] : memref<2x3x15xf32, #tpu.memory_space<vmem>>, vector<1x3x15xf32>
    %131 = vector.shape_cast %130 : vector<1x3x15xf32> to vector<3x15xf32>
    %cst_53 = arith.constant dense<0.000000e+00> : vector<80x15xf32>
    %132 = tpu.matmul %125, %131, %cst_53 {dimension_numbers = #tpu.dot_dimension_numbers<[1], [0], [0], [1], [0, 0, 1, 1], [], []>} : vector<80x3xf32>, vector<3x15xf32>, vector<80x15xf32> -> vector<80x15xf32>
    %c0_54 = arith.constant 0 : index
    %c0_55 = arith.constant 0 : index
    %c0_56 = arith.constant 0 : index
    %133 = vector.load %arg10[%c0_54, %c0_55, %c0_56] : memref<2x1x15xf32, #tpu.memory_space<vmem>>, vector<1x1x15xf32>
    %134 = vector.shape_cast %133 : vector<1x1x15xf32> to vector<1x15xf32>
    %135 = vector.extract_strided_slice %127 {offsets = [0, 0], sizes = [1, 10], strides = [1, 1]} : vector<1x15xf32> to vector<1x10xf32>
    %136 = tpu.concatenate %135, %124 in 1 : vector<1x10xf32>, vector<1x5xf32> -> vector<1x15xf32>
    %137 = arith.addf %134, %136 : vector<1x15xf32>
    %138 = vector.broadcast %137 : vector<1x15xf32> to vector<80x15xf32>
    %139 = arith.addf %132, %138 : vector<80x15xf32>
    %140 = vector.shape_cast %139 : vector<80x15xf32> to vector<10x8x15xf32>
    %c0_57 = arith.constant 0 : index
    %c0_58 = arith.constant 0 : index
    %c0_59 = arith.constant 0 : index
    %141 = vector.load %arg23[%c0_57, %c0_58, %c0_59] : memref<10x8x15xf32, #tpu.memory_space<vmem>>, vector<10x8x15xf32>
    tpu.vector_store %arg23[%c0_57, %c0_58, %c0_59], %140 {strides = array<i32>} : memref<10x8x15xf32, #tpu.memory_space<vmem>>, vector<10x8x15xf32>,
    %c1_60 = arith.constant 1 : index
    %c0_61 = arith.constant 0 : index
    %c0_62 = arith.constant 0 : index
    %142 = vector.load %arg8[%c1_60, %c0_61, %c0_62] : memref<2x3x15xf32, #tpu.memory_space<vmem>>, vector<1x3x15xf32>
    %143 = vector.shape_cast %142 : vector<1x3x15xf32> to vector<3x15xf32>
    %cst_63 = arith.constant dense<0.000000e+00> : vector<80x15xf32>
    %144 = tpu.matmul %125, %143, %cst_63 {dimension_numbers = #tpu.dot_dimension_numbers<[1], [0], [0], [1], [0, 0, 1, 1], [], []>} : vector<80x3xf32>, vector<3x15xf32>, vector<80x15xf32> -> vector<80x15xf32>
    %c1_64 = arith.constant 1 : index
    %c0_65 = arith.constant 0 : index
    %c0_66 = arith.constant 0 : index
    %145 = vector.load %arg10[%c1_64, %c0_65, %c0_66] : memref<2x1x15xf32, #tpu.memory_space<vmem>>, vector<1x1x15xf32>
    %146 = vector.shape_cast %145 : vector<1x1x15xf32> to vector<1x15xf32>
    %147 = vector.extract_strided_slice %129 {offsets = [0, 0], sizes = [1, 10], strides = [1, 1]} : vector<1x15xf32> to vector<1x10xf32>
    %148 = tpu.concatenate %147, %124 in 1 : vector<1x10xf32>, vector<1x5xf32> -> vector<1x15xf32>
    %149 = arith.addf %146, %148 : vector<1x15xf32>
    %150 = vector.broadcast %149 : vector<1x15xf32> to vector<80x15xf32>
    %151 = arith.addf %144, %150 : vector<80x15xf32>
    %152 = vector.shape_cast %151 : vector<80x15xf32> to vector<10x8x15xf32>
    %c0_67 = arith.constant 0 : index
    %c0_68 = arith.constant 0 : index
    %c0_69 = arith.constant 0 : index
    %153 = vector.load %arg24[%c0_67, %c0_68, %c0_69] : memref<10x8x15xf32, #tpu.memory_space<vmem>>, vector<10x8x15xf32>
    tpu.vector_store %arg24[%c0_67, %c0_68, %c0_69], %152 {strides = array<i32>} : memref<10x8x15xf32, #tpu.memory_space<vmem>>, vector<10x8x15xf32>,
    %c0_70 = arith.constant 0 : index
    %c0_71 = arith.constant 0 : index
    %c0_72 = arith.constant 0 : index
    %154 = vector.load %arg9[%c0_70, %c0_71, %c0_72] : memref<2x5x15xf32, #tpu.memory_space<vmem>>, vector<1x5x15xf32>
    %155 = vector.shape_cast %154 : vector<1x5x15xf32> to vector<5x15xf32>
    %156 = vector.extract_strided_slice %127 {offsets = [0, 10], sizes = [1, 5], strides = [1, 1]} : vector<1x15xf32> to vector<1x5xf32>
    %c1_73 = arith.constant 1 : index
    %c0_74 = arith.constant 0 : index
    %c0_75 = arith.constant 0 : index
    %157 = vector.load %arg9[%c1_73, %c0_74, %c0_75] : memref<2x5x15xf32, #tpu.memory_space<vmem>>, vector<1x5x15xf32>
    %158 = vector.shape_cast %157 : vector<1x5x15xf32> to vector<5x15xf32>
    %159 = vector.extract_strided_slice %129 {offsets = [0, 10], sizes = [1, 5], strides = [1, 1]} : vector<1x15xf32> to vector<1x5xf32>
    %cst_76 = arith.constant 0.000000e+00 : f32
    %160 = vector.broadcast %cst_76 : f32 to vector<8x5xf32>
    %cst_77 = arith.constant 0.000000e+00 : f32
    %161 = vector.broadcast %cst_77 : f32 to vector<8x5xf32>
    %cst_78 = arith.constant dense<0.000000e+00> : vector<8x15xf32>
    %162 = tpu.matmul %160, %155, %cst_78 {dimension_numbers = #tpu.dot_dimension_numbers<[1], [0], [0], [1], [0, 0, 1, 1], [], []>} : vector<8x5xf32>, vector<5x15xf32>, vector<8x15xf32> -> vector<8x15xf32>
    %cst_79 = arith.constant dense<0.000000e+00> : vector<8x15xf32>
    %163 = tpu.matmul %161, %158, %cst_79 {dimension_numbers = #tpu.dot_dimension_numbers<[1], [0], [0], [1], [0, 0, 1, 1], [], []>} : vector<8x5xf32>, vector<5x15xf32>, vector<8x15xf32> -> vector<8x15xf32>
    %c0_80 = arith.constant 0 : index
    %c0_81 = arith.constant 0 : index
    %c0_82 = arith.constant 0 : index
    %164 = vector.load %arg23[%c0_80, %c0_81, %c0_82] : memref<10x8x15xf32, #tpu.memory_space<vmem>>, vector<1x8x15xf32>
    %165 = vector.shape_cast %164 : vector<1x8x15xf32> to vector<8x15xf32>
    %166 = vector.extract_strided_slice %165 {offsets = [0, 0], sizes = [8, 5], strides = [1, 1]} : vector<8x15xf32> to vector<8x5xf32>
    %167 = vector.extract_strided_slice %162 {offsets = [0, 0], sizes = [8, 5], strides = [1, 1]} : vector<8x15xf32> to vector<8x5xf32>
    %168 = arith.addf %166, %167 : vector<8x5xf32>
    %169 = arith.negf %168 : vector<8x5xf32>
    %170 = math.exp %169 : vector<8x5xf32>
    %cst_83 = arith.constant 1.000000e+00 : f32
    %171 = vector.broadcast %cst_83 : f32 to vector<8x5xf32>
    %172 = arith.addf %171, %170 : vector<8x5xf32>
    %173 = arith.divf %171, %172 : vector<8x5xf32>
    %174 = vector.extract_strided_slice %165 {offsets = [0, 5], sizes = [8, 5], strides = [1, 1]} : vector<8x15xf32> to vector<8x5xf32>
    %175 = vector.extract_strided_slice %162 {offsets = [0, 5], sizes = [8, 5], strides = [1, 1]} : vector<8x15xf32> to vector<8x5xf32>
    %176 = arith.addf %174, %175 : vector<8x5xf32>
    %177 = arith.negf %176 : vector<8x5xf32>
    %178 = math.exp %177 : vector<8x5xf32>
    %cst_84 = arith.constant 1.000000e+00 : f32
    %179 = vector.broadcast %cst_84 : f32 to vector<8x5xf32>
    %180 = arith.addf %179, %178 : vector<8x5xf32>
    %181 = arith.divf %179, %180 : vector<8x5xf32>
    %182 = vector.extract_strided_slice %165 {offsets = [0, 10], sizes = [8, 5], strides = [1, 1]} : vector<8x15xf32> to vector<8x5xf32>
    %183 = vector.extract_strided_slice %162 {offsets = [0, 10], sizes = [8, 5], strides = [1, 1]} : vector<8x15xf32> to vector<8x5xf32>
    %184 = vector.broadcast %156 : vector<1x5xf32> to vector<8x5xf32>
    %185 = arith.addf %183, %184 : vector<8x5xf32>
    %186 = arith.mulf %173, %185 : vector<8x5xf32>
    %187 = arith.addf %182, %186 : vector<8x5xf32>
    %188 = math.tanh %187 : vector<8x5xf32>
    %cst_85 = arith.constant 1.000000e+00 : f32
    %189 = vector.broadcast %cst_85 : f32 to vector<8x5xf32>
    %190 = arith.subf %189, %181 : vector<8x5xf32>
    %191 = arith.mulf %190, %188 : vector<8x5xf32>
    %192 = arith.mulf %181, %160 : vector<8x5xf32>
    %193 = arith.addf %191, %192 : vector<8x5xf32>
    %c9 = arith.constant 9 : index
    %c0_86 = arith.constant 0 : index
    %c0_87 = arith.constant 0 : index
    %194 = vector.load %arg24[%c9, %c0_86, %c0_87] : memref<10x8x15xf32, #tpu.memory_space<vmem>>, vector<1x8x15xf32>
    %195 = vector.shape_cast %194 : vector<1x8x15xf32> to vector<8x15xf32>
    %196 = vector.extract_strided_slice %195 {offsets = [0, 0], sizes = [8, 5], strides = [1, 1]} : vector<8x15xf32> to vector<8x5xf32>
    %197 = vector.extract_strided_slice %163 {offsets = [0, 0], sizes = [8, 5], strides = [1, 1]} : vector<8x15xf32> to vector<8x5xf32>
    %198 = arith.addf %196, %197 : vector<8x5xf32>
    %199 = arith.negf %198 : vector<8x5xf32>
    %200 = math.exp %199 : vector<8x5xf32>
    %cst_88 = arith.constant 1.000000e+00 : f32
    %201 = vector.broadcast %cst_88 : f32 to vector<8x5xf32>
    %202 = arith.addf %201, %200 : vector<8x5xf32>
    %203 = arith.divf %201, %202 : vector<8x5xf32>
    %204 = vector.extract_strided_slice %195 {offsets = [0, 5], sizes = [8, 5], strides = [1, 1]} : vector<8x15xf32> to vector<8x5xf32>
    %205 = vector.extract_strided_slice %163 {offsets = [0, 5], sizes = [8, 5], strides = [1, 1]} : vector<8x15xf32> to vector<8x5xf32>
    %206 = arith.addf %204, %205 : vector<8x5xf32>
    %207 = arith.negf %206 : vector<8x5xf32>
    %208 = math.exp %207 : vector<8x5xf32>
    %cst_89 = arith.constant 1.000000e+00 : f32
    %209 = vector.broadcast %cst_89 : f32 to vector<8x5xf32>
    %210 = arith.addf %209, %208 : vector<8x5xf32>
    %211 = arith.divf %209, %210 : vector<8x5xf32>
    %212 = vector.extract_strided_slice %195 {offsets = [0, 10], sizes = [8, 5], strides = [1, 1]} : vector<8x15xf32> to vector<8x5xf32>
    %213 = vector.extract_strided_slice %163 {offsets = [0, 10], sizes = [8, 5], strides = [1, 1]} : vector<8x15xf32> to vector<8x5xf32>
    %214 = vector.broadcast %159 : vector<1x5xf32> to vector<8x5xf32>
    %215 = arith.addf %213, %214 : vector<8x5xf32>
    %216 = arith.mulf %203, %215 : vector<8x5xf32>
    %217 = arith.addf %212, %216 : vector<8x5xf32>
    %218 = math.tanh %217 : vector<8x5xf32>
    %cst_90 = arith.constant 1.000000e+00 : f32
    %219 = vector.broadcast %cst_90 : f32 to vector<8x5xf32>
    %220 = arith.subf %219, %211 : vector<8x5xf32>
    %221 = arith.mulf %220, %218 : vector<8x5xf32>
    %222 = arith.mulf %211, %161 : vector<8x5xf32>
    %223 = arith.addf %221, %222 : vector<8x5xf32>
    %c0_91 = arith.constant 0 : index
    %c0_92 = arith.constant 0 : index
    %c0_93 = arith.constant 0 : index
    %224 = vector.load %arg25[%c0_91, %c0_92, %c0_93] : memref<10x8x5xf32, #tpu.memory_space<vmem>>, vector<1x8x5xf32>
    %225 = vector.shape_cast %224 : vector<1x8x5xf32> to vector<8x5xf32>
    %226 = vector.shape_cast %193 : vector<8x5xf32> to vector<1x8x5xf32>
    tpu.vector_store %arg25[%c0_91, %c0_92, %c0_93], %226 {strides = array<i32>} : memref<10x8x5xf32, #tpu.memory_space<vmem>>, vector<1x8x5xf32>,
    %c9_94 = arith.constant 9 : index
    %c0_95 = arith.constant 0 : index
    %c0_96 = arith.constant 0 : index
    %227 = vector.load %arg26[%c9_94, %c0_95, %c0_96] : memref<10x8x5xf32, #tpu.memory_space<vmem>>, vector<1x8x5xf32>
    %228 = vector.shape_cast %227 : vector<1x8x5xf32> to vector<8x5xf32>
    %229 = vector.shape_cast %223 : vector<8x5xf32> to vector<1x8x5xf32>
    tpu.vector_store %arg26[%c9_94, %c0_95, %c0_96], %229 {strides = array<i32>} : memref<10x8x5xf32, #tpu.memory_space<vmem>>, vector<1x8x5xf32>,
    %cst_97 = arith.constant dense<0.000000e+00> : vector<8x15xf32>
    %230 = tpu.matmul %193, %155, %cst_97 {dimension_numbers = #tpu.dot_dimension_numbers<[1], [0], [0], [1], [0, 0, 1, 1], [], []>} : vector<8x5xf32>, vector<5x15xf32>, vector<8x15xf32> -> vector<8x15xf32>
    %cst_98 = arith.constant dense<0.000000e+00> : vector<8x15xf32>
    %231 = tpu.matmul %223, %158, %cst_98 {dimension_numbers = #tpu.dot_dimension_numbers<[1], [0], [0], [1], [0, 0, 1, 1], [], []>} : vector<8x5xf32>, vector<5x15xf32>, vector<8x15xf32> -> vector<8x15xf32>
    %c1_99 = arith.constant 1 : index
    %c0_100 = arith.constant 0 : index
    %c0_101 = arith.constant 0 : index
    %232 = vector.load %arg23[%c1_99, %c0_100, %c0_101] : memref<10x8x15xf32, #tpu.memory_space<vmem>>, vector<1x8x15xf32>
    %233 = vector.shape_cast %232 : vector<1x8x15xf32> to vector<8x15xf32>
    %234 = vector.extract_strided_slice %233 {offsets = [0, 0], sizes = [8, 5], strides = [1, 1]} : vector<8x15xf32> to vector<8x5xf32>
    %235 = vector.extract_strided_slice %230 {offsets = [0, 0], sizes = [8, 5], strides = [1, 1]} : vector<8x15xf32> to vector<8x5xf32>
    %236 = arith.addf %234, %235 : vector<8x5xf32>
    %237 = arith.negf %236 : vector<8x5xf32>
    %238 = math.exp %237 : vector<8x5xf32>
    %cst_102 = arith.constant 1.000000e+00 : f32
    %239 = vector.broadcast %cst_102 : f32 to vector<8x5xf32>
    %240 = arith.addf %239, %238 : vector<8x5xf32>
    %241 = arith.divf %239, %240 : vector<8x5xf32>
    %242 = vector.extract_strided_slice %233 {offsets = [0, 5], sizes = [8, 5], strides = [1, 1]} : vector<8x15xf32> to vector<8x5xf32>
    %243 = vector.extract_strided_slice %230 {offsets = [0, 5], sizes = [8, 5], strides = [1, 1]} : vector<8x15xf32> to vector<8x5xf32>
    %244 = arith.addf %242, %243 : vector<8x5xf32>
    %245 = arith.negf %244 : vector<8x5xf32>
    %246 = math.exp %245 : vector<8x5xf32>
    %cst_103 = arith.constant 1.000000e+00 : f32
    %247 = vector.broadcast %cst_103 : f32 to vector<8x5xf32>
    %248 = arith.addf %247, %246 : vector<8x5xf32>
    %249 = arith.divf %247, %248 : vector<8x5xf32>
    %250 = vector.extract_strided_slice %233 {offsets = [0, 10], sizes = [8, 5], strides = [1, 1]} : vector<8x15xf32> to vector<8x5xf32>
    %251 = vector.extract_strided_slice %230 {offsets = [0, 10], sizes = [8, 5], strides = [1, 1]} : vector<8x15xf32> to vector<8x5xf32>
    %252 = vector.broadcast %156 : vector<1x5xf32> to vector<8x5xf32>
    %253 = arith.addf %251, %252 : vector<8x5xf32>
    %254 = arith.mulf %241, %253 : vector<8x5xf32>
    %255 = arith.addf %250, %254 : vector<8x5xf32>
    %256 = math.tanh %255 : vector<8x5xf32>
    %cst_104 = arith.constant 1.000000e+00 : f32
    %257 = vector.broadcast %cst_104 : f32 to vector<8x5xf32>
    %258 = arith.subf %257, %249 : vector<8x5xf32>
    %259 = arith.mulf %258, %256 : vector<8x5xf32>
    %260 = arith.mulf %249, %193 : vector<8x5xf32>
    %261 = arith.addf %259, %260 : vector<8x5xf32>
    %c8 = arith.constant 8 : index
    %c0_105 = arith.constant 0 : index
    %c0_106 = arith.constant 0 : index
    %262 = vector.load %arg24[%c8, %c0_105, %c0_106] : memref<10x8x15xf32, #tpu.memory_space<vmem>>, vector<1x8x15xf32>
    %263 = vector.shape_cast %262 : vector<1x8x15xf32> to vector<8x15xf32>
    %264 = vector.extract_strided_slice %263 {offsets = [0, 0], sizes = [8, 5], strides = [1, 1]} : vector<8x15xf32> to vector<8x5xf32>
    %265 = vector.extract_strided_slice %231 {offsets = [0, 0], sizes = [8, 5], strides = [1, 1]} : vector<8x15xf32> to vector<8x5xf32>
    %266 = arith.addf %264, %265 : vector<8x5xf32>
    %267 = arith.negf %266 : vector<8x5xf32>
    %268 = math.exp %267 : vector<8x5xf32>
    %cst_107 = arith.constant 1.000000e+00 : f32
    %269 = vector.broadcast %cst_107 : f32 to vector<8x5xf32>
    %270 = arith.addf %269, %268 : vector<8x5xf32>
    %271 = arith.divf %269, %270 : vector<8x5xf32>
    %272 = vector.extract_strided_slice %263 {offsets = [0, 5], sizes = [8, 5], strides = [1, 1]} : vector<8x15xf32> to vector<8x5xf32>
    %273 = vector.extract_strided_slice %231 {offsets = [0, 5], sizes = [8, 5], strides = [1, 1]} : vector<8x15xf32> to vector<8x5xf32>
    %274 = arith.addf %272, %273 : vector<8x5xf32>
    %275 = arith.negf %274 : vector<8x5xf32>
    %276 = math.exp %275 : vector<8x5xf32>
    %cst_108 = arith.constant 1.000000e+00 : f32
    %277 = vector.broadcast %cst_108 : f32 to vector<8x5xf32>
    %278 = arith.addf %277, %276 : vector<8x5xf32>
    %279 = arith.divf %277, %278 : vector<8x5xf32>
    %280 = vector.extract_strided_slice %263 {offsets = [0, 10], sizes = [8, 5], strides = [1, 1]} : vector<8x15xf32> to vector<8x5xf32>
    %281 = vector.extract_strided_slice %231 {offsets = [0, 10], sizes = [8, 5], strides = [1, 1]} : vector<8x15xf32> to vector<8x5xf32>
    %282 = vector.broadcast %159 : vector<1x5xf32> to vector<8x5xf32>
    %283 = arith.addf %281, %282 : vector<8x5xf32>
    %284 = arith.mulf %271, %283 : vector<8x5xf32>
    %285 = arith.addf %280, %284 : vector<8x5xf32>
    %286 = math.tanh %285 : vector<8x5xf32>
    %cst_109 = arith.constant 1.000000e+00 : f32
    %287 = vector.broadcast %cst_109 : f32 to vector<8x5xf32>
    %288 = arith.subf %287, %279 : vector<8x5xf32>
    %289 = arith.mulf %288, %286 : vector<8x5xf32>
    %290 = arith.mulf %279, %223 : vector<8x5xf32>
    %291 = arith.addf %289, %290 : vector<8x5xf32>
    %c1_110 = arith.constant 1 : index
    %c0_111 = arith.constant 0 : index
    %c0_112 = arith.constant 0 : index
    %292 = vector.load %arg25[%c1_110, %c0_111, %c0_112] : memref<10x8x5xf32, #tpu.memory_space<vmem>>, vector<1x8x5xf32>
    %293 = vector.shape_cast %292 : vector<1x8x5xf32> to vector<8x5xf32>
    %294 = vector.shape_cast %261 : vector<8x5xf32> to vector<1x8x5xf32>
    tpu.vector_store %arg25[%c1_110, %c0_111, %c0_112], %294 {strides = array<i32>} : memref<10x8x5xf32, #tpu.memory_space<vmem>>, vector<1x8x5xf32>,
    %c8_113 = arith.constant 8 : index
    %c0_114 = arith.constant 0 : index
    %c0_115 = arith.constant 0 : index
    %295 = vector.load %arg26[%c8_113, %c0_114, %c0_115] : memref<10x8x5xf32, #tpu.memory_space<vmem>>, vector<1x8x5xf32>
    %296 = vector.shape_cast %295 : vector<1x8x5xf32> to vector<8x5xf32>
    %297 = vector.shape_cast %291 : vector<8x5xf32> to vector<1x8x5xf32>
    tpu.vector_store %arg26[%c8_113, %c0_114, %c0_115], %297 {strides = array<i32>} : memref<10x8x5xf32, #tpu.memory_space<vmem>>, vector<1x8x5xf32>,
    %cst_116 = arith.constant dense<0.000000e+00> : vector<8x15xf32>
    %298 = tpu.matmul %261, %155, %cst_116 {dimension_numbers = #tpu.dot_dimension_numbers<[1], [0], [0], [1], [0, 0, 1, 1], [], []>} : vector<8x5xf32>, vector<5x15xf32>, vector<8x15xf32> -> vector<8x15xf32>
    %cst_117 = arith.constant dense<0.000000e+00> : vector<8x15xf32>
    %299 = tpu.matmul %291, %158, %cst_117 {dimension_numbers = #tpu.dot_dimension_numbers<[1], [0], [0], [1], [0, 0, 1, 1], [], []>} : vector<8x5xf32>, vector<5x15xf32>, vector<8x15xf32> -> vector<8x15xf32>
    %c2_118 = arith.constant 2 : index
    %c0_119 = arith.constant 0 : index
    %c0_120 = arith.constant 0 : index
    %300 = vector.load %arg23[%c2_118, %c0_119, %c0_120] : memref<10x8x15xf32, #tpu.memory_space<vmem>>, vector<1x8x15xf32>
    %301 = vector.shape_cast %300 : vector<1x8x15xf32> to vector<8x15xf32>
    %302 = vector.extract_strided_slice %301 {offsets = [0, 0], sizes = [8, 5], strides = [1, 1]} : vector<8x15xf32> to vector<8x5xf32>
    %303 = vector.extract_strided_slice %298 {offsets = [0, 0], sizes = [8, 5], strides = [1, 1]} : vector<8x15xf32> to vector<8x5xf32>
    %304 = arith.addf %302, %303 : vector<8x5xf32>
    %305 = arith.negf %304 : vector<8x5xf32>
    %306 = math.exp %305 : vector<8x5xf32>
    %cst_121 = arith.constant 1.000000e+00 : f32
    %307 = vector.broadcast %cst_121 : f32 to vector<8x5xf32>
    %308 = arith.addf %307, %306 : vector<8x5xf32>
    %309 = arith.divf %307, %308 : vector<8x5xf32>
    %310 = vector.extract_strided_slice %301 {offsets = [0, 5], sizes = [8, 5], strides = [1, 1]} : vector<8x15xf32> to vector<8x5xf32>
    %311 = vector.extract_strided_slice %298 {offsets = [0, 5], sizes = [8, 5], strides = [1, 1]} : vector<8x15xf32> to vector<8x5xf32>
    %312 = arith.addf %310, %311 : vector<8x5xf32>
    %313 = arith.negf %312 : vector<8x5xf32>
    %314 = math.exp %313 : vector<8x5xf32>
    %cst_122 = arith.constant 1.000000e+00 : f32
    %315 = vector.broadcast %cst_122 : f32 to vector<8x5xf32>
    %316 = arith.addf %315, %314 : vector<8x5xf32>
    %317 = arith.divf %315, %316 : vector<8x5xf32>
    %318 = vector.extract_strided_slice %301 {offsets = [0, 10], sizes = [8, 5], strides = [1, 1]} : vector<8x15xf32> to vector<8x5xf32>
    %319 = vector.extract_strided_slice %298 {offsets = [0, 10], sizes = [8, 5], strides = [1, 1]} : vector<8x15xf32> to vector<8x5xf32>
    %320 = vector.broadcast %156 : vector<1x5xf32> to vector<8x5xf32>
    %321 = arith.addf %319, %320 : vector<8x5xf32>
    %322 = arith.mulf %309, %321 : vector<8x5xf32>
    %323 = arith.addf %318, %322 : vector<8x5xf32>
    %324 = math.tanh %323 : vector<8x5xf32>
    %cst_123 = arith.constant 1.000000e+00 : f32
    %325 = vector.broadcast %cst_123 : f32 to vector<8x5xf32>
    %326 = arith.subf %325, %317 : vector<8x5xf32>
    %327 = arith.mulf %326, %324 : vector<8x5xf32>
    %328 = arith.mulf %317, %261 : vector<8x5xf32>
    %329 = arith.addf %327, %328 : vector<8x5xf32>
    %c7 = arith.constant 7 : index
    %c0_124 = arith.constant 0 : index
    %c0_125 = arith.constant 0 : index
    %330 = vector.load %arg24[%c7, %c0_124, %c0_125] : memref<10x8x15xf32, #tpu.memory_space<vmem>>, vector<1x8x15xf32>
    %331 = vector.shape_cast %330 : vector<1x8x15xf32> to vector<8x15xf32>
    %332 = vector.extract_strided_slice %331 {offsets = [0, 0], sizes = [8, 5], strides = [1, 1]} : vector<8x15xf32> to vector<8x5xf32>
    %333 = vector.extract_strided_slice %299 {offsets = [0, 0], sizes = [8, 5], strides = [1, 1]} : vector<8x15xf32> to vector<8x5xf32>
    %334 = arith.addf %332, %333 : vector<8x5xf32>
    %335 = arith.negf %334 : vector<8x5xf32>
    %336 = math.exp %335 : vector<8x5xf32>
    %cst_126 = arith.constant 1.000000e+00 : f32
    %337 = vector.broadcast %cst_126 : f32 to vector<8x5xf32>
    %338 = arith.addf %337, %336 : vector<8x5xf32>
    %339 = arith.divf %337, %338 : vector<8x5xf32>
    %340 = vector.extract_strided_slice %331 {offsets = [0, 5], sizes = [8, 5], strides = [1, 1]} : vector<8x15xf32> to vector<8x5xf32>
    %341 = vector.extract_strided_slice %299 {offsets = [0, 5], sizes = [8, 5], strides = [1, 1]} : vector<8x15xf32> to vector<8x5xf32>
    %342 = arith.addf %340, %341 : vector<8x5xf32>
    %343 = arith.negf %342 : vector<8x5xf32>
    %344 = math.exp %343 : vector<8x5xf32>
    %cst_127 = arith.constant 1.000000e+00 : f32
    %345 = vector.broadcast %cst_127 : f32 to vector<8x5xf32>
    %346 = arith.addf %345, %344 : vector<8x5xf32>
    %347 = arith.divf %345, %346 : vector<8x5xf32>
    %348 = vector.extract_strided_slice %331 {offsets = [0, 10], sizes = [8, 5], strides = [1, 1]} : vector<8x15xf32> to vector<8x5xf32>
    %349 = vector.extract_strided_slice %299 {offsets = [0, 10], sizes = [8, 5], strides = [1, 1]} : vector<8x15xf32> to vector<8x5xf32>
    %350 = vector.broadcast %159 : vector<1x5xf32> to vector<8x5xf32>
    %351 = arith.addf %349, %350 : vector<8x5xf32>
    %352 = arith.mulf %339, %351 : vector<8x5xf32>
    %353 = arith.addf %348, %352 : vector<8x5xf32>
    %354 = math.tanh %353 : vector<8x5xf32>
    %cst_128 = arith.constant 1.000000e+00 : f32
    %355 = vector.broadcast %cst_128 : f32 to vector<8x5xf32>
    %356 = arith.subf %355, %347 : vector<8x5xf32>
    %357 = arith.mulf %356, %354 : vector<8x5xf32>
    %358 = arith.mulf %347, %291 : vector<8x5xf32>
    %359 = arith.addf %357, %358 : vector<8x5xf32>
    %c2_129 = arith.constant 2 : index
    %c0_130 = arith.constant 0 : index
    %c0_131 = arith.constant 0 : index
    %360 = vector.load %arg25[%c2_129, %c0_130, %c0_131] : memref<10x8x5xf32, #tpu.memory_space<vmem>>, vector<1x8x5xf32>
    %361 = vector.shape_cast %360 : vector<1x8x5xf32> to vector<8x5xf32>
    %362 = vector.shape_cast %329 : vector<8x5xf32> to vector<1x8x5xf32>
    tpu.vector_store %arg25[%c2_129, %c0_130, %c0_131], %362 {strides = array<i32>} : memref<10x8x5xf32, #tpu.memory_space<vmem>>, vector<1x8x5xf32>,
    %c7_132 = arith.constant 7 : index
    %c0_133 = arith.constant 0 : index
    %c0_134 = arith.constant 0 : index
    %363 = vector.load %arg26[%c7_132, %c0_133, %c0_134] : memref<10x8x5xf32, #tpu.memory_space<vmem>>, vector<1x8x5xf32>
    %364 = vector.shape_cast %363 : vector<1x8x5xf32> to vector<8x5xf32>
    %365 = vector.shape_cast %359 : vector<8x5xf32> to vector<1x8x5xf32>
    tpu.vector_store %arg26[%c7_132, %c0_133, %c0_134], %365 {strides = array<i32>} : memref<10x8x5xf32, #tpu.memory_space<vmem>>, vector<1x8x5xf32>,
    %cst_135 = arith.constant dense<0.000000e+00> : vector<8x15xf32>
    %366 = tpu.matmul %329, %155, %cst_135 {dimension_numbers = #tpu.dot_dimension_numbers<[1], [0], [0], [1], [0, 0, 1, 1], [], []>} : vector<8x5xf32>, vector<5x15xf32>, vector<8x15xf32> -> vector<8x15xf32>
    %cst_136 = arith.constant dense<0.000000e+00> : vector<8x15xf32>
    %367 = tpu.matmul %359, %158, %cst_136 {dimension_numbers = #tpu.dot_dimension_numbers<[1], [0], [0], [1], [0, 0, 1, 1], [], []>} : vector<8x5xf32>, vector<5x15xf32>, vector<8x15xf32> -> vector<8x15xf32>
    %c3_137 = arith.constant 3 : index
    %c0_138 = arith.constant 0 : index
    %c0_139 = arith.constant 0 : index
    %368 = vector.load %arg23[%c3_137, %c0_138, %c0_139] : memref<10x8x15xf32, #tpu.memory_space<vmem>>, vector<1x8x15xf32>
    %369 = vector.shape_cast %368 : vector<1x8x15xf32> to vector<8x15xf32>
    %370 = vector.extract_strided_slice %369 {offsets = [0, 0], sizes = [8, 5], strides = [1, 1]} : vector<8x15xf32> to vector<8x5xf32>
    %371 = vector.extract_strided_slice %366 {offsets = [0, 0], sizes = [8, 5], strides = [1, 1]} : vector<8x15xf32> to vector<8x5xf32>
    %372 = arith.addf %370, %371 : vector<8x5xf32>
    %373 = arith.negf %372 : vector<8x5xf32>
    %374 = math.exp %373 : vector<8x5xf32>
    %cst_140 = arith.constant 1.000000e+00 : f32
    %375 = vector.broadcast %cst_140 : f32 to vector<8x5xf32>
    %376 = arith.addf %375, %374 : vector<8x5xf32>
    %377 = arith.divf %375, %376 : vector<8x5xf32>
    %378 = vector.extract_strided_slice %369 {offsets = [0, 5], sizes = [8, 5], strides = [1, 1]} : vector<8x15xf32> to vector<8x5xf32>
    %379 = vector.extract_strided_slice %366 {offsets = [0, 5], sizes = [8, 5], strides = [1, 1]} : vector<8x15xf32> to vector<8x5xf32>
    %380 = arith.addf %378, %379 : vector<8x5xf32>
    %381 = arith.negf %380 : vector<8x5xf32>
    %382 = math.exp %381 : vector<8x5xf32>
    %cst_141 = arith.constant 1.000000e+00 : f32
    %383 = vector.broadcast %cst_141 : f32 to vector<8x5xf32>
    %384 = arith.addf %383, %382 : vector<8x5xf32>
    %385 = arith.divf %383, %384 : vector<8x5xf32>
    %386 = vector.extract_strided_slice %369 {offsets = [0, 10], sizes = [8, 5], strides = [1, 1]} : vector<8x15xf32> to vector<8x5xf32>
    %387 = vector.extract_strided_slice %366 {offsets = [0, 10], sizes = [8, 5], strides = [1, 1]} : vector<8x15xf32> to vector<8x5xf32>
    %388 = vector.broadcast %156 : vector<1x5xf32> to vector<8x5xf32>
    %389 = arith.addf %387, %388 : vector<8x5xf32>
    %390 = arith.mulf %377, %389 : vector<8x5xf32>
    %391 = arith.addf %386, %390 : vector<8x5xf32>
    %392 = math.tanh %391 : vector<8x5xf32>
    %cst_142 = arith.constant 1.000000e+00 : f32
    %393 = vector.broadcast %cst_142 : f32 to vector<8x5xf32>
    %394 = arith.subf %393, %385 : vector<8x5xf32>
    %395 = arith.mulf %394, %392 : vector<8x5xf32>
    %396 = arith.mulf %385, %329 : vector<8x5xf32>
    %397 = arith.addf %395, %396 : vector<8x5xf32>
    %c6 = arith.constant 6 : index
    %c0_143 = arith.constant 0 : index
    %c0_144 = arith.constant 0 : index
    %398 = vector.load %arg24[%c6, %c0_143, %c0_144] : memref<10x8x15xf32, #tpu.memory_space<vmem>>, vector<1x8x15xf32>
    %399 = vector.shape_cast %398 : vector<1x8x15xf32> to vector<8x15xf32>
    %400 = vector.extract_strided_slice %399 {offsets = [0, 0], sizes = [8, 5], strides = [1, 1]} : vector<8x15xf32> to vector<8x5xf32>
    %401 = vector.extract_strided_slice %367 {offsets = [0, 0], sizes = [8, 5], strides = [1, 1]} : vector<8x15xf32> to vector<8x5xf32>
    %402 = arith.addf %400, %401 : vector<8x5xf32>
    %403 = arith.negf %402 : vector<8x5xf32>
    %404 = math.exp %403 : vector<8x5xf32>
    %cst_145 = arith.constant 1.000000e+00 : f32
    %405 = vector.broadcast %cst_145 : f32 to vector<8x5xf32>
    %406 = arith.addf %405, %404 : vector<8x5xf32>
    %407 = arith.divf %405, %406 : vector<8x5xf32>
    %408 = vector.extract_strided_slice %399 {offsets = [0, 5], sizes = [8, 5], strides = [1, 1]} : vector<8x15xf32> to vector<8x5xf32>
    %409 = vector.extract_strided_slice %367 {offsets = [0, 5], sizes = [8, 5], strides = [1, 1]} : vector<8x15xf32> to vector<8x5xf32>
    %410 = arith.addf %408, %409 : vector<8x5xf32>
    %411 = arith.negf %410 : vector<8x5xf32>
    %412 = math.exp %411 : vector<8x5xf32>
    %cst_146 = arith.constant 1.000000e+00 : f32
    %413 = vector.broadcast %cst_146 : f32 to vector<8x5xf32>
    %414 = arith.addf %413, %412 : vector<8x5xf32>
    %415 = arith.divf %413, %414 : vector<8x5xf32>
    %416 = vector.extract_strided_slice %399 {offsets = [0, 10], sizes = [8, 5], strides = [1, 1]} : vector<8x15xf32> to vector<8x5xf32>
    %417 = vector.extract_strided_slice %367 {offsets = [0, 10], sizes = [8, 5], strides = [1, 1]} : vector<8x15xf32> to vector<8x5xf32>
    %418 = vector.broadcast %159 : vector<1x5xf32> to vector<8x5xf32>
    %419 = arith.addf %417, %418 : vector<8x5xf32>
    %420 = arith.mulf %407, %419 : vector<8x5xf32>
    %421 = arith.addf %416, %420 : vector<8x5xf32>
    %422 = math.tanh %421 : vector<8x5xf32>
    %cst_147 = arith.constant 1.000000e+00 : f32
    %423 = vector.broadcast %cst_147 : f32 to vector<8x5xf32>
    %424 = arith.subf %423, %415 : vector<8x5xf32>
    %425 = arith.mulf %424, %422 : vector<8x5xf32>
    %426 = arith.mulf %415, %359 : vector<8x5xf32>
    %427 = arith.addf %425, %426 : vector<8x5xf32>
    %c3_148 = arith.constant 3 : index
    %c0_149 = arith.constant 0 : index
    %c0_150 = arith.constant 0 : index
    %428 = vector.load %arg25[%c3_148, %c0_149, %c0_150] : memref<10x8x5xf32, #tpu.memory_space<vmem>>, vector<1x8x5xf32>
    %429 = vector.shape_cast %428 : vector<1x8x5xf32> to vector<8x5xf32>
    %430 = vector.shape_cast %397 : vector<8x5xf32> to vector<1x8x5xf32>
    tpu.vector_store %arg25[%c3_148, %c0_149, %c0_150], %430 {strides = array<i32>} : memref<10x8x5xf32, #tpu.memory_space<vmem>>, vector<1x8x5xf32>,
    %c6_151 = arith.constant 6 : index
    %c0_152 = arith.constant 0 : index
    %c0_153 = arith.constant 0 : index
    %431 = vector.load %arg26[%c6_151, %c0_152, %c0_153] : memref<10x8x5xf32, #tpu.memory_space<vmem>>, vector<1x8x5xf32>
    %432 = vector.shape_cast %431 : vector<1x8x5xf32> to vector<8x5xf32>
    %433 = vector.shape_cast %427 : vector<8x5xf32> to vector<1x8x5xf32>
    tpu.vector_store %arg26[%c6_151, %c0_152, %c0_153], %433 {strides = array<i32>} : memref<10x8x5xf32, #tpu.memory_space<vmem>>, vector<1x8x5xf32>,
    %cst_154 = arith.constant dense<0.000000e+00> : vector<8x15xf32>
    %434 = tpu.matmul %397, %155, %cst_154 {dimension_numbers = #tpu.dot_dimension_numbers<[1], [0], [0], [1], [0, 0, 1, 1], [], []>} : vector<8x5xf32>, vector<5x15xf32>, vector<8x15xf32> -> vector<8x15xf32>
    %cst_155 = arith.constant dense<0.000000e+00> : vector<8x15xf32>
    %435 = tpu.matmul %427, %158, %cst_155 {dimension_numbers = #tpu.dot_dimension_numbers<[1], [0], [0], [1], [0, 0, 1, 1], [], []>} : vector<8x5xf32>, vector<5x15xf32>, vector<8x15xf32> -> vector<8x15xf32>
    %c4 = arith.constant 4 : index
    %c0_156 = arith.constant 0 : index
    %c0_157 = arith.constant 0 : index
    %436 = vector.load %arg23[%c4, %c0_156, %c0_157] : memref<10x8x15xf32, #tpu.memory_space<vmem>>, vector<1x8x15xf32>
    %437 = vector.shape_cast %436 : vector<1x8x15xf32> to vector<8x15xf32>
    %438 = vector.extract_strided_slice %437 {offsets = [0, 0], sizes = [8, 5], strides = [1, 1]} : vector<8x15xf32> to vector<8x5xf32>
    %439 = vector.extract_strided_slice %434 {offsets = [0, 0], sizes = [8, 5], strides = [1, 1]} : vector<8x15xf32> to vector<8x5xf32>
    %440 = arith.addf %438, %439 : vector<8x5xf32>
    %441 = arith.negf %440 : vector<8x5xf32>
    %442 = math.exp %441 : vector<8x5xf32>
    %cst_158 = arith.constant 1.000000e+00 : f32
    %443 = vector.broadcast %cst_158 : f32 to vector<8x5xf32>
    %444 = arith.addf %443, %442 : vector<8x5xf32>
    %445 = arith.divf %443, %444 : vector<8x5xf32>
    %446 = vector.extract_strided_slice %437 {offsets = [0, 5], sizes = [8, 5], strides = [1, 1]} : vector<8x15xf32> to vector<8x5xf32>
    %447 = vector.extract_strided_slice %434 {offsets = [0, 5], sizes = [8, 5], strides = [1, 1]} : vector<8x15xf32> to vector<8x5xf32>
    %448 = arith.addf %446, %447 : vector<8x5xf32>
    %449 = arith.negf %448 : vector<8x5xf32>
    %450 = math.exp %449 : vector<8x5xf32>
    %cst_159 = arith.constant 1.000000e+00 : f32
    %451 = vector.broadcast %cst_159 : f32 to vector<8x5xf32>
    %452 = arith.addf %451, %450 : vector<8x5xf32>
    %453 = arith.divf %451, %452 : vector<8x5xf32>
    %454 = vector.extract_strided_slice %437 {offsets = [0, 10], sizes = [8, 5], strides = [1, 1]} : vector<8x15xf32> to vector<8x5xf32>
    %455 = vector.extract_strided_slice %434 {offsets = [0, 10], sizes = [8, 5], strides = [1, 1]} : vector<8x15xf32> to vector<8x5xf32>
    %456 = vector.broadcast %156 : vector<1x5xf32> to vector<8x5xf32>
    %457 = arith.addf %455, %456 : vector<8x5xf32>
    %458 = arith.mulf %445, %457 : vector<8x5xf32>
    %459 = arith.addf %454, %458 : vector<8x5xf32>
    %460 = math.tanh %459 : vector<8x5xf32>
    %cst_160 = arith.constant 1.000000e+00 : f32
    %461 = vector.broadcast %cst_160 : f32 to vector<8x5xf32>
    %462 = arith.subf %461, %453 : vector<8x5xf32>
    %463 = arith.mulf %462, %460 : vector<8x5xf32>
    %464 = arith.mulf %453, %397 : vector<8x5xf32>
    %465 = arith.addf %463, %464 : vector<8x5xf32>
    %c5 = arith.constant 5 : index
    %c0_161 = arith.constant 0 : index
    %c0_162 = arith.constant 0 : index
    %466 = vector.load %arg24[%c5, %c0_161, %c0_162] : memref<10x8x15xf32, #tpu.memory_space<vmem>>, vector<1x8x15xf32>
    %467 = vector.shape_cast %466 : vector<1x8x15xf32> to vector<8x15xf32>
    %468 = vector.extract_strided_slice %467 {offsets = [0, 0], sizes = [8, 5], strides = [1, 1]} : vector<8x15xf32> to vector<8x5xf32>
    %469 = vector.extract_strided_slice %435 {offsets = [0, 0], sizes = [8, 5], strides = [1, 1]} : vector<8x15xf32> to vector<8x5xf32>
    %470 = arith.addf %468, %469 : vector<8x5xf32>
    %471 = arith.negf %470 : vector<8x5xf32>
    %472 = math.exp %471 : vector<8x5xf32>
    %cst_163 = arith.constant 1.000000e+00 : f32
    %473 = vector.broadcast %cst_163 : f32 to vector<8x5xf32>
    %474 = arith.addf %473, %472 : vector<8x5xf32>
    %475 = arith.divf %473, %474 : vector<8x5xf32>
    %476 = vector.extract_strided_slice %467 {offsets = [0, 5], sizes = [8, 5], strides = [1, 1]} : vector<8x15xf32> to vector<8x5xf32>
    %477 = vector.extract_strided_slice %435 {offsets = [0, 5], sizes = [8, 5], strides = [1, 1]} : vector<8x15xf32> to vector<8x5xf32>
    %478 = arith.addf %476, %477 : vector<8x5xf32>
    %479 = arith.negf %478 : vector<8x5xf32>
    %480 = math.exp %479 : vector<8x5xf32>
    %cst_164 = arith.constant 1.000000e+00 : f32
    %481 = vector.broadcast %cst_164 : f32 to vector<8x5xf32>
    %482 = arith.addf %481, %480 : vector<8x5xf32>
    %483 = arith.divf %481, %482 : vector<8x5xf32>
    %484 = vector.extract_strided_slice %467 {offsets = [0, 10], sizes = [8, 5], strides = [1, 1]} : vector<8x15xf32> to vector<8x5xf32>
    %485 = vector.extract_strided_slice %435 {offsets = [0, 10], sizes = [8, 5], strides = [1, 1]} : vector<8x15xf32> to vector<8x5xf32>
    %486 = vector.broadcast %159 : vector<1x5xf32> to vector<8x5xf32>
    %487 = arith.addf %485, %486 : vector<8x5xf32>
    %488 = arith.mulf %475, %487 : vector<8x5xf32>
    %489 = arith.addf %484, %488 : vector<8x5xf32>
    %490 = math.tanh %489 : vector<8x5xf32>
    %cst_165 = arith.constant 1.000000e+00 : f32
    %491 = vector.broadcast %cst_165 : f32 to vector<8x5xf32>
    %492 = arith.subf %491, %483 : vector<8x5xf32>
    %493 = arith.mulf %492, %490 : vector<8x5xf32>
    %494 = arith.mulf %483, %427 : vector<8x5xf32>
    %495 = arith.addf %493, %494 : vector<8x5xf32>
    %c4_166 = arith.constant 4 : index
    %c0_167 = arith.constant 0 : index
    %c0_168 = arith.constant 0 : index
    %496 = vector.load %arg25[%c4_166, %c0_167, %c0_168] : memref<10x8x5xf32, #tpu.memory_space<vmem>>, vector<1x8x5xf32>
    %497 = vector.shape_cast %496 : vector<1x8x5xf32> to vector<8x5xf32>
    %498 = vector.shape_cast %465 : vector<8x5xf32> to vector<1x8x5xf32>
    tpu.vector_store %arg25[%c4_166, %c0_167, %c0_168], %498 {strides = array<i32>} : memref<10x8x5xf32, #tpu.memory_space<vmem>>, vector<1x8x5xf32>,
    %c5_169 = arith.constant 5 : index
    %c0_170 = arith.constant 0 : index
    %c0_171 = arith.constant 0 : index
    %499 = vector.load %arg26[%c5_169, %c0_170, %c0_171] : memref<10x8x5xf32, #tpu.memory_space<vmem>>, vector<1x8x5xf32>
    %500 = vector.shape_cast %499 : vector<1x8x5xf32> to vector<8x5xf32>
    %501 = vector.shape_cast %495 : vector<8x5xf32> to vector<1x8x5xf32>
    tpu.vector_store %arg26[%c5_169, %c0_170, %c0_171], %501 {strides = array<i32>} : memref<10x8x5xf32, #tpu.memory_space<vmem>>, vector<1x8x5xf32>,
    %cst_172 = arith.constant dense<0.000000e+00> : vector<8x15xf32>
    %502 = tpu.matmul %465, %155, %cst_172 {dimension_numbers = #tpu.dot_dimension_numbers<[1], [0], [0], [1], [0, 0, 1, 1], [], []>} : vector<8x5xf32>, vector<5x15xf32>, vector<8x15xf32> -> vector<8x15xf32>
    %cst_173 = arith.constant dense<0.000000e+00> : vector<8x15xf32>
    %503 = tpu.matmul %495, %158, %cst_173 {dimension_numbers = #tpu.dot_dimension_numbers<[1], [0], [0], [1], [0, 0, 1, 1], [], []>} : vector<8x5xf32>, vector<5x15xf32>, vector<8x15xf32> -> vector<8x15xf32>
    %c5_174 = arith.constant 5 : index
    %c0_175 = arith.constant 0 : index
    %c0_176 = arith.constant 0 : index
    %504 = vector.load %arg23[%c5_174, %c0_175, %c0_176] : memref<10x8x15xf32, #tpu.memory_space<vmem>>, vector<1x8x15xf32>
    %505 = vector.shape_cast %504 : vector<1x8x15xf32> to vector<8x15xf32>
    %506 = vector.extract_strided_slice %505 {offsets = [0, 0], sizes = [8, 5], strides = [1, 1]} : vector<8x15xf32> to vector<8x5xf32>
    %507 = vector.extract_strided_slice %502 {offsets = [0, 0], sizes = [8, 5], strides = [1, 1]} : vector<8x15xf32> to vector<8x5xf32>
    %508 = arith.addf %506, %507 : vector<8x5xf32>
    %509 = arith.negf %508 : vector<8x5xf32>
    %510 = math.exp %509 : vector<8x5xf32>
    %cst_177 = arith.constant 1.000000e+00 : f32
    %511 = vector.broadcast %cst_177 : f32 to vector<8x5xf32>
    %512 = arith.addf %511, %510 : vector<8x5xf32>
    %513 = arith.divf %511, %512 : vector<8x5xf32>
    %514 = vector.extract_strided_slice %505 {offsets = [0, 5], sizes = [8, 5], strides = [1, 1]} : vector<8x15xf32> to vector<8x5xf32>
    %515 = vector.extract_strided_slice %502 {offsets = [0, 5], sizes = [8, 5], strides = [1, 1]} : vector<8x15xf32> to vector<8x5xf32>
    %516 = arith.addf %514, %515 : vector<8x5xf32>
    %517 = arith.negf %516 : vector<8x5xf32>
    %518 = math.exp %517 : vector<8x5xf32>
    %cst_178 = arith.constant 1.000000e+00 : f32
    %519 = vector.broadcast %cst_178 : f32 to vector<8x5xf32>
    %520 = arith.addf %519, %518 : vector<8x5xf32>
    %521 = arith.divf %519, %520 : vector<8x5xf32>
    %522 = vector.extract_strided_slice %505 {offsets = [0, 10], sizes = [8, 5], strides = [1, 1]} : vector<8x15xf32> to vector<8x5xf32>
    %523 = vector.extract_strided_slice %502 {offsets = [0, 10], sizes = [8, 5], strides = [1, 1]} : vector<8x15xf32> to vector<8x5xf32>
    %524 = vector.broadcast %156 : vector<1x5xf32> to vector<8x5xf32>
    %525 = arith.addf %523, %524 : vector<8x5xf32>
    %526 = arith.mulf %513, %525 : vector<8x5xf32>
    %527 = arith.addf %522, %526 : vector<8x5xf32>
    %528 = math.tanh %527 : vector<8x5xf32>
    %cst_179 = arith.constant 1.000000e+00 : f32
    %529 = vector.broadcast %cst_179 : f32 to vector<8x5xf32>
    %530 = arith.subf %529, %521 : vector<8x5xf32>
    %531 = arith.mulf %530, %528 : vector<8x5xf32>
    %532 = arith.mulf %521, %465 : vector<8x5xf32>
    %533 = arith.addf %531, %532 : vector<8x5xf32>
    %c4_180 = arith.constant 4 : index
    %c0_181 = arith.constant 0 : index
    %c0_182 = arith.constant 0 : index
    %534 = vector.load %arg24[%c4_180, %c0_181, %c0_182] : memref<10x8x15xf32, #tpu.memory_space<vmem>>, vector<1x8x15xf32>
    %535 = vector.shape_cast %534 : vector<1x8x15xf32> to vector<8x15xf32>
    %536 = vector.extract_strided_slice %535 {offsets = [0, 0], sizes = [8, 5], strides = [1, 1]} : vector<8x15xf32> to vector<8x5xf32>
    %537 = vector.extract_strided_slice %503 {offsets = [0, 0], sizes = [8, 5], strides = [1, 1]} : vector<8x15xf32> to vector<8x5xf32>
    %538 = arith.addf %536, %537 : vector<8x5xf32>
    %539 = arith.negf %538 : vector<8x5xf32>
    %540 = math.exp %539 : vector<8x5xf32>
    %cst_183 = arith.constant 1.000000e+00 : f32
    %541 = vector.broadcast %cst_183 : f32 to vector<8x5xf32>
    %542 = arith.addf %541, %540 : vector<8x5xf32>
    %543 = arith.divf %541, %542 : vector<8x5xf32>
    %544 = vector.extract_strided_slice %535 {offsets = [0, 5], sizes = [8, 5], strides = [1, 1]} : vector<8x15xf32> to vector<8x5xf32>
    %545 = vector.extract_strided_slice %503 {offsets = [0, 5], sizes = [8, 5], strides = [1, 1]} : vector<8x15xf32> to vector<8x5xf32>
    %546 = arith.addf %544, %545 : vector<8x5xf32>
    %547 = arith.negf %546 : vector<8x5xf32>
    %548 = math.exp %547 : vector<8x5xf32>
    %cst_184 = arith.constant 1.000000e+00 : f32
    %549 = vector.broadcast %cst_184 : f32 to vector<8x5xf32>
    %550 = arith.addf %549, %548 : vector<8x5xf32>
    %551 = arith.divf %549, %550 : vector<8x5xf32>
    %552 = vector.extract_strided_slice %535 {offsets = [0, 10], sizes = [8, 5], strides = [1, 1]} : vector<8x15xf32> to vector<8x5xf32>
    %553 = vector.extract_strided_slice %503 {offsets = [0, 10], sizes = [8, 5], strides = [1, 1]} : vector<8x15xf32> to vector<8x5xf32>
    %554 = vector.broadcast %159 : vector<1x5xf32> to vector<8x5xf32>
    %555 = arith.addf %553, %554 : vector<8x5xf32>
    %556 = arith.mulf %543, %555 : vector<8x5xf32>
    %557 = arith.addf %552, %556 : vector<8x5xf32>
    %558 = math.tanh %557 : vector<8x5xf32>
    %cst_185 = arith.constant 1.000000e+00 : f32
    %559 = vector.broadcast %cst_185 : f32 to vector<8x5xf32>
    %560 = arith.subf %559, %551 : vector<8x5xf32>
    %561 = arith.mulf %560, %558 : vector<8x5xf32>
    %562 = arith.mulf %551, %495 : vector<8x5xf32>
    %563 = arith.addf %561, %562 : vector<8x5xf32>
    %c5_186 = arith.constant 5 : index
    %c0_187 = arith.constant 0 : index
    %c0_188 = arith.constant 0 : index
    %564 = vector.load %arg25[%c5_186, %c0_187, %c0_188] : memref<10x8x5xf32, #tpu.memory_space<vmem>>, vector<1x8x5xf32>
    %565 = vector.shape_cast %564 : vector<1x8x5xf32> to vector<8x5xf32>
    %566 = vector.shape_cast %533 : vector<8x5xf32> to vector<1x8x5xf32>
    tpu.vector_store %arg25[%c5_186, %c0_187, %c0_188], %566 {strides = array<i32>} : memref<10x8x5xf32, #tpu.memory_space<vmem>>, vector<1x8x5xf32>,
    %c4_189 = arith.constant 4 : index
    %c0_190 = arith.constant 0 : index
    %c0_191 = arith.constant 0 : index
    %567 = vector.load %arg26[%c4_189, %c0_190, %c0_191] : memref<10x8x5xf32, #tpu.memory_space<vmem>>, vector<1x8x5xf32>
    %568 = vector.shape_cast %567 : vector<1x8x5xf32> to vector<8x5xf32>
    %569 = vector.shape_cast %563 : vector<8x5xf32> to vector<1x8x5xf32>
    tpu.vector_store %arg26[%c4_189, %c0_190, %c0_191], %569 {strides = array<i32>} : memref<10x8x5xf32, #tpu.memory_space<vmem>>, vector<1x8x5xf32>,
    %cst_192 = arith.constant dense<0.000000e+00> : vector<8x15xf32>
    %570 = tpu.matmul %533, %155, %cst_192 {dimension_numbers = #tpu.dot_dimension_numbers<[1], [0], [0], [1], [0, 0, 1, 1], [], []>} : vector<8x5xf32>, vector<5x15xf32>, vector<8x15xf32> -> vector<8x15xf32>
    %cst_193 = arith.constant dense<0.000000e+00> : vector<8x15xf32>
    %571 = tpu.matmul %563, %158, %cst_193 {dimension_numbers = #tpu.dot_dimension_numbers<[1], [0], [0], [1], [0, 0, 1, 1], [], []>} : vector<8x5xf32>, vector<5x15xf32>, vector<8x15xf32> -> vector<8x15xf32>
    %c6_194 = arith.constant 6 : index
    %c0_195 = arith.constant 0 : index
    %c0_196 = arith.constant 0 : index
    %572 = vector.load %arg23[%c6_194, %c0_195, %c0_196] : memref<10x8x15xf32, #tpu.memory_space<vmem>>, vector<1x8x15xf32>
    %573 = vector.shape_cast %572 : vector<1x8x15xf32> to vector<8x15xf32>
    %574 = vector.extract_strided_slice %573 {offsets = [0, 0], sizes = [8, 5], strides = [1, 1]} : vector<8x15xf32> to vector<8x5xf32>
    %575 = vector.extract_strided_slice %570 {offsets = [0, 0], sizes = [8, 5], strides = [1, 1]} : vector<8x15xf32> to vector<8x5xf32>
    %576 = arith.addf %574, %575 : vector<8x5xf32>
    %577 = arith.negf %576 : vector<8x5xf32>
    %578 = math.exp %577 : vector<8x5xf32>
    %cst_197 = arith.constant 1.000000e+00 : f32
    %579 = vector.broadcast %cst_197 : f32 to vector<8x5xf32>
    %580 = arith.addf %579, %578 : vector<8x5xf32>
    %581 = arith.divf %579, %580 : vector<8x5xf32>
    %582 = vector.extract_strided_slice %573 {offsets = [0, 5], sizes = [8, 5], strides = [1, 1]} : vector<8x15xf32> to vector<8x5xf32>
    %583 = vector.extract_strided_slice %570 {offsets = [0, 5], sizes = [8, 5], strides = [1, 1]} : vector<8x15xf32> to vector<8x5xf32>
    %584 = arith.addf %582, %583 : vector<8x5xf32>
    %585 = arith.negf %584 : vector<8x5xf32>
    %586 = math.exp %585 : vector<8x5xf32>
    %cst_198 = arith.constant 1.000000e+00 : f32
    %587 = vector.broadcast %cst_198 : f32 to vector<8x5xf32>
    %588 = arith.addf %587, %586 : vector<8x5xf32>
    %589 = arith.divf %587, %588 : vector<8x5xf32>
    %590 = vector.extract_strided_slice %573 {offsets = [0, 10], sizes = [8, 5], strides = [1, 1]} : vector<8x15xf32> to vector<8x5xf32>
    %591 = vector.extract_strided_slice %570 {offsets = [0, 10], sizes = [8, 5], strides = [1, 1]} : vector<8x15xf32> to vector<8x5xf32>
    %592 = vector.broadcast %156 : vector<1x5xf32> to vector<8x5xf32>
    %593 = arith.addf %591, %592 : vector<8x5xf32>
    %594 = arith.mulf %581, %593 : vector<8x5xf32>
    %595 = arith.addf %590, %594 : vector<8x5xf32>
    %596 = math.tanh %595 : vector<8x5xf32>
    %cst_199 = arith.constant 1.000000e+00 : f32
    %597 = vector.broadcast %cst_199 : f32 to vector<8x5xf32>
    %598 = arith.subf %597, %589 : vector<8x5xf32>
    %599 = arith.mulf %598, %596 : vector<8x5xf32>
    %600 = arith.mulf %589, %533 : vector<8x5xf32>
    %601 = arith.addf %599, %600 : vector<8x5xf32>
    %c3_200 = arith.constant 3 : index
    %c0_201 = arith.constant 0 : index
    %c0_202 = arith.constant 0 : index
    %602 = vector.load %arg24[%c3_200, %c0_201, %c0_202] : memref<10x8x15xf32, #tpu.memory_space<vmem>>, vector<1x8x15xf32>
    %603 = vector.shape_cast %602 : vector<1x8x15xf32> to vector<8x15xf32>
    %604 = vector.extract_strided_slice %603 {offsets = [0, 0], sizes = [8, 5], strides = [1, 1]} : vector<8x15xf32> to vector<8x5xf32>
    %605 = vector.extract_strided_slice %571 {offsets = [0, 0], sizes = [8, 5], strides = [1, 1]} : vector<8x15xf32> to vector<8x5xf32>
    %606 = arith.addf %604, %605 : vector<8x5xf32>
    %607 = arith.negf %606 : vector<8x5xf32>
    %608 = math.exp %607 : vector<8x5xf32>
    %cst_203 = arith.constant 1.000000e+00 : f32
    %609 = vector.broadcast %cst_203 : f32 to vector<8x5xf32>
    %610 = arith.addf %609, %608 : vector<8x5xf32>
    %611 = arith.divf %609, %610 : vector<8x5xf32>
    %612 = vector.extract_strided_slice %603 {offsets = [0, 5], sizes = [8, 5], strides = [1, 1]} : vector<8x15xf32> to vector<8x5xf32>
    %613 = vector.extract_strided_slice %571 {offsets = [0, 5], sizes = [8, 5], strides = [1, 1]} : vector<8x15xf32> to vector<8x5xf32>
    %614 = arith.addf %612, %613 : vector<8x5xf32>
    %615 = arith.negf %614 : vector<8x5xf32>
    %616 = math.exp %615 : vector<8x5xf32>
    %cst_204 = arith.constant 1.000000e+00 : f32
    %617 = vector.broadcast %cst_204 : f32 to vector<8x5xf32>
    %618 = arith.addf %617, %616 : vector<8x5xf32>
    %619 = arith.divf %617, %618 : vector<8x5xf32>
    %620 = vector.extract_strided_slice %603 {offsets = [0, 10], sizes = [8, 5], strides = [1, 1]} : vector<8x15xf32> to vector<8x5xf32>
    %621 = vector.extract_strided_slice %571 {offsets = [0, 10], sizes = [8, 5], strides = [1, 1]} : vector<8x15xf32> to vector<8x5xf32>
    %622 = vector.broadcast %159 : vector<1x5xf32> to vector<8x5xf32>
    %623 = arith.addf %621, %622 : vector<8x5xf32>
    %624 = arith.mulf %611, %623 : vector<8x5xf32>
    %625 = arith.addf %620, %624 : vector<8x5xf32>
    %626 = math.tanh %625 : vector<8x5xf32>
    %cst_205 = arith.constant 1.000000e+00 : f32
    %627 = vector.broadcast %cst_205 : f32 to vector<8x5xf32>
    %628 = arith.subf %627, %619 : vector<8x5xf32>
    %629 = arith.mulf %628, %626 : vector<8x5xf32>
    %630 = arith.mulf %619, %563 : vector<8x5xf32>
    %631 = arith.addf %629, %630 : vector<8x5xf32>
    %c6_206 = arith.constant 6 : index
    %c0_207 = arith.constant 0 : index
    %c0_208 = arith.constant 0 : index
    %632 = vector.load %arg25[%c6_206, %c0_207, %c0_208] : memref<10x8x5xf32, #tpu.memory_space<vmem>>, vector<1x8x5xf32>
    %633 = vector.shape_cast %632 : vector<1x8x5xf32> to vector<8x5xf32>
    %634 = vector.shape_cast %601 : vector<8x5xf32> to vector<1x8x5xf32>
    tpu.vector_store %arg25[%c6_206, %c0_207, %c0_208], %634 {strides = array<i32>} : memref<10x8x5xf32, #tpu.memory_space<vmem>>, vector<1x8x5xf32>,
    %c3_209 = arith.constant 3 : index
    %c0_210 = arith.constant 0 : index
    %c0_211 = arith.constant 0 : index
    %635 = vector.load %arg26[%c3_209, %c0_210, %c0_211] : memref<10x8x5xf32, #tpu.memory_space<vmem>>, vector<1x8x5xf32>
    %636 = vector.shape_cast %635 : vector<1x8x5xf32> to vector<8x5xf32>
    %637 = vector.shape_cast %631 : vector<8x5xf32> to vector<1x8x5xf32>
    tpu.vector_store %arg26[%c3_209, %c0_210, %c0_211], %637 {strides = array<i32>} : memref<10x8x5xf32, #tpu.memory_space<vmem>>, vector<1x8x5xf32>,
    %cst_212 = arith.constant dense<0.000000e+00> : vector<8x15xf32>
    %638 = tpu.matmul %601, %155, %cst_212 {dimension_numbers = #tpu.dot_dimension_numbers<[1], [0], [0], [1], [0, 0, 1, 1], [], []>} : vector<8x5xf32>, vector<5x15xf32>, vector<8x15xf32> -> vector<8x15xf32>
    %cst_213 = arith.constant dense<0.000000e+00> : vector<8x15xf32>
    %639 = tpu.matmul %631, %158, %cst_213 {dimension_numbers = #tpu.dot_dimension_numbers<[1], [0], [0], [1], [0, 0, 1, 1], [], []>} : vector<8x5xf32>, vector<5x15xf32>, vector<8x15xf32> -> vector<8x15xf32>
    %c7_214 = arith.constant 7 : index
    %c0_215 = arith.constant 0 : index
    %c0_216 = arith.constant 0 : index
    %640 = vector.load %arg23[%c7_214, %c0_215, %c0_216] : memref<10x8x15xf32, #tpu.memory_space<vmem>>, vector<1x8x15xf32>
    %641 = vector.shape_cast %640 : vector<1x8x15xf32> to vector<8x15xf32>
    %642 = vector.extract_strided_slice %641 {offsets = [0, 0], sizes = [8, 5], strides = [1, 1]} : vector<8x15xf32> to vector<8x5xf32>
    %643 = vector.extract_strided_slice %638 {offsets = [0, 0], sizes = [8, 5], strides = [1, 1]} : vector<8x15xf32> to vector<8x5xf32>
    %644 = arith.addf %642, %643 : vector<8x5xf32>
    %645 = arith.negf %644 : vector<8x5xf32>
    %646 = math.exp %645 : vector<8x5xf32>
    %cst_217 = arith.constant 1.000000e+00 : f32
    %647 = vector.broadcast %cst_217 : f32 to vector<8x5xf32>
    %648 = arith.addf %647, %646 : vector<8x5xf32>
    %649 = arith.divf %647, %648 : vector<8x5xf32>
    %650 = vector.extract_strided_slice %641 {offsets = [0, 5], sizes = [8, 5], strides = [1, 1]} : vector<8x15xf32> to vector<8x5xf32>
    %651 = vector.extract_strided_slice %638 {offsets = [0, 5], sizes = [8, 5], strides = [1, 1]} : vector<8x15xf32> to vector<8x5xf32>
    %652 = arith.addf %650, %651 : vector<8x5xf32>
    %653 = arith.negf %652 : vector<8x5xf32>
    %654 = math.exp %653 : vector<8x5xf32>
    %cst_218 = arith.constant 1.000000e+00 : f32
    %655 = vector.broadcast %cst_218 : f32 to vector<8x5xf32>
    %656 = arith.addf %655, %654 : vector<8x5xf32>
    %657 = arith.divf %655, %656 : vector<8x5xf32>
    %658 = vector.extract_strided_slice %641 {offsets = [0, 10], sizes = [8, 5], strides = [1, 1]} : vector<8x15xf32> to vector<8x5xf32>
    %659 = vector.extract_strided_slice %638 {offsets = [0, 10], sizes = [8, 5], strides = [1, 1]} : vector<8x15xf32> to vector<8x5xf32>
    %660 = vector.broadcast %156 : vector<1x5xf32> to vector<8x5xf32>
    %661 = arith.addf %659, %660 : vector<8x5xf32>
    %662 = arith.mulf %649, %661 : vector<8x5xf32>
    %663 = arith.addf %658, %662 : vector<8x5xf32>
    %664 = math.tanh %663 : vector<8x5xf32>
    %cst_219 = arith.constant 1.000000e+00 : f32
    %665 = vector.broadcast %cst_219 : f32 to vector<8x5xf32>
    %666 = arith.subf %665, %657 : vector<8x5xf32>
    %667 = arith.mulf %666, %664 : vector<8x5xf32>
    %668 = arith.mulf %657, %601 : vector<8x5xf32>
    %669 = arith.addf %667, %668 : vector<8x5xf32>
    %c2_220 = arith.constant 2 : index
    %c0_221 = arith.constant 0 : index
    %c0_222 = arith.constant 0 : index
    %670 = vector.load %arg24[%c2_220, %c0_221, %c0_222] : memref<10x8x15xf32, #tpu.memory_space<vmem>>, vector<1x8x15xf32>
    %671 = vector.shape_cast %670 : vector<1x8x15xf32> to vector<8x15xf32>
    %672 = vector.extract_strided_slice %671 {offsets = [0, 0], sizes = [8, 5], strides = [1, 1]} : vector<8x15xf32> to vector<8x5xf32>
    %673 = vector.extract_strided_slice %639 {offsets = [0, 0], sizes = [8, 5], strides = [1, 1]} : vector<8x15xf32> to vector<8x5xf32>
    %674 = arith.addf %672, %673 : vector<8x5xf32>
    %675 = arith.negf %674 : vector<8x5xf32>
    %676 = math.exp %675 : vector<8x5xf32>
    %cst_223 = arith.constant 1.000000e+00 : f32
    %677 = vector.broadcast %cst_223 : f32 to vector<8x5xf32>
    %678 = arith.addf %677, %676 : vector<8x5xf32>
    %679 = arith.divf %677, %678 : vector<8x5xf32>
    %680 = vector.extract_strided_slice %671 {offsets = [0, 5], sizes = [8, 5], strides = [1, 1]} : vector<8x15xf32> to vector<8x5xf32>
    %681 = vector.extract_strided_slice %639 {offsets = [0, 5], sizes = [8, 5], strides = [1, 1]} : vector<8x15xf32> to vector<8x5xf32>
    %682 = arith.addf %680, %681 : vector<8x5xf32>
    %683 = arith.negf %682 : vector<8x5xf32>
    %684 = math.exp %683 : vector<8x5xf32>
    %cst_224 = arith.constant 1.000000e+00 : f32
    %685 = vector.broadcast %cst_224 : f32 to vector<8x5xf32>
    %686 = arith.addf %685, %684 : vector<8x5xf32>
    %687 = arith.divf %685, %686 : vector<8x5xf32>
    %688 = vector.extract_strided_slice %671 {offsets = [0, 10], sizes = [8, 5], strides = [1, 1]} : vector<8x15xf32> to vector<8x5xf32>
    %689 = vector.extract_strided_slice %639 {offsets = [0, 10], sizes = [8, 5], strides = [1, 1]} : vector<8x15xf32> to vector<8x5xf32>
    %690 = vector.broadcast %159 : vector<1x5xf32> to vector<8x5xf32>
    %691 = arith.addf %689, %690 : vector<8x5xf32>
    %692 = arith.mulf %679, %691 : vector<8x5xf32>
    %693 = arith.addf %688, %692 : vector<8x5xf32>
    %694 = math.tanh %693 : vector<8x5xf32>
    %cst_225 = arith.constant 1.000000e+00 : f32
    %695 = vector.broadcast %cst_225 : f32 to vector<8x5xf32>
    %696 = arith.subf %695, %687 : vector<8x5xf32>
    %697 = arith.mulf %696, %694 : vector<8x5xf32>
    %698 = arith.mulf %687, %631 : vector<8x5xf32>
    %699 = arith.addf %697, %698 : vector<8x5xf32>
    %c7_226 = arith.constant 7 : index
    %c0_227 = arith.constant 0 : index
    %c0_228 = arith.constant 0 : index
    %700 = vector.load %arg25[%c7_226, %c0_227, %c0_228] : memref<10x8x5xf32, #tpu.memory_space<vmem>>, vector<1x8x5xf32>
    %701 = vector.shape_cast %700 : vector<1x8x5xf32> to vector<8x5xf32>
    %702 = vector.shape_cast %669 : vector<8x5xf32> to vector<1x8x5xf32>
    tpu.vector_store %arg25[%c7_226, %c0_227, %c0_228], %702 {strides = array<i32>} : memref<10x8x5xf32, #tpu.memory_space<vmem>>, vector<1x8x5xf32>,
    %c2_229 = arith.constant 2 : index
    %c0_230 = arith.constant 0 : index
    %c0_231 = arith.constant 0 : index
    %703 = vector.load %arg26[%c2_229, %c0_230, %c0_231] : memref<10x8x5xf32, #tpu.memory_space<vmem>>, vector<1x8x5xf32>
    %704 = vector.shape_cast %703 : vector<1x8x5xf32> to vector<8x5xf32>
    %705 = vector.shape_cast %699 : vector<8x5xf32> to vector<1x8x5xf32>
    tpu.vector_store %arg26[%c2_229, %c0_230, %c0_231], %705 {strides = array<i32>} : memref<10x8x5xf32, #tpu.memory_space<vmem>>, vector<1x8x5xf32>,
    %cst_232 = arith.constant dense<0.000000e+00> : vector<8x15xf32>
    %706 = tpu.matmul %669, %155, %cst_232 {dimension_numbers = #tpu.dot_dimension_numbers<[1], [0], [0], [1], [0, 0, 1, 1], [], []>} : vector<8x5xf32>, vector<5x15xf32>, vector<8x15xf32> -> vector<8x15xf32>
    %cst_233 = arith.constant dense<0.000000e+00> : vector<8x15xf32>
    %707 = tpu.matmul %699, %158, %cst_233 {dimension_numbers = #tpu.dot_dimension_numbers<[1], [0], [0], [1], [0, 0, 1, 1], [], []>} : vector<8x5xf32>, vector<5x15xf32>, vector<8x15xf32> -> vector<8x15xf32>
    %c8_234 = arith.constant 8 : index
    %c0_235 = arith.constant 0 : index
    %c0_236 = arith.constant 0 : index
    %708 = vector.load %arg23[%c8_234, %c0_235, %c0_236] : memref<10x8x15xf32, #tpu.memory_space<vmem>>, vector<1x8x15xf32>
    %709 = vector.shape_cast %708 : vector<1x8x15xf32> to vector<8x15xf32>
    %710 = vector.extract_strided_slice %709 {offsets = [0, 0], sizes = [8, 5], strides = [1, 1]} : vector<8x15xf32> to vector<8x5xf32>
    %711 = vector.extract_strided_slice %706 {offsets = [0, 0], sizes = [8, 5], strides = [1, 1]} : vector<8x15xf32> to vector<8x5xf32>
    %712 = arith.addf %710, %711 : vector<8x5xf32>
    %713 = arith.negf %712 : vector<8x5xf32>
    %714 = math.exp %713 : vector<8x5xf32>
    %cst_237 = arith.constant 1.000000e+00 : f32
    %715 = vector.broadcast %cst_237 : f32 to vector<8x5xf32>
    %716 = arith.addf %715, %714 : vector<8x5xf32>
    %717 = arith.divf %715, %716 : vector<8x5xf32>
    %718 = vector.extract_strided_slice %709 {offsets = [0, 5], sizes = [8, 5], strides = [1, 1]} : vector<8x15xf32> to vector<8x5xf32>
    %719 = vector.extract_strided_slice %706 {offsets = [0, 5], sizes = [8, 5], strides = [1, 1]} : vector<8x15xf32> to vector<8x5xf32>
    %720 = arith.addf %718, %719 : vector<8x5xf32>
    %721 = arith.negf %720 : vector<8x5xf32>
    %722 = math.exp %721 : vector<8x5xf32>
    %cst_238 = arith.constant 1.000000e+00 : f32
    %723 = vector.broadcast %cst_238 : f32 to vector<8x5xf32>
    %724 = arith.addf %723, %722 : vector<8x5xf32>
    %725 = arith.divf %723, %724 : vector<8x5xf32>
    %726 = vector.extract_strided_slice %709 {offsets = [0, 10], sizes = [8, 5], strides = [1, 1]} : vector<8x15xf32> to vector<8x5xf32>
    %727 = vector.extract_strided_slice %706 {offsets = [0, 10], sizes = [8, 5], strides = [1, 1]} : vector<8x15xf32> to vector<8x5xf32>
    %728 = vector.broadcast %156 : vector<1x5xf32> to vector<8x5xf32>
    %729 = arith.addf %727, %728 : vector<8x5xf32>
    %730 = arith.mulf %717, %729 : vector<8x5xf32>
    %731 = arith.addf %726, %730 : vector<8x5xf32>
    %732 = math.tanh %731 : vector<8x5xf32>
    %cst_239 = arith.constant 1.000000e+00 : f32
    %733 = vector.broadcast %cst_239 : f32 to vector<8x5xf32>
    %734 = arith.subf %733, %725 : vector<8x5xf32>
    %735 = arith.mulf %734, %732 : vector<8x5xf32>
    %736 = arith.mulf %725, %669 : vector<8x5xf32>
    %737 = arith.addf %735, %736 : vector<8x5xf32>
    %c1_240 = arith.constant 1 : index
    %c0_241 = arith.constant 0 : index
    %c0_242 = arith.constant 0 : index
    %738 = vector.load %arg24[%c1_240, %c0_241, %c0_242] : memref<10x8x15xf32, #tpu.memory_space<vmem>>, vector<1x8x15xf32>
    %739 = vector.shape_cast %738 : vector<1x8x15xf32> to vector<8x15xf32>
    %740 = vector.extract_strided_slice %739 {offsets = [0, 0], sizes = [8, 5], strides = [1, 1]} : vector<8x15xf32> to vector<8x5xf32>
    %741 = vector.extract_strided_slice %707 {offsets = [0, 0], sizes = [8, 5], strides = [1, 1]} : vector<8x15xf32> to vector<8x5xf32>
    %742 = arith.addf %740, %741 : vector<8x5xf32>
    %743 = arith.negf %742 : vector<8x5xf32>
    %744 = math.exp %743 : vector<8x5xf32>
    %cst_243 = arith.constant 1.000000e+00 : f32
    %745 = vector.broadcast %cst_243 : f32 to vector<8x5xf32>
    %746 = arith.addf %745, %744 : vector<8x5xf32>
    %747 = arith.divf %745, %746 : vector<8x5xf32>
    %748 = vector.extract_strided_slice %739 {offsets = [0, 5], sizes = [8, 5], strides = [1, 1]} : vector<8x15xf32> to vector<8x5xf32>
    %749 = vector.extract_strided_slice %707 {offsets = [0, 5], sizes = [8, 5], strides = [1, 1]} : vector<8x15xf32> to vector<8x5xf32>
    %750 = arith.addf %748, %749 : vector<8x5xf32>
    %751 = arith.negf %750 : vector<8x5xf32>
    %752 = math.exp %751 : vector<8x5xf32>
    %cst_244 = arith.constant 1.000000e+00 : f32
    %753 = vector.broadcast %cst_244 : f32 to vector<8x5xf32>
    %754 = arith.addf %753, %752 : vector<8x5xf32>
    %755 = arith.divf %753, %754 : vector<8x5xf32>
    %756 = vector.extract_strided_slice %739 {offsets = [0, 10], sizes = [8, 5], strides = [1, 1]} : vector<8x15xf32> to vector<8x5xf32>
    %757 = vector.extract_strided_slice %707 {offsets = [0, 10], sizes = [8, 5], strides = [1, 1]} : vector<8x15xf32> to vector<8x5xf32>
    %758 = vector.broadcast %159 : vector<1x5xf32> to vector<8x5xf32>
    %759 = arith.addf %757, %758 : vector<8x5xf32>
    %760 = arith.mulf %747, %759 : vector<8x5xf32>
    %761 = arith.addf %756, %760 : vector<8x5xf32>
    %762 = math.tanh %761 : vector<8x5xf32>
    %cst_245 = arith.constant 1.000000e+00 : f32
    %763 = vector.broadcast %cst_245 : f32 to vector<8x5xf32>
    %764 = arith.subf %763, %755 : vector<8x5xf32>
    %765 = arith.mulf %764, %762 : vector<8x5xf32>
    %766 = arith.mulf %755, %699 : vector<8x5xf32>
    %767 = arith.addf %765, %766 : vector<8x5xf32>
    %c8_246 = arith.constant 8 : index
    %c0_247 = arith.constant 0 : index
    %c0_248 = arith.constant 0 : index
    %768 = vector.load %arg25[%c8_246, %c0_247, %c0_248] : memref<10x8x5xf32, #tpu.memory_space<vmem>>, vector<1x8x5xf32>
    %769 = vector.shape_cast %768 : vector<1x8x5xf32> to vector<8x5xf32>
    %770 = vector.shape_cast %737 : vector<8x5xf32> to vector<1x8x5xf32>
    tpu.vector_store %arg25[%c8_246, %c0_247, %c0_248], %770 {strides = array<i32>} : memref<10x8x5xf32, #tpu.memory_space<vmem>>, vector<1x8x5xf32>,
    %c1_249 = arith.constant 1 : index
    %c0_250 = arith.constant 0 : index
    %c0_251 = arith.constant 0 : index
    %771 = vector.load %arg26[%c1_249, %c0_250, %c0_251] : memref<10x8x5xf32, #tpu.memory_space<vmem>>, vector<1x8x5xf32>
    %772 = vector.shape_cast %771 : vector<1x8x5xf32> to vector<8x5xf32>
    %773 = vector.shape_cast %767 : vector<8x5xf32> to vector<1x8x5xf32>
    tpu.vector_store %arg26[%c1_249, %c0_250, %c0_251], %773 {strides = array<i32>} : memref<10x8x5xf32, #tpu.memory_space<vmem>>, vector<1x8x5xf32>,
    %cst_252 = arith.constant dense<0.000000e+00> : vector<8x15xf32>
    %774 = tpu.matmul %737, %155, %cst_252 {dimension_numbers = #tpu.dot_dimension_numbers<[1], [0], [0], [1], [0, 0, 1, 1], [], []>} : vector<8x5xf32>, vector<5x15xf32>, vector<8x15xf32> -> vector<8x15xf32>
    %cst_253 = arith.constant dense<0.000000e+00> : vector<8x15xf32>
    %775 = tpu.matmul %767, %158, %cst_253 {dimension_numbers = #tpu.dot_dimension_numbers<[1], [0], [0], [1], [0, 0, 1, 1], [], []>} : vector<8x5xf32>, vector<5x15xf32>, vector<8x15xf32> -> vector<8x15xf32>
    %c9_254 = arith.constant 9 : index
    %c0_255 = arith.constant 0 : index
    %c0_256 = arith.constant 0 : index
    %776 = vector.load %arg23[%c9_254, %c0_255, %c0_256] : memref<10x8x15xf32, #tpu.memory_space<vmem>>, vector<1x8x15xf32>
    %777 = vector.shape_cast %776 : vector<1x8x15xf32> to vector<8x15xf32>
    %778 = vector.extract_strided_slice %777 {offsets = [0, 0], sizes = [8, 5], strides = [1, 1]} : vector<8x15xf32> to vector<8x5xf32>
    %779 = vector.extract_strided_slice %774 {offsets = [0, 0], sizes = [8, 5], strides = [1, 1]} : vector<8x15xf32> to vector<8x5xf32>
    %780 = arith.addf %778, %779 : vector<8x5xf32>
    %781 = arith.negf %780 : vector<8x5xf32>
    %782 = math.exp %781 : vector<8x5xf32>
    %cst_257 = arith.constant 1.000000e+00 : f32
    %783 = vector.broadcast %cst_257 : f32 to vector<8x5xf32>
    %784 = arith.addf %783, %782 : vector<8x5xf32>
    %785 = arith.divf %783, %784 : vector<8x5xf32>
    %786 = vector.extract_strided_slice %777 {offsets = [0, 5], sizes = [8, 5], strides = [1, 1]} : vector<8x15xf32> to vector<8x5xf32>
    %787 = vector.extract_strided_slice %774 {offsets = [0, 5], sizes = [8, 5], strides = [1, 1]} : vector<8x15xf32> to vector<8x5xf32>
    %788 = arith.addf %786, %787 : vector<8x5xf32>
    %789 = arith.negf %788 : vector<8x5xf32>
    %790 = math.exp %789 : vector<8x5xf32>
    %cst_258 = arith.constant 1.000000e+00 : f32
    %791 = vector.broadcast %cst_258 : f32 to vector<8x5xf32>
    %792 = arith.addf %791, %790 : vector<8x5xf32>
    %793 = arith.divf %791, %792 : vector<8x5xf32>
    %794 = vector.extract_strided_slice %777 {offsets = [0, 10], sizes = [8, 5], strides = [1, 1]} : vector<8x15xf32> to vector<8x5xf32>
    %795 = vector.extract_strided_slice %774 {offsets = [0, 10], sizes = [8, 5], strides = [1, 1]} : vector<8x15xf32> to vector<8x5xf32>
    %796 = vector.broadcast %156 : vector<1x5xf32> to vector<8x5xf32>
    %797 = arith.addf %795, %796 : vector<8x5xf32>
    %798 = arith.mulf %785, %797 : vector<8x5xf32>
    %799 = arith.addf %794, %798 : vector<8x5xf32>
    %800 = math.tanh %799 : vector<8x5xf32>
    %cst_259 = arith.constant 1.000000e+00 : f32
    %801 = vector.broadcast %cst_259 : f32 to vector<8x5xf32>
    %802 = arith.subf %801, %793 : vector<8x5xf32>
    %803 = arith.mulf %802, %800 : vector<8x5xf32>
    %804 = arith.mulf %793, %737 : vector<8x5xf32>
    %805 = arith.addf %803, %804 : vector<8x5xf32>
    %c0_260 = arith.constant 0 : index
    %c0_261 = arith.constant 0 : index
    %c0_262 = arith.constant 0 : index
    %806 = vector.load %arg24[%c0_260, %c0_261, %c0_262] : memref<10x8x15xf32, #tpu.memory_space<vmem>>, vector<1x8x15xf32>
    %807 = vector.shape_cast %806 : vector<1x8x15xf32> to vector<8x15xf32>
    %808 = vector.extract_strided_slice %807 {offsets = [0, 0], sizes = [8, 5], strides = [1, 1]} : vector<8x15xf32> to vector<8x5xf32>
    %809 = vector.extract_strided_slice %775 {offsets = [0, 0], sizes = [8, 5], strides = [1, 1]} : vector<8x15xf32> to vector<8x5xf32>
    %810 = arith.addf %808, %809 : vector<8x5xf32>
    %811 = arith.negf %810 : vector<8x5xf32>
    %812 = math.exp %811 : vector<8x5xf32>
    %cst_263 = arith.constant 1.000000e+00 : f32
    %813 = vector.broadcast %cst_263 : f32 to vector<8x5xf32>
    %814 = arith.addf %813, %812 : vector<8x5xf32>
    %815 = arith.divf %813, %814 : vector<8x5xf32>
    %816 = vector.extract_strided_slice %807 {offsets = [0, 5], sizes = [8, 5], strides = [1, 1]} : vector<8x15xf32> to vector<8x5xf32>
    %817 = vector.extract_strided_slice %775 {offsets = [0, 5], sizes = [8, 5], strides = [1, 1]} : vector<8x15xf32> to vector<8x5xf32>
    %818 = arith.addf %816, %817 : vector<8x5xf32>
    %819 = arith.negf %818 : vector<8x5xf32>
    %820 = math.exp %819 : vector<8x5xf32>
    %cst_264 = arith.constant 1.000000e+00 : f32
    %821 = vector.broadcast %cst_264 : f32 to vector<8x5xf32>
    %822 = arith.addf %821, %820 : vector<8x5xf32>
    %823 = arith.divf %821, %822 : vector<8x5xf32>
    %824 = vector.extract_strided_slice %807 {offsets = [0, 10], sizes = [8, 5], strides = [1, 1]} : vector<8x15xf32> to vector<8x5xf32>
    %825 = vector.extract_strided_slice %775 {offsets = [0, 10], sizes = [8, 5], strides = [1, 1]} : vector<8x15xf32> to vector<8x5xf32>
    %826 = vector.broadcast %159 : vector<1x5xf32> to vector<8x5xf32>
    %827 = arith.addf %825, %826 : vector<8x5xf32>
    %828 = arith.mulf %815, %827 : vector<8x5xf32>
    %829 = arith.addf %824, %828 : vector<8x5xf32>
    %830 = math.tanh %829 : vector<8x5xf32>
    %cst_265 = arith.constant 1.000000e+00 : f32
    %831 = vector.broadcast %cst_265 : f32 to vector<8x5xf32>
    %832 = arith.subf %831, %823 : vector<8x5xf32>
    %833 = arith.mulf %832, %830 : vector<8x5xf32>
    %834 = arith.mulf %823, %767 : vector<8x5xf32>
    %835 = arith.addf %833, %834 : vector<8x5xf32>
    %c9_266 = arith.constant 9 : index
    %c0_267 = arith.constant 0 : index
    %c0_268 = arith.constant 0 : index
    %836 = vector.load %arg25[%c9_266, %c0_267, %c0_268] : memref<10x8x5xf32, #tpu.memory_space<vmem>>, vector<1x8x5xf32>
    %837 = vector.shape_cast %836 : vector<1x8x5xf32> to vector<8x5xf32>
    %838 = vector.shape_cast %805 : vector<8x5xf32> to vector<1x8x5xf32>
    tpu.vector_store %arg25[%c9_266, %c0_267, %c0_268], %838 {strides = array<i32>} : memref<10x8x5xf32, #tpu.memory_space<vmem>>, vector<1x8x5xf32>,
    %c0_269 = arith.constant 0 : index
    %c0_270 = arith.constant 0 : index
    %c0_271 = arith.constant 0 : index
    %839 = vector.load %arg26[%c0_269, %c0_270, %c0_271] : memref<10x8x5xf32, #tpu.memory_space<vmem>>, vector<1x8x5xf32>
    %840 = vector.shape_cast %839 : vector<1x8x5xf32> to vector<8x5xf32>
    %841 = vector.shape_cast %835 : vector<8x5xf32> to vector<1x8x5xf32>
    tpu.vector_store %arg26[%c0_269, %c0_270, %c0_271], %841 {strides = array<i32>} : memref<10x8x5xf32, #tpu.memory_space<vmem>>, vector<1x8x5xf32>,
    %c0_272 = arith.constant 0 : index
    %c0_273 = arith.constant 0 : index
    %c0_274 = arith.constant 0 : index
    %842 = vector.load %arg16[%c0_272, %c0_273, %c0_274] : memref<1x1x10xf32, #tpu.memory_space<vmem>>, vector<1x1x10xf32>
    %c0_275 = arith.constant 0 : index
    %c0_276 = arith.constant 0 : index
    %c0_277 = arith.constant 0 : index
    %843 = vector.load %arg17[%c0_275, %c0_276, %c0_277] : memref<1x1x10xf32, #tpu.memory_space<vmem>>, vector<1x1x10xf32>
    %c0_278 = arith.constant 0 : index
    %c0_279 = arith.constant 0 : index
    %c0_280 = arith.constant 0 : index
    %844 = vector.load %arg25[%c0_278, %c0_279, %c0_280] : memref<10x8x5xf32, #tpu.memory_space<vmem>>, vector<10x8x5xf32>
    %845 = vector.extract_strided_slice %842 {offsets = [0, 0, 0], sizes = [1, 1, 5], strides = [1, 1, 1]} : vector<1x1x10xf32> to vector<1x1x5xf32>
    %846 = vector.extract_strided_slice %843 {offsets = [0, 0, 0], sizes = [1, 1, 5], strides = [1, 1, 1]} : vector<1x1x10xf32> to vector<1x1x5xf32>
    %cst_281 = arith.constant dense<0.000000e+00> : vector<5xf32>
    %847 = vector.multi_reduction <add>, %844, %cst_281 [0, 1] : vector<10x8x5xf32> to vector<5xf32>
    %848 = vector.shape_cast %847 : vector<5xf32> to vector<1x1x5xf32>
    %cst_282 = arith.constant 8.000000e+01 : f32
    %849 = vector.broadcast %cst_282 : f32 to vector<1x1x5xf32>
    %850 = arith.divf %848, %849 : vector<1x1x5xf32>
    %851 = vector.broadcast %850 : vector<1x1x5xf32> to vector<10x8x5xf32>
    %852 = arith.subf %844, %851 : vector<10x8x5xf32>
    %853 = arith.mulf %852, %852 : vector<10x8x5xf32>
    %cst_283 = arith.constant dense<0.000000e+00> : vector<5xf32>
    %854 = vector.multi_reduction <add>, %853, %cst_283 [0, 1] : vector<10x8x5xf32> to vector<5xf32>
    %855 = vector.shape_cast %854 : vector<5xf32> to vector<1x1x5xf32>
    %cst_284 = arith.constant 8.000000e+01 : f32
    %856 = vector.broadcast %cst_284 : f32 to vector<1x1x5xf32>
    %857 = arith.divf %855, %856 : vector<1x1x5xf32>
    %858 = vector.broadcast %850 : vector<1x1x5xf32> to vector<10x8x5xf32>
    %859 = arith.subf %844, %858 : vector<10x8x5xf32>
    %cst_285 = arith.constant 1.000000e-03 : f32
    %860 = vector.broadcast %cst_285 : f32 to vector<1x1x5xf32>
    %861 = arith.addf %857, %860 : vector<1x1x5xf32>
    %862 = math.rsqrt %861 : vector<1x1x5xf32>
    %863 = vector.broadcast %862 : vector<1x1x5xf32> to vector<10x8x5xf32>
    %864 = arith.mulf %859, %863 : vector<10x8x5xf32>
    %865 = vector.broadcast %845 : vector<1x1x5xf32> to vector<10x8x5xf32>
    %866 = arith.mulf %864, %865 : vector<10x8x5xf32>
    %867 = vector.broadcast %846 : vector<1x1x5xf32> to vector<10x8x5xf32>
    %868 = arith.addf %866, %867 : vector<10x8x5xf32>
    %c0_286 = arith.constant 0 : index
    %c0_287 = arith.constant 0 : index
    %c0_288 = arith.constant 0 : index
    %869 = vector.load %arg26[%c0_286, %c0_287, %c0_288] : memref<10x8x5xf32, #tpu.memory_space<vmem>>, vector<10x8x5xf32>
    %870 = vector.extract_strided_slice %842 {offsets = [0, 0, 5], sizes = [1, 1, 5], strides = [1, 1, 1]} : vector<1x1x10xf32> to vector<1x1x5xf32>
    %871 = vector.extract_strided_slice %843 {offsets = [0, 0, 5], sizes = [1, 1, 5], strides = [1, 1, 1]} : vector<1x1x10xf32> to vector<1x1x5xf32>
    %cst_289 = arith.constant dense<0.000000e+00> : vector<5xf32>
    %872 = vector.multi_reduction <add>, %869, %cst_289 [0, 1] : vector<10x8x5xf32> to vector<5xf32>
    %873 = vector.shape_cast %872 : vector<5xf32> to vector<1x1x5xf32>
    %cst_290 = arith.constant 8.000000e+01 : f32
    %874 = vector.broadcast %cst_290 : f32 to vector<1x1x5xf32>
    %875 = arith.divf %873, %874 : vector<1x1x5xf32>
    %876 = vector.broadcast %875 : vector<1x1x5xf32> to vector<10x8x5xf32>
    %877 = arith.subf %869, %876 : vector<10x8x5xf32>
    %878 = arith.mulf %877, %877 : vector<10x8x5xf32>
    %cst_291 = arith.constant dense<0.000000e+00> : vector<5xf32>
    %879 = vector.multi_reduction <add>, %878, %cst_291 [0, 1] : vector<10x8x5xf32> to vector<5xf32>
    %880 = vector.shape_cast %879 : vector<5xf32> to vector<1x1x5xf32>
    %cst_292 = arith.constant 8.000000e+01 : f32
    %881 = vector.broadcast %cst_292 : f32 to vector<1x1x5xf32>
    %882 = arith.divf %880, %881 : vector<1x1x5xf32>
    %883 = vector.broadcast %875 : vector<1x1x5xf32> to vector<10x8x5xf32>
    %884 = arith.subf %869, %883 : vector<10x8x5xf32>
    %cst_293 = arith.constant 1.000000e-03 : f32
    %885 = vector.broadcast %cst_293 : f32 to vector<1x1x5xf32>
    %886 = arith.addf %882, %885 : vector<1x1x5xf32>
    %887 = math.rsqrt %886 : vector<1x1x5xf32>
    %888 = vector.broadcast %887 : vector<1x1x5xf32> to vector<10x8x5xf32>
    %889 = arith.mulf %884, %888 : vector<10x8x5xf32>
    %890 = vector.broadcast %870 : vector<1x1x5xf32> to vector<10x8x5xf32>
    %891 = arith.mulf %889, %890 : vector<10x8x5xf32>
    %892 = vector.broadcast %871 : vector<1x1x5xf32> to vector<10x8x5xf32>
    %893 = arith.addf %891, %892 : vector<10x8x5xf32>
    %894 = vector.shape_cast %868 : vector<10x8x5xf32> to vector<80x5xf32>
    %895 = vector.shape_cast %893 : vector<10x8x5xf32> to vector<80x5xf32>
    %c0_294 = arith.constant 0 : index
    %c0_295 = arith.constant 0 : index
    %c0_296 = arith.constant 0 : index
    %896 = vector.load %arg12[%c0_294, %c0_295, %c0_296] : memref<2x10x15xf32, #tpu.memory_space<vmem>>, vector<1x10x15xf32>
    %897 = vector.shape_cast %896 : vector<1x10x15xf32> to vector<10x15xf32>
    %c1_297 = arith.constant 1 : index
    %c0_298 = arith.constant 0 : index
    %c0_299 = arith.constant 0 : index
    %898 = vector.load %arg12[%c1_297, %c0_298, %c0_299] : memref<2x10x15xf32, #tpu.memory_space<vmem>>, vector<1x10x15xf32>
    %899 = vector.shape_cast %898 : vector<1x10x15xf32> to vector<10x15xf32>
    %c0_300 = arith.constant 0 : index
    %c0_301 = arith.constant 0 : index
    %c0_302 = arith.constant 0 : index
    %900 = vector.load %arg15[%c0_300, %c0_301, %c0_302] : memref<2x1x15xf32, #tpu.memory_space<vmem>>, vector<1x1x15xf32>
    %901 = vector.shape_cast %900 : vector<1x1x15xf32> to vector<1x15xf32>
    %c1_303 = arith.constant 1 : index
    %c0_304 = arith.constant 0 : index
    %c0_305 = arith.constant 0 : index
    %902 = vector.load %arg15[%c1_303, %c0_304, %c0_305] : memref<2x1x15xf32, #tpu.memory_space<vmem>>, vector<1x1x15xf32>
    %903 = vector.shape_cast %902 : vector<1x1x15xf32> to vector<1x15xf32>
    %904 = vector.extract_strided_slice %897 {offsets = [0, 0], sizes = [5, 15], strides = [1, 1]} : vector<10x15xf32> to vector<5x15xf32>
    %cst_306 = arith.constant dense<0.000000e+00> : vector<80x15xf32>
    %905 = tpu.matmul %894, %904, %cst_306 {dimension_numbers = #tpu.dot_dimension_numbers<[1], [0], [0], [1], [0, 0, 1, 1], [], []>} : vector<80x5xf32>, vector<5x15xf32>, vector<80x15xf32> -> vector<80x15xf32>
    %906 = vector.extract_strided_slice %897 {offsets = [5, 0], sizes = [5, 15], strides = [1, 1]} : vector<10x15xf32> to vector<5x15xf32>
    %cst_307 = arith.constant dense<0.000000e+00> : vector<80x15xf32>
    %907 = tpu.matmul %895, %906, %cst_307 {dimension_numbers = #tpu.dot_dimension_numbers<[1], [0], [0], [1], [0, 0, 1, 1], [], []>} : vector<80x5xf32>, vector<5x15xf32>, vector<80x15xf32> -> vector<80x15xf32>
    %908 = arith.addf %905, %907 : vector<80x15xf32>
    %c0_308 = arith.constant 0 : index
    %c0_309 = arith.constant 0 : index
    %c0_310 = arith.constant 0 : index
    %909 = vector.load %arg14[%c0_308, %c0_309, %c0_310] : memref<2x1x15xf32, #tpu.memory_space<vmem>>, vector<1x1x15xf32>
    %910 = vector.shape_cast %909 : vector<1x1x15xf32> to vector<1x15xf32>
    %911 = vector.extract_strided_slice %901 {offsets = [0, 0], sizes = [1, 10], strides = [1, 1]} : vector<1x15xf32> to vector<1x10xf32>
    %912 = tpu.concatenate %911, %124 in 1 : vector<1x10xf32>, vector<1x5xf32> -> vector<1x15xf32>
    %913 = arith.addf %910, %912 : vector<1x15xf32>
    %914 = vector.broadcast %913 : vector<1x15xf32> to vector<80x15xf32>
    %915 = arith.addf %908, %914 : vector<80x15xf32>
    %916 = vector.shape_cast %915 : vector<80x15xf32> to vector<10x8x15xf32>
    %c0_311 = arith.constant 0 : index
    %c0_312 = arith.constant 0 : index
    %c0_313 = arith.constant 0 : index
    %917 = vector.load %arg23[%c0_311, %c0_312, %c0_313] : memref<10x8x15xf32, #tpu.memory_space<vmem>>, vector<10x8x15xf32>
    tpu.vector_store %arg23[%c0_311, %c0_312, %c0_313], %916 {strides = array<i32>} : memref<10x8x15xf32, #tpu.memory_space<vmem>>, vector<10x8x15xf32>,
    %918 = vector.extract_strided_slice %899 {offsets = [0, 0], sizes = [5, 15], strides = [1, 1]} : vector<10x15xf32> to vector<5x15xf32>
    %cst_314 = arith.constant dense<0.000000e+00> : vector<80x15xf32>
    %919 = tpu.matmul %894, %918, %cst_314 {dimension_numbers = #tpu.dot_dimension_numbers<[1], [0], [0], [1], [0, 0, 1, 1], [], []>} : vector<80x5xf32>, vector<5x15xf32>, vector<80x15xf32> -> vector<80x15xf32>
    %920 = vector.extract_strided_slice %899 {offsets = [5, 0], sizes = [5, 15], strides = [1, 1]} : vector<10x15xf32> to vector<5x15xf32>
    %cst_315 = arith.constant dense<0.000000e+00> : vector<80x15xf32>
    %921 = tpu.matmul %895, %920, %cst_315 {dimension_numbers = #tpu.dot_dimension_numbers<[1], [0], [0], [1], [0, 0, 1, 1], [], []>} : vector<80x5xf32>, vector<5x15xf32>, vector<80x15xf32> -> vector<80x15xf32>
    %922 = arith.addf %919, %921 : vector<80x15xf32>
    %c1_316 = arith.constant 1 : index
    %c0_317 = arith.constant 0 : index
    %c0_318 = arith.constant 0 : index
    %923 = vector.load %arg14[%c1_316, %c0_317, %c0_318] : memref<2x1x15xf32, #tpu.memory_space<vmem>>, vector<1x1x15xf32>
    %924 = vector.shape_cast %923 : vector<1x1x15xf32> to vector<1x15xf32>
    %925 = vector.extract_strided_slice %903 {offsets = [0, 0], sizes = [1, 10], strides = [1, 1]} : vector<1x15xf32> to vector<1x10xf32>
    %926 = tpu.concatenate %925, %124 in 1 : vector<1x10xf32>, vector<1x5xf32> -> vector<1x15xf32>
    %927 = arith.addf %924, %926 : vector<1x15xf32>
    %928 = vector.broadcast %927 : vector<1x15xf32> to vector<80x15xf32>
    %929 = arith.addf %922, %928 : vector<80x15xf32>
    %930 = vector.shape_cast %929 : vector<80x15xf32> to vector<10x8x15xf32>
    %c0_319 = arith.constant 0 : index
    %c0_320 = arith.constant 0 : index
    %c0_321 = arith.constant 0 : index
    %931 = vector.load %arg24[%c0_319, %c0_320, %c0_321] : memref<10x8x15xf32, #tpu.memory_space<vmem>>, vector<10x8x15xf32>
    tpu.vector_store %arg24[%c0_319, %c0_320, %c0_321], %930 {strides = array<i32>} : memref<10x8x15xf32, #tpu.memory_space<vmem>>, vector<10x8x15xf32>,
    %c0_322 = arith.constant 0 : index
    %c0_323 = arith.constant 0 : index
    %c0_324 = arith.constant 0 : index
    %932 = vector.load %arg13[%c0_322, %c0_323, %c0_324] : memref<2x5x15xf32, #tpu.memory_space<vmem>>, vector<1x5x15xf32>
    %933 = vector.shape_cast %932 : vector<1x5x15xf32> to vector<5x15xf32>
    %934 = vector.extract_strided_slice %901 {offsets = [0, 10], sizes = [1, 5], strides = [1, 1]} : vector<1x15xf32> to vector<1x5xf32>
    %c1_325 = arith.constant 1 : index
    %c0_326 = arith.constant 0 : index
    %c0_327 = arith.constant 0 : index
    %935 = vector.load %arg13[%c1_325, %c0_326, %c0_327] : memref<2x5x15xf32, #tpu.memory_space<vmem>>, vector<1x5x15xf32>
    %936 = vector.shape_cast %935 : vector<1x5x15xf32> to vector<5x15xf32>
    %937 = vector.extract_strided_slice %903 {offsets = [0, 10], sizes = [1, 5], strides = [1, 1]} : vector<1x15xf32> to vector<1x5xf32>
    %cst_328 = arith.constant 0.000000e+00 : f32
    %938 = vector.broadcast %cst_328 : f32 to vector<8x5xf32>
    %cst_329 = arith.constant 0.000000e+00 : f32
    %939 = vector.broadcast %cst_329 : f32 to vector<8x5xf32>
    %cst_330 = arith.constant dense<0.000000e+00> : vector<8x15xf32>
    %940 = tpu.matmul %938, %933, %cst_330 {dimension_numbers = #tpu.dot_dimension_numbers<[1], [0], [0], [1], [0, 0, 1, 1], [], []>} : vector<8x5xf32>, vector<5x15xf32>, vector<8x15xf32> -> vector<8x15xf32>
    %cst_331 = arith.constant dense<0.000000e+00> : vector<8x15xf32>
    %941 = tpu.matmul %939, %936, %cst_331 {dimension_numbers = #tpu.dot_dimension_numbers<[1], [0], [0], [1], [0, 0, 1, 1], [], []>} : vector<8x5xf32>, vector<5x15xf32>, vector<8x15xf32> -> vector<8x15xf32>
    %c0_332 = arith.constant 0 : index
    %c0_333 = arith.constant 0 : index
    %c0_334 = arith.constant 0 : index
    %942 = vector.load %arg23[%c0_332, %c0_333, %c0_334] : memref<10x8x15xf32, #tpu.memory_space<vmem>>, vector<1x8x15xf32>
    %943 = vector.shape_cast %942 : vector<1x8x15xf32> to vector<8x15xf32>
    %944 = vector.extract_strided_slice %943 {offsets = [0, 0], sizes = [8, 5], strides = [1, 1]} : vector<8x15xf32> to vector<8x5xf32>
    %945 = vector.extract_strided_slice %940 {offsets = [0, 0], sizes = [8, 5], strides = [1, 1]} : vector<8x15xf32> to vector<8x5xf32>
    %946 = arith.addf %944, %945 : vector<8x5xf32>
    %947 = arith.negf %946 : vector<8x5xf32>
    %948 = math.exp %947 : vector<8x5xf32>
    %cst_335 = arith.constant 1.000000e+00 : f32
    %949 = vector.broadcast %cst_335 : f32 to vector<8x5xf32>
    %950 = arith.addf %949, %948 : vector<8x5xf32>
    %951 = arith.divf %949, %950 : vector<8x5xf32>
    %952 = vector.extract_strided_slice %943 {offsets = [0, 5], sizes = [8, 5], strides = [1, 1]} : vector<8x15xf32> to vector<8x5xf32>
    %953 = vector.extract_strided_slice %940 {offsets = [0, 5], sizes = [8, 5], strides = [1, 1]} : vector<8x15xf32> to vector<8x5xf32>
    %954 = arith.addf %952, %953 : vector<8x5xf32>
    %955 = arith.negf %954 : vector<8x5xf32>
    %956 = math.exp %955 : vector<8x5xf32>
    %cst_336 = arith.constant 1.000000e+00 : f32
    %957 = vector.broadcast %cst_336 : f32 to vector<8x5xf32>
    %958 = arith.addf %957, %956 : vector<8x5xf32>
    %959 = arith.divf %957, %958 : vector<8x5xf32>
    %960 = vector.extract_strided_slice %943 {offsets = [0, 10], sizes = [8, 5], strides = [1, 1]} : vector<8x15xf32> to vector<8x5xf32>
    %961 = vector.extract_strided_slice %940 {offsets = [0, 10], sizes = [8, 5], strides = [1, 1]} : vector<8x15xf32> to vector<8x5xf32>
    %962 = vector.broadcast %934 : vector<1x5xf32> to vector<8x5xf32>
    %963 = arith.addf %961, %962 : vector<8x5xf32>
    %964 = arith.mulf %951, %963 : vector<8x5xf32>
    %965 = arith.addf %960, %964 : vector<8x5xf32>
    %966 = math.tanh %965 : vector<8x5xf32>
    %cst_337 = arith.constant 1.000000e+00 : f32
    %967 = vector.broadcast %cst_337 : f32 to vector<8x5xf32>
    %968 = arith.subf %967, %959 : vector<8x5xf32>
    %969 = arith.mulf %968, %966 : vector<8x5xf32>
    %970 = arith.mulf %959, %938 : vector<8x5xf32>
    %971 = arith.addf %969, %970 : vector<8x5xf32>
    %c9_338 = arith.constant 9 : index
    %c0_339 = arith.constant 0 : index
    %c0_340 = arith.constant 0 : index
    %972 = vector.load %arg24[%c9_338, %c0_339, %c0_340] : memref<10x8x15xf32, #tpu.memory_space<vmem>>, vector<1x8x15xf32>
    %973 = vector.shape_cast %972 : vector<1x8x15xf32> to vector<8x15xf32>
    %974 = vector.extract_strided_slice %973 {offsets = [0, 0], sizes = [8, 5], strides = [1, 1]} : vector<8x15xf32> to vector<8x5xf32>
    %975 = vector.extract_strided_slice %941 {offsets = [0, 0], sizes = [8, 5], strides = [1, 1]} : vector<8x15xf32> to vector<8x5xf32>
    %976 = arith.addf %974, %975 : vector<8x5xf32>
    %977 = arith.negf %976 : vector<8x5xf32>
    %978 = math.exp %977 : vector<8x5xf32>
    %cst_341 = arith.constant 1.000000e+00 : f32
    %979 = vector.broadcast %cst_341 : f32 to vector<8x5xf32>
    %980 = arith.addf %979, %978 : vector<8x5xf32>
    %981 = arith.divf %979, %980 : vector<8x5xf32>
    %982 = vector.extract_strided_slice %973 {offsets = [0, 5], sizes = [8, 5], strides = [1, 1]} : vector<8x15xf32> to vector<8x5xf32>
    %983 = vector.extract_strided_slice %941 {offsets = [0, 5], sizes = [8, 5], strides = [1, 1]} : vector<8x15xf32> to vector<8x5xf32>
    %984 = arith.addf %982, %983 : vector<8x5xf32>
    %985 = arith.negf %984 : vector<8x5xf32>
    %986 = math.exp %985 : vector<8x5xf32>
    %cst_342 = arith.constant 1.000000e+00 : f32
    %987 = vector.broadcast %cst_342 : f32 to vector<8x5xf32>
    %988 = arith.addf %987, %986 : vector<8x5xf32>
    %989 = arith.divf %987, %988 : vector<8x5xf32>
    %990 = vector.extract_strided_slice %973 {offsets = [0, 10], sizes = [8, 5], strides = [1, 1]} : vector<8x15xf32> to vector<8x5xf32>
    %991 = vector.extract_strided_slice %941 {offsets = [0, 10], sizes = [8, 5], strides = [1, 1]} : vector<8x15xf32> to vector<8x5xf32>
    %992 = vector.broadcast %937 : vector<1x5xf32> to vector<8x5xf32>
    %993 = arith.addf %991, %992 : vector<8x5xf32>
    %994 = arith.mulf %981, %993 : vector<8x5xf32>
    %995 = arith.addf %990, %994 : vector<8x5xf32>
    %996 = math.tanh %995 : vector<8x5xf32>
    %cst_343 = arith.constant 1.000000e+00 : f32
    %997 = vector.broadcast %cst_343 : f32 to vector<8x5xf32>
    %998 = arith.subf %997, %989 : vector<8x5xf32>
    %999 = arith.mulf %998, %996 : vector<8x5xf32>
    %1000 = arith.mulf %989, %939 : vector<8x5xf32>
    %1001 = arith.addf %999, %1000 : vector<8x5xf32>
    %c0_344 = arith.constant 0 : index
    %c0_345 = arith.constant 0 : index
    %c0_346 = arith.constant 0 : index
    %1002 = vector.load %arg27[%c0_344, %c0_345, %c0_346] : memref<10x8x5xf32, #tpu.memory_space<vmem>>, vector<1x8x5xf32>
    %1003 = vector.shape_cast %1002 : vector<1x8x5xf32> to vector<8x5xf32>
    %1004 = vector.shape_cast %971 : vector<8x5xf32> to vector<1x8x5xf32>
    tpu.vector_store %arg27[%c0_344, %c0_345, %c0_346], %1004 {strides = array<i32>} : memref<10x8x5xf32, #tpu.memory_space<vmem>>, vector<1x8x5xf32>,
    %c9_347 = arith.constant 9 : index
    %c0_348 = arith.constant 0 : index
    %c0_349 = arith.constant 0 : index
    %1005 = vector.load %arg28[%c9_347, %c0_348, %c0_349] : memref<10x8x5xf32, #tpu.memory_space<vmem>>, vector<1x8x5xf32>
    %1006 = vector.shape_cast %1005 : vector<1x8x5xf32> to vector<8x5xf32>
    %1007 = vector.shape_cast %1001 : vector<8x5xf32> to vector<1x8x5xf32>
    tpu.vector_store %arg28[%c9_347, %c0_348, %c0_349], %1007 {strides = array<i32>} : memref<10x8x5xf32, #tpu.memory_space<vmem>>, vector<1x8x5xf32>,
    %cst_350 = arith.constant dense<0.000000e+00> : vector<8x15xf32>
    %1008 = tpu.matmul %971, %933, %cst_350 {dimension_numbers = #tpu.dot_dimension_numbers<[1], [0], [0], [1], [0, 0, 1, 1], [], []>} : vector<8x5xf32>, vector<5x15xf32>, vector<8x15xf32> -> vector<8x15xf32>
    %cst_351 = arith.constant dense<0.000000e+00> : vector<8x15xf32>
    %1009 = tpu.matmul %1001, %936, %cst_351 {dimension_numbers = #tpu.dot_dimension_numbers<[1], [0], [0], [1], [0, 0, 1, 1], [], []>} : vector<8x5xf32>, vector<5x15xf32>, vector<8x15xf32> -> vector<8x15xf32>
    %c1_352 = arith.constant 1 : index
    %c0_353 = arith.constant 0 : index
    %c0_354 = arith.constant 0 : index
    %1010 = vector.load %arg23[%c1_352, %c0_353, %c0_354] : memref<10x8x15xf32, #tpu.memory_space<vmem>>, vector<1x8x15xf32>
    %1011 = vector.shape_cast %1010 : vector<1x8x15xf32> to vector<8x15xf32>
    %1012 = vector.extract_strided_slice %1011 {offsets = [0, 0], sizes = [8, 5], strides = [1, 1]} : vector<8x15xf32> to vector<8x5xf32>
    %1013 = vector.extract_strided_slice %1008 {offsets = [0, 0], sizes = [8, 5], strides = [1, 1]} : vector<8x15xf32> to vector<8x5xf32>
    %1014 = arith.addf %1012, %1013 : vector<8x5xf32>
    %1015 = arith.negf %1014 : vector<8x5xf32>
    %1016 = math.exp %1015 : vector<8x5xf32>
    %cst_355 = arith.constant 1.000000e+00 : f32
    %1017 = vector.broadcast %cst_355 : f32 to vector<8x5xf32>
    %1018 = arith.addf %1017, %1016 : vector<8x5xf32>
    %1019 = arith.divf %1017, %1018 : vector<8x5xf32>
    %1020 = vector.extract_strided_slice %1011 {offsets = [0, 5], sizes = [8, 5], strides = [1, 1]} : vector<8x15xf32> to vector<8x5xf32>
    %1021 = vector.extract_strided_slice %1008 {offsets = [0, 5], sizes = [8, 5], strides = [1, 1]} : vector<8x15xf32> to vector<8x5xf32>
    %1022 = arith.addf %1020, %1021 : vector<8x5xf32>
    %1023 = arith.negf %1022 : vector<8x5xf32>
    %1024 = math.exp %1023 : vector<8x5xf32>
    %cst_356 = arith.constant 1.000000e+00 : f32
    %1025 = vector.broadcast %cst_356 : f32 to vector<8x5xf32>
    %1026 = arith.addf %1025, %1024 : vector<8x5xf32>
    %1027 = arith.divf %1025, %1026 : vector<8x5xf32>
    %1028 = vector.extract_strided_slice %1011 {offsets = [0, 10], sizes = [8, 5], strides = [1, 1]} : vector<8x15xf32> to vector<8x5xf32>
    %1029 = vector.extract_strided_slice %1008 {offsets = [0, 10], sizes = [8, 5], strides = [1, 1]} : vector<8x15xf32> to vector<8x5xf32>
    %1030 = vector.broadcast %934 : vector<1x5xf32> to vector<8x5xf32>
    %1031 = arith.addf %1029, %1030 : vector<8x5xf32>
    %1032 = arith.mulf %1019, %1031 : vector<8x5xf32>
    %1033 = arith.addf %1028, %1032 : vector<8x5xf32>
    %1034 = math.tanh %1033 : vector<8x5xf32>
    %cst_357 = arith.constant 1.000000e+00 : f32
    %1035 = vector.broadcast %cst_357 : f32 to vector<8x5xf32>
    %1036 = arith.subf %1035, %1027 : vector<8x5xf32>
    %1037 = arith.mulf %1036, %1034 : vector<8x5xf32>
    %1038 = arith.mulf %1027, %971 : vector<8x5xf32>
    %1039 = arith.addf %1037, %1038 : vector<8x5xf32>
    %c8_358 = arith.constant 8 : index
    %c0_359 = arith.constant 0 : index
    %c0_360 = arith.constant 0 : index
    %1040 = vector.load %arg24[%c8_358, %c0_359, %c0_360] : memref<10x8x15xf32, #tpu.memory_space<vmem>>, vector<1x8x15xf32>
    %1041 = vector.shape_cast %1040 : vector<1x8x15xf32> to vector<8x15xf32>
    %1042 = vector.extract_strided_slice %1041 {offsets = [0, 0], sizes = [8, 5], strides = [1, 1]} : vector<8x15xf32> to vector<8x5xf32>
    %1043 = vector.extract_strided_slice %1009 {offsets = [0, 0], sizes = [8, 5], strides = [1, 1]} : vector<8x15xf32> to vector<8x5xf32>
    %1044 = arith.addf %1042, %1043 : vector<8x5xf32>
    %1045 = arith.negf %1044 : vector<8x5xf32>
    %1046 = math.exp %1045 : vector<8x5xf32>
    %cst_361 = arith.constant 1.000000e+00 : f32
    %1047 = vector.broadcast %cst_361 : f32 to vector<8x5xf32>
    %1048 = arith.addf %1047, %1046 : vector<8x5xf32>
    %1049 = arith.divf %1047, %1048 : vector<8x5xf32>
    %1050 = vector.extract_strided_slice %1041 {offsets = [0, 5], sizes = [8, 5], strides = [1, 1]} : vector<8x15xf32> to vector<8x5xf32>
    %1051 = vector.extract_strided_slice %1009 {offsets = [0, 5], sizes = [8, 5], strides = [1, 1]} : vector<8x15xf32> to vector<8x5xf32>
    %1052 = arith.addf %1050, %1051 : vector<8x5xf32>
    %1053 = arith.negf %1052 : vector<8x5xf32>
    %1054 = math.exp %1053 : vector<8x5xf32>
    %cst_362 = arith.constant 1.000000e+00 : f32
    %1055 = vector.broadcast %cst_362 : f32 to vector<8x5xf32>
    %1056 = arith.addf %1055, %1054 : vector<8x5xf32>
    %1057 = arith.divf %1055, %1056 : vector<8x5xf32>
    %1058 = vector.extract_strided_slice %1041 {offsets = [0, 10], sizes = [8, 5], strides = [1, 1]} : vector<8x15xf32> to vector<8x5xf32>
    %1059 = vector.extract_strided_slice %1009 {offsets = [0, 10], sizes = [8, 5], strides = [1, 1]} : vector<8x15xf32> to vector<8x5xf32>
    %1060 = vector.broadcast %937 : vector<1x5xf32> to vector<8x5xf32>
    %1061 = arith.addf %1059, %1060 : vector<8x5xf32>
    %1062 = arith.mulf %1049, %1061 : vector<8x5xf32>
    %1063 = arith.addf %1058, %1062 : vector<8x5xf32>
    %1064 = math.tanh %1063 : vector<8x5xf32>
    %cst_363 = arith.constant 1.000000e+00 : f32
    %1065 = vector.broadcast %cst_363 : f32 to vector<8x5xf32>
    %1066 = arith.subf %1065, %1057 : vector<8x5xf32>
    %1067 = arith.mulf %1066, %1064 : vector<8x5xf32>
    %1068 = arith.mulf %1057, %1001 : vector<8x5xf32>
    %1069 = arith.addf %1067, %1068 : vector<8x5xf32>
    %c1_364 = arith.constant 1 : index
    %c0_365 = arith.constant 0 : index
    %c0_366 = arith.constant 0 : index
    %1070 = vector.load %arg27[%c1_364, %c0_365, %c0_366] : memref<10x8x5xf32, #tpu.memory_space<vmem>>, vector<1x8x5xf32>
    %1071 = vector.shape_cast %1070 : vector<1x8x5xf32> to vector<8x5xf32>
    %1072 = vector.shape_cast %1039 : vector<8x5xf32> to vector<1x8x5xf32>
    tpu.vector_store %arg27[%c1_364, %c0_365, %c0_366], %1072 {strides = array<i32>} : memref<10x8x5xf32, #tpu.memory_space<vmem>>, vector<1x8x5xf32>,
    %c8_367 = arith.constant 8 : index
    %c0_368 = arith.constant 0 : index
    %c0_369 = arith.constant 0 : index
    %1073 = vector.load %arg28[%c8_367, %c0_368, %c0_369] : memref<10x8x5xf32, #tpu.memory_space<vmem>>, vector<1x8x5xf32>
    %1074 = vector.shape_cast %1073 : vector<1x8x5xf32> to vector<8x5xf32>
    %1075 = vector.shape_cast %1069 : vector<8x5xf32> to vector<1x8x5xf32>
    tpu.vector_store %arg28[%c8_367, %c0_368, %c0_369], %1075 {strides = array<i32>} : memref<10x8x5xf32, #tpu.memory_space<vmem>>, vector<1x8x5xf32>,
    %cst_370 = arith.constant dense<0.000000e+00> : vector<8x15xf32>
    %1076 = tpu.matmul %1039, %933, %cst_370 {dimension_numbers = #tpu.dot_dimension_numbers<[1], [0], [0], [1], [0, 0, 1, 1], [], []>} : vector<8x5xf32>, vector<5x15xf32>, vector<8x15xf32> -> vector<8x15xf32>
    %cst_371 = arith.constant dense<0.000000e+00> : vector<8x15xf32>
    %1077 = tpu.matmul %1069, %936, %cst_371 {dimension_numbers = #tpu.dot_dimension_numbers<[1], [0], [0], [1], [0, 0, 1, 1], [], []>} : vector<8x5xf32>, vector<5x15xf32>, vector<8x15xf32> -> vector<8x15xf32>
    %c2_372 = arith.constant 2 : index
    %c0_373 = arith.constant 0 : index
    %c0_374 = arith.constant 0 : index
    %1078 = vector.load %arg23[%c2_372, %c0_373, %c0_374] : memref<10x8x15xf32, #tpu.memory_space<vmem>>, vector<1x8x15xf32>
    %1079 = vector.shape_cast %1078 : vector<1x8x15xf32> to vector<8x15xf32>
    %1080 = vector.extract_strided_slice %1079 {offsets = [0, 0], sizes = [8, 5], strides = [1, 1]} : vector<8x15xf32> to vector<8x5xf32>
    %1081 = vector.extract_strided_slice %1076 {offsets = [0, 0], sizes = [8, 5], strides = [1, 1]} : vector<8x15xf32> to vector<8x5xf32>
    %1082 = arith.addf %1080, %1081 : vector<8x5xf32>
    %1083 = arith.negf %1082 : vector<8x5xf32>
    %1084 = math.exp %1083 : vector<8x5xf32>
    %cst_375 = arith.constant 1.000000e+00 : f32
    %1085 = vector.broadcast %cst_375 : f32 to vector<8x5xf32>
    %1086 = arith.addf %1085, %1084 : vector<8x5xf32>
    %1087 = arith.divf %1085, %1086 : vector<8x5xf32>
    %1088 = vector.extract_strided_slice %1079 {offsets = [0, 5], sizes = [8, 5], strides = [1, 1]} : vector<8x15xf32> to vector<8x5xf32>
    %1089 = vector.extract_strided_slice %1076 {offsets = [0, 5], sizes = [8, 5], strides = [1, 1]} : vector<8x15xf32> to vector<8x5xf32>
    %1090 = arith.addf %1088, %1089 : vector<8x5xf32>
    %1091 = arith.negf %1090 : vector<8x5xf32>
    %1092 = math.exp %1091 : vector<8x5xf32>
    %cst_376 = arith.constant 1.000000e+00 : f32
    %1093 = vector.broadcast %cst_376 : f32 to vector<8x5xf32>
    %1094 = arith.addf %1093, %1092 : vector<8x5xf32>
    %1095 = arith.divf %1093, %1094 : vector<8x5xf32>
    %1096 = vector.extract_strided_slice %1079 {offsets = [0, 10], sizes = [8, 5], strides = [1, 1]} : vector<8x15xf32> to vector<8x5xf32>
    %1097 = vector.extract_strided_slice %1076 {offsets = [0, 10], sizes = [8, 5], strides = [1, 1]} : vector<8x15xf32> to vector<8x5xf32>
    %1098 = vector.broadcast %934 : vector<1x5xf32> to vector<8x5xf32>
    %1099 = arith.addf %1097, %1098 : vector<8x5xf32>
    %1100 = arith.mulf %1087, %1099 : vector<8x5xf32>
    %1101 = arith.addf %1096, %1100 : vector<8x5xf32>
    %1102 = math.tanh %1101 : vector<8x5xf32>
    %cst_377 = arith.constant 1.000000e+00 : f32
    %1103 = vector.broadcast %cst_377 : f32 to vector<8x5xf32>
    %1104 = arith.subf %1103, %1095 : vector<8x5xf32>
    %1105 = arith.mulf %1104, %1102 : vector<8x5xf32>
    %1106 = arith.mulf %1095, %1039 : vector<8x5xf32>
    %1107 = arith.addf %1105, %1106 : vector<8x5xf32>
    %c7_378 = arith.constant 7 : index
    %c0_379 = arith.constant 0 : index
    %c0_380 = arith.constant 0 : index
    %1108 = vector.load %arg24[%c7_378, %c0_379, %c0_380] : memref<10x8x15xf32, #tpu.memory_space<vmem>>, vector<1x8x15xf32>
    %1109 = vector.shape_cast %1108 : vector<1x8x15xf32> to vector<8x15xf32>
    %1110 = vector.extract_strided_slice %1109 {offsets = [0, 0], sizes = [8, 5], strides = [1, 1]} : vector<8x15xf32> to vector<8x5xf32>
    %1111 = vector.extract_strided_slice %1077 {offsets = [0, 0], sizes = [8, 5], strides = [1, 1]} : vector<8x15xf32> to vector<8x5xf32>
    %1112 = arith.addf %1110, %1111 : vector<8x5xf32>
    %1113 = arith.negf %1112 : vector<8x5xf32>
    %1114 = math.exp %1113 : vector<8x5xf32>
    %cst_381 = arith.constant 1.000000e+00 : f32
    %1115 = vector.broadcast %cst_381 : f32 to vector<8x5xf32>
    %1116 = arith.addf %1115, %1114 : vector<8x5xf32>
    %1117 = arith.divf %1115, %1116 : vector<8x5xf32>
    %1118 = vector.extract_strided_slice %1109 {offsets = [0, 5], sizes = [8, 5], strides = [1, 1]} : vector<8x15xf32> to vector<8x5xf32>
    %1119 = vector.extract_strided_slice %1077 {offsets = [0, 5], sizes = [8, 5], strides = [1, 1]} : vector<8x15xf32> to vector<8x5xf32>
    %1120 = arith.addf %1118, %1119 : vector<8x5xf32>
    %1121 = arith.negf %1120 : vector<8x5xf32>
    %1122 = math.exp %1121 : vector<8x5xf32>
    %cst_382 = arith.constant 1.000000e+00 : f32
    %1123 = vector.broadcast %cst_382 : f32 to vector<8x5xf32>
    %1124 = arith.addf %1123, %1122 : vector<8x5xf32>
    %1125 = arith.divf %1123, %1124 : vector<8x5xf32>
    %1126 = vector.extract_strided_slice %1109 {offsets = [0, 10], sizes = [8, 5], strides = [1, 1]} : vector<8x15xf32> to vector<8x5xf32>
    %1127 = vector.extract_strided_slice %1077 {offsets = [0, 10], sizes = [8, 5], strides = [1, 1]} : vector<8x15xf32> to vector<8x5xf32>
    %1128 = vector.broadcast %937 : vector<1x5xf32> to vector<8x5xf32>
    %1129 = arith.addf %1127, %1128 : vector<8x5xf32>
    %1130 = arith.mulf %1117, %1129 : vector<8x5xf32>
    %1131 = arith.addf %1126, %1130 : vector<8x5xf32>
    %1132 = math.tanh %1131 : vector<8x5xf32>
    %cst_383 = arith.constant 1.000000e+00 : f32
    %1133 = vector.broadcast %cst_383 : f32 to vector<8x5xf32>
    %1134 = arith.subf %1133, %1125 : vector<8x5xf32>
    %1135 = arith.mulf %1134, %1132 : vector<8x5xf32>
    %1136 = arith.mulf %1125, %1069 : vector<8x5xf32>
    %1137 = arith.addf %1135, %1136 : vector<8x5xf32>
    %c2_384 = arith.constant 2 : index
    %c0_385 = arith.constant 0 : index
    %c0_386 = arith.constant 0 : index
    %1138 = vector.load %arg27[%c2_384, %c0_385, %c0_386] : memref<10x8x5xf32, #tpu.memory_space<vmem>>, vector<1x8x5xf32>
    %1139 = vector.shape_cast %1138 : vector<1x8x5xf32> to vector<8x5xf32>
    %1140 = vector.shape_cast %1107 : vector<8x5xf32> to vector<1x8x5xf32>
    tpu.vector_store %arg27[%c2_384, %c0_385, %c0_386], %1140 {strides = array<i32>} : memref<10x8x5xf32, #tpu.memory_space<vmem>>, vector<1x8x5xf32>,
    %c7_387 = arith.constant 7 : index
    %c0_388 = arith.constant 0 : index
    %c0_389 = arith.constant 0 : index
    %1141 = vector.load %arg28[%c7_387, %c0_388, %c0_389] : memref<10x8x5xf32, #tpu.memory_space<vmem>>, vector<1x8x5xf32>
    %1142 = vector.shape_cast %1141 : vector<1x8x5xf32> to vector<8x5xf32>
    %1143 = vector.shape_cast %1137 : vector<8x5xf32> to vector<1x8x5xf32>
    tpu.vector_store %arg28[%c7_387, %c0_388, %c0_389], %1143 {strides = array<i32>} : memref<10x8x5xf32, #tpu.memory_space<vmem>>, vector<1x8x5xf32>,
    %cst_390 = arith.constant dense<0.000000e+00> : vector<8x15xf32>
    %1144 = tpu.matmul %1107, %933, %cst_390 {dimension_numbers = #tpu.dot_dimension_numbers<[1], [0], [0], [1], [0, 0, 1, 1], [], []>} : vector<8x5xf32>, vector<5x15xf32>, vector<8x15xf32> -> vector<8x15xf32>
    %cst_391 = arith.constant dense<0.000000e+00> : vector<8x15xf32>
    %1145 = tpu.matmul %1137, %936, %cst_391 {dimension_numbers = #tpu.dot_dimension_numbers<[1], [0], [0], [1], [0, 0, 1, 1], [], []>} : vector<8x5xf32>, vector<5x15xf32>, vector<8x15xf32> -> vector<8x15xf32>
    %c3_392 = arith.constant 3 : index
    %c0_393 = arith.constant 0 : index
    %c0_394 = arith.constant 0 : index
    %1146 = vector.load %arg23[%c3_392, %c0_393, %c0_394] : memref<10x8x15xf32, #tpu.memory_space<vmem>>, vector<1x8x15xf32>
    %1147 = vector.shape_cast %1146 : vector<1x8x15xf32> to vector<8x15xf32>
    %1148 = vector.extract_strided_slice %1147 {offsets = [0, 0], sizes = [8, 5], strides = [1, 1]} : vector<8x15xf32> to vector<8x5xf32>
    %1149 = vector.extract_strided_slice %1144 {offsets = [0, 0], sizes = [8, 5], strides = [1, 1]} : vector<8x15xf32> to vector<8x5xf32>
    %1150 = arith.addf %1148, %1149 : vector<8x5xf32>
    %1151 = arith.negf %1150 : vector<8x5xf32>
    %1152 = math.exp %1151 : vector<8x5xf32>
    %cst_395 = arith.constant 1.000000e+00 : f32
    %1153 = vector.broadcast %cst_395 : f32 to vector<8x5xf32>
    %1154 = arith.addf %1153, %1152 : vector<8x5xf32>
    %1155 = arith.divf %1153, %1154 : vector<8x5xf32>
    %1156 = vector.extract_strided_slice %1147 {offsets = [0, 5], sizes = [8, 5], strides = [1, 1]} : vector<8x15xf32> to vector<8x5xf32>
    %1157 = vector.extract_strided_slice %1144 {offsets = [0, 5], sizes = [8, 5], strides = [1, 1]} : vector<8x15xf32> to vector<8x5xf32>
    %1158 = arith.addf %1156, %1157 : vector<8x5xf32>
    %1159 = arith.negf %1158 : vector<8x5xf32>
    %1160 = math.exp %1159 : vector<8x5xf32>
    %cst_396 = arith.constant 1.000000e+00 : f32
    %1161 = vector.broadcast %cst_396 : f32 to vector<8x5xf32>
    %1162 = arith.addf %1161, %1160 : vector<8x5xf32>
    %1163 = arith.divf %1161, %1162 : vector<8x5xf32>
    %1164 = vector.extract_strided_slice %1147 {offsets = [0, 10], sizes = [8, 5], strides = [1, 1]} : vector<8x15xf32> to vector<8x5xf32>
    %1165 = vector.extract_strided_slice %1144 {offsets = [0, 10], sizes = [8, 5], strides = [1, 1]} : vector<8x15xf32> to vector<8x5xf32>
    %1166 = vector.broadcast %934 : vector<1x5xf32> to vector<8x5xf32>
    %1167 = arith.addf %1165, %1166 : vector<8x5xf32>
    %1168 = arith.mulf %1155, %1167 : vector<8x5xf32>
    %1169 = arith.addf %1164, %1168 : vector<8x5xf32>
    %1170 = math.tanh %1169 : vector<8x5xf32>
    %cst_397 = arith.constant 1.000000e+00 : f32
    %1171 = vector.broadcast %cst_397 : f32 to vector<8x5xf32>
    %1172 = arith.subf %1171, %1163 : vector<8x5xf32>
    %1173 = arith.mulf %1172, %1170 : vector<8x5xf32>
    %1174 = arith.mulf %1163, %1107 : vector<8x5xf32>
    %1175 = arith.addf %1173, %1174 : vector<8x5xf32>
    %c6_398 = arith.constant 6 : index
    %c0_399 = arith.constant 0 : index
    %c0_400 = arith.constant 0 : index
    %1176 = vector.load %arg24[%c6_398, %c0_399, %c0_400] : memref<10x8x15xf32, #tpu.memory_space<vmem>>, vector<1x8x15xf32>
    %1177 = vector.shape_cast %1176 : vector<1x8x15xf32> to vector<8x15xf32>
    %1178 = vector.extract_strided_slice %1177 {offsets = [0, 0], sizes = [8, 5], strides = [1, 1]} : vector<8x15xf32> to vector<8x5xf32>
    %1179 = vector.extract_strided_slice %1145 {offsets = [0, 0], sizes = [8, 5], strides = [1, 1]} : vector<8x15xf32> to vector<8x5xf32>
    %1180 = arith.addf %1178, %1179 : vector<8x5xf32>
    %1181 = arith.negf %1180 : vector<8x5xf32>
    %1182 = math.exp %1181 : vector<8x5xf32>
    %cst_401 = arith.constant 1.000000e+00 : f32
    %1183 = vector.broadcast %cst_401 : f32 to vector<8x5xf32>
    %1184 = arith.addf %1183, %1182 : vector<8x5xf32>
    %1185 = arith.divf %1183, %1184 : vector<8x5xf32>
    %1186 = vector.extract_strided_slice %1177 {offsets = [0, 5], sizes = [8, 5], strides = [1, 1]} : vector<8x15xf32> to vector<8x5xf32>
    %1187 = vector.extract_strided_slice %1145 {offsets = [0, 5], sizes = [8, 5], strides = [1, 1]} : vector<8x15xf32> to vector<8x5xf32>
    %1188 = arith.addf %1186, %1187 : vector<8x5xf32>
    %1189 = arith.negf %1188 : vector<8x5xf32>
    %1190 = math.exp %1189 : vector<8x5xf32>
    %cst_402 = arith.constant 1.000000e+00 : f32
    %1191 = vector.broadcast %cst_402 : f32 to vector<8x5xf32>
    %1192 = arith.addf %1191, %1190 : vector<8x5xf32>
    %1193 = arith.divf %1191, %1192 : vector<8x5xf32>
    %1194 = vector.extract_strided_slice %1177 {offsets = [0, 10], sizes = [8, 5], strides = [1, 1]} : vector<8x15xf32> to vector<8x5xf32>
    %1195 = vector.extract_strided_slice %1145 {offsets = [0, 10], sizes = [8, 5], strides = [1, 1]} : vector<8x15xf32> to vector<8x5xf32>
    %1196 = vector.broadcast %937 : vector<1x5xf32> to vector<8x5xf32>
    %1197 = arith.addf %1195, %1196 : vector<8x5xf32>
    %1198 = arith.mulf %1185, %1197 : vector<8x5xf32>
    %1199 = arith.addf %1194, %1198 : vector<8x5xf32>
    %1200 = math.tanh %1199 : vector<8x5xf32>
    %cst_403 = arith.constant 1.000000e+00 : f32
    %1201 = vector.broadcast %cst_403 : f32 to vector<8x5xf32>
    %1202 = arith.subf %1201, %1193 : vector<8x5xf32>
    %1203 = arith.mulf %1202, %1200 : vector<8x5xf32>
    %1204 = arith.mulf %1193, %1137 : vector<8x5xf32>
    %1205 = arith.addf %1203, %1204 : vector<8x5xf32>
    %c3_404 = arith.constant 3 : index
    %c0_405 = arith.constant 0 : index
    %c0_406 = arith.constant 0 : index
    %1206 = vector.load %arg27[%c3_404, %c0_405, %c0_406] : memref<10x8x5xf32, #tpu.memory_space<vmem>>, vector<1x8x5xf32>
    %1207 = vector.shape_cast %1206 : vector<1x8x5xf32> to vector<8x5xf32>
    %1208 = vector.shape_cast %1175 : vector<8x5xf32> to vector<1x8x5xf32>
    tpu.vector_store %arg27[%c3_404, %c0_405, %c0_406], %1208 {strides = array<i32>} : memref<10x8x5xf32, #tpu.memory_space<vmem>>, vector<1x8x5xf32>,
    %c6_407 = arith.constant 6 : index
    %c0_408 = arith.constant 0 : index
    %c0_409 = arith.constant 0 : index
    %1209 = vector.load %arg28[%c6_407, %c0_408, %c0_409] : memref<10x8x5xf32, #tpu.memory_space<vmem>>, vector<1x8x5xf32>
    %1210 = vector.shape_cast %1209 : vector<1x8x5xf32> to vector<8x5xf32>
    %1211 = vector.shape_cast %1205 : vector<8x5xf32> to vector<1x8x5xf32>
    tpu.vector_store %arg28[%c6_407, %c0_408, %c0_409], %1211 {strides = array<i32>} : memref<10x8x5xf32, #tpu.memory_space<vmem>>, vector<1x8x5xf32>,
    %cst_410 = arith.constant dense<0.000000e+00> : vector<8x15xf32>
    %1212 = tpu.matmul %1175, %933, %cst_410 {dimension_numbers = #tpu.dot_dimension_numbers<[1], [0], [0], [1], [0, 0, 1, 1], [], []>} : vector<8x5xf32>, vector<5x15xf32>, vector<8x15xf32> -> vector<8x15xf32>
    %cst_411 = arith.constant dense<0.000000e+00> : vector<8x15xf32>
    %1213 = tpu.matmul %1205, %936, %cst_411 {dimension_numbers = #tpu.dot_dimension_numbers<[1], [0], [0], [1], [0, 0, 1, 1], [], []>} : vector<8x5xf32>, vector<5x15xf32>, vector<8x15xf32> -> vector<8x15xf32>
    %c4_412 = arith.constant 4 : index
    %c0_413 = arith.constant 0 : index
    %c0_414 = arith.constant 0 : index
    %1214 = vector.load %arg23[%c4_412, %c0_413, %c0_414] : memref<10x8x15xf32, #tpu.memory_space<vmem>>, vector<1x8x15xf32>
    %1215 = vector.shape_cast %1214 : vector<1x8x15xf32> to vector<8x15xf32>
    %1216 = vector.extract_strided_slice %1215 {offsets = [0, 0], sizes = [8, 5], strides = [1, 1]} : vector<8x15xf32> to vector<8x5xf32>
    %1217 = vector.extract_strided_slice %1212 {offsets = [0, 0], sizes = [8, 5], strides = [1, 1]} : vector<8x15xf32> to vector<8x5xf32>
    %1218 = arith.addf %1216, %1217 : vector<8x5xf32>
    %1219 = arith.negf %1218 : vector<8x5xf32>
    %1220 = math.exp %1219 : vector<8x5xf32>
    %cst_415 = arith.constant 1.000000e+00 : f32
    %1221 = vector.broadcast %cst_415 : f32 to vector<8x5xf32>
    %1222 = arith.addf %1221, %1220 : vector<8x5xf32>
    %1223 = arith.divf %1221, %1222 : vector<8x5xf32>
    %1224 = vector.extract_strided_slice %1215 {offsets = [0, 5], sizes = [8, 5], strides = [1, 1]} : vector<8x15xf32> to vector<8x5xf32>
    %1225 = vector.extract_strided_slice %1212 {offsets = [0, 5], sizes = [8, 5], strides = [1, 1]} : vector<8x15xf32> to vector<8x5xf32>
    %1226 = arith.addf %1224, %1225 : vector<8x5xf32>
    %1227 = arith.negf %1226 : vector<8x5xf32>
    %1228 = math.exp %1227 : vector<8x5xf32>
    %cst_416 = arith.constant 1.000000e+00 : f32
    %1229 = vector.broadcast %cst_416 : f32 to vector<8x5xf32>
    %1230 = arith.addf %1229, %1228 : vector<8x5xf32>
    %1231 = arith.divf %1229, %1230 : vector<8x5xf32>
    %1232 = vector.extract_strided_slice %1215 {offsets = [0, 10], sizes = [8, 5], strides = [1, 1]} : vector<8x15xf32> to vector<8x5xf32>
    %1233 = vector.extract_strided_slice %1212 {offsets = [0, 10], sizes = [8, 5], strides = [1, 1]} : vector<8x15xf32> to vector<8x5xf32>
    %1234 = vector.broadcast %934 : vector<1x5xf32> to vector<8x5xf32>
    %1235 = arith.addf %1233, %1234 : vector<8x5xf32>
    %1236 = arith.mulf %1223, %1235 : vector<8x5xf32>
    %1237 = arith.addf %1232, %1236 : vector<8x5xf32>
    %1238 = math.tanh %1237 : vector<8x5xf32>
    %cst_417 = arith.constant 1.000000e+00 : f32
    %1239 = vector.broadcast %cst_417 : f32 to vector<8x5xf32>
    %1240 = arith.subf %1239, %1231 : vector<8x5xf32>
    %1241 = arith.mulf %1240, %1238 : vector<8x5xf32>
    %1242 = arith.mulf %1231, %1175 : vector<8x5xf32>
    %1243 = arith.addf %1241, %1242 : vector<8x5xf32>
    %c5_418 = arith.constant 5 : index
    %c0_419 = arith.constant 0 : index
    %c0_420 = arith.constant 0 : index
    %1244 = vector.load %arg24[%c5_418, %c0_419, %c0_420] : memref<10x8x15xf32, #tpu.memory_space<vmem>>, vector<1x8x15xf32>
    %1245 = vector.shape_cast %1244 : vector<1x8x15xf32> to vector<8x15xf32>
    %1246 = vector.extract_strided_slice %1245 {offsets = [0, 0], sizes = [8, 5], strides = [1, 1]} : vector<8x15xf32> to vector<8x5xf32>
    %1247 = vector.extract_strided_slice %1213 {offsets = [0, 0], sizes = [8, 5], strides = [1, 1]} : vector<8x15xf32> to vector<8x5xf32>
    %1248 = arith.addf %1246, %1247 : vector<8x5xf32>
    %1249 = arith.negf %1248 : vector<8x5xf32>
    %1250 = math.exp %1249 : vector<8x5xf32>
    %cst_421 = arith.constant 1.000000e+00 : f32
    %1251 = vector.broadcast %cst_421 : f32 to vector<8x5xf32>
    %1252 = arith.addf %1251, %1250 : vector<8x5xf32>
    %1253 = arith.divf %1251, %1252 : vector<8x5xf32>
    %1254 = vector.extract_strided_slice %1245 {offsets = [0, 5], sizes = [8, 5], strides = [1, 1]} : vector<8x15xf32> to vector<8x5xf32>
    %1255 = vector.extract_strided_slice %1213 {offsets = [0, 5], sizes = [8, 5], strides = [1, 1]} : vector<8x15xf32> to vector<8x5xf32>
    %1256 = arith.addf %1254, %1255 : vector<8x5xf32>
    %1257 = arith.negf %1256 : vector<8x5xf32>
    %1258 = math.exp %1257 : vector<8x5xf32>
    %cst_422 = arith.constant 1.000000e+00 : f32
    %1259 = vector.broadcast %cst_422 : f32 to vector<8x5xf32>
    %1260 = arith.addf %1259, %1258 : vector<8x5xf32>
    %1261 = arith.divf %1259, %1260 : vector<8x5xf32>
    %1262 = vector.extract_strided_slice %1245 {offsets = [0, 10], sizes = [8, 5], strides = [1, 1]} : vector<8x15xf32> to vector<8x5xf32>
    %1263 = vector.extract_strided_slice %1213 {offsets = [0, 10], sizes = [8, 5], strides = [1, 1]} : vector<8x15xf32> to vector<8x5xf32>
    %1264 = vector.broadcast %937 : vector<1x5xf32> to vector<8x5xf32>
    %1265 = arith.addf %1263, %1264 : vector<8x5xf32>
    %1266 = arith.mulf %1253, %1265 : vector<8x5xf32>
    %1267 = arith.addf %1262, %1266 : vector<8x5xf32>
    %1268 = math.tanh %1267 : vector<8x5xf32>
    %cst_423 = arith.constant 1.000000e+00 : f32
    %1269 = vector.broadcast %cst_423 : f32 to vector<8x5xf32>
    %1270 = arith.subf %1269, %1261 : vector<8x5xf32>
    %1271 = arith.mulf %1270, %1268 : vector<8x5xf32>
    %1272 = arith.mulf %1261, %1205 : vector<8x5xf32>
    %1273 = arith.addf %1271, %1272 : vector<8x5xf32>
    %c4_424 = arith.constant 4 : index
    %c0_425 = arith.constant 0 : index
    %c0_426 = arith.constant 0 : index
    %1274 = vector.load %arg27[%c4_424, %c0_425, %c0_426] : memref<10x8x5xf32, #tpu.memory_space<vmem>>, vector<1x8x5xf32>
    %1275 = vector.shape_cast %1274 : vector<1x8x5xf32> to vector<8x5xf32>
    %1276 = vector.shape_cast %1243 : vector<8x5xf32> to vector<1x8x5xf32>
    tpu.vector_store %arg27[%c4_424, %c0_425, %c0_426], %1276 {strides = array<i32>} : memref<10x8x5xf32, #tpu.memory_space<vmem>>, vector<1x8x5xf32>,
    %c5_427 = arith.constant 5 : index
    %c0_428 = arith.constant 0 : index
    %c0_429 = arith.constant 0 : index
    %1277 = vector.load %arg28[%c5_427, %c0_428, %c0_429] : memref<10x8x5xf32, #tpu.memory_space<vmem>>, vector<1x8x5xf32>
    %1278 = vector.shape_cast %1277 : vector<1x8x5xf32> to vector<8x5xf32>
    %1279 = vector.shape_cast %1273 : vector<8x5xf32> to vector<1x8x5xf32>
    tpu.vector_store %arg28[%c5_427, %c0_428, %c0_429], %1279 {strides = array<i32>} : memref<10x8x5xf32, #tpu.memory_space<vmem>>, vector<1x8x5xf32>,
    %cst_430 = arith.constant dense<0.000000e+00> : vector<8x15xf32>
    %1280 = tpu.matmul %1243, %933, %cst_430 {dimension_numbers = #tpu.dot_dimension_numbers<[1], [0], [0], [1], [0, 0, 1, 1], [], []>} : vector<8x5xf32>, vector<5x15xf32>, vector<8x15xf32> -> vector<8x15xf32>
    %cst_431 = arith.constant dense<0.000000e+00> : vector<8x15xf32>
    %1281 = tpu.matmul %1273, %936, %cst_431 {dimension_numbers = #tpu.dot_dimension_numbers<[1], [0], [0], [1], [0, 0, 1, 1], [], []>} : vector<8x5xf32>, vector<5x15xf32>, vector<8x15xf32> -> vector<8x15xf32>
    %c5_432 = arith.constant 5 : index
    %c0_433 = arith.constant 0 : index
    %c0_434 = arith.constant 0 : index
    %1282 = vector.load %arg23[%c5_432, %c0_433, %c0_434] : memref<10x8x15xf32, #tpu.memory_space<vmem>>, vector<1x8x15xf32>
    %1283 = vector.shape_cast %1282 : vector<1x8x15xf32> to vector<8x15xf32>
    %1284 = vector.extract_strided_slice %1283 {offsets = [0, 0], sizes = [8, 5], strides = [1, 1]} : vector<8x15xf32> to vector<8x5xf32>
    %1285 = vector.extract_strided_slice %1280 {offsets = [0, 0], sizes = [8, 5], strides = [1, 1]} : vector<8x15xf32> to vector<8x5xf32>
    %1286 = arith.addf %1284, %1285 : vector<8x5xf32>
    %1287 = arith.negf %1286 : vector<8x5xf32>
    %1288 = math.exp %1287 : vector<8x5xf32>
    %cst_435 = arith.constant 1.000000e+00 : f32
    %1289 = vector.broadcast %cst_435 : f32 to vector<8x5xf32>
    %1290 = arith.addf %1289, %1288 : vector<8x5xf32>
    %1291 = arith.divf %1289, %1290 : vector<8x5xf32>
    %1292 = vector.extract_strided_slice %1283 {offsets = [0, 5], sizes = [8, 5], strides = [1, 1]} : vector<8x15xf32> to vector<8x5xf32>
    %1293 = vector.extract_strided_slice %1280 {offsets = [0, 5], sizes = [8, 5], strides = [1, 1]} : vector<8x15xf32> to vector<8x5xf32>
    %1294 = arith.addf %1292, %1293 : vector<8x5xf32>
    %1295 = arith.negf %1294 : vector<8x5xf32>
    %1296 = math.exp %1295 : vector<8x5xf32>
    %cst_436 = arith.constant 1.000000e+00 : f32
    %1297 = vector.broadcast %cst_436 : f32 to vector<8x5xf32>
    %1298 = arith.addf %1297, %1296 : vector<8x5xf32>
    %1299 = arith.divf %1297, %1298 : vector<8x5xf32>
    %1300 = vector.extract_strided_slice %1283 {offsets = [0, 10], sizes = [8, 5], strides = [1, 1]} : vector<8x15xf32> to vector<8x5xf32>
    %1301 = vector.extract_strided_slice %1280 {offsets = [0, 10], sizes = [8, 5], strides = [1, 1]} : vector<8x15xf32> to vector<8x5xf32>
    %1302 = vector.broadcast %934 : vector<1x5xf32> to vector<8x5xf32>
    %1303 = arith.addf %1301, %1302 : vector<8x5xf32>
    %1304 = arith.mulf %1291, %1303 : vector<8x5xf32>
    %1305 = arith.addf %1300, %1304 : vector<8x5xf32>
    %1306 = math.tanh %1305 : vector<8x5xf32>
    %cst_437 = arith.constant 1.000000e+00 : f32
    %1307 = vector.broadcast %cst_437 : f32 to vector<8x5xf32>
    %1308 = arith.subf %1307, %1299 : vector<8x5xf32>
    %1309 = arith.mulf %1308, %1306 : vector<8x5xf32>
    %1310 = arith.mulf %1299, %1243 : vector<8x5xf32>
    %1311 = arith.addf %1309, %1310 : vector<8x5xf32>
    %c4_438 = arith.constant 4 : index
    %c0_439 = arith.constant 0 : index
    %c0_440 = arith.constant 0 : index
    %1312 = vector.load %arg24[%c4_438, %c0_439, %c0_440] : memref<10x8x15xf32, #tpu.memory_space<vmem>>, vector<1x8x15xf32>
    %1313 = vector.shape_cast %1312 : vector<1x8x15xf32> to vector<8x15xf32>
    %1314 = vector.extract_strided_slice %1313 {offsets = [0, 0], sizes = [8, 5], strides = [1, 1]} : vector<8x15xf32> to vector<8x5xf32>
    %1315 = vector.extract_strided_slice %1281 {offsets = [0, 0], sizes = [8, 5], strides = [1, 1]} : vector<8x15xf32> to vector<8x5xf32>
    %1316 = arith.addf %1314, %1315 : vector<8x5xf32>
    %1317 = arith.negf %1316 : vector<8x5xf32>
    %1318 = math.exp %1317 : vector<8x5xf32>
    %cst_441 = arith.constant 1.000000e+00 : f32
    %1319 = vector.broadcast %cst_441 : f32 to vector<8x5xf32>
    %1320 = arith.addf %1319, %1318 : vector<8x5xf32>
    %1321 = arith.divf %1319, %1320 : vector<8x5xf32>
    %1322 = vector.extract_strided_slice %1313 {offsets = [0, 5], sizes = [8, 5], strides = [1, 1]} : vector<8x15xf32> to vector<8x5xf32>
    %1323 = vector.extract_strided_slice %1281 {offsets = [0, 5], sizes = [8, 5], strides = [1, 1]} : vector<8x15xf32> to vector<8x5xf32>
    %1324 = arith.addf %1322, %1323 : vector<8x5xf32>
    %1325 = arith.negf %1324 : vector<8x5xf32>
    %1326 = math.exp %1325 : vector<8x5xf32>
    %cst_442 = arith.constant 1.000000e+00 : f32
    %1327 = vector.broadcast %cst_442 : f32 to vector<8x5xf32>
    %1328 = arith.addf %1327, %1326 : vector<8x5xf32>
    %1329 = arith.divf %1327, %1328 : vector<8x5xf32>
    %1330 = vector.extract_strided_slice %1313 {offsets = [0, 10], sizes = [8, 5], strides = [1, 1]} : vector<8x15xf32> to vector<8x5xf32>
    %1331 = vector.extract_strided_slice %1281 {offsets = [0, 10], sizes = [8, 5], strides = [1, 1]} : vector<8x15xf32> to vector<8x5xf32>
    %1332 = vector.broadcast %937 : vector<1x5xf32> to vector<8x5xf32>
    %1333 = arith.addf %1331, %1332 : vector<8x5xf32>
    %1334 = arith.mulf %1321, %1333 : vector<8x5xf32>
    %1335 = arith.addf %1330, %1334 : vector<8x5xf32>
    %1336 = math.tanh %1335 : vector<8x5xf32>
    %cst_443 = arith.constant 1.000000e+00 : f32
    %1337 = vector.broadcast %cst_443 : f32 to vector<8x5xf32>
    %1338 = arith.subf %1337, %1329 : vector<8x5xf32>
    %1339 = arith.mulf %1338, %1336 : vector<8x5xf32>
    %1340 = arith.mulf %1329, %1273 : vector<8x5xf32>
    %1341 = arith.addf %1339, %1340 : vector<8x5xf32>
    %c5_444 = arith.constant 5 : index
    %c0_445 = arith.constant 0 : index
    %c0_446 = arith.constant 0 : index
    %1342 = vector.load %arg27[%c5_444, %c0_445, %c0_446] : memref<10x8x5xf32, #tpu.memory_space<vmem>>, vector<1x8x5xf32>
    %1343 = vector.shape_cast %1342 : vector<1x8x5xf32> to vector<8x5xf32>
    %1344 = vector.shape_cast %1311 : vector<8x5xf32> to vector<1x8x5xf32>
    tpu.vector_store %arg27[%c5_444, %c0_445, %c0_446], %1344 {strides = array<i32>} : memref<10x8x5xf32, #tpu.memory_space<vmem>>, vector<1x8x5xf32>,
    %c4_447 = arith.constant 4 : index
    %c0_448 = arith.constant 0 : index
    %c0_449 = arith.constant 0 : index
    %1345 = vector.load %arg28[%c4_447, %c0_448, %c0_449] : memref<10x8x5xf32, #tpu.memory_space<vmem>>, vector<1x8x5xf32>
    %1346 = vector.shape_cast %1345 : vector<1x8x5xf32> to vector<8x5xf32>
    %1347 = vector.shape_cast %1341 : vector<8x5xf32> to vector<1x8x5xf32>
    tpu.vector_store %arg28[%c4_447, %c0_448, %c0_449], %1347 {strides = array<i32>} : memref<10x8x5xf32, #tpu.memory_space<vmem>>, vector<1x8x5xf32>,
    %cst_450 = arith.constant dense<0.000000e+00> : vector<8x15xf32>
    %1348 = tpu.matmul %1311, %933, %cst_450 {dimension_numbers = #tpu.dot_dimension_numbers<[1], [0], [0], [1], [0, 0, 1, 1], [], []>} : vector<8x5xf32>, vector<5x15xf32>, vector<8x15xf32> -> vector<8x15xf32>
    %cst_451 = arith.constant dense<0.000000e+00> : vector<8x15xf32>
    %1349 = tpu.matmul %1341, %936, %cst_451 {dimension_numbers = #tpu.dot_dimension_numbers<[1], [0], [0], [1], [0, 0, 1, 1], [], []>} : vector<8x5xf32>, vector<5x15xf32>, vector<8x15xf32> -> vector<8x15xf32>
    %c6_452 = arith.constant 6 : index
    %c0_453 = arith.constant 0 : index
    %c0_454 = arith.constant 0 : index
    %1350 = vector.load %arg23[%c6_452, %c0_453, %c0_454] : memref<10x8x15xf32, #tpu.memory_space<vmem>>, vector<1x8x15xf32>
    %1351 = vector.shape_cast %1350 : vector<1x8x15xf32> to vector<8x15xf32>
    %1352 = vector.extract_strided_slice %1351 {offsets = [0, 0], sizes = [8, 5], strides = [1, 1]} : vector<8x15xf32> to vector<8x5xf32>
    %1353 = vector.extract_strided_slice %1348 {offsets = [0, 0], sizes = [8, 5], strides = [1, 1]} : vector<8x15xf32> to vector<8x5xf32>
    %1354 = arith.addf %1352, %1353 : vector<8x5xf32>
    %1355 = arith.negf %1354 : vector<8x5xf32>
    %1356 = math.exp %1355 : vector<8x5xf32>
    %cst_455 = arith.constant 1.000000e+00 : f32
    %1357 = vector.broadcast %cst_455 : f32 to vector<8x5xf32>
    %1358 = arith.addf %1357, %1356 : vector<8x5xf32>
    %1359 = arith.divf %1357, %1358 : vector<8x5xf32>
    %1360 = vector.extract_strided_slice %1351 {offsets = [0, 5], sizes = [8, 5], strides = [1, 1]} : vector<8x15xf32> to vector<8x5xf32>
    %1361 = vector.extract_strided_slice %1348 {offsets = [0, 5], sizes = [8, 5], strides = [1, 1]} : vector<8x15xf32> to vector<8x5xf32>
    %1362 = arith.addf %1360, %1361 : vector<8x5xf32>
    %1363 = arith.negf %1362 : vector<8x5xf32>
    %1364 = math.exp %1363 : vector<8x5xf32>
    %cst_456 = arith.constant 1.000000e+00 : f32
    %1365 = vector.broadcast %cst_456 : f32 to vector<8x5xf32>
    %1366 = arith.addf %1365, %1364 : vector<8x5xf32>
    %1367 = arith.divf %1365, %1366 : vector<8x5xf32>
    %1368 = vector.extract_strided_slice %1351 {offsets = [0, 10], sizes = [8, 5], strides = [1, 1]} : vector<8x15xf32> to vector<8x5xf32>
    %1369 = vector.extract_strided_slice %1348 {offsets = [0, 10], sizes = [8, 5], strides = [1, 1]} : vector<8x15xf32> to vector<8x5xf32>
    %1370 = vector.broadcast %934 : vector<1x5xf32> to vector<8x5xf32>
    %1371 = arith.addf %1369, %1370 : vector<8x5xf32>
    %1372 = arith.mulf %1359, %1371 : vector<8x5xf32>
    %1373 = arith.addf %1368, %1372 : vector<8x5xf32>
    %1374 = math.tanh %1373 : vector<8x5xf32>
    %cst_457 = arith.constant 1.000000e+00 : f32
    %1375 = vector.broadcast %cst_457 : f32 to vector<8x5xf32>
    %1376 = arith.subf %1375, %1367 : vector<8x5xf32>
    %1377 = arith.mulf %1376, %1374 : vector<8x5xf32>
    %1378 = arith.mulf %1367, %1311 : vector<8x5xf32>
    %1379 = arith.addf %1377, %1378 : vector<8x5xf32>
    %c3_458 = arith.constant 3 : index
    %c0_459 = arith.constant 0 : index
    %c0_460 = arith.constant 0 : index
    %1380 = vector.load %arg24[%c3_458, %c0_459, %c0_460] : memref<10x8x15xf32, #tpu.memory_space<vmem>>, vector<1x8x15xf32>
    %1381 = vector.shape_cast %1380 : vector<1x8x15xf32> to vector<8x15xf32>
    %1382 = vector.extract_strided_slice %1381 {offsets = [0, 0], sizes = [8, 5], strides = [1, 1]} : vector<8x15xf32> to vector<8x5xf32>
    %1383 = vector.extract_strided_slice %1349 {offsets = [0, 0], sizes = [8, 5], strides = [1, 1]} : vector<8x15xf32> to vector<8x5xf32>
    %1384 = arith.addf %1382, %1383 : vector<8x5xf32>
    %1385 = arith.negf %1384 : vector<8x5xf32>
    %1386 = math.exp %1385 : vector<8x5xf32>
    %cst_461 = arith.constant 1.000000e+00 : f32
    %1387 = vector.broadcast %cst_461 : f32 to vector<8x5xf32>
    %1388 = arith.addf %1387, %1386 : vector<8x5xf32>
    %1389 = arith.divf %1387, %1388 : vector<8x5xf32>
    %1390 = vector.extract_strided_slice %1381 {offsets = [0, 5], sizes = [8, 5], strides = [1, 1]} : vector<8x15xf32> to vector<8x5xf32>
    %1391 = vector.extract_strided_slice %1349 {offsets = [0, 5], sizes = [8, 5], strides = [1, 1]} : vector<8x15xf32> to vector<8x5xf32>
    %1392 = arith.addf %1390, %1391 : vector<8x5xf32>
    %1393 = arith.negf %1392 : vector<8x5xf32>
    %1394 = math.exp %1393 : vector<8x5xf32>
    %cst_462 = arith.constant 1.000000e+00 : f32
    %1395 = vector.broadcast %cst_462 : f32 to vector<8x5xf32>
    %1396 = arith.addf %1395, %1394 : vector<8x5xf32>
    %1397 = arith.divf %1395, %1396 : vector<8x5xf32>
    %1398 = vector.extract_strided_slice %1381 {offsets = [0, 10], sizes = [8, 5], strides = [1, 1]} : vector<8x15xf32> to vector<8x5xf32>
    %1399 = vector.extract_strided_slice %1349 {offsets = [0, 10], sizes = [8, 5], strides = [1, 1]} : vector<8x15xf32> to vector<8x5xf32>
    %1400 = vector.broadcast %937 : vector<1x5xf32> to vector<8x5xf32>
    %1401 = arith.addf %1399, %1400 : vector<8x5xf32>
    %1402 = arith.mulf %1389, %1401 : vector<8x5xf32>
    %1403 = arith.addf %1398, %1402 : vector<8x5xf32>
    %1404 = math.tanh %1403 : vector<8x5xf32>
    %cst_463 = arith.constant 1.000000e+00 : f32
    %1405 = vector.broadcast %cst_463 : f32 to vector<8x5xf32>
    %1406 = arith.subf %1405, %1397 : vector<8x5xf32>
    %1407 = arith.mulf %1406, %1404 : vector<8x5xf32>
    %1408 = arith.mulf %1397, %1341 : vector<8x5xf32>
    %1409 = arith.addf %1407, %1408 : vector<8x5xf32>
    %c6_464 = arith.constant 6 : index
    %c0_465 = arith.constant 0 : index
    %c0_466 = arith.constant 0 : index
    %1410 = vector.load %arg27[%c6_464, %c0_465, %c0_466] : memref<10x8x5xf32, #tpu.memory_space<vmem>>, vector<1x8x5xf32>
    %1411 = vector.shape_cast %1410 : vector<1x8x5xf32> to vector<8x5xf32>
    %1412 = vector.shape_cast %1379 : vector<8x5xf32> to vector<1x8x5xf32>
    tpu.vector_store %arg27[%c6_464, %c0_465, %c0_466], %1412 {strides = array<i32>} : memref<10x8x5xf32, #tpu.memory_space<vmem>>, vector<1x8x5xf32>,
    %c3_467 = arith.constant 3 : index
    %c0_468 = arith.constant 0 : index
    %c0_469 = arith.constant 0 : index
    %1413 = vector.load %arg28[%c3_467, %c0_468, %c0_469] : memref<10x8x5xf32, #tpu.memory_space<vmem>>, vector<1x8x5xf32>
    %1414 = vector.shape_cast %1413 : vector<1x8x5xf32> to vector<8x5xf32>
    %1415 = vector.shape_cast %1409 : vector<8x5xf32> to vector<1x8x5xf32>
    tpu.vector_store %arg28[%c3_467, %c0_468, %c0_469], %1415 {strides = array<i32>} : memref<10x8x5xf32, #tpu.memory_space<vmem>>, vector<1x8x5xf32>,
    %cst_470 = arith.constant dense<0.000000e+00> : vector<8x15xf32>
    %1416 = tpu.matmul %1379, %933, %cst_470 {dimension_numbers = #tpu.dot_dimension_numbers<[1], [0], [0], [1], [0, 0, 1, 1], [], []>} : vector<8x5xf32>, vector<5x15xf32>, vector<8x15xf32> -> vector<8x15xf32>
    %cst_471 = arith.constant dense<0.000000e+00> : vector<8x15xf32>
    %1417 = tpu.matmul %1409, %936, %cst_471 {dimension_numbers = #tpu.dot_dimension_numbers<[1], [0], [0], [1], [0, 0, 1, 1], [], []>} : vector<8x5xf32>, vector<5x15xf32>, vector<8x15xf32> -> vector<8x15xf32>
    %c7_472 = arith.constant 7 : index
    %c0_473 = arith.constant 0 : index
    %c0_474 = arith.constant 0 : index
    %1418 = vector.load %arg23[%c7_472, %c0_473, %c0_474] : memref<10x8x15xf32, #tpu.memory_space<vmem>>, vector<1x8x15xf32>
    %1419 = vector.shape_cast %1418 : vector<1x8x15xf32> to vector<8x15xf32>
    %1420 = vector.extract_strided_slice %1419 {offsets = [0, 0], sizes = [8, 5], strides = [1, 1]} : vector<8x15xf32> to vector<8x5xf32>
    %1421 = vector.extract_strided_slice %1416 {offsets = [0, 0], sizes = [8, 5], strides = [1, 1]} : vector<8x15xf32> to vector<8x5xf32>
    %1422 = arith.addf %1420, %1421 : vector<8x5xf32>
    %1423 = arith.negf %1422 : vector<8x5xf32>
    %1424 = math.exp %1423 : vector<8x5xf32>
    %cst_475 = arith.constant 1.000000e+00 : f32
    %1425 = vector.broadcast %cst_475 : f32 to vector<8x5xf32>
    %1426 = arith.addf %1425, %1424 : vector<8x5xf32>
    %1427 = arith.divf %1425, %1426 : vector<8x5xf32>
    %1428 = vector.extract_strided_slice %1419 {offsets = [0, 5], sizes = [8, 5], strides = [1, 1]} : vector<8x15xf32> to vector<8x5xf32>
    %1429 = vector.extract_strided_slice %1416 {offsets = [0, 5], sizes = [8, 5], strides = [1, 1]} : vector<8x15xf32> to vector<8x5xf32>
    %1430 = arith.addf %1428, %1429 : vector<8x5xf32>
    %1431 = arith.negf %1430 : vector<8x5xf32>
    %1432 = math.exp %1431 : vector<8x5xf32>
    %cst_476 = arith.constant 1.000000e+00 : f32
    %1433 = vector.broadcast %cst_476 : f32 to vector<8x5xf32>
    %1434 = arith.addf %1433, %1432 : vector<8x5xf32>
    %1435 = arith.divf %1433, %1434 : vector<8x5xf32>
    %1436 = vector.extract_strided_slice %1419 {offsets = [0, 10], sizes = [8, 5], strides = [1, 1]} : vector<8x15xf32> to vector<8x5xf32>
    %1437 = vector.extract_strided_slice %1416 {offsets = [0, 10], sizes = [8, 5], strides = [1, 1]} : vector<8x15xf32> to vector<8x5xf32>
    %1438 = vector.broadcast %934 : vector<1x5xf32> to vector<8x5xf32>
    %1439 = arith.addf %1437, %1438 : vector<8x5xf32>
    %1440 = arith.mulf %1427, %1439 : vector<8x5xf32>
    %1441 = arith.addf %1436, %1440 : vector<8x5xf32>
    %1442 = math.tanh %1441 : vector<8x5xf32>
    %cst_477 = arith.constant 1.000000e+00 : f32
    %1443 = vector.broadcast %cst_477 : f32 to vector<8x5xf32>
    %1444 = arith.subf %1443, %1435 : vector<8x5xf32>
    %1445 = arith.mulf %1444, %1442 : vector<8x5xf32>
    %1446 = arith.mulf %1435, %1379 : vector<8x5xf32>
    %1447 = arith.addf %1445, %1446 : vector<8x5xf32>
    %c2_478 = arith.constant 2 : index
    %c0_479 = arith.constant 0 : index
    %c0_480 = arith.constant 0 : index
    %1448 = vector.load %arg24[%c2_478, %c0_479, %c0_480] : memref<10x8x15xf32, #tpu.memory_space<vmem>>, vector<1x8x15xf32>
    %1449 = vector.shape_cast %1448 : vector<1x8x15xf32> to vector<8x15xf32>
    %1450 = vector.extract_strided_slice %1449 {offsets = [0, 0], sizes = [8, 5], strides = [1, 1]} : vector<8x15xf32> to vector<8x5xf32>
    %1451 = vector.extract_strided_slice %1417 {offsets = [0, 0], sizes = [8, 5], strides = [1, 1]} : vector<8x15xf32> to vector<8x5xf32>
    %1452 = arith.addf %1450, %1451 : vector<8x5xf32>
    %1453 = arith.negf %1452 : vector<8x5xf32>
    %1454 = math.exp %1453 : vector<8x5xf32>
    %cst_481 = arith.constant 1.000000e+00 : f32
    %1455 = vector.broadcast %cst_481 : f32 to vector<8x5xf32>
    %1456 = arith.addf %1455, %1454 : vector<8x5xf32>
    %1457 = arith.divf %1455, %1456 : vector<8x5xf32>
    %1458 = vector.extract_strided_slice %1449 {offsets = [0, 5], sizes = [8, 5], strides = [1, 1]} : vector<8x15xf32> to vector<8x5xf32>
    %1459 = vector.extract_strided_slice %1417 {offsets = [0, 5], sizes = [8, 5], strides = [1, 1]} : vector<8x15xf32> to vector<8x5xf32>
    %1460 = arith.addf %1458, %1459 : vector<8x5xf32>
    %1461 = arith.negf %1460 : vector<8x5xf32>
    %1462 = math.exp %1461 : vector<8x5xf32>
    %cst_482 = arith.constant 1.000000e+00 : f32
    %1463 = vector.broadcast %cst_482 : f32 to vector<8x5xf32>
    %1464 = arith.addf %1463, %1462 : vector<8x5xf32>
    %1465 = arith.divf %1463, %1464 : vector<8x5xf32>
    %1466 = vector.extract_strided_slice %1449 {offsets = [0, 10], sizes = [8, 5], strides = [1, 1]} : vector<8x15xf32> to vector<8x5xf32>
    %1467 = vector.extract_strided_slice %1417 {offsets = [0, 10], sizes = [8, 5], strides = [1, 1]} : vector<8x15xf32> to vector<8x5xf32>
    %1468 = vector.broadcast %937 : vector<1x5xf32> to vector<8x5xf32>
    %1469 = arith.addf %1467, %1468 : vector<8x5xf32>
    %1470 = arith.mulf %1457, %1469 : vector<8x5xf32>
    %1471 = arith.addf %1466, %1470 : vector<8x5xf32>
    %1472 = math.tanh %1471 : vector<8x5xf32>
    %cst_483 = arith.constant 1.000000e+00 : f32
    %1473 = vector.broadcast %cst_483 : f32 to vector<8x5xf32>
    %1474 = arith.subf %1473, %1465 : vector<8x5xf32>
    %1475 = arith.mulf %1474, %1472 : vector<8x5xf32>
    %1476 = arith.mulf %1465, %1409 : vector<8x5xf32>
    %1477 = arith.addf %1475, %1476 : vector<8x5xf32>
    %c7_484 = arith.constant 7 : index
    %c0_485 = arith.constant 0 : index
    %c0_486 = arith.constant 0 : index
    %1478 = vector.load %arg27[%c7_484, %c0_485, %c0_486] : memref<10x8x5xf32, #tpu.memory_space<vmem>>, vector<1x8x5xf32>
    %1479 = vector.shape_cast %1478 : vector<1x8x5xf32> to vector<8x5xf32>
    %1480 = vector.shape_cast %1447 : vector<8x5xf32> to vector<1x8x5xf32>
    tpu.vector_store %arg27[%c7_484, %c0_485, %c0_486], %1480 {strides = array<i32>} : memref<10x8x5xf32, #tpu.memory_space<vmem>>, vector<1x8x5xf32>,
    %c2_487 = arith.constant 2 : index
    %c0_488 = arith.constant 0 : index
    %c0_489 = arith.constant 0 : index
    %1481 = vector.load %arg28[%c2_487, %c0_488, %c0_489] : memref<10x8x5xf32, #tpu.memory_space<vmem>>, vector<1x8x5xf32>
    %1482 = vector.shape_cast %1481 : vector<1x8x5xf32> to vector<8x5xf32>
    %1483 = vector.shape_cast %1477 : vector<8x5xf32> to vector<1x8x5xf32>
    tpu.vector_store %arg28[%c2_487, %c0_488, %c0_489], %1483 {strides = array<i32>} : memref<10x8x5xf32, #tpu.memory_space<vmem>>, vector<1x8x5xf32>,
    %cst_490 = arith.constant dense<0.000000e+00> : vector<8x15xf32>
    %1484 = tpu.matmul %1447, %933, %cst_490 {dimension_numbers = #tpu.dot_dimension_numbers<[1], [0], [0], [1], [0, 0, 1, 1], [], []>} : vector<8x5xf32>, vector<5x15xf32>, vector<8x15xf32> -> vector<8x15xf32>
    %cst_491 = arith.constant dense<0.000000e+00> : vector<8x15xf32>
    %1485 = tpu.matmul %1477, %936, %cst_491 {dimension_numbers = #tpu.dot_dimension_numbers<[1], [0], [0], [1], [0, 0, 1, 1], [], []>} : vector<8x5xf32>, vector<5x15xf32>, vector<8x15xf32> -> vector<8x15xf32>
    %c8_492 = arith.constant 8 : index
    %c0_493 = arith.constant 0 : index
    %c0_494 = arith.constant 0 : index
    %1486 = vector.load %arg23[%c8_492, %c0_493, %c0_494] : memref<10x8x15xf32, #tpu.memory_space<vmem>>, vector<1x8x15xf32>
    %1487 = vector.shape_cast %1486 : vector<1x8x15xf32> to vector<8x15xf32>
    %1488 = vector.extract_strided_slice %1487 {offsets = [0, 0], sizes = [8, 5], strides = [1, 1]} : vector<8x15xf32> to vector<8x5xf32>
    %1489 = vector.extract_strided_slice %1484 {offsets = [0, 0], sizes = [8, 5], strides = [1, 1]} : vector<8x15xf32> to vector<8x5xf32>
    %1490 = arith.addf %1488, %1489 : vector<8x5xf32>
    %1491 = arith.negf %1490 : vector<8x5xf32>
    %1492 = math.exp %1491 : vector<8x5xf32>
    %cst_495 = arith.constant 1.000000e+00 : f32
    %1493 = vector.broadcast %cst_495 : f32 to vector<8x5xf32>
    %1494 = arith.addf %1493, %1492 : vector<8x5xf32>
    %1495 = arith.divf %1493, %1494 : vector<8x5xf32>
    %1496 = vector.extract_strided_slice %1487 {offsets = [0, 5], sizes = [8, 5], strides = [1, 1]} : vector<8x15xf32> to vector<8x5xf32>
    %1497 = vector.extract_strided_slice %1484 {offsets = [0, 5], sizes = [8, 5], strides = [1, 1]} : vector<8x15xf32> to vector<8x5xf32>
    %1498 = arith.addf %1496, %1497 : vector<8x5xf32>
    %1499 = arith.negf %1498 : vector<8x5xf32>
    %1500 = math.exp %1499 : vector<8x5xf32>
    %cst_496 = arith.constant 1.000000e+00 : f32
    %1501 = vector.broadcast %cst_496 : f32 to vector<8x5xf32>
    %1502 = arith.addf %1501, %1500 : vector<8x5xf32>
    %1503 = arith.divf %1501, %1502 : vector<8x5xf32>
    %1504 = vector.extract_strided_slice %1487 {offsets = [0, 10], sizes = [8, 5], strides = [1, 1]} : vector<8x15xf32> to vector<8x5xf32>
    %1505 = vector.extract_strided_slice %1484 {offsets = [0, 10], sizes = [8, 5], strides = [1, 1]} : vector<8x15xf32> to vector<8x5xf32>
    %1506 = vector.broadcast %934 : vector<1x5xf32> to vector<8x5xf32>
    %1507 = arith.addf %1505, %1506 : vector<8x5xf32>
    %1508 = arith.mulf %1495, %1507 : vector<8x5xf32>
    %1509 = arith.addf %1504, %1508 : vector<8x5xf32>
    %1510 = math.tanh %1509 : vector<8x5xf32>
    %cst_497 = arith.constant 1.000000e+00 : f32
    %1511 = vector.broadcast %cst_497 : f32 to vector<8x5xf32>
    %1512 = arith.subf %1511, %1503 : vector<8x5xf32>
    %1513 = arith.mulf %1512, %1510 : vector<8x5xf32>
    %1514 = arith.mulf %1503, %1447 : vector<8x5xf32>
    %1515 = arith.addf %1513, %1514 : vector<8x5xf32>
    %c1_498 = arith.constant 1 : index
    %c0_499 = arith.constant 0 : index
    %c0_500 = arith.constant 0 : index
    %1516 = vector.load %arg24[%c1_498, %c0_499, %c0_500] : memref<10x8x15xf32, #tpu.memory_space<vmem>>, vector<1x8x15xf32>
    %1517 = vector.shape_cast %1516 : vector<1x8x15xf32> to vector<8x15xf32>
    %1518 = vector.extract_strided_slice %1517 {offsets = [0, 0], sizes = [8, 5], strides = [1, 1]} : vector<8x15xf32> to vector<8x5xf32>
    %1519 = vector.extract_strided_slice %1485 {offsets = [0, 0], sizes = [8, 5], strides = [1, 1]} : vector<8x15xf32> to vector<8x5xf32>
    %1520 = arith.addf %1518, %1519 : vector<8x5xf32>
    %1521 = arith.negf %1520 : vector<8x5xf32>
    %1522 = math.exp %1521 : vector<8x5xf32>
    %cst_501 = arith.constant 1.000000e+00 : f32
    %1523 = vector.broadcast %cst_501 : f32 to vector<8x5xf32>
    %1524 = arith.addf %1523, %1522 : vector<8x5xf32>
    %1525 = arith.divf %1523, %1524 : vector<8x5xf32>
    %1526 = vector.extract_strided_slice %1517 {offsets = [0, 5], sizes = [8, 5], strides = [1, 1]} : vector<8x15xf32> to vector<8x5xf32>
    %1527 = vector.extract_strided_slice %1485 {offsets = [0, 5], sizes = [8, 5], strides = [1, 1]} : vector<8x15xf32> to vector<8x5xf32>
    %1528 = arith.addf %1526, %1527 : vector<8x5xf32>
    %1529 = arith.negf %1528 : vector<8x5xf32>
    %1530 = math.exp %1529 : vector<8x5xf32>
    %cst_502 = arith.constant 1.000000e+00 : f32
    %1531 = vector.broadcast %cst_502 : f32 to vector<8x5xf32>
    %1532 = arith.addf %1531, %1530 : vector<8x5xf32>
    %1533 = arith.divf %1531, %1532 : vector<8x5xf32>
    %1534 = vector.extract_strided_slice %1517 {offsets = [0, 10], sizes = [8, 5], strides = [1, 1]} : vector<8x15xf32> to vector<8x5xf32>
    %1535 = vector.extract_strided_slice %1485 {offsets = [0, 10], sizes = [8, 5], strides = [1, 1]} : vector<8x15xf32> to vector<8x5xf32>
    %1536 = vector.broadcast %937 : vector<1x5xf32> to vector<8x5xf32>
    %1537 = arith.addf %1535, %1536 : vector<8x5xf32>
    %1538 = arith.mulf %1525, %1537 : vector<8x5xf32>
    %1539 = arith.addf %1534, %1538 : vector<8x5xf32>
    %1540 = math.tanh %1539 : vector<8x5xf32>
    %cst_503 = arith.constant 1.000000e+00 : f32
    %1541 = vector.broadcast %cst_503 : f32 to vector<8x5xf32>
    %1542 = arith.subf %1541, %1533 : vector<8x5xf32>
    %1543 = arith.mulf %1542, %1540 : vector<8x5xf32>
    %1544 = arith.mulf %1533, %1477 : vector<8x5xf32>
    %1545 = arith.addf %1543, %1544 : vector<8x5xf32>
    %c8_504 = arith.constant 8 : index
    %c0_505 = arith.constant 0 : index
    %c0_506 = arith.constant 0 : index
    %1546 = vector.load %arg27[%c8_504, %c0_505, %c0_506] : memref<10x8x5xf32, #tpu.memory_space<vmem>>, vector<1x8x5xf32>
    %1547 = vector.shape_cast %1546 : vector<1x8x5xf32> to vector<8x5xf32>
    %1548 = vector.shape_cast %1515 : vector<8x5xf32> to vector<1x8x5xf32>
    tpu.vector_store %arg27[%c8_504, %c0_505, %c0_506], %1548 {strides = array<i32>} : memref<10x8x5xf32, #tpu.memory_space<vmem>>, vector<1x8x5xf32>,
    %c1_507 = arith.constant 1 : index
    %c0_508 = arith.constant 0 : index
    %c0_509 = arith.constant 0 : index
    %1549 = vector.load %arg28[%c1_507, %c0_508, %c0_509] : memref<10x8x5xf32, #tpu.memory_space<vmem>>, vector<1x8x5xf32>
    %1550 = vector.shape_cast %1549 : vector<1x8x5xf32> to vector<8x5xf32>
    %1551 = vector.shape_cast %1545 : vector<8x5xf32> to vector<1x8x5xf32>
    tpu.vector_store %arg28[%c1_507, %c0_508, %c0_509], %1551 {strides = array<i32>} : memref<10x8x5xf32, #tpu.memory_space<vmem>>, vector<1x8x5xf32>,
    %cst_510 = arith.constant dense<0.000000e+00> : vector<8x15xf32>
    %1552 = tpu.matmul %1515, %933, %cst_510 {dimension_numbers = #tpu.dot_dimension_numbers<[1], [0], [0], [1], [0, 0, 1, 1], [], []>} : vector<8x5xf32>, vector<5x15xf32>, vector<8x15xf32> -> vector<8x15xf32>
    %cst_511 = arith.constant dense<0.000000e+00> : vector<8x15xf32>
    %1553 = tpu.matmul %1545, %936, %cst_511 {dimension_numbers = #tpu.dot_dimension_numbers<[1], [0], [0], [1], [0, 0, 1, 1], [], []>} : vector<8x5xf32>, vector<5x15xf32>, vector<8x15xf32> -> vector<8x15xf32>
    %c9_512 = arith.constant 9 : index
    %c0_513 = arith.constant 0 : index
    %c0_514 = arith.constant 0 : index
    %1554 = vector.load %arg23[%c9_512, %c0_513, %c0_514] : memref<10x8x15xf32, #tpu.memory_space<vmem>>, vector<1x8x15xf32>
    %1555 = vector.shape_cast %1554 : vector<1x8x15xf32> to vector<8x15xf32>
    %1556 = vector.extract_strided_slice %1555 {offsets = [0, 0], sizes = [8, 5], strides = [1, 1]} : vector<8x15xf32> to vector<8x5xf32>
    %1557 = vector.extract_strided_slice %1552 {offsets = [0, 0], sizes = [8, 5], strides = [1, 1]} : vector<8x15xf32> to vector<8x5xf32>
    %1558 = arith.addf %1556, %1557 : vector<8x5xf32>
    %1559 = arith.negf %1558 : vector<8x5xf32>
    %1560 = math.exp %1559 : vector<8x5xf32>
    %cst_515 = arith.constant 1.000000e+00 : f32
    %1561 = vector.broadcast %cst_515 : f32 to vector<8x5xf32>
    %1562 = arith.addf %1561, %1560 : vector<8x5xf32>
    %1563 = arith.divf %1561, %1562 : vector<8x5xf32>
    %1564 = vector.extract_strided_slice %1555 {offsets = [0, 5], sizes = [8, 5], strides = [1, 1]} : vector<8x15xf32> to vector<8x5xf32>
    %1565 = vector.extract_strided_slice %1552 {offsets = [0, 5], sizes = [8, 5], strides = [1, 1]} : vector<8x15xf32> to vector<8x5xf32>
    %1566 = arith.addf %1564, %1565 : vector<8x5xf32>
    %1567 = arith.negf %1566 : vector<8x5xf32>
    %1568 = math.exp %1567 : vector<8x5xf32>
    %cst_516 = arith.constant 1.000000e+00 : f32
    %1569 = vector.broadcast %cst_516 : f32 to vector<8x5xf32>
    %1570 = arith.addf %1569, %1568 : vector<8x5xf32>
    %1571 = arith.divf %1569, %1570 : vector<8x5xf32>
    %1572 = vector.extract_strided_slice %1555 {offsets = [0, 10], sizes = [8, 5], strides = [1, 1]} : vector<8x15xf32> to vector<8x5xf32>
    %1573 = vector.extract_strided_slice %1552 {offsets = [0, 10], sizes = [8, 5], strides = [1, 1]} : vector<8x15xf32> to vector<8x5xf32>
    %1574 = vector.broadcast %934 : vector<1x5xf32> to vector<8x5xf32>
    %1575 = arith.addf %1573, %1574 : vector<8x5xf32>
    %1576 = arith.mulf %1563, %1575 : vector<8x5xf32>
    %1577 = arith.addf %1572, %1576 : vector<8x5xf32>
    %1578 = math.tanh %1577 : vector<8x5xf32>
    %cst_517 = arith.constant 1.000000e+00 : f32
    %1579 = vector.broadcast %cst_517 : f32 to vector<8x5xf32>
    %1580 = arith.subf %1579, %1571 : vector<8x5xf32>
    %1581 = arith.mulf %1580, %1578 : vector<8x5xf32>
    %1582 = arith.mulf %1571, %1515 : vector<8x5xf32>
    %1583 = arith.addf %1581, %1582 : vector<8x5xf32>
    %c0_518 = arith.constant 0 : index
    %c0_519 = arith.constant 0 : index
    %c0_520 = arith.constant 0 : index
    %1584 = vector.load %arg24[%c0_518, %c0_519, %c0_520] : memref<10x8x15xf32, #tpu.memory_space<vmem>>, vector<1x8x15xf32>
    %1585 = vector.shape_cast %1584 : vector<1x8x15xf32> to vector<8x15xf32>
    %1586 = vector.extract_strided_slice %1585 {offsets = [0, 0], sizes = [8, 5], strides = [1, 1]} : vector<8x15xf32> to vector<8x5xf32>
    %1587 = vector.extract_strided_slice %1553 {offsets = [0, 0], sizes = [8, 5], strides = [1, 1]} : vector<8x15xf32> to vector<8x5xf32>
    %1588 = arith.addf %1586, %1587 : vector<8x5xf32>
    %1589 = arith.negf %1588 : vector<8x5xf32>
    %1590 = math.exp %1589 : vector<8x5xf32>
    %cst_521 = arith.constant 1.000000e+00 : f32
    %1591 = vector.broadcast %cst_521 : f32 to vector<8x5xf32>
    %1592 = arith.addf %1591, %1590 : vector<8x5xf32>
    %1593 = arith.divf %1591, %1592 : vector<8x5xf32>
    %1594 = vector.extract_strided_slice %1585 {offsets = [0, 5], sizes = [8, 5], strides = [1, 1]} : vector<8x15xf32> to vector<8x5xf32>
    %1595 = vector.extract_strided_slice %1553 {offsets = [0, 5], sizes = [8, 5], strides = [1, 1]} : vector<8x15xf32> to vector<8x5xf32>
    %1596 = arith.addf %1594, %1595 : vector<8x5xf32>
    %1597 = arith.negf %1596 : vector<8x5xf32>
    %1598 = math.exp %1597 : vector<8x5xf32>
    %cst_522 = arith.constant 1.000000e+00 : f32
    %1599 = vector.broadcast %cst_522 : f32 to vector<8x5xf32>
    %1600 = arith.addf %1599, %1598 : vector<8x5xf32>
    %1601 = arith.divf %1599, %1600 : vector<8x5xf32>
    %1602 = vector.extract_strided_slice %1585 {offsets = [0, 10], sizes = [8, 5], strides = [1, 1]} : vector<8x15xf32> to vector<8x5xf32>
    %1603 = vector.extract_strided_slice %1553 {offsets = [0, 10], sizes = [8, 5], strides = [1, 1]} : vector<8x15xf32> to vector<8x5xf32>
    %1604 = vector.broadcast %937 : vector<1x5xf32> to vector<8x5xf32>
    %1605 = arith.addf %1603, %1604 : vector<8x5xf32>
    %1606 = arith.mulf %1593, %1605 : vector<8x5xf32>
    %1607 = arith.addf %1602, %1606 : vector<8x5xf32>
    %1608 = math.tanh %1607 : vector<8x5xf32>
    %cst_523 = arith.constant 1.000000e+00 : f32
    %1609 = vector.broadcast %cst_523 : f32 to vector<8x5xf32>
    %1610 = arith.subf %1609, %1601 : vector<8x5xf32>
    %1611 = arith.mulf %1610, %1608 : vector<8x5xf32>
    %1612 = arith.mulf %1601, %1545 : vector<8x5xf32>
    %1613 = arith.addf %1611, %1612 : vector<8x5xf32>
    %c9_524 = arith.constant 9 : index
    %c0_525 = arith.constant 0 : index
    %c0_526 = arith.constant 0 : index
    %1614 = vector.load %arg27[%c9_524, %c0_525, %c0_526] : memref<10x8x5xf32, #tpu.memory_space<vmem>>, vector<1x8x5xf32>
    %1615 = vector.shape_cast %1614 : vector<1x8x5xf32> to vector<8x5xf32>
    %1616 = vector.shape_cast %1583 : vector<8x5xf32> to vector<1x8x5xf32>
    tpu.vector_store %arg27[%c9_524, %c0_525, %c0_526], %1616 {strides = array<i32>} : memref<10x8x5xf32, #tpu.memory_space<vmem>>, vector<1x8x5xf32>,
    %c0_527 = arith.constant 0 : index
    %c0_528 = arith.constant 0 : index
    %c0_529 = arith.constant 0 : index
    %1617 = vector.load %arg28[%c0_527, %c0_528, %c0_529] : memref<10x8x5xf32, #tpu.memory_space<vmem>>, vector<1x8x5xf32>
    %1618 = vector.shape_cast %1617 : vector<1x8x5xf32> to vector<8x5xf32>
    %1619 = vector.shape_cast %1613 : vector<8x5xf32> to vector<1x8x5xf32>
    tpu.vector_store %arg28[%c0_527, %c0_528, %c0_529], %1619 {strides = array<i32>} : memref<10x8x5xf32, #tpu.memory_space<vmem>>, vector<1x8x5xf32>,
    %c0_530 = arith.constant 0 : index
    %c0_531 = arith.constant 0 : index
    %c0_532 = arith.constant 0 : index
    %1620 = vector.load %arg18[%c0_530, %c0_531, %c0_532] : memref<1x1x10xf32, #tpu.memory_space<vmem>>, vector<1x1x10xf32>
    %c0_533 = arith.constant 0 : index
    %c0_534 = arith.constant 0 : index
    %c0_535 = arith.constant 0 : index
    %1621 = vector.load %arg19[%c0_533, %c0_534, %c0_535] : memref<1x1x10xf32, #tpu.memory_space<vmem>>, vector<1x1x10xf32>
    %c0_536 = arith.constant 0 : index
    %c0_537 = arith.constant 0 : index
    %c0_538 = arith.constant 0 : index
    %1622 = vector.load %arg27[%c0_536, %c0_537, %c0_538] : memref<10x8x5xf32, #tpu.memory_space<vmem>>, vector<10x8x5xf32>
    %1623 = vector.extract_strided_slice %1620 {offsets = [0, 0, 0], sizes = [1, 1, 5], strides = [1, 1, 1]} : vector<1x1x10xf32> to vector<1x1x5xf32>
    %1624 = vector.extract_strided_slice %1621 {offsets = [0, 0, 0], sizes = [1, 1, 5], strides = [1, 1, 1]} : vector<1x1x10xf32> to vector<1x1x5xf32>
    %cst_539 = arith.constant dense<0.000000e+00> : vector<5xf32>
    %1625 = vector.multi_reduction <add>, %1622, %cst_539 [0, 1] : vector<10x8x5xf32> to vector<5xf32>
    %1626 = vector.shape_cast %1625 : vector<5xf32> to vector<1x1x5xf32>
    %cst_540 = arith.constant 8.000000e+01 : f32
    %1627 = vector.broadcast %cst_540 : f32 to vector<1x1x5xf32>
    %1628 = arith.divf %1626, %1627 : vector<1x1x5xf32>
    %1629 = vector.broadcast %1628 : vector<1x1x5xf32> to vector<10x8x5xf32>
    %1630 = arith.subf %1622, %1629 : vector<10x8x5xf32>
    %1631 = arith.mulf %1630, %1630 : vector<10x8x5xf32>
    %cst_541 = arith.constant dense<0.000000e+00> : vector<5xf32>
    %1632 = vector.multi_reduction <add>, %1631, %cst_541 [0, 1] : vector<10x8x5xf32> to vector<5xf32>
    %1633 = vector.shape_cast %1632 : vector<5xf32> to vector<1x1x5xf32>
    %cst_542 = arith.constant 8.000000e+01 : f32
    %1634 = vector.broadcast %cst_542 : f32 to vector<1x1x5xf32>
    %1635 = arith.divf %1633, %1634 : vector<1x1x5xf32>
    %1636 = vector.broadcast %1628 : vector<1x1x5xf32> to vector<10x8x5xf32>
    %1637 = arith.subf %1622, %1636 : vector<10x8x5xf32>
    %cst_543 = arith.constant 1.000000e-03 : f32
    %1638 = vector.broadcast %cst_543 : f32 to vector<1x1x5xf32>
    %1639 = arith.addf %1635, %1638 : vector<1x1x5xf32>
    %1640 = math.rsqrt %1639 : vector<1x1x5xf32>
    %1641 = vector.broadcast %1640 : vector<1x1x5xf32> to vector<10x8x5xf32>
    %1642 = arith.mulf %1637, %1641 : vector<10x8x5xf32>
    %1643 = vector.broadcast %1623 : vector<1x1x5xf32> to vector<10x8x5xf32>
    %1644 = arith.mulf %1642, %1643 : vector<10x8x5xf32>
    %1645 = vector.broadcast %1624 : vector<1x1x5xf32> to vector<10x8x5xf32>
    %1646 = arith.addf %1644, %1645 : vector<10x8x5xf32>
    %c0_544 = arith.constant 0 : index
    %c0_545 = arith.constant 0 : index
    %c0_546 = arith.constant 0 : index
    %1647 = vector.load %arg28[%c0_544, %c0_545, %c0_546] : memref<10x8x5xf32, #tpu.memory_space<vmem>>, vector<10x8x5xf32>
    %1648 = vector.extract_strided_slice %1620 {offsets = [0, 0, 5], sizes = [1, 1, 5], strides = [1, 1, 1]} : vector<1x1x10xf32> to vector<1x1x5xf32>
    %1649 = vector.extract_strided_slice %1621 {offsets = [0, 0, 5], sizes = [1, 1, 5], strides = [1, 1, 1]} : vector<1x1x10xf32> to vector<1x1x5xf32>
    %cst_547 = arith.constant dense<0.000000e+00> : vector<5xf32>
    %1650 = vector.multi_reduction <add>, %1647, %cst_547 [0, 1] : vector<10x8x5xf32> to vector<5xf32>
    %1651 = vector.shape_cast %1650 : vector<5xf32> to vector<1x1x5xf32>
    %cst_548 = arith.constant 8.000000e+01 : f32
    %1652 = vector.broadcast %cst_548 : f32 to vector<1x1x5xf32>
    %1653 = arith.divf %1651, %1652 : vector<1x1x5xf32>
    %1654 = vector.broadcast %1653 : vector<1x1x5xf32> to vector<10x8x5xf32>
    %1655 = arith.subf %1647, %1654 : vector<10x8x5xf32>
    %1656 = arith.mulf %1655, %1655 : vector<10x8x5xf32>
    %cst_549 = arith.constant dense<0.000000e+00> : vector<5xf32>
    %1657 = vector.multi_reduction <add>, %1656, %cst_549 [0, 1] : vector<10x8x5xf32> to vector<5xf32>
    %1658 = vector.shape_cast %1657 : vector<5xf32> to vector<1x1x5xf32>
    %cst_550 = arith.constant 8.000000e+01 : f32
    %1659 = vector.broadcast %cst_550 : f32 to vector<1x1x5xf32>
    %1660 = arith.divf %1658, %1659 : vector<1x1x5xf32>
    %1661 = vector.broadcast %1653 : vector<1x1x5xf32> to vector<10x8x5xf32>
    %1662 = arith.subf %1647, %1661 : vector<10x8x5xf32>
    %cst_551 = arith.constant 1.000000e-03 : f32
    %1663 = vector.broadcast %cst_551 : f32 to vector<1x1x5xf32>
    %1664 = arith.addf %1660, %1663 : vector<1x1x5xf32>
    %1665 = math.rsqrt %1664 : vector<1x1x5xf32>
    %1666 = vector.broadcast %1665 : vector<1x1x5xf32> to vector<10x8x5xf32>
    %1667 = arith.mulf %1662, %1666 : vector<10x8x5xf32>
    %1668 = vector.broadcast %1648 : vector<1x1x5xf32> to vector<10x8x5xf32>
    %1669 = arith.mulf %1667, %1668 : vector<10x8x5xf32>
    %1670 = vector.broadcast %1649 : vector<1x1x5xf32> to vector<10x8x5xf32>
    %1671 = arith.addf %1669, %1670 : vector<10x8x5xf32>
    %c0_552 = arith.constant 0 : index
    %c0_553 = arith.constant 0 : index
    %c0_554 = arith.constant 0 : index
    %1672 = vector.load %arg20[%c0_552, %c0_553, %c0_554] : memref<1x1x10xf32, #tpu.memory_space<vmem>>, vector<1x1x10xf32>
    %1673 = vector.extract_strided_slice %1672 {offsets = [0, 0, 0], sizes = [1, 1, 5], strides = [1, 1, 1]} : vector<1x1x10xf32> to vector<1x1x5xf32>
    %1674 = vector.broadcast %1673 : vector<1x1x5xf32> to vector<10x8x5xf32>
    %1675 = arith.mulf %1646, %1674 : vector<10x8x5xf32>
    %cst_555 = arith.constant dense<0.000000e+00> : vector<10x8xf32>
    %1676 = vector.multi_reduction <add>, %1675, %cst_555 [2] : vector<10x8x5xf32> to vector<10x8xf32>
    %1677 = vector.shape_cast %1676 : vector<10x8xf32> to vector<10x8x1xf32>
    %1678 = vector.extract_strided_slice %1672 {offsets = [0, 0, 5], sizes = [1, 1, 5], strides = [1, 1, 1]} : vector<1x1x10xf32> to vector<1x1x5xf32>
    %1679 = vector.broadcast %1678 : vector<1x1x5xf32> to vector<10x8x5xf32>
    %1680 = arith.mulf %1671, %1679 : vector<10x8x5xf32>
    %cst_556 = arith.constant dense<0.000000e+00> : vector<10x8xf32>
    %1681 = vector.multi_reduction <add>, %1680, %cst_556 [2] : vector<10x8x5xf32> to vector<10x8xf32>
    %1682 = vector.shape_cast %1681 : vector<10x8xf32> to vector<10x8x1xf32>
    %1683 = arith.addf %1677, %1682 : vector<10x8x1xf32>
    %c0_557 = arith.constant 0 : index
    %1684 = memref.load %arg5[%c0_557] : memref<1xf32, #tpu.memory_space<smem>>
    %1685 = vector.broadcast %1684 : f32 to vector<10x8x1xf32>
    %1686 = arith.addf %1683, %1685 : vector<10x8x1xf32>
    %1687 = arith.negf %1686 : vector<10x8x1xf32>
    %1688 = math.exp %1687 : vector<10x8x1xf32>
    %cst_558 = arith.constant 1.000000e+00 : f32
    %1689 = vector.broadcast %cst_558 : f32 to vector<10x8x1xf32>
    %1690 = arith.addf %1689, %1688 : vector<10x8x1xf32>
    %1691 = arith.divf %1689, %1690 : vector<10x8x1xf32>
    %c0_559 = arith.constant 0 : index
    %c0_560 = arith.constant 0 : index
    %c0_561 = arith.constant 0 : index
    %1692 = vector.load %arg22[%c0_559, %c0_560, %c0_561] : memref<10x8x1xf32, #tpu.memory_space<vmem>>, vector<10x8x1xf32>
    tpu.vector_store %arg22[%c0_559, %c0_560, %c0_561], %1691 {strides = array<i32>} : memref<10x8x1xf32, #tpu.memory_space<vmem>>, vector<10x8x1xf32>,
    return
  }
}

</mosaic_0001>

<llo_original>
// kernel: ae_forward.1
$region0: #{ae_forward.1}
  #allocation0 [shape = 'u32[]', space=smem, size = 0x4, offset = 0x4, fixed_abs, tag = 'smem constant byte address 0x4 - core index']
  #allocation1 [shape = 'u32[72,128]{1,0:T(1,128)}', space=vmem, size = 0x9000, scoped, tag = 'internal scratch']
  #allocation2 [shape = 'f32[10,8,15]{2,1,0:T(8,128)}', space=vmem, size = 0xa000, scoped, tag = 'scratch operand']
  #allocation3 [shape = 'f32[10,8,15]{2,1,0:T(8,128)}', space=vmem, size = 0xa000, scoped, tag = 'scratch operand']
  #allocation4 [shape = 'f32[10,8,5]{2,1,0:T(8,128)}', space=vmem, size = 0xa000, scoped, tag = 'scratch operand']
  #allocation5 [shape = 'f32[10,8,5]{2,1,0:T(8,128)}', space=vmem, size = 0xa000, scoped, tag = 'scratch operand']
  #allocation6 [shape = 'f32[10,8,5]{2,1,0:T(8,128)}', space=vmem, size = 0xa000, scoped, tag = 'scratch operand']
  #allocation7 [shape = 'f32[10,8,5]{2,1,0:T(8,128)}', space=vmem, size = 0xa000, scoped, tag = 'scratch operand']
  #allocation8 [shape = 'f32[1]{0:T(128)S(6)}', space=smem, size = 0x200, scoped, tag = 'scoped memory for ae_forward.1']
  %s0 = inlined_call_operand.vmem [shape: f32[10,8,1], index: 0, kind: input, shape index: {}]
  %s1 = inlined_call_operand.vmem [shape: f32[10,8,3], index: 1, kind: input, shape index: {}]
  %s2 = inlined_call_operand.vmem [shape: f32[10,8,3], index: 2, kind: input, shape index: {}]
  %s3 = inlined_call_operand.vmem [shape: f32[2], index: 3, kind: input, shape index: {}]
  %s4 = inlined_call_operand.vmem [shape: f32[4], index: 4, kind: input, shape index: {}]
  %s5 = inlined_call_operand.<no memory space> [shape: f32[1], index: 5, kind: input, shape index: {}]
  %s6 = inlined_call_operand.vmem [shape: f32[10,1,1], index: 6, kind: input, shape index: {}]
  %s7 = inlined_call_operand.vmem [shape: f32[1,1,3], index: 7, kind: input, shape index: {}]
  %s8 = inlined_call_operand.vmem [shape: f32[2,3,15], index: 8, kind: input, shape index: {}]
  %s9 = inlined_call_operand.vmem [shape: f32[2,5,15], index: 9, kind: input, shape index: {}]
  %s10 = inlined_call_operand.vmem [shape: f32[2,1,15], index: 10, kind: input, shape index: {}]
  %s11 = inlined_call_operand.vmem [shape: f32[2,1,15], index: 11, kind: input, shape index: {}]
  %s12 = inlined_call_operand.vmem [shape: f32[2,10,15], index: 12, kind: input, shape index: {}]
  %s13 = inlined_call_operand.vmem [shape: f32[2,5,15], index: 13, kind: input, shape index: {}]
  %s14 = inlined_call_operand.vmem [shape: f32[2,1,15], index: 14, kind: input, shape index: {}]
  %s15 = inlined_call_operand.vmem [shape: f32[2,1,15], index: 15, kind: input, shape index: {}]
  %s16 = inlined_call_operand.vmem [shape: f32[1,1,10], index: 16, kind: input, shape index: {}]
  %s17 = inlined_call_operand.vmem [shape: f32[1,1,10], index: 17, kind: input, shape index: {}]
  %s18 = inlined_call_operand.vmem [shape: f32[1,1,10], index: 18, kind: input, shape index: {}]
  %s19 = inlined_call_operand.vmem [shape: f32[1,1,10], index: 19, kind: input, shape index: {}]
  %s20 = inlined_call_operand.vmem [shape: f32[1,1,10], index: 20, kind: input, shape index: {}]
  %s21 = inlined_call_operand.vmem [shape: f32[10,8,3], index: 21, kind: output, shape index: {0}]
  %s22 = inlined_call_operand.vmem [shape: f32[10,8,1], index: 22, kind: output, shape index: {1}]
  %23 = xla_tuple %s21, %s22
  %s24 = sld [smem:[#allocation0]]
  $region110: #{ae_forward.1} parent=0
    _
  %s26 = ssub.s32 1, %s24
  %s27 = scalar_select 0, %s26, %s24
  %28 = sst [smem:[#allocation8]] %s5
  $region1: #{ae_forward.1} parent=0
    #allocation9 [shape = 'u8[512]{0}', space=smem, size = 0x200, scoped, tag = 'input window, operand 3, single buffered']
    #allocation10 [shape = 's32[1]{0}', space=sflag, size = 0x4, scoped, tag = 'scoped memory for ae_forward.1']
    #allocation11 [shape = 'u8[512]{0}', space=smem, size = 0x200, scoped, tag = 'input window, operand 4, single buffered']
    #allocation12 [shape = 's32[1]{0}', space=sflag, size = 0x4, scoped, tag = 'scoped memory for ae_forward.1']
    %29 = vsyncpa [#allocation10], 0
    %30 = vsyncpa [#allocation12], 0
    // Predicated region
    $region2: #{ae_forward.1} parent=1 // pred_check
      _
    $region3: #{ae_forward.1} parent=1 // pred_check_branch
      %32 = sbr.rel (0) target = $region5
    $region4: #{ae_forward.1} parent=1 // pred_region
      _
    $region5: #{ae_forward.1} parent=1 // pred_fallthru
      _
    // Predicated region
    $region6: #{ae_forward.1} parent=1 // pred_check
      _
    $region7: #{ae_forward.1} parent=1 // pred_check_branch
      %34 = sbr.rel (0) target = $region9
    $region8: #{ae_forward.1} parent=1 // pred_region
      _
    $region9: #{ae_forward.1} parent=1 // pred_fallthru
      _
    // Predicated region
    $region10: #{ae_forward.1} parent=1 // pred_check
      _
    $region11: #{ae_forward.1} parent=1 // pred_check_branch
      %36 = sbr.rel (0) target = $region13
    $region12: #{ae_forward.1} parent=1 // pred_region
      _
    $region13: #{ae_forward.1} parent=1 // pred_fallthru
      _
    // Predicated region
    $region14: #{ae_forward.1} parent=1 // pred_check
      _
    $region15: #{ae_forward.1} parent=1 // pred_check_branch
      %38 = sbr.rel (0) target = $region17
    $region16: #{ae_forward.1} parent=1 // pred_region
      %40 = vsyncadd [#allocation10], 0
      %s42 = sshll.u32 %s3, 4
      %s43 = int_to_ptr.vmem [resolvable:$true] %s42
      %45 = dma.vmem_to_smem %s43, 16, [#allocation9], [#allocation10]
    $region17: #{ae_forward.1} parent=1 // pred_fallthru
      _
    // Predicated region
    $region18: #{ae_forward.1} parent=1 // pred_check
      _
    $region19: #{ae_forward.1} parent=1 // pred_check_branch
      %47 = sbr.rel (0) target = $region21
    $region20: #{ae_forward.1} parent=1 // pred_region
      %49 = vsyncadd [#allocation12], 0
      %s51 = sshll.u32 %s4, 4
      %s52 = int_to_ptr.vmem [resolvable:$true] %s51
      %54 = dma.vmem_to_smem %s52, 16, [#allocation11], [#allocation12]
    $region21: #{ae_forward.1} parent=1 // pred_fallthru
      _
    // Predicated region
    $region22: #{ae_forward.1} parent=1 // pred_check
      _
    $region23: #{ae_forward.1} parent=1 // pred_check_branch
      %56 = sbr.rel (0) target = $region25
    $region24: #{ae_forward.1} parent=1 // pred_region
      _
    $region25: #{ae_forward.1} parent=1 // pred_fallthru
      _
    // Predicated region
    $region26: #{ae_forward.1} parent=1 // pred_check
      _
    $region27: #{ae_forward.1} parent=1 // pred_check_branch
      %58 = sbr.rel (0) target = $region29
    $region28: #{ae_forward.1} parent=1 // pred_region
      _
    $region29: #{ae_forward.1} parent=1 // pred_fallthru
      _
    // Predicated region
    $region30: #{ae_forward.1} parent=1 // pred_check
      _
    $region31: #{ae_forward.1} parent=1 // pred_check_branch
      %60 = sbr.rel (0) target = $region33
    $region32: #{ae_forward.1} parent=1 // pred_region
      _
    $region33: #{ae_forward.1} parent=1 // pred_fallthru
      _
    // Predicated region
    $region34: #{ae_forward.1} parent=1 // pred_check
      _
    $region35: #{ae_forward.1} parent=1 // pred_check_branch
      %62 = sbr.rel (0) target = $region37
    $region36: #{ae_forward.1} parent=1 // pred_region
      _
    $region37: #{ae_forward.1} parent=1 // pred_fallthru
      _
    // Predicated region
    $region38: #{ae_forward.1} parent=1 // pred_check
      _
    $region39: #{ae_forward.1} parent=1 // pred_check_branch
      %64 = sbr.rel (0) target = $region41
    $region40: #{ae_forward.1} parent=1 // pred_region
      _
    $region41: #{ae_forward.1} parent=1 // pred_fallthru
      _
    // Predicated region
    $region42: #{ae_forward.1} parent=1 // pred_check
      _
    $region43: #{ae_forward.1} parent=1 // pred_check_branch
      %66 = sbr.rel (0) target = $region45
    $region44: #{ae_forward.1} parent=1 // pred_region
      _
    $region45: #{ae_forward.1} parent=1 // pred_fallthru
      _
    // Predicated region
    $region46: #{ae_forward.1} parent=1 // pred_check
      _
    $region47: #{ae_forward.1} parent=1 // pred_check_branch
      %68 = sbr.rel (0) target = $region49
    $region48: #{ae_forward.1} parent=1 // pred_region
      _
    $region49: #{ae_forward.1} parent=1 // pred_fallthru
      _
    // Predicated region
    $region50: #{ae_forward.1} parent=1 // pred_check
      _
    $region51: #{ae_forward.1} parent=1 // pred_check_branch
      %70 = sbr.rel (0) target = $region53
    $region52: #{ae_forward.1} parent=1 // pred_region
      _
    $region53: #{ae_forward.1} parent=1 // pred_fallthru
      _
    // Predicated region
    $region54: #{ae_forward.1} parent=1 // pred_check
      _
    $region55: #{ae_forward.1} parent=1 // pred_check_branch
      %72 = sbr.rel (0) target = $region57
    $region56: #{ae_forward.1} parent=1 // pred_region
      _
    $region57: #{ae_forward.1} parent=1 // pred_fallthru
      _
    // Predicated region
    $region58: #{ae_forward.1} parent=1 // pred_check
      _
    $region59: #{ae_forward.1} parent=1 // pred_check_branch
      %74 = sbr.rel (0) target = $region61
    $region60: #{ae_forward.1} parent=1 // pred_region
      _
    $region61: #{ae_forward.1} parent=1 // pred_fallthru
      _
    // Predicated region
    $region62: #{ae_forward.1} parent=1 // pred_check
      _
    $region63: #{ae_forward.1} parent=1 // pred_check_branch
      %76 = sbr.rel (0) target = $region65
    $region64: #{ae_forward.1} parent=1 // pred_region
      _
    $region65: #{ae_forward.1} parent=1 // pred_fallthru
      _
    // Predicated region
    $region66: #{ae_forward.1} parent=1 // pred_check
      _
    $region67: #{ae_forward.1} parent=1 // pred_check_branch
      %78 = sbr.rel (0) target = $region69
    $region68: #{ae_forward.1} parent=1 // pred_region
      _
    $region69: #{ae_forward.1} parent=1 // pred_fallthru
      _
    // Predicated region
    $region70: #{ae_forward.1} parent=1 // pred_check
      _
    $region71: #{ae_forward.1} parent=1 // pred_check_branch
      %80 = sbr.rel (0) target = $region73
    $region72: #{ae_forward.1} parent=1 // pred_region
      _
    $region73: #{ae_forward.1} parent=1 // pred_fallthru
      _
    // Predicated region
    $region74: #{ae_forward.1} parent=1 // pred_check
      _
    $region75: #{ae_forward.1} parent=1 // pred_check_branch
      %82 = sbr.rel (0) target = $region77
    $region76: #{ae_forward.1} parent=1 // pred_region
      _
    $region77: #{ae_forward.1} parent=1 // pred_fallthru
      _
    // Predicated region
    $region78: #{ae_forward.1} parent=1 // pred_check
      _
    $region79: #{ae_forward.1} parent=1 // pred_check_branch
      %84 = sbr.rel (0) target = $region81
    $region80: #{ae_forward.1} parent=1 // pred_region
      _
    $region81: #{ae_forward.1} parent=1 // pred_fallthru
      _
    // Predicated region
    $region82: #{ae_forward.1} parent=1 // pred_check
      _
    $region83: #{ae_forward.1} parent=1 // pred_check_branch
      %86 = sbr.rel (0) target = $region85
    $region84: #{ae_forward.1} parent=1 // pred_region
      _
    $region85: #{ae_forward.1} parent=1 // pred_fallthru
      _
    // Predicated region
    $region86: #{ae_forward.1} parent=1 // pred_check
      _
    $region87: #{ae_forward.1} parent=1 // pred_check_branch
      %88 = sbr.rel (0) target = $region89
    $region88: #{ae_forward.1} parent=1 // pred_region
      %90 = dma.done [#allocation10], 16
    $region89: #{ae_forward.1} parent=1 // pred_fallthru
      _
    // Predicated region
    $region90: #{ae_forward.1} parent=1 // pred_check
      _
    $region91: #{ae_forward.1} parent=1 // pred_check_branch
      %92 = sbr.rel (0) target = $region93
    $region92: #{ae_forward.1} parent=1 // pred_region
      %94 = dma.done [#allocation12], 16
    $region93: #{ae_forward.1} parent=1 // pred_fallthru
      _
    %95 = sfence
    %s96 = sld [smem:[#allocation9]]
    %s97 = sld [smem:[#allocation9 + $0x1]]
    %s98 = sld [smem:[#allocation11]]
    %s99 = sld [smem:[#allocation11 + $0x1]]
    %s100 = sld [smem:[#allocation11 + $0x2]]
    %s101 = sld [smem:[#allocation11 + $0x3]]
    %v102 = vld [vmem:[%s0] sm:$0xff]
    %v103 = vld [vmem:[%s0 + $0x8] sm:$0xff]
    %v104 = vld [vmem:[%s0 + $0x10] sm:$0xff]
    %v105 = vld [vmem:[%s0 + $0x18] sm:$0xff]
    %v106 = vld [vmem:[%s0 + $0x20] sm:$0xff]
    %v107 = vld [vmem:[%s0 + $0x28] sm:$0xff]
    %v108 = vld [vmem:[%s0 + $0x30] sm:$0xff]
    %v109 = vld [vmem:[%s0 + $0x38] sm:$0xff]
    %v110 = vld [vmem:[%s0 + $0x40] sm:$0xff]
    %v111 = vld [vmem:[%s0 + $0x48] sm:$0xff]
    %v112 = vld [vmem:[%s1] sm:$0xff]
    %v113 = vld [vmem:[%s1 + $0x8] sm:$0xff]
    %v114 = vld [vmem:[%s1 + $0x10] sm:$0xff]
    %v115 = vld [vmem:[%s1 + $0x18] sm:$0xff]
    %v116 = vld [vmem:[%s1 + $0x20] sm:$0xff]
    %v117 = vld [vmem:[%s1 + $0x28] sm:$0xff]
    %v118 = vld [vmem:[%s1 + $0x30] sm:$0xff]
    %v119 = vld [vmem:[%s1 + $0x38] sm:$0xff]
    %v120 = vld [vmem:[%s1 + $0x40] sm:$0xff]
    %v121 = vld [vmem:[%s1 + $0x48] sm:$0xff]
    %v122 = vld [vmem:[%s2] sm:$0xff]
    %v123 = vld [vmem:[%s2 + $0x8] sm:$0xff]
    %v124 = vld [vmem:[%s2 + $0x10] sm:$0xff]
    %v125 = vld [vmem:[%s2 + $0x18] sm:$0xff]
    %v126 = vld [vmem:[%s2 + $0x20] sm:$0xff]
    %v127 = vld [vmem:[%s2 + $0x28] sm:$0xff]
    %v128 = vld [vmem:[%s2 + $0x30] sm:$0xff]
    %v129 = vld [vmem:[%s2 + $0x38] sm:$0xff]
    %v130 = vld [vmem:[%s2 + $0x40] sm:$0xff]
    %v131 = vld [vmem:[%s2 + $0x48] sm:$0xff]
    %v132 = vadd.f32 %v112, %v122
    %v133 = vadd.f32 %v113, %v123
    %v134 = vadd.f32 %v114, %v124
    %v135 = vadd.f32 %v115, %v125
    %v136 = vadd.f32 %v116, %v126
    %v137 = vadd.f32 %v117, %v127
    %v138 = vadd.f32 %v118, %v128
    %v139 = vadd.f32 %v119, %v129
    %v140 = vadd.f32 %v120, %v130
    %v141 = vadd.f32 %v121, %v131
    %151 = vrot.lane.b32.xlu0 %v132, 127
    %v152 = vpop.permute.xlu0 %151
    %153 = vrot.lane.b32.xlu0 %v133, 127
    %v154 = vpop.permute.xlu0 %153
    %155 = vrot.lane.b32.xlu0 %v134, 127
    %v156 = vpop.permute.xlu0 %155
    %157 = vrot.lane.b32.xlu0 %v135, 127
    %v158 = vpop.permute.xlu0 %157
    %159 = vrot.lane.b32.xlu0 %v136, 127
    %v160 = vpop.permute.xlu0 %159
    %161 = vrot.lane.b32.xlu0 %v137, 127
    %v162 = vpop.permute.xlu0 %161
    %163 = vrot.lane.b32.xlu0 %v138, 127
    %v164 = vpop.permute.xlu0 %163
    %165 = vrot.lane.b32.xlu0 %v139, 127
    %v166 = vpop.permute.xlu0 %165
    %167 = vrot.lane.b32.xlu0 %v140, 127
    %v168 = vpop.permute.xlu0 %167
    %v178 = vmul.f32 %v102, 2.0
    %v179 = vmul.f32 %v103, 2.0
    %v180 = vmul.f32 %v104, 2.0
    %v181 = vmul.f32 %v105, 2.0
    %v182 = vmul.f32 %v106, 2.0
    %v183 = vmul.f32 %v107, 2.0
    %v184 = vmul.f32 %v108, 2.0
    %v185 = vmul.f32 %v109, 2.0
    %v186 = vmul.f32 %v110, 2.0
    %v187 = vmul.f32 %v111, 2.0
    %v188 = vsub.f32 %v178, 1.0
    %v189 = vsub.f32 %v179, 1.0
    %v190 = vsub.f32 %v180, 1.0
    %v191 = vsub.f32 %v181, 1.0
    %v192 = vsub.f32 %v182, 1.0
    %v193 = vsub.f32 %v183, 1.0
    %v194 = vsub.f32 %v184, 1.0
    %v195 = vsub.f32 %v185, 1.0
    %v196 = vsub.f32 %v186, 1.0
    %v197 = vsub.f32 %v187, 1.0
    %v198 = vsub.f32 0.0, %v188
    %v199 = vsub.f32 0.0, %v189
    %v200 = vsub.f32 0.0, %v190
    %v201 = vsub.f32 0.0, %v191
    %v202 = vsub.f32 0.0, %v192
    %v203 = vsub.f32 0.0, %v193
    %v204 = vsub.f32 0.0, %v194
    %v205 = vsub.f32 0.0, %v195
    %v206 = vsub.f32 0.0, %v196
    %v207 = vsub.f32 0.0, %v197
    %v208 = vmul.f32 %v198, %v132
    %v209 = vmul.f32 %v199, %v133
    %v210 = vmul.f32 %v200, %v134
    %v211 = vmul.f32 %v201, %v135
    %v212 = vmul.f32 %v202, %v136
    %v213 = vmul.f32 %v203, %v137
    %v214 = vmul.f32 %v204, %v138
    %v215 = vmul.f32 %v205, %v139
    %v216 = vmul.f32 %v206, %v140
    %v217 = vmul.f32 %v207, %v141
    %vm218 = vcmp.gt.f32.partialorder %v208, 0.0
    %vm219 = vcmp.gt.f32.partialorder %v209, 0.0
    %vm220 = vcmp.gt.f32.partialorder %v210, 0.0
    %vm221 = vcmp.gt.f32.partialorder %v211, 0.0
    %vm222 = vcmp.gt.f32.partialorder %v212, 0.0
    %vm223 = vcmp.gt.f32.partialorder %v213, 0.0
    %vm224 = vcmp.gt.f32.partialorder %v214, 0.0
    %vm225 = vcmp.gt.f32.partialorder %v215, 0.0
    %vm226 = vcmp.gt.f32.partialorder %v216, 0.0
    %vm227 = vcmp.gt.f32.partialorder %v217, 0.0
    %v228 = vsel %vm218, 1, 0
    %v229 = vsel %vm219, 1, 0
    %v230 = vsel %vm220, 1, 0
    %v231 = vsel %vm221, 1, 0
    %v232 = vsel %vm222, 1, 0
    %v233 = vsel %vm223, 1, 0
    %v234 = vsel %vm224, 1, 0
    %v235 = vsel %vm225, 1, 0
    %v236 = vsel %vm226, 1, 0
    %v237 = vsel %vm227, 1, 0
    %v238 = vcvt.s32.f32 %v228
    %v239 = vcvt.s32.f32 %v229
    %v240 = vcvt.s32.f32 %v230
    %v241 = vcvt.s32.f32 %v231
    %v242 = vcvt.s32.f32 %v232
    %v243 = vcvt.s32.f32 %v233
    %v244 = vcvt.s32.f32 %v234
    %v245 = vcvt.s32.f32 %v235
    %v246 = vcvt.s32.f32 %v236
    %v247 = vcvt.s32.f32 %v237
    %v248 = vstv %s96
    %v249 = vmul.f32 %v248, %v132
    %v250 = vmul.f32 %v248, %v133
    %v251 = vmul.f32 %v248, %v134
    %v252 = vmul.f32 %v248, %v135
    %v253 = vmul.f32 %v248, %v136
    %v254 = vmul.f32 %v248, %v137
    %v255 = vmul.f32 %v248, %v138
    %v256 = vmul.f32 %v248, %v139
    %v257 = vmul.f32 %v248, %v140
    %v258 = vmul.f32 %v248, %v141
    %v259 = vmul.f32 %v249, %v238
    %v260 = vmul.f32 %v250, %v239
    %v261 = vmul.f32 %v251, %v240
    %v262 = vmul.f32 %v252, %v241
    %v263 = vmul.f32 %v253, %v242
    %v264 = vmul.f32 %v254, %v243
    %v265 = vmul.f32 %v255, %v244
    %v266 = vmul.f32 %v256, %v245
    %v267 = vmul.f32 %v257, %v246
    %v268 = vmul.f32 %v258, %v247
    %s269 = ssub.f32 0.0, %s98
    %v270 = vstv %s269
    %v271 = vmul.f32 %v270, 0.0
    %v272 = vmul.f32 %v270, %v112
    %v273 = vmul.f32 %v270, %v113
    %v274 = vmul.f32 %v270, %v114
    %v275 = vmul.f32 %v270, %v115
    %v276 = vmul.f32 %v270, %v116
    %v277 = vmul.f32 %v270, %v117
    %v278 = vmul.f32 %v270, %v118
    %v279 = vmul.f32 %v270, %v119
    %v280 = vmul.f32 %v270, %v120
    %v281 = vstv %s99
    %v282 = vmul.f32 %v281, 0.0
    %v283 = vmul.f32 %v281, %v152
    %v284 = vmul.f32 %v281, %v154
    %v285 = vmul.f32 %v281, %v156
    %v286 = vmul.f32 %v281, %v158
    %v287 = vmul.f32 %v281, %v160
    %v288 = vmul.f32 %v281, %v162
    %v289 = vmul.f32 %v281, %v164
    %v290 = vmul.f32 %v281, %v166
    %v291 = vmul.f32 %v281, %v168
    %v292 = vadd.f32 %v271, %v282
    %v293 = vadd.f32 %v272, %v283
    %v294 = vadd.f32 %v273, %v284
    %v295 = vadd.f32 %v274, %v285
    %v296 = vadd.f32 %v275, %v286
    %v297 = vadd.f32 %v276, %v287
    %v298 = vadd.f32 %v277, %v288
    %v299 = vadd.f32 %v278, %v289
    %v300 = vadd.f32 %v279, %v290
    %v301 = vadd.f32 %v280, %v291
    %v302 = vstv %s100
    %v303 = vmul.f32 %v302, 0.0
    %v304 = vmul.f32 %v302, %v152
    %v305 = vmul.f32 %v302, %v154
    %v306 = vmul.f32 %v302, %v156
    %v307 = vmul.f32 %v302, %v158
    %v308 = vmul.f32 %v302, %v160
    %v309 = vmul.f32 %v302, %v162
    %v310 = vmul.f32 %v302, %v164
    %v311 = vmul.f32 %v302, %v166
    %v312 = vmul.f32 %v302, %v168
    %323 = vrot.lane.b32.xlu0 %v303, 127
    %v324 = vpop.permute.xlu0 %323
    %325 = vrot.lane.b32.xlu0 %v304, 127
    %v326 = vpop.permute.xlu0 %325
    %327 = vrot.lane.b32.xlu0 %v305, 127
    %v328 = vpop.permute.xlu0 %327
    %329 = vrot.lane.b32.xlu0 %v306, 127
    %v330 = vpop.permute.xlu0 %329
    %331 = vrot.lane.b32.xlu0 %v307, 127
    %v332 = vpop.permute.xlu0 %331
    %333 = vrot.lane.b32.xlu0 %v308, 127
    %v334 = vpop.permute.xlu0 %333
    %335 = vrot.lane.b32.xlu0 %v309, 127
    %v336 = vpop.permute.xlu0 %335
    %337 = vrot.lane.b32.xlu0 %v310, 127
    %v338 = vpop.permute.xlu0 %337
    %339 = vrot.lane.b32.xlu0 %v311, 127
    %v340 = vpop.permute.xlu0 %339
    %341 = vrot.lane.b32.xlu0 %v312, 127
    %v342 = vpop.permute.xlu0 %341
    %v353 = vsub.f32 %v292, %v324
    %v354 = vsub.f32 %v293, %v326
    %v355 = vsub.f32 %v294, %v328
    %v356 = vsub.f32 %v295, %v330
    %v357 = vsub.f32 %v296, %v332
    %v358 = vsub.f32 %v297, %v334
    %v359 = vsub.f32 %v298, %v336
    %v360 = vsub.f32 %v299, %v338
    %v361 = vsub.f32 %v300, %v340
    %v362 = vsub.f32 %v301, %v342
    %vm363 = vcmp.eq.f32.partialorder 0.0, 0.0
    %vm364 = vcmp.eq.f32.partialorder %v102, 0.0
    %vm365 = vcmp.eq.f32.partialorder %v103, 0.0
    %vm366 = vcmp.eq.f32.partialorder %v104, 0.0
    %vm367 = vcmp.eq.f32.partialorder %v105, 0.0
    %vm368 = vcmp.eq.f32.partialorder %v106, 0.0
    %vm369 = vcmp.eq.f32.partialorder %v107, 0.0
    %vm370 = vcmp.eq.f32.partialorder %v108, 0.0
    %vm371 = vcmp.eq.f32.partialorder %v109, 0.0
    %vm372 = vcmp.eq.f32.partialorder %v110, 0.0
    %v373 = vstv %s101
    %v374 = vadd.f32 %v353, %v373
    %v375 = vadd.f32 %v354, %v373
    %v376 = vadd.f32 %v355, %v373
    %v377 = vadd.f32 %v356, %v373
    %v378 = vadd.f32 %v357, %v373
    %v379 = vadd.f32 %v358, %v373
    %v380 = vadd.f32 %v359, %v373
    %v381 = vadd.f32 %v360, %v373
    %v382 = vadd.f32 %v361, %v373
    %v383 = vadd.f32 %v362, %v373
    %v384 = vtanh.pop %v374
    %v385 = vtanh.pop %v375
    %v386 = vtanh.pop %v376
    %v387 = vtanh.pop %v377
    %v388 = vtanh.pop %v378
    %v389 = vtanh.pop %v379
    %v390 = vtanh.pop %v380
    %v391 = vtanh.pop %v381
    %v392 = vtanh.pop %v382
    %v393 = vtanh.pop %v383
    %v394 = vsel %vm363, %v384, 1.0
    %v395 = vsel %vm364, %v385, 1.0
    %v396 = vsel %vm365, %v386, 1.0
    %v397 = vsel %vm366, %v387, 1.0
    %v398 = vsel %vm367, %v388, 1.0
    %v399 = vsel %vm368, %v389, 1.0
    %v400 = vsel %vm369, %v390, 1.0
    %v401 = vsel %vm370, %v391, 1.0
    %v402 = vsel %vm371, %v392, 1.0
    %v403 = vsel %vm372, %v393, 1.0
    %vm404 = vcmp.eq.f32.partialorder 0.0, 1.0
    %vm405 = vcmp.eq.f32.partialorder %v102, 1.0
    %vm406 = vcmp.eq.f32.partialorder %v103, 1.0
    %vm407 = vcmp.eq.f32.partialorder %v104, 1.0
    %vm408 = vcmp.eq.f32.partialorder %v105, 1.0
    %vm409 = vcmp.eq.f32.partialorder %v106, 1.0
    %vm410 = vcmp.eq.f32.partialorder %v107, 1.0
    %vm411 = vcmp.eq.f32.partialorder %v108, 1.0
    %vm412 = vcmp.eq.f32.partialorder %v109, 1.0
    %vm413 = vcmp.eq.f32.partialorder %v110, 1.0
    %v414 = vsub.f32 %v353, %v373
    %v415 = vsub.f32 %v354, %v373
    %v416 = vsub.f32 %v355, %v373
    %v417 = vsub.f32 %v356, %v373
    %v418 = vsub.f32 %v357, %v373
    %v419 = vsub.f32 %v358, %v373
    %v420 = vsub.f32 %v359, %v373
    %v421 = vsub.f32 %v360, %v373
    %v422 = vsub.f32 %v361, %v373
    %v423 = vsub.f32 %v362, %v373
    %v424 = vtanh.pop %v414
    %v425 = vtanh.pop %v415
    %v426 = vtanh.pop %v416
    %v427 = vtanh.pop %v417
    %v428 = vtanh.pop %v418
    %v429 = vtanh.pop %v419
    %v430 = vtanh.pop %v420
    %v431 = vtanh.pop %v421
    %v432 = vtanh.pop %v422
    %v433 = vtanh.pop %v423
    %v434 = vsel %vm404, %v424, -1.0
    %v435 = vsel %vm405, %v425, -1.0
    %v436 = vsel %vm406, %v426, -1.0
    %v437 = vsel %vm407, %v427, -1.0
    %v438 = vsel %vm408, %v428, -1.0
    %v439 = vsel %vm409, %v429, -1.0
    %v440 = vsel %vm410, %v430, -1.0
    %v441 = vsel %vm411, %v431, -1.0
    %v442 = vsel %vm412, %v432, -1.0
    %v443 = vsel %vm413, %v433, -1.0
    %v444 = vsel 1, 1.0, %v394
    %v445 = vsel 0, 1.0, %v395
    %v446 = vsel 0, 1.0, %v396
    %v447 = vsel 0, 1.0, %v397
    %v448 = vsel 0, 1.0, %v398
    %v449 = vsel 0, 1.0, %v399
    %v450 = vsel 0, 1.0, %v400
    %v451 = vsel 0, 1.0, %v401
    %v452 = vsel 0, 1.0, %v402
    %v453 = vsel 0, 1.0, %v403
    %v454 = vsel 1, -1.0, %v434
    %v455 = vsel 0, -1.0, %v435
    %v456 = vsel 0, -1.0, %v436
    %v457 = vsel 0, -1.0, %v437
    %v458 = vsel 0, -1.0, %v438
    %v459 = vsel 0, -1.0, %v439
    %v460 = vsel 0, -1.0, %v440
    %v461 = vsel 0, -1.0, %v441
    %v462 = vsel 0, -1.0, %v442
    %v463 = vsel 0, -1.0, %v443
    %v464 = vstv %s97
    %v465 = vmul.f32 %v464, %v444
    %v466 = vmul.f32 %v464, %v445
    %v467 = vmul.f32 %v464, %v446
    %v468 = vmul.f32 %v464, %v447
    %v469 = vmul.f32 %v464, %v448
    %v470 = vmul.f32 %v464, %v449
    %v471 = vmul.f32 %v464, %v450
    %v472 = vmul.f32 %v464, %v451
    %v473 = vmul.f32 %v464, %v452
    %v474 = vmul.f32 %v464, %v453
    %v475 = vmul.f32 %v464, %v454
    %v476 = vmul.f32 %v464, %v455
    %v477 = vmul.f32 %v464, %v456
    %v478 = vmul.f32 %v464, %v457
    %v479 = vmul.f32 %v464, %v458
    %v480 = vmul.f32 %v464, %v459
    %v481 = vmul.f32 %v464, %v460
    %v482 = vmul.f32 %v464, %v461
    %v483 = vmul.f32 %v464, %v462
    %v484 = vmul.f32 %v464, %v463
    %v485 = vadd.f32 %v465, %v475
    %v486 = vadd.f32 %v466, %v476
    %v487 = vadd.f32 %v467, %v477
    %v488 = vadd.f32 %v468, %v478
    %v489 = vadd.f32 %v469, %v479
    %v490 = vadd.f32 %v470, %v480
    %v491 = vadd.f32 %v471, %v481
    %v492 = vadd.f32 %v472, %v482
    %v493 = vadd.f32 %v473, %v483
    %v494 = vadd.f32 %v474, %v484
    %v495 = vsub.f32 %v259, %v485
    %v496 = vsub.f32 %v260, %v486
    %v497 = vsub.f32 %v261, %v487
    %v498 = vsub.f32 %v262, %v488
    %v499 = vsub.f32 %v263, %v489
    %v500 = vsub.f32 %v264, %v490
    %v501 = vsub.f32 %v265, %v491
    %v502 = vsub.f32 %v266, %v492
    %v503 = vsub.f32 %v267, %v493
    %v504 = vsub.f32 %v268, %v494
    %v505 = vsub.f32 0.0, %v259
    %v506 = vsub.f32 0.0, %v260
    %v507 = vsub.f32 0.0, %v261
    %v508 = vsub.f32 0.0, %v262
    %v509 = vsub.f32 0.0, %v263
    %v510 = vsub.f32 0.0, %v264
    %v511 = vsub.f32 0.0, %v265
    %v512 = vsub.f32 0.0, %v266
    %v513 = vsub.f32 0.0, %v267
    %v514 = vsub.f32 0.0, %v268
    %v515 = vsub.f32 %v505, %v485
    %v516 = vsub.f32 %v506, %v486
    %v517 = vsub.f32 %v507, %v487
    %v518 = vsub.f32 %v508, %v488
    %v519 = vsub.f32 %v509, %v489
    %v520 = vsub.f32 %v510, %v490
    %v521 = vsub.f32 %v511, %v491
    %v522 = vsub.f32 %v512, %v492
    %v523 = vsub.f32 %v513, %v493
    %v524 = vsub.f32 %v514, %v494
    %vm525 = vcmask 7168
    %v526 = vsel %vm525, %v495, 0.0
    %v527 = vrot.slane %v526, 4
    %v528 = vadd.f32 %v526, %v527
    %v529 = vrot.slane %v528, 2
    %v530 = vadd.f32 %v528, %v529
    %v531 = vrot.slane %v530, 1
    %v532 = vadd.f32 %v530, %v531
    %v533 = vsel %vm525, %v496, 0.0
    %v534 = vrot.slane %v533, 4
    %v535 = vadd.f32 %v533, %v534
    %v536 = vrot.slane %v535, 2
    %v537 = vadd.f32 %v535, %v536
    %v538 = vrot.slane %v537, 1
    %v539 = vadd.f32 %v537, %v538
    %v540 = vsel %vm525, %v497, 0.0
    %v541 = vrot.slane %v540, 4
    %v542 = vadd.f32 %v540, %v541
    %v543 = vrot.slane %v542, 2
    %v544 = vadd.f32 %v542, %v543
    %v545 = vrot.slane %v544, 1
    %v546 = vadd.f32 %v544, %v545
    %v547 = vsel %vm525, %v498, 0.0
    %v548 = vrot.slane %v547, 4
    %v549 = vadd.f32 %v547, %v548
    %v550 = vrot.slane %v549, 2
    %v551 = vadd.f32 %v549, %v550
    %v552 = vrot.slane %v551, 1
    %v553 = vadd.f32 %v551, %v552
    %v554 = vsel %vm525, %v499, 0.0
    %v555 = vrot.slane %v554, 4
    %v556 = vadd.f32 %v554, %v555
    %v557 = vrot.slane %v556, 2
    %v558 = vadd.f32 %v556, %v557
    %v559 = vrot.slane %v558, 1
    %v560 = vadd.f32 %v558, %v559
    %v561 = vsel %vm525, %v500, 0.0
    %v562 = vrot.slane %v561, 4
    %v563 = vadd.f32 %v561, %v562
    %v564 = vrot.slane %v563, 2
    %v565 = vadd.f32 %v563, %v564
    %v566 = vrot.slane %v565, 1
    %v567 = vadd.f32 %v565, %v566
    %v568 = vsel %vm525, %v501, 0.0
    %v569 = vrot.slane %v568, 4
    %v570 = vadd.f32 %v568, %v569
    %v571 = vrot.slane %v570, 2
    %v572 = vadd.f32 %v570, %v571
    %v573 = vrot.slane %v572, 1
    %v574 = vadd.f32 %v572, %v573
    %v575 = vsel %vm525, %v502, 0.0
    %v576 = vrot.slane %v575, 4
    %v577 = vadd.f32 %v575, %v576
    %v578 = vrot.slane %v577, 2
    %v579 = vadd.f32 %v577, %v578
    %v580 = vrot.slane %v579, 1
    %v581 = vadd.f32 %v579, %v580
    %v582 = vsel %vm525, %v503, 0.0
    %v583 = vrot.slane %v582, 4
    %v584 = vadd.f32 %v582, %v583
    %v585 = vrot.slane %v584, 2
    %v586 = vadd.f32 %v584, %v585
    %v587 = vrot.slane %v586, 1
    %v588 = vadd.f32 %v586, %v587
    %v589 = vsel %vm525, %v504, 0.0
    %v590 = vrot.slane %v589, 4
    %v591 = vadd.f32 %v589, %v590
    %v592 = vrot.slane %v591, 2
    %v593 = vadd.f32 %v591, %v592
    %v594 = vrot.slane %v593, 1
    %v595 = vadd.f32 %v593, %v594
    %v596 = vrcp.pop 8.0
    %v597 = vmul.f32 8.0, %v596
    %v598 = vsub.f32 1.0, %v597
    %v599 = vmul.f32 %v596, %v598
    %v600 = vadd.f32 %v596, %v599
    %vm601 = vweird.f32 %v596
    %v602 = vsel %vm601, %v596, %v600
    %v603 = vmul.f32 %v532, %v602
    %v604 = vmul.f32 %v539, %v602
    %v605 = vmul.f32 %v546, %v602
    %v606 = vmul.f32 %v553, %v602
    %v607 = vmul.f32 %v560, %v602
    %v608 = vmul.f32 %v567, %v602
    %v609 = vmul.f32 %v574, %v602
    %v610 = vmul.f32 %v581, %v602
    %v611 = vmul.f32 %v588, %v602
    %v612 = vmul.f32 %v595, %v602
    %v613 = vsub.f32 %v495, %v603
    %v614 = vsub.f32 %v496, %v604
    %v615 = vsub.f32 %v497, %v605
    %v616 = vsub.f32 %v498, %v606
    %v617 = vsub.f32 %v499, %v607
    %v618 = vsub.f32 %v500, %v608
    %v619 = vsub.f32 %v501, %v609
    %v620 = vsub.f32 %v502, %v610
    %v621 = vsub.f32 %v503, %v611
    %v622 = vsub.f32 %v504, %v612
    %v623 = vmul.f32 %v613, %v613
    %v624 = vmul.f32 %v614, %v614
    %v625 = vmul.f32 %v615, %v615
    %v626 = vmul.f32 %v616, %v616
    %v627 = vmul.f32 %v617, %v617
    %v628 = vmul.f32 %v618, %v618
    %v629 = vmul.f32 %v619, %v619
    %v630 = vmul.f32 %v620, %v620
    %v631 = vmul.f32 %v621, %v621
    %v632 = vmul.f32 %v622, %v622
    %v633 = vsel %vm525, %v623, 0.0
    %v634 = vrot.slane %v633, 4
    %v635 = vadd.f32 %v633, %v634
    %v636 = vrot.slane %v635, 2
    %v637 = vadd.f32 %v635, %v636
    %v638 = vrot.slane %v637, 1
    %v639 = vadd.f32 %v637, %v638
    %v640 = vsel %vm525, %v624, 0.0
    %v641 = vrot.slane %v640, 4
    %v642 = vadd.f32 %v640, %v641
    %v643 = vrot.slane %v642, 2
    %v644 = vadd.f32 %v642, %v643
    %v645 = vrot.slane %v644, 1
    %v646 = vadd.f32 %v644, %v645
    %v647 = vsel %vm525, %v625, 0.0
    %v648 = vrot.slane %v647, 4
    %v649 = vadd.f32 %v647, %v648
    %v650 = vrot.slane %v649, 2
    %v651 = vadd.f32 %v649, %v650
    %v652 = vrot.slane %v651, 1
    %v653 = vadd.f32 %v651, %v652
    %v654 = vsel %vm525, %v626, 0.0
    %v655 = vrot.slane %v654, 4
    %v656 = vadd.f32 %v654, %v655
    %v657 = vrot.slane %v656, 2
    %v658 = vadd.f32 %v656, %v657
    %v659 = vrot.slane %v658, 1
    %v660 = vadd.f32 %v658, %v659
    %v661 = vsel %vm525, %v627, 0.0
    %v662 = vrot.slane %v661, 4
    %v663 = vadd.f32 %v661, %v662
    %v664 = vrot.slane %v663, 2
    %v665 = vadd.f32 %v663, %v664
    %v666 = vrot.slane %v665, 1
    %v667 = vadd.f32 %v665, %v666
    %v668 = vsel %vm525, %v628, 0.0
    %v669 = vrot.slane %v668, 4
    %v670 = vadd.f32 %v668, %v669
    %v671 = vrot.slane %v670, 2
    %v672 = vadd.f32 %v670, %v671
    %v673 = vrot.slane %v672, 1
    %v674 = vadd.f32 %v672, %v673
    %v675 = vsel %vm525, %v629, 0.0
    %v676 = vrot.slane %v675, 4
    %v677 = vadd.f32 %v675, %v676
    %v678 = vrot.slane %v677, 2
    %v679 = vadd.f32 %v677, %v678
    %v680 = vrot.slane %v679, 1
    %v681 = vadd.f32 %v679, %v680
    %v682 = vsel %vm525, %v630, 0.0
    %v683 = vrot.slane %v682, 4
    %v684 = vadd.f32 %v682, %v683
    %v685 = vrot.slane %v684, 2
    %v686 = vadd.f32 %v684, %v685
    %v687 = vrot.slane %v686, 1
    %v688 = vadd.f32 %v686, %v687
    %v689 = vsel %vm525, %v631, 0.0
    %v690 = vrot.slane %v689, 4
    %v691 = vadd.f32 %v689, %v690
    %v692 = vrot.slane %v691, 2
    %v693 = vadd.f32 %v691, %v692
    %v694 = vrot.slane %v693, 1
    %v695 = vadd.f32 %v693, %v694
    %v696 = vsel %vm525, %v632, 0.0
    %v697 = vrot.slane %v696, 4
    %v698 = vadd.f32 %v696, %v697
    %v699 = vrot.slane %v698, 2
    %v700 = vadd.f32 %v698, %v699
    %v701 = vrot.slane %v700, 1
    %v702 = vadd.f32 %v700, %v701
    %v703 = vrcp.pop 7.0
    %v704 = vmul.f32 7.0, %v703
    %v705 = vsub.f32 1.0, %v704
    %v706 = vmul.f32 %v703, %v705
    %v707 = vadd.f32 %v703, %v706
    %vm708 = vweird.f32 %v703
    %v709 = vsel %vm708, %v703, %v707
    %v710 = vmul.f32 %v639, %v709
    %v711 = vmul.f32 %v646, %v709
    %v712 = vmul.f32 %v653, %v709
    %v713 = vmul.f32 %v660, %v709
    %v714 = vmul.f32 %v667, %v709
    %v715 = vmul.f32 %v674, %v709
    %v716 = vmul.f32 %v681, %v709
    %v717 = vmul.f32 %v688, %v709
    %v718 = vmul.f32 %v695, %v709
    %v719 = vmul.f32 %v702, %v709
    %v720 = vrsqrt.pop %v710
    %v721 = vmul.f32 %v720, %v710
    %v722 = vmul.f32 %v721, %v720
    %v723 = vmul.f32 0.5, %v722
    %v724 = vsub.f32 1.5, %v723
    %v725 = vmul.f32 %v720, %v724
    %v726 = vmul.f32 %v710, %v725
    %vm727 = vcmp.eq.f32.partialorder %v710, inf
    %v728 = vsel %vm727, %v710, %v726
    %vm729 = vcmp.eq.f32.partialorder %v710, 0.0
    %v730 = vand.u32 %v710, 2147483648
    %v731 = vsel %vm729, %v730, %v728
    %v732 = vrsqrt.pop %v711
    %v733 = vmul.f32 %v732, %v711
    %v734 = vmul.f32 %v733, %v732
    %v735 = vmul.f32 0.5, %v734
    %v736 = vsub.f32 1.5, %v735
    %v737 = vmul.f32 %v732, %v736
    %v738 = vmul.f32 %v711, %v737
    %vm739 = vcmp.eq.f32.partialorder %v711, inf
    %v740 = vsel %vm739, %v711, %v738
    %vm741 = vcmp.eq.f32.partialorder %v711, 0.0
    %v742 = vand.u32 %v711, 2147483648
    %v743 = vsel %vm741, %v742, %v740
    %v744 = vrsqrt.pop %v712
    %v745 = vmul.f32 %v744, %v712
    %v746 = vmul.f32 %v745, %v744
    %v747 = vmul.f32 0.5, %v746
    %v748 = vsub.f32 1.5, %v747
    %v749 = vmul.f32 %v744, %v748
    %v750 = vmul.f32 %v712, %v749
    %vm751 = vcmp.eq.f32.partialorder %v712, inf
    %v752 = vsel %vm751, %v712, %v750
    %vm753 = vcmp.eq.f32.partialorder %v712, 0.0
    %v754 = vand.u32 %v712, 2147483648
    %v755 = vsel %vm753, %v754, %v752
    %v756 = vrsqrt.pop %v713
    %v757 = vmul.f32 %v756, %v713
    %v758 = vmul.f32 %v757, %v756
    %v759 = vmul.f32 0.5, %v758
    %v760 = vsub.f32 1.5, %v759
    %v761 = vmul.f32 %v756, %v760
    %v762 = vmul.f32 %v713, %v761
    %vm763 = vcmp.eq.f32.partialorder %v713, inf
    %v764 = vsel %vm763, %v713, %v762
    %vm765 = vcmp.eq.f32.partialorder %v713, 0.0
    %v766 = vand.u32 %v713, 2147483648
    %v767 = vsel %vm765, %v766, %v764
    %v768 = vrsqrt.pop %v714
    %v769 = vmul.f32 %v768, %v714
    %v770 = vmul.f32 %v769, %v768
    %v771 = vmul.f32 0.5, %v770
    %v772 = vsub.f32 1.5, %v771
    %v773 = vmul.f32 %v768, %v772
    %v774 = vmul.f32 %v714, %v773
    %vm775 = vcmp.eq.f32.partialorder %v714, inf
    %v776 = vsel %vm775, %v714, %v774
    %vm777 = vcmp.eq.f32.partialorder %v714, 0.0
    %v778 = vand.u32 %v714, 2147483648
    %v779 = vsel %vm777, %v778, %v776
    %v780 = vrsqrt.pop %v715
    %v781 = vmul.f32 %v780, %v715
    %v782 = vmul.f32 %v781, %v780
    %v783 = vmul.f32 0.5, %v782
    %v784 = vsub.f32 1.5, %v783
    %v785 = vmul.f32 %v780, %v784
    %v786 = vmul.f32 %v715, %v785
    %vm787 = vcmp.eq.f32.partialorder %v715, inf
    %v788 = vsel %vm787, %v715, %v786
    %vm789 = vcmp.eq.f32.partialorder %v715, 0.0
    %v790 = vand.u32 %v715, 2147483648
    %v791 = vsel %vm789, %v790, %v788
    %v792 = vrsqrt.pop %v716
    %v793 = vmul.f32 %v792, %v716
    %v794 = vmul.f32 %v793, %v792
    %v795 = vmul.f32 0.5, %v794
    %v796 = vsub.f32 1.5, %v795
    %v797 = vmul.f32 %v792, %v796
    %v798 = vmul.f32 %v716, %v797
    %vm799 = vcmp.eq.f32.partialorder %v716, inf
    %v800 = vsel %vm799, %v716, %v798
    %vm801 = vcmp.eq.f32.partialorder %v716, 0.0
    %v802 = vand.u32 %v716, 2147483648
    %v803 = vsel %vm801, %v802, %v800
    %v804 = vrsqrt.pop %v717
    %v805 = vmul.f32 %v804, %v717
    %v806 = vmul.f32 %v805, %v804
    %v807 = vmul.f32 0.5, %v806
    %v808 = vsub.f32 1.5, %v807
    %v809 = vmul.f32 %v804, %v808
    %v810 = vmul.f32 %v717, %v809
    %vm811 = vcmp.eq.f32.partialorder %v717, inf
    %v812 = vsel %vm811, %v717, %v810
    %vm813 = vcmp.eq.f32.partialorder %v717, 0.0
    %v814 = vand.u32 %v717, 2147483648
    %v815 = vsel %vm813, %v814, %v812
    %v816 = vrsqrt.pop %v718
    %v817 = vmul.f32 %v816, %v718
    %v818 = vmul.f32 %v817, %v816
    %v819 = vmul.f32 0.5, %v818
    %v820 = vsub.f32 1.5, %v819
    %v821 = vmul.f32 %v816, %v820
    %v822 = vmul.f32 %v718, %v821
    %vm823 = vcmp.eq.f32.partialorder %v718, inf
    %v824 = vsel %vm823, %v718, %v822
    %vm825 = vcmp.eq.f32.partialorder %v718, 0.0
    %v826 = vand.u32 %v718, 2147483648
    %v827 = vsel %vm825, %v826, %v824
    %v828 = vrsqrt.pop %v719
    %v829 = vmul.f32 %v828, %v719
    %v830 = vmul.f32 %v829, %v828
    %v831 = vmul.f32 0.5, %v830
    %v832 = vsub.f32 1.5, %v831
    %v833 = vmul.f32 %v828, %v832
    %v834 = vmul.f32 %v719, %v833
    %vm835 = vcmp.eq.f32.partialorder %v719, inf
    %v836 = vsel %vm835, %v719, %v834
    %vm837 = vcmp.eq.f32.partialorder %v719, 0.0
    %v838 = vand.u32 %v719, 2147483648
    %v839 = vsel %vm837, %v838, %v836
    %v840 = vrcp.pop %v731
    %v841 = vmul.f32 %v731, %v840
    %v842 = vsub.f32 1.0, %v841
    %v843 = vmul.f32 %v840, %v842
    %v844 = vadd.f32 %v840, %v843
    %vm845 = vweird.f32 %v731
    %vm846 = vweird.f32 %v840
    %vm847 = vmor %vm845, %vm846
    %v848 = vsel %vm847, %v840, %v844
    %v849 = vand.u32 2147483647, %v731
    %vm850 = vcmp.eq.f32.partialorder %v849, 8.507059e+37
    %v851 = vand.u32 %v731, 2147483648
    %v852 = vor.u32 1.1754944e-38, %v851
    %v853 = vsel %vm850, %v852, %v848
    %v854 = vmul.f32 %v613, %v853
    %v855 = vrcp.pop %v743
    %v856 = vmul.f32 %v743, %v855
    %v857 = vsub.f32 1.0, %v856
    %v858 = vmul.f32 %v855, %v857
    %v859 = vadd.f32 %v855, %v858
    %vm860 = vweird.f32 %v743
    %vm861 = vweird.f32 %v855
    %vm862 = vmor %vm860, %vm861
    %v863 = vsel %vm862, %v855, %v859
    %v864 = vand.u32 2147483647, %v743
    %vm865 = vcmp.eq.f32.partialorder %v864, 8.507059e+37
    %v866 = vand.u32 %v743, 2147483648
    %v867 = vor.u32 1.1754944e-38, %v866
    %v868 = vsel %vm865, %v867, %v863
    %v869 = vmul.f32 %v614, %v868
    %v870 = vrcp.pop %v755
    %v871 = vmul.f32 %v755, %v870
    %v872 = vsub.f32 1.0, %v871
    %v873 = vmul.f32 %v870, %v872
    %v874 = vadd.f32 %v870, %v873
    %vm875 = vweird.f32 %v755
    %vm876 = vweird.f32 %v870
    %vm877 = vmor %vm875, %vm876
    %v878 = vsel %vm877, %v870, %v874
    %v879 = vand.u32 2147483647, %v755
    %vm880 = vcmp.eq.f32.partialorder %v879, 8.507059e+37
    %v881 = vand.u32 %v755, 2147483648
    %v882 = vor.u32 1.1754944e-38, %v881
    %v883 = vsel %vm880, %v882, %v878
    %v884 = vmul.f32 %v615, %v883
    %v885 = vrcp.pop %v767
    %v886 = vmul.f32 %v767, %v885
    %v887 = vsub.f32 1.0, %v886
    %v888 = vmul.f32 %v885, %v887
    %v889 = vadd.f32 %v885, %v888
    %vm890 = vweird.f32 %v767
    %vm891 = vweird.f32 %v885
    %vm892 = vmor %vm890, %vm891
    %v893 = vsel %vm892, %v885, %v889
    %v894 = vand.u32 2147483647, %v767
    %vm895 = vcmp.eq.f32.partialorder %v894, 8.507059e+37
    %v896 = vand.u32 %v767, 2147483648
    %v897 = vor.u32 1.1754944e-38, %v896
    %v898 = vsel %vm895, %v897, %v893
    %v899 = vmul.f32 %v616, %v898
    %v900 = vrcp.pop %v779
    %v901 = vmul.f32 %v779, %v900
    %v902 = vsub.f32 1.0, %v901
    %v903 = vmul.f32 %v900, %v902
    %v904 = vadd.f32 %v900, %v903
    %vm905 = vweird.f32 %v779
    %vm906 = vweird.f32 %v900
    %vm907 = vmor %vm905, %vm906
    %v908 = vsel %vm907, %v900, %v904
    %v909 = vand.u32 2147483647, %v779
    %vm910 = vcmp.eq.f32.partialorder %v909, 8.507059e+37
    %v911 = vand.u32 %v779, 2147483648
    %v912 = vor.u32 1.1754944e-38, %v911
    %v913 = vsel %vm910, %v912, %v908
    %v914 = vmul.f32 %v617, %v913
    %v915 = vrcp.pop %v791
    %v916 = vmul.f32 %v791, %v915
    %v917 = vsub.f32 1.0, %v916
    %v918 = vmul.f32 %v915, %v917
    %v919 = vadd.f32 %v915, %v918
    %vm920 = vweird.f32 %v791
    %vm921 = vweird.f32 %v915
    %vm922 = vmor %vm920, %vm921
    %v923 = vsel %vm922, %v915, %v919
    %v924 = vand.u32 2147483647, %v791
    %vm925 = vcmp.eq.f32.partialorder %v924, 8.507059e+37
    %v926 = vand.u32 %v791, 2147483648
    %v927 = vor.u32 1.1754944e-38, %v926
    %v928 = vsel %vm925, %v927, %v923
    %v929 = vmul.f32 %v618, %v928
    %v930 = vrcp.pop %v803
    %v931 = vmul.f32 %v803, %v930
    %v932 = vsub.f32 1.0, %v931
    %v933 = vmul.f32 %v930, %v932
    %v934 = vadd.f32 %v930, %v933
    %vm935 = vweird.f32 %v803
    %vm936 = vweird.f32 %v930
    %vm937 = vmor %vm935, %vm936
    %v938 = vsel %vm937, %v930, %v934
    %v939 = vand.u32 2147483647, %v803
    %vm940 = vcmp.eq.f32.partialorder %v939, 8.507059e+37
    %v941 = vand.u32 %v803, 2147483648
    %v942 = vor.u32 1.1754944e-38, %v941
    %v943 = vsel %vm940, %v942, %v938
    %v944 = vmul.f32 %v619, %v943
    %v945 = vrcp.pop %v815
    %v946 = vmul.f32 %v815, %v945
    %v947 = vsub.f32 1.0, %v946
    %v948 = vmul.f32 %v945, %v947
    %v949 = vadd.f32 %v945, %v948
    %vm950 = vweird.f32 %v815
    %vm951 = vweird.f32 %v945
    %vm952 = vmor %vm950, %vm951
    %v953 = vsel %vm952, %v945, %v949
    %v954 = vand.u32 2147483647, %v815
    %vm955 = vcmp.eq.f32.partialorder %v954, 8.507059e+37
    %v956 = vand.u32 %v815, 2147483648
    %v957 = vor.u32 1.1754944e-38, %v956
    %v958 = vsel %vm955, %v957, %v953
    %v959 = vmul.f32 %v620, %v958
    %v960 = vrcp.pop %v827
    %v961 = vmul.f32 %v827, %v960
    %v962 = vsub.f32 1.0, %v961
    %v963 = vmul.f32 %v960, %v962
    %v964 = vadd.f32 %v960, %v963
    %vm965 = vweird.f32 %v827
    %vm966 = vweird.f32 %v960
    %vm967 = vmor %vm965, %vm966
    %v968 = vsel %vm967, %v960, %v964
    %v969 = vand.u32 2147483647, %v827
    %vm970 = vcmp.eq.f32.partialorder %v969, 8.507059e+37
    %v971 = vand.u32 %v827, 2147483648
    %v972 = vor.u32 1.1754944e-38, %v971
    %v973 = vsel %vm970, %v972, %v968
    %v974 = vmul.f32 %v621, %v973
    %v975 = vrcp.pop %v839
    %v976 = vmul.f32 %v839, %v975
    %v977 = vsub.f32 1.0, %v976
    %v978 = vmul.f32 %v975, %v977
    %v979 = vadd.f32 %v975, %v978
    %vm980 = vweird.f32 %v839
    %vm981 = vweird.f32 %v975
    %vm982 = vmor %vm980, %vm981
    %v983 = vsel %vm982, %v975, %v979
    %v984 = vand.u32 2147483647, %v839
    %vm985 = vcmp.eq.f32.partialorder %v984, 8.507059e+37
    %v986 = vand.u32 %v839, 2147483648
    %v987 = vor.u32 1.1754944e-38, %v986
    %v988 = vsel %vm985, %v987, %v983
    %v989 = vmul.f32 %v622, %v988
    %v990 = vsel %vm525, %v515, 0.0
    %v991 = vrot.slane %v990, 4
    %v992 = vadd.f32 %v990, %v991
    %v993 = vrot.slane %v992, 2
    %v994 = vadd.f32 %v992, %v993
    %v995 = vrot.slane %v994, 1
    %v996 = vadd.f32 %v994, %v995
    %v997 = vsel %vm525, %v516, 0.0
    %v998 = vrot.slane %v997, 4
    %v999 = vadd.f32 %v997, %v998
    %v1000 = vrot.slane %v999, 2
    %v1001 = vadd.f32 %v999, %v1000
    %v1002 = vrot.slane %v1001, 1
    %v1003 = vadd.f32 %v1001, %v1002
    %v1004 = vsel %vm525, %v517, 0.0
    %v1005 = vrot.slane %v1004, 4
    %v1006 = vadd.f32 %v1004, %v1005
    %v1007 = vrot.slane %v1006, 2
    %v1008 = vadd.f32 %v1006, %v1007
    %v1009 = vrot.slane %v1008, 1
    %v1010 = vadd.f32 %v1008, %v1009
    %v1011 = vsel %vm525, %v518, 0.0
    %v1012 = vrot.slane %v1011, 4
    %v1013 = vadd.f32 %v1011, %v1012
    %v1014 = vrot.slane %v1013, 2
    %v1015 = vadd.f32 %v1013, %v1014
    %v1016 = vrot.slane %v1015, 1
    %v1017 = vadd.f32 %v1015, %v1016
    %v1018 = vsel %vm525, %v519, 0.0
    %v1019 = vrot.slane %v1018, 4
    %v1020 = vadd.f32 %v1018, %v1019
    %v1021 = vrot.slane %v1020, 2
    %v1022 = vadd.f32 %v1020, %v1021
    %v1023 = vrot.slane %v1022, 1
    %v1024 = vadd.f32 %v1022, %v1023
    %v1025 = vsel %vm525, %v520, 0.0
    %v1026 = vrot.slane %v1025, 4
    %v1027 = vadd.f32 %v1025, %v1026
    %v1028 = vrot.slane %v1027, 2
    %v1029 = vadd.f32 %v1027, %v1028
    %v1030 = vrot.slane %v1029, 1
    %v1031 = vadd.f32 %v1029, %v1030
    %v1032 = vsel %vm525, %v521, 0.0
    %v1033 = vrot.slane %v1032, 4
    %v1034 = vadd.f32 %v1032, %v1033
    %v1035 = vrot.slane %v1034, 2
    %v1036 = vadd.f32 %v1034, %v1035
    %v1037 = vrot.slane %v1036, 1
    %v1038 = vadd.f32 %v1036, %v1037
    %v1039 = vsel %vm525, %v522, 0.0
    %v1040 = vrot.slane %v1039, 4
    %v1041 = vadd.f32 %v1039, %v1040
    %v1042 = vrot.slane %v1041, 2
    %v1043 = vadd.f32 %v1041, %v1042
    %v1044 = vrot.slane %v1043, 1
    %v1045 = vadd.f32 %v1043, %v1044
    %v1046 = vsel %vm525, %v523, 0.0
    %v1047 = vrot.slane %v1046, 4
    %v1048 = vadd.f32 %v1046, %v1047
    %v1049 = vrot.slane %v1048, 2
    %v1050 = vadd.f32 %v1048, %v1049
    %v1051 = vrot.slane %v1050, 1
    %v1052 = vadd.f32 %v1050, %v1051
    %v1053 = vsel %vm525, %v524, 0.0
    %v1054 = vrot.slane %v1053, 4
    %v1055 = vadd.f32 %v1053, %v1054
    %v1056 = vrot.slane %v1055, 2
    %v1057 = vadd.f32 %v1055, %v1056
    %v1058 = vrot.slane %v1057, 1
    %v1059 = vadd.f32 %v1057, %v1058
    %v1060 = vmul.f32 %v996, %v602
    %v1061 = vmul.f32 %v1003, %v602
    %v1062 = vmul.f32 %v1010, %v602
    %v1063 = vmul.f32 %v1017, %v602
    %v1064 = vmul.f32 %v1024, %v602
    %v1065 = vmul.f32 %v1031, %v602
    %v1066 = vmul.f32 %v1038, %v602
    %v1067 = vmul.f32 %v1045, %v602
    %v1068 = vmul.f32 %v1052, %v602
    %v1069 = vmul.f32 %v1059, %v602
    %v1070 = vsub.f32 %v515, %v1060
    %v1071 = vsub.f32 %v516, %v1061
    %v1072 = vsub.f32 %v517, %v1062
    %v1073 = vsub.f32 %v518, %v1063
    %v1074 = vsub.f32 %v519, %v1064
    %v1075 = vsub.f32 %v520, %v1065
    %v1076 = vsub.f32 %v521, %v1066
    %v1077 = vsub.f32 %v522, %v1067
    %v1078 = vsub.f32 %v523, %v1068
    %v1079 = vsub.f32 %v524, %v1069
    %v1080 = vmul.f32 %v1070, %v1070
    %v1081 = vmul.f32 %v1071, %v1071
    %v1082 = vmul.f32 %v1072, %v1072
    %v1083 = vmul.f32 %v1073, %v1073
    %v1084 = vmul.f32 %v1074, %v1074
    %v1085 = vmul.f32 %v1075, %v1075
    %v1086 = vmul.f32 %v1076, %v1076
    %v1087 = vmul.f32 %v1077, %v1077
    %v1088 = vmul.f32 %v1078, %v1078
    %v1089 = vmul.f32 %v1079, %v1079
    %v1090 = vsel %vm525, %v1080, 0.0
    %v1091 = vrot.slane %v1090, 4
    %v1092 = vadd.f32 %v1090, %v1091
    %v1093 = vrot.slane %v1092, 2
    %v1094 = vadd.f32 %v1092, %v1093
    %v1095 = vrot.slane %v1094, 1
    %v1096 = vadd.f32 %v1094, %v1095
    %v1097 = vsel %vm525, %v1081, 0.0
    %v1098 = vrot.slane %v1097, 4
    %v1099 = vadd.f32 %v1097, %v1098
    %v1100 = vrot.slane %v1099, 2
    %v1101 = vadd.f32 %v1099, %v1100
    %v1102 = vrot.slane %v1101, 1
    %v1103 = vadd.f32 %v1101, %v1102
    %v1104 = vsel %vm525, %v1082, 0.0
    %v1105 = vrot.slane %v1104, 4
    %v1106 = vadd.f32 %v1104, %v1105
    %v1107 = vrot.slane %v1106, 2
    %v1108 = vadd.f32 %v1106, %v1107
    %v1109 = vrot.slane %v1108, 1
    %v1110 = vadd.f32 %v1108, %v1109
    %v1111 = vsel %vm525, %v1083, 0.0
    %v1112 = vrot.slane %v1111, 4
    %v1113 = vadd.f32 %v1111, %v1112
    %v1114 = vrot.slane %v1113, 2
    %v1115 = vadd.f32 %v1113, %v1114
    %v1116 = vrot.slane %v1115, 1
    %v1117 = vadd.f32 %v1115, %v1116
    %v1118 = vsel %vm525, %v1084, 0.0
    %v1119 = vrot.slane %v1118, 4
    %v1120 = vadd.f32 %v1118, %v1119
    %v1121 = vrot.slane %v1120, 2
    %v1122 = vadd.f32 %v1120, %v1121
    %v1123 = vrot.slane %v1122, 1
    %v1124 = vadd.f32 %v1122, %v1123
    %v1125 = vsel %vm525, %v1085, 0.0
    %v1126 = vrot.slane %v1125, 4
    %v1127 = vadd.f32 %v1125, %v1126
    %v1128 = vrot.slane %v1127, 2
    %v1129 = vadd.f32 %v1127, %v1128
    %v1130 = vrot.slane %v1129, 1
    %v1131 = vadd.f32 %v1129, %v1130
    %v1132 = vsel %vm525, %v1086, 0.0
    %v1133 = vrot.slane %v1132, 4
    %v1134 = vadd.f32 %v1132, %v1133
    %v1135 = vrot.slane %v1134, 2
    %v1136 = vadd.f32 %v1134, %v1135
    %v1137 = vrot.slane %v1136, 1
    %v1138 = vadd.f32 %v1136, %v1137
    %v1139 = vsel %vm525, %v1087, 0.0
    %v1140 = vrot.slane %v1139, 4
    %v1141 = vadd.f32 %v1139, %v1140
    %v1142 = vrot.slane %v1141, 2
    %v1143 = vadd.f32 %v1141, %v1142
    %v1144 = vrot.slane %v1143, 1
    %v1145 = vadd.f32 %v1143, %v1144
    %v1146 = vsel %vm525, %v1088, 0.0
    %v1147 = vrot.slane %v1146, 4
    %v1148 = vadd.f32 %v1146, %v1147
    %v1149 = vrot.slane %v1148, 2
    %v1150 = vadd.f32 %v1148, %v1149
    %v1151 = vrot.slane %v1150, 1
    %v1152 = vadd.f32 %v1150, %v1151
    %v1153 = vsel %vm525, %v1089, 0.0
    %v1154 = vrot.slane %v1153, 4
    %v1155 = vadd.f32 %v1153, %v1154
    %v1156 = vrot.slane %v1155, 2
    %v1157 = vadd.f32 %v1155, %v1156
    %v1158 = vrot.slane %v1157, 1
    %v1159 = vadd.f32 %v1157, %v1158
    %v1160 = vmul.f32 %v1096, %v709
    %v1161 = vmul.f32 %v1103, %v709
    %v1162 = vmul.f32 %v1110, %v709
    %v1163 = vmul.f32 %v1117, %v709
    %v1164 = vmul.f32 %v1124, %v709
    %v1165 = vmul.f32 %v1131, %v709
    %v1166 = vmul.f32 %v1138, %v709
    %v1167 = vmul.f32 %v1145, %v709
    %v1168 = vmul.f32 %v1152, %v709
    %v1169 = vmul.f32 %v1159, %v709
    %v1170 = vrsqrt.pop %v1160
    %v1171 = vmul.f32 %v1170, %v1160
    %v1172 = vmul.f32 %v1171, %v1170
    %v1173 = vmul.f32 0.5, %v1172
    %v1174 = vsub.f32 1.5, %v1173
    %v1175 = vmul.f32 %v1170, %v1174
    %v1176 = vmul.f32 %v1160, %v1175
    %vm1177 = vcmp.eq.f32.partialorder %v1160, inf
    %v1178 = vsel %vm1177, %v1160, %v1176
    %vm1179 = vcmp.eq.f32.partialorder %v1160, 0.0
    %v1180 = vand.u32 %v1160, 2147483648
    %v1181 = vsel %vm1179, %v1180, %v1178
    %v1182 = vrsqrt.pop %v1161
    %v1183 = vmul.f32 %v1182, %v1161
    %v1184 = vmul.f32 %v1183, %v1182
    %v1185 = vmul.f32 0.5, %v1184
    %v1186 = vsub.f32 1.5, %v1185
    %v1187 = vmul.f32 %v1182, %v1186
    %v1188 = vmul.f32 %v1161, %v1187
    %vm1189 = vcmp.eq.f32.partialorder %v1161, inf
    %v1190 = vsel %vm1189, %v1161, %v1188
    %vm1191 = vcmp.eq.f32.partialorder %v1161, 0.0
    %v1192 = vand.u32 %v1161, 2147483648
    %v1193 = vsel %vm1191, %v1192, %v1190
    %v1194 = vrsqrt.pop %v1162
    %v1195 = vmul.f32 %v1194, %v1162
    %v1196 = vmul.f32 %v1195, %v1194
    %v1197 = vmul.f32 0.5, %v1196
    %v1198 = vsub.f32 1.5, %v1197
    %v1199 = vmul.f32 %v1194, %v1198
    %v1200 = vmul.f32 %v1162, %v1199
    %vm1201 = vcmp.eq.f32.partialorder %v1162, inf
    %v1202 = vsel %vm1201, %v1162, %v1200
    %vm1203 = vcmp.eq.f32.partialorder %v1162, 0.0
    %v1204 = vand.u32 %v1162, 2147483648
    %v1205 = vsel %vm1203, %v1204, %v1202
    %v1206 = vrsqrt.pop %v1163
    %v1207 = vmul.f32 %v1206, %v1163
    %v1208 = vmul.f32 %v1207, %v1206
    %v1209 = vmul.f32 0.5, %v1208
    %v1210 = vsub.f32 1.5, %v1209
    %v1211 = vmul.f32 %v1206, %v1210
    %v1212 = vmul.f32 %v1163, %v1211
    %vm1213 = vcmp.eq.f32.partialorder %v1163, inf
    %v1214 = vsel %vm1213, %v1163, %v1212
    %vm1215 = vcmp.eq.f32.partialorder %v1163, 0.0
    %v1216 = vand.u32 %v1163, 2147483648
    %v1217 = vsel %vm1215, %v1216, %v1214
    %v1218 = vrsqrt.pop %v1164
    %v1219 = vmul.f32 %v1218, %v1164
    %v1220 = vmul.f32 %v1219, %v1218
    %v1221 = vmul.f32 0.5, %v1220
    %v1222 = vsub.f32 1.5, %v1221
    %v1223 = vmul.f32 %v1218, %v1222
    %v1224 = vmul.f32 %v1164, %v1223
    %vm1225 = vcmp.eq.f32.partialorder %v1164, inf
    %v1226 = vsel %vm1225, %v1164, %v1224
    %vm1227 = vcmp.eq.f32.partialorder %v1164, 0.0
    %v1228 = vand.u32 %v1164, 2147483648
    %v1229 = vsel %vm1227, %v1228, %v1226
    %v1230 = vrsqrt.pop %v1165
    %v1231 = vmul.f32 %v1230, %v1165
    %v1232 = vmul.f32 %v1231, %v1230
    %v1233 = vmul.f32 0.5, %v1232
    %v1234 = vsub.f32 1.5, %v1233
    %v1235 = vmul.f32 %v1230, %v1234
    %v1236 = vmul.f32 %v1165, %v1235
    %vm1237 = vcmp.eq.f32.partialorder %v1165, inf
    %v1238 = vsel %vm1237, %v1165, %v1236
    %vm1239 = vcmp.eq.f32.partialorder %v1165, 0.0
    %v1240 = vand.u32 %v1165, 2147483648
    %v1241 = vsel %vm1239, %v1240, %v1238
    %v1242 = vrsqrt.pop %v1166
    %v1243 = vmul.f32 %v1242, %v1166
    %v1244 = vmul.f32 %v1243, %v1242
    %v1245 = vmul.f32 0.5, %v1244
    %v1246 = vsub.f32 1.5, %v1245
    %v1247 = vmul.f32 %v1242, %v1246
    %v1248 = vmul.f32 %v1166, %v1247
    %vm1249 = vcmp.eq.f32.partialorder %v1166, inf
    %v1250 = vsel %vm1249, %v1166, %v1248
    %vm1251 = vcmp.eq.f32.partialorder %v1166, 0.0
    %v1252 = vand.u32 %v1166, 2147483648
    %v1253 = vsel %vm1251, %v1252, %v1250
    %v1254 = vrsqrt.pop %v1167
    %v1255 = vmul.f32 %v1254, %v1167
    %v1256 = vmul.f32 %v1255, %v1254
    %v1257 = vmul.f32 0.5, %v1256
    %v1258 = vsub.f32 1.5, %v1257
    %v1259 = vmul.f32 %v1254, %v1258
    %v1260 = vmul.f32 %v1167, %v1259
    %vm1261 = vcmp.eq.f32.partialorder %v1167, inf
    %v1262 = vsel %vm1261, %v1167, %v1260
    %vm1263 = vcmp.eq.f32.partialorder %v1167, 0.0
    %v1264 = vand.u32 %v1167, 2147483648
    %v1265 = vsel %vm1263, %v1264, %v1262
    %v1266 = vrsqrt.pop %v1168
    %v1267 = vmul.f32 %v1266, %v1168
    %v1268 = vmul.f32 %v1267, %v1266
    %v1269 = vmul.f32 0.5, %v1268
    %v1270 = vsub.f32 1.5, %v1269
    %v1271 = vmul.f32 %v1266, %v1270
    %v1272 = vmul.f32 %v1168, %v1271
    %vm1273 = vcmp.eq.f32.partialorder %v1168, inf
    %v1274 = vsel %vm1273, %v1168, %v1272
    %vm1275 = vcmp.eq.f32.partialorder %v1168, 0.0
    %v1276 = vand.u32 %v1168, 2147483648
    %v1277 = vsel %vm1275, %v1276, %v1274
    %v1278 = vrsqrt.pop %v1169
    %v1279 = vmul.f32 %v1278, %v1169
    %v1280 = vmul.f32 %v1279, %v1278
    %v1281 = vmul.f32 0.5, %v1280
    %v1282 = vsub.f32 1.5, %v1281
    %v1283 = vmul.f32 %v1278, %v1282
    %v1284 = vmul.f32 %v1169, %v1283
    %vm1285 = vcmp.eq.f32.partialorder %v1169, inf
    %v1286 = vsel %vm1285, %v1169, %v1284
    %vm1287 = vcmp.eq.f32.partialorder %v1169, 0.0
    %v1288 = vand.u32 %v1169, 2147483648
    %v1289 = vsel %vm1287, %v1288, %v1286
    %v1290 = vrcp.pop %v1181
    %v1291 = vmul.f32 %v1181, %v1290
    %v1292 = vsub.f32 1.0, %v1291
    %v1293 = vmul.f32 %v1290, %v1292
    %v1294 = vadd.f32 %v1290, %v1293
    %vm1295 = vweird.f32 %v1181
    %vm1296 = vweird.f32 %v1290
    %vm1297 = vmor %vm1295, %vm1296
    %v1298 = vsel %vm1297, %v1290, %v1294
    %v1299 = vand.u32 2147483647, %v1181
    %vm1300 = vcmp.eq.f32.partialorder %v1299, 8.507059e+37
    %v1301 = vand.u32 %v1181, 2147483648
    %v1302 = vor.u32 1.1754944e-38, %v1301
    %v1303 = vsel %vm1300, %v1302, %v1298
    %v1304 = vmul.f32 %v1070, %v1303
    %v1305 = vrcp.pop %v1193
    %v1306 = vmul.f32 %v1193, %v1305
    %v1307 = vsub.f32 1.0, %v1306
    %v1308 = vmul.f32 %v1305, %v1307
    %v1309 = vadd.f32 %v1305, %v1308
    %vm1310 = vweird.f32 %v1193
    %vm1311 = vweird.f32 %v1305
    %vm1312 = vmor %vm1310, %vm1311
    %v1313 = vsel %vm1312, %v1305, %v1309
    %v1314 = vand.u32 2147483647, %v1193
    %vm1315 = vcmp.eq.f32.partialorder %v1314, 8.507059e+37
    %v1316 = vand.u32 %v1193, 2147483648
    %v1317 = vor.u32 1.1754944e-38, %v1316
    %v1318 = vsel %vm1315, %v1317, %v1313
    %v1319 = vmul.f32 %v1071, %v1318
    %v1320 = vrcp.pop %v1205
    %v1321 = vmul.f32 %v1205, %v1320
    %v1322 = vsub.f32 1.0, %v1321
    %v1323 = vmul.f32 %v1320, %v1322
    %v1324 = vadd.f32 %v1320, %v1323
    %vm1325 = vweird.f32 %v1205
    %vm1326 = vweird.f32 %v1320
    %vm1327 = vmor %vm1325, %vm1326
    %v1328 = vsel %vm1327, %v1320, %v1324
    %v1329 = vand.u32 2147483647, %v1205
    %vm1330 = vcmp.eq.f32.partialorder %v1329, 8.507059e+37
    %v1331 = vand.u32 %v1205, 2147483648
    %v1332 = vor.u32 1.1754944e-38, %v1331
    %v1333 = vsel %vm1330, %v1332, %v1328
    %v1334 = vmul.f32 %v1072, %v1333
    %v1335 = vrcp.pop %v1217
    %v1336 = vmul.f32 %v1217, %v1335
    %v1337 = vsub.f32 1.0, %v1336
    %v1338 = vmul.f32 %v1335, %v1337
    %v1339 = vadd.f32 %v1335, %v1338
    %vm1340 = vweird.f32 %v1217
    %vm1341 = vweird.f32 %v1335
    %vm1342 = vmor %vm1340, %vm1341
    %v1343 = vsel %vm1342, %v1335, %v1339
    %v1344 = vand.u32 2147483647, %v1217
    %vm1345 = vcmp.eq.f32.partialorder %v1344, 8.507059e+37
    %v1346 = vand.u32 %v1217, 2147483648
    %v1347 = vor.u32 1.1754944e-38, %v1346
    %v1348 = vsel %vm1345, %v1347, %v1343
    %v1349 = vmul.f32 %v1073, %v1348
    %v1350 = vrcp.pop %v1229
    %v1351 = vmul.f32 %v1229, %v1350
    %v1352 = vsub.f32 1.0, %v1351
    %v1353 = vmul.f32 %v1350, %v1352
    %v1354 = vadd.f32 %v1350, %v1353
    %vm1355 = vweird.f32 %v1229
    %vm1356 = vweird.f32 %v1350
    %vm1357 = vmor %vm1355, %vm1356
    %v1358 = vsel %vm1357, %v1350, %v1354
    %v1359 = vand.u32 2147483647, %v1229
    %vm1360 = vcmp.eq.f32.partialorder %v1359, 8.507059e+37
    %v1361 = vand.u32 %v1229, 2147483648
    %v1362 = vor.u32 1.1754944e-38, %v1361
    %v1363 = vsel %vm1360, %v1362, %v1358
    %v1364 = vmul.f32 %v1074, %v1363
    %v1365 = vrcp.pop %v1241
    %v1366 = vmul.f32 %v1241, %v1365
    %v1367 = vsub.f32 1.0, %v1366
    %v1368 = vmul.f32 %v1365, %v1367
    %v1369 = vadd.f32 %v1365, %v1368
    %vm1370 = vweird.f32 %v1241
    %vm1371 = vweird.f32 %v1365
    %vm1372 = vmor %vm1370, %vm1371
    %v1373 = vsel %vm1372, %v1365, %v1369
    %v1374 = vand.u32 2147483647, %v1241
    %vm1375 = vcmp.eq.f32.partialorder %v1374, 8.507059e+37
    %v1376 = vand.u32 %v1241, 2147483648
    %v1377 = vor.u32 1.1754944e-38, %v1376
    %v1378 = vsel %vm1375, %v1377, %v1373
    %v1379 = vmul.f32 %v1075, %v1378
    %v1380 = vrcp.pop %v1253
    %v1381 = vmul.f32 %v1253, %v1380
    %v1382 = vsub.f32 1.0, %v1381
    %v1383 = vmul.f32 %v1380, %v1382
    %v1384 = vadd.f32 %v1380, %v1383
    %vm1385 = vweird.f32 %v1253
    %vm1386 = vweird.f32 %v1380
    %vm1387 = vmor %vm1385, %vm1386
    %v1388 = vsel %vm1387, %v1380, %v1384
    %v1389 = vand.u32 2147483647, %v1253
    %vm1390 = vcmp.eq.f32.partialorder %v1389, 8.507059e+37
    %v1391 = vand.u32 %v1253, 2147483648
    %v1392 = vor.u32 1.1754944e-38, %v1391
    %v1393 = vsel %vm1390, %v1392, %v1388
    %v1394 = vmul.f32 %v1076, %v1393
    %v1395 = vrcp.pop %v1265
    %v1396 = vmul.f32 %v1265, %v1395
    %v1397 = vsub.f32 1.0, %v1396
    %v1398 = vmul.f32 %v1395, %v1397
    %v1399 = vadd.f32 %v1395, %v1398
    %vm1400 = vweird.f32 %v1265
    %vm1401 = vweird.f32 %v1395
    %vm1402 = vmor %vm1400, %vm1401
    %v1403 = vsel %vm1402, %v1395, %v1399
    %v1404 = vand.u32 2147483647, %v1265
    %vm1405 = vcmp.eq.f32.partialorder %v1404, 8.507059e+37
    %v1406 = vand.u32 %v1265, 2147483648
    %v1407 = vor.u32 1.1754944e-38, %v1406
    %v1408 = vsel %vm1405, %v1407, %v1403
    %v1409 = vmul.f32 %v1077, %v1408
    %v1410 = vrcp.pop %v1277
    %v1411 = vmul.f32 %v1277, %v1410
    %v1412 = vsub.f32 1.0, %v1411
    %v1413 = vmul.f32 %v1410, %v1412
    %v1414 = vadd.f32 %v1410, %v1413
    %vm1415 = vweird.f32 %v1277
    %vm1416 = vweird.f32 %v1410
    %vm1417 = vmor %vm1415, %vm1416
    %v1418 = vsel %vm1417, %v1410, %v1414
    %v1419 = vand.u32 2147483647, %v1277
    %vm1420 = vcmp.eq.f32.partialorder %v1419, 8.507059e+37
    %v1421 = vand.u32 %v1277, 2147483648
    %v1422 = vor.u32 1.1754944e-38, %v1421
    %v1423 = vsel %vm1420, %v1422, %v1418
    %v1424 = vmul.f32 %v1078, %v1423
    %v1425 = vrcp.pop %v1289
    %v1426 = vmul.f32 %v1289, %v1425
    %v1427 = vsub.f32 1.0, %v1426
    %v1428 = vmul.f32 %v1425, %v1427
    %v1429 = vadd.f32 %v1425, %v1428
    %vm1430 = vweird.f32 %v1289
    %vm1431 = vweird.f32 %v1425
    %vm1432 = vmor %vm1430, %vm1431
    %v1433 = vsel %vm1432, %v1425, %v1429
    %v1434 = vand.u32 2147483647, %v1289
    %vm1435 = vcmp.eq.f32.partialorder %v1434, 8.507059e+37
    %v1436 = vand.u32 %v1289, 2147483648
    %v1437 = vor.u32 1.1754944e-38, %v1436
    %v1438 = vsel %vm1435, %v1437, %v1433
    %v1439 = vmul.f32 %v1079, %v1438
    %v1440 = vld [vmem:[%s6] sm:$0x1]
    %v1441 = vld [vmem:[%s6 + $0x1] sm:$0x1]
    %v1442 = vld [vmem:[%s6 + $0x2] sm:$0x1]
    %v1443 = vld [vmem:[%s6 + $0x3] sm:$0x1]
    %v1444 = vld [vmem:[%s6 + $0x4] sm:$0x1]
    %v1445 = vld [vmem:[%s6 + $0x5] sm:$0x1]
    %v1446 = vld [vmem:[%s6 + $0x6] sm:$0x1]
    %v1447 = vld [vmem:[%s6 + $0x7] sm:$0x1]
    %v1448 = vld [vmem:[%s6 + $0x8] sm:$0x1]
    %v1449 = vld [vmem:[%s6 + $0x9] sm:$0x1]
    %v1450 = vld [vmem:[%s7] sm:$0x1]
    %1461 = vrot.lane.b32.xlu0 %v854, 1
    %v1462 = vpop.permute.xlu0 %1461
    %1463 = vrot.lane.b32.xlu0 %v869, 1
    %v1464 = vpop.permute.xlu0 %1463
    %1465 = vrot.lane.b32.xlu0 %v884, 1
    %v1466 = vpop.permute.xlu0 %1465
    %1467 = vrot.lane.b32.xlu0 %v899, 1
    %v1468 = vpop.permute.xlu0 %1467
    %1469 = vrot.lane.b32.xlu0 %v914, 1
    %v1470 = vpop.permute.xlu0 %1469
    %1471 = vrot.lane.b32.xlu0 %v929, 1
    %v1472 = vpop.permute.xlu0 %1471
    %1473 = vrot.lane.b32.xlu0 %v944, 1
    %v1474 = vpop.permute.xlu0 %1473
    %1475 = vrot.lane.b32.xlu0 %v959, 1
    %v1476 = vpop.permute.xlu0 %1475
    %1477 = vrot.lane.b32.xlu0 %v974, 1
    %v1478 = vpop.permute.xlu0 %1477
    %1479 = vrot.lane.b32.xlu0 %v989, 1
    %v1480 = vpop.permute.xlu0 %1479
    %1501 = vrot.lane.b32.xlu0 %v1304, 2
    %v1502 = vpop.permute.xlu0 %1501
    %1503 = vrot.lane.b32.xlu0 %v1319, 2
    %v1504 = vpop.permute.xlu0 %1503
    %1505 = vrot.lane.b32.xlu0 %v1334, 2
    %v1506 = vpop.permute.xlu0 %1505
    %1507 = vrot.lane.b32.xlu0 %v1349, 2
    %v1508 = vpop.permute.xlu0 %1507
    %1509 = vrot.lane.b32.xlu0 %v1364, 2
    %v1510 = vpop.permute.xlu0 %1509
    %1511 = vrot.lane.b32.xlu0 %v1379, 2
    %v1512 = vpop.permute.xlu0 %1511
    %1513 = vrot.lane.b32.xlu0 %v1394, 2
    %v1514 = vpop.permute.xlu0 %1513
    %1515 = vrot.lane.b32.xlu0 %v1409, 2
    %v1516 = vpop.permute.xlu0 %1515
    %1517 = vrot.lane.b32.xlu0 %v1424, 2
    %v1518 = vpop.permute.xlu0 %1517
    %1519 = vrot.lane.b32.xlu0 %v1439, 2
    %v1520 = vpop.permute.xlu0 %1519
    %v1531 = vsel %vm525, %v188, %v1462
    %v1532 = vsel %vm525, %v189, %v1464
    %v1533 = vsel %vm525, %v190, %v1466
    %v1534 = vsel %vm525, %v191, %v1468
    %v1535 = vsel %vm525, %v192, %v1470
    %v1536 = vsel %vm525, %v193, %v1472
    %v1537 = vsel %vm525, %v194, %v1474
    %v1538 = vsel %vm525, %v195, %v1476
    %v1539 = vsel %vm525, %v196, %v1478
    %v1540 = vsel %vm525, %v197, %v1480
    %vm1541 = vcmask 15360
    %v1542 = vsel %vm1541, %v1531, %v1502
    %v1543 = vsel %vm1541, %v1532, %v1504
    %v1544 = vsel %vm1541, %v1533, %v1506
    %v1545 = vsel %vm1541, %v1534, %v1508
    %v1546 = vsel %vm1541, %v1535, %v1510
    %v1547 = vsel %vm1541, %v1536, %v1512
    %v1548 = vsel %vm1541, %v1537, %v1514
    %v1549 = vsel %vm1541, %v1538, %v1516
    %v1550 = vsel %vm1541, %v1539, %v1518
    %v1551 = vsel %vm1541, %v1540, %v1520
    %1553 = vset.pattern.permute.xlu0 0
    %1554 = vperm.xlu0 %1553, %v1440
    %v1555 = vpop.permute.xlu0 %1554
    %v1557 = vperm.slane %v1555, 0
    %1559 = vset.pattern.permute.xlu0 0
    %1560 = vperm.xlu0 %1559, %v1441
    %v1561 = vpop.permute.xlu0 %1560
    %v1563 = vperm.slane %v1561, 0
    %1565 = vset.pattern.permute.xlu0 0
    %1566 = vperm.xlu0 %1565, %v1442
    %v1567 = vpop.permute.xlu0 %1566
    %v1569 = vperm.slane %v1567, 0
    %1571 = vset.pattern.permute.xlu0 0
    %1572 = vperm.xlu0 %1571, %v1443
    %v1573 = vpop.permute.xlu0 %1572
    %v1575 = vperm.slane %v1573, 0
    %1577 = vset.pattern.permute.xlu0 0
    %1578 = vperm.xlu0 %1577, %v1444
    %v1579 = vpop.permute.xlu0 %1578
    %v1581 = vperm.slane %v1579, 0
    %1583 = vset.pattern.permute.xlu0 0
    %1584 = vperm.xlu0 %1583, %v1445
    %v1585 = vpop.permute.xlu0 %1584
    %v1587 = vperm.slane %v1585, 0
    %1589 = vset.pattern.permute.xlu0 0
    %1590 = vperm.xlu0 %1589, %v1446
    %v1591 = vpop.permute.xlu0 %1590
    %v1593 = vperm.slane %v1591, 0
    %1595 = vset.pattern.permute.xlu0 0
    %1596 = vperm.xlu0 %1595, %v1447
    %v1597 = vpop.permute.xlu0 %1596
    %v1599 = vperm.slane %v1597, 0
    %1601 = vset.pattern.permute.xlu0 0
    %1602 = vperm.xlu0 %1601, %v1448
    %v1603 = vpop.permute.xlu0 %1602
    %v1605 = vperm.slane %v1603, 0
    %1607 = vset.pattern.permute.xlu0 0
    %1608 = vperm.xlu0 %1607, %v1449
    %v1609 = vpop.permute.xlu0 %1608
    %v1611 = vperm.slane %v1609, 0
    %v1612 = vmul.f32 %v1557, %v1450
    %v1613 = vmul.f32 %v1563, %v1450
    %v1614 = vmul.f32 %v1569, %v1450
    %v1615 = vmul.f32 %v1575, %v1450
    %v1616 = vmul.f32 %v1581, %v1450
    %v1617 = vmul.f32 %v1587, %v1450
    %v1618 = vmul.f32 %v1593, %v1450
    %v1619 = vmul.f32 %v1599, %v1450
    %v1620 = vmul.f32 %v1605, %v1450
    %v1621 = vmul.f32 %v1611, %v1450
    %v1632 = vperm.slane %v1612, 0
    %v1633 = vperm.slane %v1613, 0
    %v1634 = vperm.slane %v1614, 0
    %v1635 = vperm.slane %v1615, 0
    %v1636 = vperm.slane %v1616, 0
    %v1637 = vperm.slane %v1617, 0
    %v1638 = vperm.slane %v1618, 0
    %v1639 = vperm.slane %v1619, 0
    %v1640 = vperm.slane %v1620, 0
    %v1641 = vperm.slane %v1621, 0
    %v1652 = vmul.f32 %v1542, %v1632
    %v1653 = vmul.f32 %v1543, %v1633
    %v1654 = vmul.f32 %v1544, %v1634
    %v1655 = vmul.f32 %v1545, %v1635
    %v1656 = vmul.f32 %v1546, %v1636
    %v1657 = vmul.f32 %v1547, %v1637
    %v1658 = vmul.f32 %v1548, %v1638
    %v1659 = vmul.f32 %v1549, %v1639
    %v1660 = vmul.f32 %v1550, %v1640
    %v1661 = vmul.f32 %v1551, %v1641
    %vm1662 = vcmask 23552
    %1663 = vst.msk [vmem:[%s21] sm:$0xff] %vm1662, %v1652
    %1664 = vst.msk [vmem:[%s21 + $0x8] sm:$0xff] %vm1662, %v1653
    %1665 = vst.msk [vmem:[%s21 + $0x10] sm:$0xff] %vm1662, %v1654
    %1666 = vst.msk [vmem:[%s21 + $0x18] sm:$0xff] %vm1662, %v1655
    %1667 = vst.msk [vmem:[%s21 + $0x20] sm:$0xff] %vm1662, %v1656
    %1668 = vst.msk [vmem:[%s21 + $0x28] sm:$0xff] %vm1662, %v1657
    %1669 = vst.msk [vmem:[%s21 + $0x30] sm:$0xff] %vm1662, %v1658
    %1670 = vst.msk [vmem:[%s21 + $0x38] sm:$0xff] %vm1662, %v1659
    %1671 = vst.msk [vmem:[%s21 + $0x40] sm:$0xff] %vm1662, %v1660
    %1672 = vst.msk [vmem:[%s21 + $0x48] sm:$0xff] %vm1662, %v1661
    %v1673 = vadd.f32 %v1652, %v112
    %v1674 = vadd.f32 %v1653, %v113
    %v1675 = vadd.f32 %v1654, %v114
    %v1676 = vadd.f32 %v1655, %v115
    %v1677 = vadd.f32 %v1656, %v116
    %v1678 = vadd.f32 %v1657, %v117
    %v1679 = vadd.f32 %v1658, %v118
    %v1680 = vadd.f32 %v1659, %v119
    %v1681 = vadd.f32 %v1660, %v120
    %v1682 = vadd.f32 %v1661, %v121
    %v1683 = vld [vmem:[%s11] sm:$0x1]
    %s1684 = scalar_lea.vmem %s11, 1
    %v1685 = vld [vmem:[%s1684] sm:$0x1]
    %v1686 = vld [vmem:[%s8] sm:$0x7]
    %v1687 = vld [vmem:[%s10] sm:$0x1]
    %vm1688 = vcmask 80896
    %v1689 = vsel %vm1688, %v1683, 0.0
    %v1690 = vadd.f32 %v1687, %v1689
    %v1692 = vperm.slane %v1690, 0
    %v1695 = vsel %vm1662, %v1673, 0
    %v1698 = vsel %vm1662, %v1674, 0
    %v1701 = vsel %vm1662, %v1675, 0
    %v1704 = vsel %vm1662, %v1676, 0
    %v1707 = vsel %vm1662, %v1677, 0
    %v1710 = vsel %vm1662, %v1678, 0
    %v1713 = vsel %vm1662, %v1679, 0
    %v1716 = vsel %vm1662, %v1680, 0
    %v1719 = vsel %vm1662, %v1681, 0
    %v1722 = vsel %vm1662, %v1682, 0
    %vm1724 = vcmask 1042432
    %v1726 = vsel %vm1724, %v1686, 0
    %1728 = vmatpush.msra.mxu0 0.0
    %1729 = vmatpush.msra.mxu0 0.0
    %1730 = vmatpush.msra.mxu0 0.0
    %1731 = vmatpush.msra.mxu0 0.0
    %1732 = vmatpush.msra.mxu0 0.0
    %1733 = vmatpush.msra.mxu0 0.0
    %1734 = vmatpush.msra.mxu0 0.0
    %1735 = vmatpush.msra.mxu0 0.0
    %1736 = vmatpush.msra.mxu0 0.0
    %1737 = vmatpush.msra.mxu0 0.0
    %1738 = vmatpush.msra.mxu0 0.0
    %1739 = vmatpush.msra.mxu0 0.0
    %1740 = vmatpush.msra.mxu0 0.0
    %1741 = vmatpush.msra.mxu0 0.0
    %1742 = vmatpush.msra.mxu0 0.0
    %1743 = vmatpush.msra.mxu0 %v1726
    %1744 = vmatmul.f32.gmra.mxu0 %v1695
    %v1745 = vpop.f32.mrf.mxu0
    %v1746 = vadd.f32 %v1692, %v1745
    %1747 = vmatmul.f32.gmra.mxu0 %v1698
    %v1748 = vpop.f32.mrf.mxu0
    %v1749 = vadd.f32 %v1692, %v1748
    %1750 = vmatmul.f32.gmra.mxu0 %v1701
    %v1751 = vpop.f32.mrf.mxu0
    %v1752 = vadd.f32 %v1692, %v1751
    %1753 = vmatmul.f32.gmra.mxu0 %v1704
    %v1754 = vpop.f32.mrf.mxu0
    %v1755 = vadd.f32 %v1692, %v1754
    %1756 = vmatmul.f32.gmra.mxu0 %v1707
    %v1757 = vpop.f32.mrf.mxu0
    %v1758 = vadd.f32 %v1692, %v1757
    %1759 = vmatmul.f32.gmra.mxu0 %v1710
    %v1760 = vpop.f32.mrf.mxu0
    %v1761 = vadd.f32 %v1692, %v1760
    %1762 = vmatmul.f32.gmra.mxu0 %v1713
    %v1763 = vpop.f32.mrf.mxu0
    %v1764 = vadd.f32 %v1692, %v1763
    %1765 = vmatmul.f32.gmra.mxu0 %v1716
    %v1766 = vpop.f32.mrf.mxu0
    %v1767 = vadd.f32 %v1692, %v1766
    %1768 = vmatmul.f32.gmra.mxu0 %v1719
    %v1769 = vpop.f32.mrf.mxu0
    %v1770 = vadd.f32 %v1692, %v1769
    %1771 = vmatmul.f32.gmra.mxu0 %v1722
    %v1772 = vpop.f32.mrf.mxu0
    %v1773 = vadd.f32 %v1692, %v1772
    %1774 = vdwg.mxu0
    %vm1775 = vcmask 121856
    %1776 = vst.msk [vmem:[#allocation2] sm:$0xff] %vm1775, %v1746
    %1777 = vst.msk [vmem:[#allocation2 + $0x8] sm:$0xff] %vm1775, %v1749
    %1778 = vst.msk [vmem:[#allocation2 + $0x10] sm:$0xff] %vm1775, %v1752
    %1779 = vst.msk [vmem:[#allocation2 + $0x18] sm:$0xff] %vm1775, %v1755
    %1780 = vst.msk [vmem:[#allocation2 + $0x20] sm:$0xff] %vm1775, %v1758
    %1781 = vst.msk [vmem:[#allocation2 + $0x28] sm:$0xff] %vm1775, %v1761
    %1782 = vst.msk [vmem:[#allocation2 + $0x30] sm:$0xff] %vm1775, %v1764
    %1783 = vst.msk [vmem:[#allocation2 + $0x38] sm:$0xff] %vm1775, %v1767
    %1784 = vst.msk [vmem:[#allocation2 + $0x40] sm:$0xff] %vm1775, %v1770
    %1785 = vst.msk [vmem:[#allocation2 + $0x48] sm:$0xff] %vm1775, %v1773
    %s1786 = scalar_lea.vmem %s8, 4
    %v1787 = vld [vmem:[%s1786] sm:$0x7]
    %s1788 = scalar_lea.vmem %s10, 1
    %v1789 = vld [vmem:[%s1788] sm:$0x1]
    %v1790 = vsel %vm1688, %v1685, 0.0
    %v1791 = vadd.f32 %v1789, %v1790
    %v1793 = vperm.slane %v1791, 0
    %v1796 = vsel %vm1724, %v1787, 0
    %1798 = vmatpush.msra.mxu0 0.0
    %1799 = vmatpush.msra.mxu0 0.0
    %1800 = vmatpush.msra.mxu0 0.0
    %1801 = vmatpush.msra.mxu0 0.0
    %1802 = vmatpush.msra.mxu0 0.0
    %1803 = vmatpush.msra.mxu0 0.0
    %1804 = vmatpush.msra.mxu0 0.0
    %1805 = vmatpush.msra.mxu0 0.0
    %1806 = vmatpush.msra.mxu0 0.0
    %1807 = vmatpush.msra.mxu0 0.0
    %1808 = vmatpush.msra.mxu0 0.0
    %1809 = vmatpush.msra.mxu0 0.0
    %1810 = vmatpush.msra.mxu0 0.0
    %1811 = vmatpush.msra.mxu0 0.0
    %1812 = vmatpush.msra.mxu0 0.0
    %1813 = vmatpush.msra.mxu0 %v1796
    %1814 = vmatmul.f32.gmra.mxu0 %v1695
    %v1815 = vpop.f32.mrf.mxu0
    %v1816 = vadd.f32 %v1793, %v1815
    %1817 = vmatmul.f32.gmra.mxu0 %v1698
    %v1818 = vpop.f32.mrf.mxu0
    %v1819 = vadd.f32 %v1793, %v1818
    %1820 = vmatmul.f32.gmra.mxu0 %v1701
    %v1821 = vpop.f32.mrf.mxu0
    %v1822 = vadd.f32 %v1793, %v1821
    %1823 = vmatmul.f32.gmra.mxu0 %v1704
    %v1824 = vpop.f32.mrf.mxu0
    %v1825 = vadd.f32 %v1793, %v1824
    %1826 = vmatmul.f32.gmra.mxu0 %v1707
    %v1827 = vpop.f32.mrf.mxu0
    %v1828 = vadd.f32 %v1793, %v1827
    %1829 = vmatmul.f32.gmra.mxu0 %v1710
    %v1830 = vpop.f32.mrf.mxu0
    %v1831 = vadd.f32 %v1793, %v1830
    %1832 = vmatmul.f32.gmra.mxu0 %v1713
    %v1833 = vpop.f32.mrf.mxu0
    %v1834 = vadd.f32 %v1793, %v1833
    %1835 = vmatmul.f32.gmra.mxu0 %v1716
    %v1836 = vpop.f32.mrf.mxu0
    %v1837 = vadd.f32 %v1793, %v1836
    %1838 = vmatmul.f32.gmra.mxu0 %v1719
    %v1839 = vpop.f32.mrf.mxu0
    %v1840 = vadd.f32 %v1793, %v1839
    %1841 = vmatmul.f32.gmra.mxu0 %v1722
    %v1842 = vpop.f32.mrf.mxu0
    %v1843 = vadd.f32 %v1793, %v1842
    %1844 = vdwg.mxu0
    %1845 = vst.msk [vmem:[#allocation3] sm:$0xff] %vm1775, %v1816
    %1846 = vst.msk [vmem:[#allocation3 + $0x8] sm:$0xff] %vm1775, %v1819
    %1847 = vst.msk [vmem:[#allocation3 + $0x10] sm:$0xff] %vm1775, %v1822
    %1848 = vst.msk [vmem:[#allocation3 + $0x18] sm:$0xff] %vm1775, %v1825
    %1849 = vst.msk [vmem:[#allocation3 + $0x20] sm:$0xff] %vm1775, %v1828
    %1850 = vst.msk [vmem:[#allocation3 + $0x28] sm:$0xff] %vm1775, %v1831
    %1851 = vst.msk [vmem:[#allocation3 + $0x30] sm:$0xff] %vm1775, %v1834
    %1852 = vst.msk [vmem:[#allocation3 + $0x38] sm:$0xff] %vm1775, %v1837
    %1853 = vst.msk [vmem:[#allocation3 + $0x40] sm:$0xff] %vm1775, %v1840
    %1854 = vst.msk [vmem:[#allocation3 + $0x48] sm:$0xff] %vm1775, %v1843
    %v1855 = vld [vmem:[%s9] sm:$0x1f]
    %s1856 = scalar_lea.vmem %s9, 8
    %v1857 = vld [vmem:[%s1856] sm:$0x1f]
    %vm1858 = vcmask 39936
    %v1860 = vsel %vm1858, 0.0, 0
    %vm1862 = vcmask 1044480
    %v1864 = vsel %vm1862, %v1855, 0
    %1866 = vmatpush.msra.mxu0 0.0
    %1867 = vmatpush.msra.mxu0 0.0
    %1868 = vmatpush.msra.mxu0 0.0
    %1869 = vmatpush.msra.mxu0 0.0
    %1870 = vmatpush.msra.mxu0 0.0
    %1871 = vmatpush.msra.mxu0 0.0
    %1872 = vmatpush.msra.mxu0 0.0
    %1873 = vmatpush.msra.mxu0 0.0
    %1874 = vmatpush.msra.mxu0 0.0
    %1875 = vmatpush.msra.mxu0 0.0
    %1876 = vmatpush.msra.mxu0 0.0
    %1877 = vmatpush.msra.mxu0 0.0
    %1878 = vmatpush.msra.mxu0 0.0
    %1879 = vmatpush.msra.mxu0 0.0
    %1880 = vmatpush.msra.mxu0 0.0
    %1881 = vmatpush.msra.mxu0 %v1864
    %1882 = vmatmul.f32.gmra.mxu0 %v1860
    %v1883 = vpop.f32.mrf.mxu0
    %v1884 = vadd.f32 0.0, %v1883
    %1885 = vdwg.mxu0
    %v1887 = vsel %vm1862, %v1857, 0
    %1889 = vmatpush.msra.mxu0 0.0
    %1890 = vmatpush.msra.mxu0 0.0
    %1891 = vmatpush.msra.mxu0 0.0
    %1892 = vmatpush.msra.mxu0 0.0
    %1893 = vmatpush.msra.mxu0 0.0
    %1894 = vmatpush.msra.mxu0 0.0
    %1895 = vmatpush.msra.mxu0 0.0
    %1896 = vmatpush.msra.mxu0 0.0
    %1897 = vmatpush.msra.mxu0 0.0
    %1898 = vmatpush.msra.mxu0 0.0
    %1899 = vmatpush.msra.mxu0 0.0
    %1900 = vmatpush.msra.mxu0 0.0
    %1901 = vmatpush.msra.mxu0 0.0
    %1902 = vmatpush.msra.mxu0 0.0
    %1903 = vmatpush.msra.mxu0 0.0
    %1904 = vmatpush.msra.mxu0 %v1887
    %1905 = vmatmul.f32.gmra.mxu0 %v1860
    %v1906 = vpop.f32.mrf.mxu0
    %v1907 = vadd.f32 0.0, %v1906
    %1908 = vdwg.mxu0
    %v1909 = vld [vmem:[#allocation2] sm:$0xff]
    %v1910 = vadd.f32 %v1909, %v1884
    %v1911 = vxor.u32 %v1910, 2147483648
    %v1912 = vmul.f32 %v1911, 1.442695
    %v1913 = vpow.pop %v1912
    %v1914 = vadd.f32 %v1913, 1.0
    %v1915 = vrcp.pop %v1914
    %v1916 = vmul.f32 %v1914, %v1915
    %v1917 = vsub.f32 1.0, %v1916
    %v1918 = vmul.f32 %v1915, %v1917
    %v1919 = vadd.f32 %v1915, %v1918
    %vm1920 = vweird.f32 %v1914
    %vm1921 = vweird.f32 %v1915
    %vm1922 = vmor %vm1920, %vm1921
    %v1923 = vsel %vm1922, %v1915, %v1919
    %v1924 = vand.u32 2147483647, %v1914
    %vm1925 = vcmp.eq.f32.partialorder %v1924, 8.507059e+37
    %v1926 = vand.u32 %v1914, 2147483648
    %v1927 = vor.u32 1.1754944e-38, %v1926
    %v1928 = vsel %vm1925, %v1927, %v1923
    %v1929 = vmul.f32 1.0, %v1928
    %v1931 = vperm.slane %v1683, 0
    %v1933 = vadd.f32 %v1884, %v1931
    %1935 = vrot.lane.b32.xlu0 %v1933, 118
    %v1936 = vpop.permute.xlu0 %1935
    %v1938 = vmul.f32 %v1929, %v1936
    %1940 = vrot.lane.b32.xlu0 %v1938, 10
    %v1941 = vpop.permute.xlu0 %1940
    %v1943 = vadd.f32 %v1909, %v1941
    %v1944 = vtanh.pop %v1943
    %v1945 = vsub.f32 1.0, %v1929
    %1947 = vrot.lane.b32.xlu0 %v1944, 123
    %v1948 = vpop.permute.xlu0 %1947
    %v1950 = vmul.f32 %v1945, %v1948
    %v1951 = vmul.f32 %v1929, 0.0
    %v1952 = vadd.f32 %v1950, %v1951
    %s1953 = scalar_lea.vmem [#allocation3], 72
    %v1954 = vld [vmem:[%s1953] sm:$0xff]
    %v1955 = vadd.f32 %v1954, %v1907
    %v1956 = vxor.u32 %v1955, 2147483648
    %v1957 = vmul.f32 %v1956, 1.442695
    %v1958 = vpow.pop %v1957
    %v1959 = vadd.f32 %v1958, 1.0
    %v1960 = vrcp.pop %v1959
    %v1961 = vmul.f32 %v1959, %v1960
    %v1962 = vsub.f32 1.0, %v1961
    %v1963 = vmul.f32 %v1960, %v1962
    %v1964 = vadd.f32 %v1960, %v1963
    %vm1965 = vweird.f32 %v1959
    %vm1966 = vweird.f32 %v1960
    %vm1967 = vmor %vm1965, %vm1966
    %v1968 = vsel %vm1967, %v1960, %v1964
    %v1969 = vand.u32 2147483647, %v1959
    %vm1970 = vcmp.eq.f32.partialorder %v1969, 8.507059e+37
    %v1971 = vand.u32 %v1959, 2147483648
    %v1972 = vor.u32 1.1754944e-38, %v1971
    %v1973 = vsel %vm1970, %v1972, %v1968
    %v1974 = vmul.f32 1.0, %v1973
    %v1976 = vperm.slane %v1685, 0
    %v1978 = vadd.f32 %v1907, %v1976
    %1980 = vrot.lane.b32.xlu0 %v1978, 118
    %v1981 = vpop.permute.xlu0 %1980
    %v1983 = vmul.f32 %v1974, %v1981
    %1985 = vrot.lane.b32.xlu0 %v1983, 10
    %v1986 = vpop.permute.xlu0 %1985
    %v1988 = vadd.f32 %v1954, %v1986
    %v1989 = vtanh.pop %v1988
    %v1990 = vsub.f32 1.0, %v1974
    %1992 = vrot.lane.b32.xlu0 %v1989, 123
    %v1993 = vpop.permute.xlu0 %1992
    %v1995 = vmul.f32 %v1990, %v1993
    %v1996 = vmul.f32 %v1974, 0.0
    %v1997 = vadd.f32 %v1995, %v1996
    %1999 = vrot.lane.b32.xlu0 %v1952, 123
    %v2000 = vpop.permute.xlu0 %1999
    %2002 = vst.msk [vmem:[#allocation4] sm:$0xff] %vm1858, %v2000
    %2004 = vrot.lane.b32.xlu0 %v1997, 123
    %v2005 = vpop.permute.xlu0 %2004
    %s2007 = scalar_lea.vmem [#allocation5], 72
    %2008 = vst.msk [vmem:[%s2007] sm:$0xff] %vm1858, %v2005
    %v2009 = vsel %vm1858, %v2000, 0
    %2011 = vmatpush.msra.mxu0 0.0
    %2012 = vmatpush.msra.mxu0 0.0
    %2013 = vmatpush.msra.mxu0 0.0
    %2014 = vmatpush.msra.mxu0 0.0
    %2015 = vmatpush.msra.mxu0 0.0
    %2016 = vmatpush.msra.mxu0 0.0
    %2017 = vmatpush.msra.mxu0 0.0
    %2018 = vmatpush.msra.mxu0 0.0
    %2019 = vmatpush.msra.mxu0 0.0
    %2020 = vmatpush.msra.mxu0 0.0
    %2021 = vmatpush.msra.mxu0 0.0
    %2022 = vmatpush.msra.mxu0 0.0
    %2023 = vmatpush.msra.mxu0 0.0
    %2024 = vmatpush.msra.mxu0 0.0
    %2025 = vmatpush.msra.mxu0 0.0
    %2026 = vmatpush.msra.mxu0 %v1864
    %2027 = vmatmul.f32.gmra.mxu0 %v2009
    %v2028 = vpop.f32.mrf.mxu0
    %v2029 = vadd.f32 0.0, %v2028
    %2030 = vdwg.mxu0
    %v2031 = vsel %vm1858, %v2005, 0
    %2033 = vmatpush.msra.mxu0 0.0
    %2034 = vmatpush.msra.mxu0 0.0
    %2035 = vmatpush.msra.mxu0 0.0
    %2036 = vmatpush.msra.mxu0 0.0
    %2037 = vmatpush.msra.mxu0 0.0
    %2038 = vmatpush.msra.mxu0 0.0
    %2039 = vmatpush.msra.mxu0 0.0
    %2040 = vmatpush.msra.mxu0 0.0
    %2041 = vmatpush.msra.mxu0 0.0
    %2042 = vmatpush.msra.mxu0 0.0
    %2043 = vmatpush.msra.mxu0 0.0
    %2044 = vmatpush.msra.mxu0 0.0
    %2045 = vmatpush.msra.mxu0 0.0
    %2046 = vmatpush.msra.mxu0 0.0
    %2047 = vmatpush.msra.mxu0 0.0
    %2048 = vmatpush.msra.mxu0 %v1887
    %2049 = vmatmul.f32.gmra.mxu0 %v2031
    %v2050 = vpop.f32.mrf.mxu0
    %v2051 = vadd.f32 0.0, %v2050
    %2052 = vdwg.mxu0
    %s2053 = scalar_lea.vmem [#allocation2], 8
    %v2054 = vld [vmem:[%s2053] sm:$0xff]
    %v2055 = vadd.f32 %v2054, %v2029
    %v2056 = vxor.u32 %v2055, 2147483648
    %v2057 = vmul.f32 %v2056, 1.442695
    %v2058 = vpow.pop %v2057
    %v2059 = vadd.f32 %v2058, 1.0
    %v2060 = vrcp.pop %v2059
    %v2061 = vmul.f32 %v2059, %v2060
    %v2062 = vsub.f32 1.0, %v2061
    %v2063 = vmul.f32 %v2060, %v2062
    %v2064 = vadd.f32 %v2060, %v2063
    %vm2065 = vweird.f32 %v2059
    %vm2066 = vweird.f32 %v2060
    %vm2067 = vmor %vm2065, %vm2066
    %v2068 = vsel %vm2067, %v2060, %v2064
    %v2069 = vand.u32 2147483647, %v2059
    %vm2070 = vcmp.eq.f32.partialorder %v2069, 8.507059e+37
    %v2071 = vand.u32 %v2059, 2147483648
    %v2072 = vor.u32 1.1754944e-38, %v2071
    %v2073 = vsel %vm2070, %v2072, %v2068
    %v2074 = vmul.f32 1.0, %v2073
    %v2075 = vadd.f32 %v2029, %v1931
    %2077 = vrot.lane.b32.xlu0 %v2075, 118
    %v2078 = vpop.permute.xlu0 %2077
    %v2080 = vmul.f32 %v2074, %v2078
    %2082 = vrot.lane.b32.xlu0 %v2080, 10
    %v2083 = vpop.permute.xlu0 %2082
    %v2085 = vadd.f32 %v2054, %v2083
    %v2086 = vtanh.pop %v2085
    %v2087 = vsub.f32 1.0, %v2074
    %2089 = vrot.lane.b32.xlu0 %v2086, 123
    %v2090 = vpop.permute.xlu0 %2089
    %v2092 = vmul.f32 %v2087, %v2090
    %v2093 = vmul.f32 %v2074, %v1952
    %v2094 = vadd.f32 %v2092, %v2093
    %s2095 = scalar_lea.vmem [#allocation3], 64
    %v2096 = vld [vmem:[%s2095] sm:$0xff]
    %v2097 = vadd.f32 %v2096, %v2051
    %v2098 = vxor.u32 %v2097, 2147483648
    %v2099 = vmul.f32 %v2098, 1.442695
    %v2100 = vpow.pop %v2099
    %v2101 = vadd.f32 %v2100, 1.0
    %v2102 = vrcp.pop %v2101
    %v2103 = vmul.f32 %v2101, %v2102
    %v2104 = vsub.f32 1.0, %v2103
    %v2105 = vmul.f32 %v2102, %v2104
    %v2106 = vadd.f32 %v2102, %v2105
    %vm2107 = vweird.f32 %v2101
    %vm2108 = vweird.f32 %v2102
    %vm2109 = vmor %vm2107, %vm2108
    %v2110 = vsel %vm2109, %v2102, %v2106
    %v2111 = vand.u32 2147483647, %v2101
    %vm2112 = vcmp.eq.f32.partialorder %v2111, 8.507059e+37
    %v2113 = vand.u32 %v2101, 2147483648
    %v2114 = vor.u32 1.1754944e-38, %v2113
    %v2115 = vsel %vm2112, %v2114, %v2110
    %v2116 = vmul.f32 1.0, %v2115
    %v2117 = vadd.f32 %v2051, %v1976
    %2119 = vrot.lane.b32.xlu0 %v2117, 118
    %v2120 = vpop.permute.xlu0 %2119
    %v2122 = vmul.f32 %v2116, %v2120
    %2124 = vrot.lane.b32.xlu0 %v2122, 10
    %v2125 = vpop.permute.xlu0 %2124
    %v2127 = vadd.f32 %v2096, %v2125
    %v2128 = vtanh.pop %v2127
    %v2129 = vsub.f32 1.0, %v2116
    %2131 = vrot.lane.b32.xlu0 %v2128, 123
    %v2132 = vpop.permute.xlu0 %2131
    %v2134 = vmul.f32 %v2129, %v2132
    %v2135 = vmul.f32 %v2116, %v1997
    %v2136 = vadd.f32 %v2134, %v2135
    %2138 = vrot.lane.b32.xlu0 %v2094, 123
    %v2139 = vpop.permute.xlu0 %2138
    %s2141 = scalar_lea.vmem [#allocation4], 8
    %2142 = vst.msk [vmem:[%s2141] sm:$0xff] %vm1858, %v2139
    %2144 = vrot.lane.b32.xlu0 %v2136, 123
    %v2145 = vpop.permute.xlu0 %2144
    %s2147 = scalar_lea.vmem [#allocation5], 64
    %2148 = vst.msk [vmem:[%s2147] sm:$0xff] %vm1858, %v2145
    %v2149 = vsel %vm1858, %v2139, 0
    %2151 = vmatpush.msra.mxu0 0.0
    %2152 = vmatpush.msra.mxu0 0.0
    %2153 = vmatpush.msra.mxu0 0.0
    %2154 = vmatpush.msra.mxu0 0.0
    %2155 = vmatpush.msra.mxu0 0.0
    %2156 = vmatpush.msra.mxu0 0.0
    %2157 = vmatpush.msra.mxu0 0.0
    %2158 = vmatpush.msra.mxu0 0.0
    %2159 = vmatpush.msra.mxu0 0.0
    %2160 = vmatpush.msra.mxu0 0.0
    %2161 = vmatpush.msra.mxu0 0.0
    %2162 = vmatpush.msra.mxu0 0.0
    %2163 = vmatpush.msra.mxu0 0.0
    %2164 = vmatpush.msra.mxu0 0.0
    %2165 = vmatpush.msra.mxu0 0.0
    %2166 = vmatpush.msra.mxu0 %v1864
    %2167 = vmatmul.f32.gmra.mxu0 %v2149
    %v2168 = vpop.f32.mrf.mxu0
    %v2169 = vadd.f32 0.0, %v2168
    %2170 = vdwg.mxu0
    %v2171 = vsel %vm1858, %v2145, 0
    %2173 = vmatpush.msra.mxu0 0.0
    %2174 = vmatpush.msra.mxu0 0.0
    %2175 = vmatpush.msra.mxu0 0.0
    %2176 = vmatpush.msra.mxu0 0.0
    %2177 = vmatpush.msra.mxu0 0.0
    %2178 = vmatpush.msra.mxu0 0.0
    %2179 = vmatpush.msra.mxu0 0.0
    %2180 = vmatpush.msra.mxu0 0.0
    %2181 = vmatpush.msra.mxu0 0.0
    %2182 = vmatpush.msra.mxu0 0.0
    %2183 = vmatpush.msra.mxu0 0.0
    %2184 = vmatpush.msra.mxu0 0.0
    %2185 = vmatpush.msra.mxu0 0.0
    %2186 = vmatpush.msra.mxu0 0.0
    %2187 = vmatpush.msra.mxu0 0.0
    %2188 = vmatpush.msra.mxu0 %v1887
    %2189 = vmatmul.f32.gmra.mxu0 %v2171
    %v2190 = vpop.f32.mrf.mxu0
    %v2191 = vadd.f32 0.0, %v2190
    %2192 = vdwg.mxu0
    %s2193 = scalar_lea.vmem [#allocation2], 16
    %v2194 = vld [vmem:[%s2193] sm:$0xff]
    %v2195 = vadd.f32 %v2194, %v2169
    %v2196 = vxor.u32 %v2195, 2147483648
    %v2197 = vmul.f32 %v2196, 1.442695
    %v2198 = vpow.pop %v2197
    %v2199 = vadd.f32 %v2198, 1.0
    %v2200 = vrcp.pop %v2199
    %v2201 = vmul.f32 %v2199, %v2200
    %v2202 = vsub.f32 1.0, %v2201
    %v2203 = vmul.f32 %v2200, %v2202
    %v2204 = vadd.f32 %v2200, %v2203
    %vm2205 = vweird.f32 %v2199
    %vm2206 = vweird.f32 %v2200
    %vm2207 = vmor %vm2205, %vm2206
    %v2208 = vsel %vm2207, %v2200, %v2204
    %v2209 = vand.u32 2147483647, %v2199
    %vm2210 = vcmp.eq.f32.partialorder %v2209, 8.507059e+37
    %v2211 = vand.u32 %v2199, 2147483648
    %v2212 = vor.u32 1.1754944e-38, %v2211
    %v2213 = vsel %vm2210, %v2212, %v2208
    %v2214 = vmul.f32 1.0, %v2213
    %v2215 = vadd.f32 %v2169, %v1931
    %2217 = vrot.lane.b32.xlu0 %v2215, 118
    %v2218 = vpop.permute.xlu0 %2217
    %v2220 = vmul.f32 %v2214, %v2218
    %2222 = vrot.lane.b32.xlu0 %v2220, 10
    %v2223 = vpop.permute.xlu0 %2222
    %v2225 = vadd.f32 %v2194, %v2223
    %v2226 = vtanh.pop %v2225
    %v2227 = vsub.f32 1.0, %v2214
    %2229 = vrot.lane.b32.xlu0 %v2226, 123
    %v2230 = vpop.permute.xlu0 %2229
    %v2232 = vmul.f32 %v2227, %v2230
    %v2233 = vmul.f32 %v2214, %v2094
    %v2234 = vadd.f32 %v2232, %v2233
    %s2235 = scalar_lea.vmem [#allocation3], 56
    %v2236 = vld [vmem:[%s2235] sm:$0xff]
    %v2237 = vadd.f32 %v2236, %v2191
    %v2238 = vxor.u32 %v2237, 2147483648
    %v2239 = vmul.f32 %v2238, 1.442695
    %v2240 = vpow.pop %v2239
    %v2241 = vadd.f32 %v2240, 1.0
    %v2242 = vrcp.pop %v2241
    %v2243 = vmul.f32 %v2241, %v2242
    %v2244 = vsub.f32 1.0, %v2243
    %v2245 = vmul.f32 %v2242, %v2244
    %v2246 = vadd.f32 %v2242, %v2245
    %vm2247 = vweird.f32 %v2241
    %vm2248 = vweird.f32 %v2242
    %vm2249 = vmor %vm2247, %vm2248
    %v2250 = vsel %vm2249, %v2242, %v2246
    %v2251 = vand.u32 2147483647, %v2241
    %vm2252 = vcmp.eq.f32.partialorder %v2251, 8.507059e+37
    %v2253 = vand.u32 %v2241, 2147483648
    %v2254 = vor.u32 1.1754944e-38, %v2253
    %v2255 = vsel %vm2252, %v2254, %v2250
    %v2256 = vmul.f32 1.0, %v2255
    %v2257 = vadd.f32 %v2191, %v1976
    %2259 = vrot.lane.b32.xlu0 %v2257, 118
    %v2260 = vpop.permute.xlu0 %2259
    %v2262 = vmul.f32 %v2256, %v2260
    %2264 = vrot.lane.b32.xlu0 %v2262, 10
    %v2265 = vpop.permute.xlu0 %2264
    %v2267 = vadd.f32 %v2236, %v2265
    %v2268 = vtanh.pop %v2267
    %v2269 = vsub.f32 1.0, %v2256
    %2271 = vrot.lane.b32.xlu0 %v2268, 123
    %v2272 = vpop.permute.xlu0 %2271
    %v2274 = vmul.f32 %v2269, %v2272
    %v2275 = vmul.f32 %v2256, %v2136
    %v2276 = vadd.f32 %v2274, %v2275
    %2278 = vrot.lane.b32.xlu0 %v2234, 123
    %v2279 = vpop.permute.xlu0 %2278
    %s2281 = scalar_lea.vmem [#allocation4], 16
    %2282 = vst.msk [vmem:[%s2281] sm:$0xff] %vm1858, %v2279
    %2284 = vrot.lane.b32.xlu0 %v2276, 123
    %v2285 = vpop.permute.xlu0 %2284
    %s2287 = scalar_lea.vmem [#allocation5], 56
    %2288 = vst.msk [vmem:[%s2287] sm:$0xff] %vm1858, %v2285
    %v2289 = vsel %vm1858, %v2279, 0
    %2291 = vmatpush.msra.mxu0 0.0
    %2292 = vmatpush.msra.mxu0 0.0
    %2293 = vmatpush.msra.mxu0 0.0
    %2294 = vmatpush.msra.mxu0 0.0
    %2295 = vmatpush.msra.mxu0 0.0
    %2296 = vmatpush.msra.mxu0 0.0
    %2297 = vmatpush.msra.mxu0 0.0
    %2298 = vmatpush.msra.mxu0 0.0
    %2299 = vmatpush.msra.mxu0 0.0
    %2300 = vmatpush.msra.mxu0 0.0
    %2301 = vmatpush.msra.mxu0 0.0
    %2302 = vmatpush.msra.mxu0 0.0
    %2303 = vmatpush.msra.mxu0 0.0
    %2304 = vmatpush.msra.mxu0 0.0
    %2305 = vmatpush.msra.mxu0 0.0
    %2306 = vmatpush.msra.mxu0 %v1864
    %2307 = vmatmul.f32.gmra.mxu0 %v2289
    %v2308 = vpop.f32.mrf.mxu0
    %v2309 = vadd.f32 0.0, %v2308
    %2310 = vdwg.mxu0
    %v2311 = vsel %vm1858, %v2285, 0
    %2313 = vmatpush.msra.mxu0 0.0
    %2314 = vmatpush.msra.mxu0 0.0
    %2315 = vmatpush.msra.mxu0 0.0
    %2316 = vmatpush.msra.mxu0 0.0
    %2317 = vmatpush.msra.mxu0 0.0
    %2318 = vmatpush.msra.mxu0 0.0
    %2319 = vmatpush.msra.mxu0 0.0
    %2320 = vmatpush.msra.mxu0 0.0
    %2321 = vmatpush.msra.mxu0 0.0
    %2322 = vmatpush.msra.mxu0 0.0
    %2323 = vmatpush.msra.mxu0 0.0
    %2324 = vmatpush.msra.mxu0 0.0
    %2325 = vmatpush.msra.mxu0 0.0
    %2326 = vmatpush.msra.mxu0 0.0
    %2327 = vmatpush.msra.mxu0 0.0
    %2328 = vmatpush.msra.mxu0 %v1887
    %2329 = vmatmul.f32.gmra.mxu0 %v2311
    %v2330 = vpop.f32.mrf.mxu0
    %v2331 = vadd.f32 0.0, %v2330
    %2332 = vdwg.mxu0
    %s2333 = scalar_lea.vmem [#allocation2], 24
    %v2334 = vld [vmem:[%s2333] sm:$0xff]
    %v2335 = vadd.f32 %v2334, %v2309
    %v2336 = vxor.u32 %v2335, 2147483648
    %v2337 = vmul.f32 %v2336, 1.442695
    %v2338 = vpow.pop %v2337
    %v2339 = vadd.f32 %v2338, 1.0
    %v2340 = vrcp.pop %v2339
    %v2341 = vmul.f32 %v2339, %v2340
    %v2342 = vsub.f32 1.0, %v2341
    %v2343 = vmul.f32 %v2340, %v2342
    %v2344 = vadd.f32 %v2340, %v2343
    %vm2345 = vweird.f32 %v2339
    %vm2346 = vweird.f32 %v2340
    %vm2347 = vmor %vm2345, %vm2346
    %v2348 = vsel %vm2347, %v2340, %v2344
    %v2349 = vand.u32 2147483647, %v2339
    %vm2350 = vcmp.eq.f32.partialorder %v2349, 8.507059e+37
    %v2351 = vand.u32 %v2339, 2147483648
    %v2352 = vor.u32 1.1754944e-38, %v2351
    %v2353 = vsel %vm2350, %v2352, %v2348
    %v2354 = vmul.f32 1.0, %v2353
    %v2355 = vadd.f32 %v2309, %v1931
    %2357 = vrot.lane.b32.xlu0 %v2355, 118
    %v2358 = vpop.permute.xlu0 %2357
    %v2360 = vmul.f32 %v2354, %v2358
    %2362 = vrot.lane.b32.xlu0 %v2360, 10
    %v2363 = vpop.permute.xlu0 %2362
    %v2365 = vadd.f32 %v2334, %v2363
    %v2366 = vtanh.pop %v2365
    %v2367 = vsub.f32 1.0, %v2354
    %2369 = vrot.lane.b32.xlu0 %v2366, 123
    %v2370 = vpop.permute.xlu0 %2369
    %v2372 = vmul.f32 %v2367, %v2370
    %v2373 = vmul.f32 %v2354, %v2234
    %v2374 = vadd.f32 %v2372, %v2373
    %s2375 = scalar_lea.vmem [#allocation3], 48
    %v2376 = vld [vmem:[%s2375] sm:$0xff]
    %v2377 = vadd.f32 %v2376, %v2331
    %v2378 = vxor.u32 %v2377, 2147483648
    %v2379 = vmul.f32 %v2378, 1.442695
    %v2380 = vpow.pop %v2379
    %v2381 = vadd.f32 %v2380, 1.0
    %v2382 = vrcp.pop %v2381
    %v2383 = vmul.f32 %v2381, %v2382
    %v2384 = vsub.f32 1.0, %v2383
    %v2385 = vmul.f32 %v2382, %v2384
    %v2386 = vadd.f32 %v2382, %v2385
    %vm2387 = vweird.f32 %v2381
    %vm2388 = vweird.f32 %v2382
    %vm2389 = vmor %vm2387, %vm2388
    %v2390 = vsel %vm2389, %v2382, %v2386
    %v2391 = vand.u32 2147483647, %v2381
    %vm2392 = vcmp.eq.f32.partialorder %v2391, 8.507059e+37
    %v2393 = vand.u32 %v2381, 2147483648
    %v2394 = vor.u32 1.1754944e-38, %v2393
    %v2395 = vsel %vm2392, %v2394, %v2390
    %v2396 = vmul.f32 1.0, %v2395
    %v2397 = vadd.f32 %v2331, %v1976
    %2399 = vrot.lane.b32.xlu0 %v2397, 118
    %v2400 = vpop.permute.xlu0 %2399
    %v2402 = vmul.f32 %v2396, %v2400
    %2404 = vrot.lane.b32.xlu0 %v2402, 10
    %v2405 = vpop.permute.xlu0 %2404
    %v2407 = vadd.f32 %v2376, %v2405
    %v2408 = vtanh.pop %v2407
    %v2409 = vsub.f32 1.0, %v2396
    %2411 = vrot.lane.b32.xlu0 %v2408, 123
    %v2412 = vpop.permute.xlu0 %2411
    %v2414 = vmul.f32 %v2409, %v2412
    %v2415 = vmul.f32 %v2396, %v2276
    %v2416 = vadd.f32 %v2414, %v2415
    %2418 = vrot.lane.b32.xlu0 %v2374, 123
    %v2419 = vpop.permute.xlu0 %2418
    %s2421 = scalar_lea.vmem [#allocation4], 24
    %2422 = vst.msk [vmem:[%s2421] sm:$0xff] %vm1858, %v2419
    %2424 = vrot.lane.b32.xlu0 %v2416, 123
    %v2425 = vpop.permute.xlu0 %2424
    %s2427 = scalar_lea.vmem [#allocation5], 48
    %2428 = vst.msk [vmem:[%s2427] sm:$0xff] %vm1858, %v2425
    %v2429 = vsel %vm1858, %v2419, 0
    %2431 = vmatpush.msra.mxu0 0.0
    %2432 = vmatpush.msra.mxu0 0.0
    %2433 = vmatpush.msra.mxu0 0.0
    %2434 = vmatpush.msra.mxu0 0.0
    %2435 = vmatpush.msra.mxu0 0.0
    %2436 = vmatpush.msra.mxu0 0.0
    %2437 = vmatpush.msra.mxu0 0.0
    %2438 = vmatpush.msra.mxu0 0.0
    %2439 = vmatpush.msra.mxu0 0.0
    %2440 = vmatpush.msra.mxu0 0.0
    %2441 = vmatpush.msra.mxu0 0.0
    %2442 = vmatpush.msra.mxu0 0.0
    %2443 = vmatpush.msra.mxu0 0.0
    %2444 = vmatpush.msra.mxu0 0.0
    %2445 = vmatpush.msra.mxu0 0.0
    %2446 = vmatpush.msra.mxu0 %v1864
    %2447 = vmatmul.f32.gmra.mxu0 %v2429
    %v2448 = vpop.f32.mrf.mxu0
    %v2449 = vadd.f32 0.0, %v2448
    %2450 = vdwg.mxu0
    %v2451 = vsel %vm1858, %v2425, 0
    %2453 = vmatpush.msra.mxu0 0.0
    %2454 = vmatpush.msra.mxu0 0.0
    %2455 = vmatpush.msra.mxu0 0.0
    %2456 = vmatpush.msra.mxu0 0.0
    %2457 = vmatpush.msra.mxu0 0.0
    %2458 = vmatpush.msra.mxu0 0.0
    %2459 = vmatpush.msra.mxu0 0.0
    %2460 = vmatpush.msra.mxu0 0.0
    %2461 = vmatpush.msra.mxu0 0.0
    %2462 = vmatpush.msra.mxu0 0.0
    %2463 = vmatpush.msra.mxu0 0.0
    %2464 = vmatpush.msra.mxu0 0.0
    %2465 = vmatpush.msra.mxu0 0.0
    %2466 = vmatpush.msra.mxu0 0.0
    %2467 = vmatpush.msra.mxu0 0.0
    %2468 = vmatpush.msra.mxu0 %v1887
    %2469 = vmatmul.f32.gmra.mxu0 %v2451
    %v2470 = vpop.f32.mrf.mxu0
    %v2471 = vadd.f32 0.0, %v2470
    %2472 = vdwg.mxu0
    %s2473 = scalar_lea.vmem [#allocation2], 32
    %v2474 = vld [vmem:[%s2473] sm:$0xff]
    %v2475 = vadd.f32 %v2474, %v2449
    %v2476 = vxor.u32 %v2475, 2147483648
    %v2477 = vmul.f32 %v2476, 1.442695
    %v2478 = vpow.pop %v2477
    %v2479 = vadd.f32 %v2478, 1.0
    %v2480 = vrcp.pop %v2479
    %v2481 = vmul.f32 %v2479, %v2480
    %v2482 = vsub.f32 1.0, %v2481
    %v2483 = vmul.f32 %v2480, %v2482
    %v2484 = vadd.f32 %v2480, %v2483
    %vm2485 = vweird.f32 %v2479
    %vm2486 = vweird.f32 %v2480
    %vm2487 = vmor %vm2485, %vm2486
    %v2488 = vsel %vm2487, %v2480, %v2484
    %v2489 = vand.u32 2147483647, %v2479
    %vm2490 = vcmp.eq.f32.partialorder %v2489, 8.507059e+37
    %v2491 = vand.u32 %v2479, 2147483648
    %v2492 = vor.u32 1.1754944e-38, %v2491
    %v2493 = vsel %vm2490, %v2492, %v2488
    %v2494 = vmul.f32 1.0, %v2493
    %v2495 = vadd.f32 %v2449, %v1931
    %2497 = vrot.lane.b32.xlu0 %v2495, 118
    %v2498 = vpop.permute.xlu0 %2497
    %v2500 = vmul.f32 %v2494, %v2498
    %2502 = vrot.lane.b32.xlu0 %v2500, 10
    %v2503 = vpop.permute.xlu0 %2502
    %v2505 = vadd.f32 %v2474, %v2503
    %v2506 = vtanh.pop %v2505
    %v2507 = vsub.f32 1.0, %v2494
    %2509 = vrot.lane.b32.xlu0 %v2506, 123
    %v2510 = vpop.permute.xlu0 %2509
    %v2512 = vmul.f32 %v2507, %v2510
    %v2513 = vmul.f32 %v2494, %v2374
    %v2514 = vadd.f32 %v2512, %v2513
    %s2515 = scalar_lea.vmem [#allocation3], 40
    %v2516 = vld [vmem:[%s2515] sm:$0xff]
    %v2517 = vadd.f32 %v2516, %v2471
    %v2518 = vxor.u32 %v2517, 2147483648
    %v2519 = vmul.f32 %v2518, 1.442695
    %v2520 = vpow.pop %v2519
    %v2521 = vadd.f32 %v2520, 1.0
    %v2522 = vrcp.pop %v2521
    %v2523 = vmul.f32 %v2521, %v2522
    %v2524 = vsub.f32 1.0, %v2523
    %v2525 = vmul.f32 %v2522, %v2524
    %v2526 = vadd.f32 %v2522, %v2525
    %vm2527 = vweird.f32 %v2521
    %vm2528 = vweird.f32 %v2522
    %vm2529 = vmor %vm2527, %vm2528
    %v2530 = vsel %vm2529, %v2522, %v2526
    %v2531 = vand.u32 2147483647, %v2521
    %vm2532 = vcmp.eq.f32.partialorder %v2531, 8.507059e+37
    %v2533 = vand.u32 %v2521, 2147483648
    %v2534 = vor.u32 1.1754944e-38, %v2533
    %v2535 = vsel %vm2532, %v2534, %v2530
    %v2536 = vmul.f32 1.0, %v2535
    %v2537 = vadd.f32 %v2471, %v1976
    %2539 = vrot.lane.b32.xlu0 %v2537, 118
    %v2540 = vpop.permute.xlu0 %2539
    %v2542 = vmul.f32 %v2536, %v2540
    %2544 = vrot.lane.b32.xlu0 %v2542, 10
    %v2545 = vpop.permute.xlu0 %2544
    %v2547 = vadd.f32 %v2516, %v2545
    %v2548 = vtanh.pop %v2547
    %v2549 = vsub.f32 1.0, %v2536
    %2551 = vrot.lane.b32.xlu0 %v2548, 123
    %v2552 = vpop.permute.xlu0 %2551
    %v2554 = vmul.f32 %v2549, %v2552
    %v2555 = vmul.f32 %v2536, %v2416
    %v2556 = vadd.f32 %v2554, %v2555
    %2558 = vrot.lane.b32.xlu0 %v2514, 123
    %v2559 = vpop.permute.xlu0 %2558
    %s2561 = scalar_lea.vmem [#allocation4], 32
    %2562 = vst.msk [vmem:[%s2561] sm:$0xff] %vm1858, %v2559
    %2564 = vrot.lane.b32.xlu0 %v2556, 123
    %v2565 = vpop.permute.xlu0 %2564
    %s2567 = scalar_lea.vmem [#allocation5], 40
    %2568 = vst.msk [vmem:[%s2567] sm:$0xff] %vm1858, %v2565
    %v2569 = vsel %vm1858, %v2559, 0
    %2571 = vmatpush.msra.mxu0 0.0
    %2572 = vmatpush.msra.mxu0 0.0
    %2573 = vmatpush.msra.mxu0 0.0
    %2574 = vmatpush.msra.mxu0 0.0
    %2575 = vmatpush.msra.mxu0 0.0
    %2576 = vmatpush.msra.mxu0 0.0
    %2577 = vmatpush.msra.mxu0 0.0
    %2578 = vmatpush.msra.mxu0 0.0
    %2579 = vmatpush.msra.mxu0 0.0
    %2580 = vmatpush.msra.mxu0 0.0
    %2581 = vmatpush.msra.mxu0 0.0
    %2582 = vmatpush.msra.mxu0 0.0
    %2583 = vmatpush.msra.mxu0 0.0
    %2584 = vmatpush.msra.mxu0 0.0
    %2585 = vmatpush.msra.mxu0 0.0
    %2586 = vmatpush.msra.mxu0 %v1864
    %2587 = vmatmul.f32.gmra.mxu0 %v2569
    %v2588 = vpop.f32.mrf.mxu0
    %v2589 = vadd.f32 0.0, %v2588
    %2590 = vdwg.mxu0
    %v2591 = vsel %vm1858, %v2565, 0
    %2593 = vmatpush.msra.mxu0 0.0
    %2594 = vmatpush.msra.mxu0 0.0
    %2595 = vmatpush.msra.mxu0 0.0
    %2596 = vmatpush.msra.mxu0 0.0
    %2597 = vmatpush.msra.mxu0 0.0
    %2598 = vmatpush.msra.mxu0 0.0
    %2599 = vmatpush.msra.mxu0 0.0
    %2600 = vmatpush.msra.mxu0 0.0
    %2601 = vmatpush.msra.mxu0 0.0
    %2602 = vmatpush.msra.mxu0 0.0
    %2603 = vmatpush.msra.mxu0 0.0
    %2604 = vmatpush.msra.mxu0 0.0
    %2605 = vmatpush.msra.mxu0 0.0
    %2606 = vmatpush.msra.mxu0 0.0
    %2607 = vmatpush.msra.mxu0 0.0
    %2608 = vmatpush.msra.mxu0 %v1887
    %2609 = vmatmul.f32.gmra.mxu0 %v2591
    %v2610 = vpop.f32.mrf.mxu0
    %v2611 = vadd.f32 0.0, %v2610
    %2612 = vdwg.mxu0
    %s2613 = scalar_lea.vmem [#allocation2], 40
    %v2614 = vld [vmem:[%s2613] sm:$0xff]
    %v2615 = vadd.f32 %v2614, %v2589
    %v2616 = vxor.u32 %v2615, 2147483648
    %v2617 = vmul.f32 %v2616, 1.442695
    %v2618 = vpow.pop %v2617
    %v2619 = vadd.f32 %v2618, 1.0
    %v2620 = vrcp.pop %v2619
    %v2621 = vmul.f32 %v2619, %v2620
    %v2622 = vsub.f32 1.0, %v2621
    %v2623 = vmul.f32 %v2620, %v2622
    %v2624 = vadd.f32 %v2620, %v2623
    %vm2625 = vweird.f32 %v2619
    %vm2626 = vweird.f32 %v2620
    %vm2627 = vmor %vm2625, %vm2626
    %v2628 = vsel %vm2627, %v2620, %v2624
    %v2629 = vand.u32 2147483647, %v2619
    %vm2630 = vcmp.eq.f32.partialorder %v2629, 8.507059e+37
    %v2631 = vand.u32 %v2619, 2147483648
    %v2632 = vor.u32 1.1754944e-38, %v2631
    %v2633 = vsel %vm2630, %v2632, %v2628
    %v2634 = vmul.f32 1.0, %v2633
    %v2635 = vadd.f32 %v2589, %v1931
    %2637 = vrot.lane.b32.xlu0 %v2635, 118
    %v2638 = vpop.permute.xlu0 %2637
    %v2640 = vmul.f32 %v2634, %v2638
    %2642 = vrot.lane.b32.xlu0 %v2640, 10
    %v2643 = vpop.permute.xlu0 %2642
    %v2645 = vadd.f32 %v2614, %v2643
    %v2646 = vtanh.pop %v2645
    %v2647 = vsub.f32 1.0, %v2634
    %2649 = vrot.lane.b32.xlu0 %v2646, 123
    %v2650 = vpop.permute.xlu0 %2649
    %v2652 = vmul.f32 %v2647, %v2650
    %v2653 = vmul.f32 %v2634, %v2514
    %v2654 = vadd.f32 %v2652, %v2653
    %s2655 = scalar_lea.vmem [#allocation3], 32
    %v2656 = vld [vmem:[%s2655] sm:$0xff]
    %v2657 = vadd.f32 %v2656, %v2611
    %v2658 = vxor.u32 %v2657, 2147483648
    %v2659 = vmul.f32 %v2658, 1.442695
    %v2660 = vpow.pop %v2659
    %v2661 = vadd.f32 %v2660, 1.0
    %v2662 = vrcp.pop %v2661
    %v2663 = vmul.f32 %v2661, %v2662
    %v2664 = vsub.f32 1.0, %v2663
    %v2665 = vmul.f32 %v2662, %v2664
    %v2666 = vadd.f32 %v2662, %v2665
    %vm2667 = vweird.f32 %v2661
    %vm2668 = vweird.f32 %v2662
    %vm2669 = vmor %vm2667, %vm2668
    %v2670 = vsel %vm2669, %v2662, %v2666
    %v2671 = vand.u32 2147483647, %v2661
    %vm2672 = vcmp.eq.f32.partialorder %v2671, 8.507059e+37
    %v2673 = vand.u32 %v2661, 2147483648
    %v2674 = vor.u32 1.1754944e-38, %v2673
    %v2675 = vsel %vm2672, %v2674, %v2670
    %v2676 = vmul.f32 1.0, %v2675
    %v2677 = vadd.f32 %v2611, %v1976
    %2679 = vrot.lane.b32.xlu0 %v2677, 118
    %v2680 = vpop.permute.xlu0 %2679
    %v2682 = vmul.f32 %v2676, %v2680
    %2684 = vrot.lane.b32.xlu0 %v2682, 10
    %v2685 = vpop.permute.xlu0 %2684
    %v2687 = vadd.f32 %v2656, %v2685
    %v2688 = vtanh.pop %v2687
    %v2689 = vsub.f32 1.0, %v2676
    %2691 = vrot.lane.b32.xlu0 %v2688, 123
    %v2692 = vpop.permute.xlu0 %2691
    %v2694 = vmul.f32 %v2689, %v2692
    %v2695 = vmul.f32 %v2676, %v2556
    %v2696 = vadd.f32 %v2694, %v2695
    %2698 = vrot.lane.b32.xlu0 %v2654, 123
    %v2699 = vpop.permute.xlu0 %2698
    %s2701 = scalar_lea.vmem [#allocation4], 40
    %2702 = vst.msk [vmem:[%s2701] sm:$0xff] %vm1858, %v2699
    %2704 = vrot.lane.b32.xlu0 %v2696, 123
    %v2705 = vpop.permute.xlu0 %2704
    %s2707 = scalar_lea.vmem [#allocation5], 32
    %2708 = vst.msk [vmem:[%s2707] sm:$0xff] %vm1858, %v2705
    %v2709 = vsel %vm1858, %v2699, 0
    %2711 = vmatpush.msra.mxu0 0.0
    %2712 = vmatpush.msra.mxu0 0.0
    %2713 = vmatpush.msra.mxu0 0.0
    %2714 = vmatpush.msra.mxu0 0.0
    %2715 = vmatpush.msra.mxu0 0.0
    %2716 = vmatpush.msra.mxu0 0.0
    %2717 = vmatpush.msra.mxu0 0.0
    %2718 = vmatpush.msra.mxu0 0.0
    %2719 = vmatpush.msra.mxu0 0.0
    %2720 = vmatpush.msra.mxu0 0.0
    %2721 = vmatpush.msra.mxu0 0.0
    %2722 = vmatpush.msra.mxu0 0.0
    %2723 = vmatpush.msra.mxu0 0.0
    %2724 = vmatpush.msra.mxu0 0.0
    %2725 = vmatpush.msra.mxu0 0.0
    %2726 = vmatpush.msra.mxu0 %v1864
    %2727 = vmatmul.f32.gmra.mxu0 %v2709
    %v2728 = vpop.f32.mrf.mxu0
    %v2729 = vadd.f32 0.0, %v2728
    %2730 = vdwg.mxu0
    %v2731 = vsel %vm1858, %v2705, 0
    %2733 = vmatpush.msra.mxu0 0.0
    %2734 = vmatpush.msra.mxu0 0.0
    %2735 = vmatpush.msra.mxu0 0.0
    %2736 = vmatpush.msra.mxu0 0.0
    %2737 = vmatpush.msra.mxu0 0.0
    %2738 = vmatpush.msra.mxu0 0.0
    %2739 = vmatpush.msra.mxu0 0.0
    %2740 = vmatpush.msra.mxu0 0.0
    %2741 = vmatpush.msra.mxu0 0.0
    %2742 = vmatpush.msra.mxu0 0.0
    %2743 = vmatpush.msra.mxu0 0.0
    %2744 = vmatpush.msra.mxu0 0.0
    %2745 = vmatpush.msra.mxu0 0.0
    %2746 = vmatpush.msra.mxu0 0.0
    %2747 = vmatpush.msra.mxu0 0.0
    %2748 = vmatpush.msra.mxu0 %v1887
    %2749 = vmatmul.f32.gmra.mxu0 %v2731
    %v2750 = vpop.f32.mrf.mxu0
    %v2751 = vadd.f32 0.0, %v2750
    %2752 = vdwg.mxu0
    %s2753 = scalar_lea.vmem [#allocation2], 48
    %v2754 = vld [vmem:[%s2753] sm:$0xff]
    %v2755 = vadd.f32 %v2754, %v2729
    %v2756 = vxor.u32 %v2755, 2147483648
    %v2757 = vmul.f32 %v2756, 1.442695
    %v2758 = vpow.pop %v2757
    %v2759 = vadd.f32 %v2758, 1.0
    %v2760 = vrcp.pop %v2759
    %v2761 = vmul.f32 %v2759, %v2760
    %v2762 = vsub.f32 1.0, %v2761
    %v2763 = vmul.f32 %v2760, %v2762
    %v2764 = vadd.f32 %v2760, %v2763
    %vm2765 = vweird.f32 %v2759
    %vm2766 = vweird.f32 %v2760
    %vm2767 = vmor %vm2765, %vm2766
    %v2768 = vsel %vm2767, %v2760, %v2764
    %v2769 = vand.u32 2147483647, %v2759
    %vm2770 = vcmp.eq.f32.partialorder %v2769, 8.507059e+37
    %v2771 = vand.u32 %v2759, 2147483648
    %v2772 = vor.u32 1.1754944e-38, %v2771
    %v2773 = vsel %vm2770, %v2772, %v2768
    %v2774 = vmul.f32 1.0, %v2773
    %v2775 = vadd.f32 %v2729, %v1931
    %2777 = vrot.lane.b32.xlu0 %v2775, 118
    %v2778 = vpop.permute.xlu0 %2777
    %v2780 = vmul.f32 %v2774, %v2778
    %2782 = vrot.lane.b32.xlu0 %v2780, 10
    %v2783 = vpop.permute.xlu0 %2782
    %v2785 = vadd.f32 %v2754, %v2783
    %v2786 = vtanh.pop %v2785
    %v2787 = vsub.f32 1.0, %v2774
    %2789 = vrot.lane.b32.xlu0 %v2786, 123
    %v2790 = vpop.permute.xlu0 %2789
    %v2792 = vmul.f32 %v2787, %v2790
    %v2793 = vmul.f32 %v2774, %v2654
    %v2794 = vadd.f32 %v2792, %v2793
    %s2795 = scalar_lea.vmem [#allocation3], 24
    %v2796 = vld [vmem:[%s2795] sm:$0xff]
    %v2797 = vadd.f32 %v2796, %v2751
    %v2798 = vxor.u32 %v2797, 2147483648
    %v2799 = vmul.f32 %v2798, 1.442695
    %v2800 = vpow.pop %v2799
    %v2801 = vadd.f32 %v2800, 1.0
    %v2802 = vrcp.pop %v2801
    %v2803 = vmul.f32 %v2801, %v2802
    %v2804 = vsub.f32 1.0, %v2803
    %v2805 = vmul.f32 %v2802, %v2804
    %v2806 = vadd.f32 %v2802, %v2805
    %vm2807 = vweird.f32 %v2801
    %vm2808 = vweird.f32 %v2802
    %vm2809 = vmor %vm2807, %vm2808
    %v2810 = vsel %vm2809, %v2802, %v2806
    %v2811 = vand.u32 2147483647, %v2801
    %vm2812 = vcmp.eq.f32.partialorder %v2811, 8.507059e+37
    %v2813 = vand.u32 %v2801, 2147483648
    %v2814 = vor.u32 1.1754944e-38, %v2813
    %v2815 = vsel %vm2812, %v2814, %v2810
    %v2816 = vmul.f32 1.0, %v2815
    %v2817 = vadd.f32 %v2751, %v1976
    %2819 = vrot.lane.b32.xlu0 %v2817, 118
    %v2820 = vpop.permute.xlu0 %2819
    %v2822 = vmul.f32 %v2816, %v2820
    %2824 = vrot.lane.b32.xlu0 %v2822, 10
    %v2825 = vpop.permute.xlu0 %2824
    %v2827 = vadd.f32 %v2796, %v2825
    %v2828 = vtanh.pop %v2827
    %v2829 = vsub.f32 1.0, %v2816
    %2831 = vrot.lane.b32.xlu0 %v2828, 123
    %v2832 = vpop.permute.xlu0 %2831
    %v2834 = vmul.f32 %v2829, %v2832
    %v2835 = vmul.f32 %v2816, %v2696
    %v2836 = vadd.f32 %v2834, %v2835
    %2838 = vrot.lane.b32.xlu0 %v2794, 123
    %v2839 = vpop.permute.xlu0 %2838
    %s2841 = scalar_lea.vmem [#allocation4], 48
    %2842 = vst.msk [vmem:[%s2841] sm:$0xff] %vm1858, %v2839
    %2844 = vrot.lane.b32.xlu0 %v2836, 123
    %v2845 = vpop.permute.xlu0 %2844
    %s2847 = scalar_lea.vmem [#allocation5], 24
    %2848 = vst.msk [vmem:[%s2847] sm:$0xff] %vm1858, %v2845
    %v2849 = vsel %vm1858, %v2839, 0
    %2851 = vmatpush.msra.mxu0 0.0
    %2852 = vmatpush.msra.mxu0 0.0
    %2853 = vmatpush.msra.mxu0 0.0
    %2854 = vmatpush.msra.mxu0 0.0
    %2855 = vmatpush.msra.mxu0 0.0
    %2856 = vmatpush.msra.mxu0 0.0
    %2857 = vmatpush.msra.mxu0 0.0
    %2858 = vmatpush.msra.mxu0 0.0
    %2859 = vmatpush.msra.mxu0 0.0
    %2860 = vmatpush.msra.mxu0 0.0
    %2861 = vmatpush.msra.mxu0 0.0
    %2862 = vmatpush.msra.mxu0 0.0
    %2863 = vmatpush.msra.mxu0 0.0
    %2864 = vmatpush.msra.mxu0 0.0
    %2865 = vmatpush.msra.mxu0 0.0
    %2866 = vmatpush.msra.mxu0 %v1864
    %2867 = vmatmul.f32.gmra.mxu0 %v2849
    %v2868 = vpop.f32.mrf.mxu0
    %v2869 = vadd.f32 0.0, %v2868
    %2870 = vdwg.mxu0
    %v2871 = vsel %vm1858, %v2845, 0
    %2873 = vmatpush.msra.mxu0 0.0
    %2874 = vmatpush.msra.mxu0 0.0
    %2875 = vmatpush.msra.mxu0 0.0
    %2876 = vmatpush.msra.mxu0 0.0
    %2877 = vmatpush.msra.mxu0 0.0
    %2878 = vmatpush.msra.mxu0 0.0
    %2879 = vmatpush.msra.mxu0 0.0
    %2880 = vmatpush.msra.mxu0 0.0
    %2881 = vmatpush.msra.mxu0 0.0
    %2882 = vmatpush.msra.mxu0 0.0
    %2883 = vmatpush.msra.mxu0 0.0
    %2884 = vmatpush.msra.mxu0 0.0
    %2885 = vmatpush.msra.mxu0 0.0
    %2886 = vmatpush.msra.mxu0 0.0
    %2887 = vmatpush.msra.mxu0 0.0
    %2888 = vmatpush.msra.mxu0 %v1887
    %2889 = vmatmul.f32.gmra.mxu0 %v2871
    %v2890 = vpop.f32.mrf.mxu0
    %v2891 = vadd.f32 0.0, %v2890
    %2892 = vdwg.mxu0
    %s2893 = scalar_lea.vmem [#allocation2], 56
    %v2894 = vld [vmem:[%s2893] sm:$0xff]
    %v2895 = vadd.f32 %v2894, %v2869
    %v2896 = vxor.u32 %v2895, 2147483648
    %v2897 = vmul.f32 %v2896, 1.442695
    %v2898 = vpow.pop %v2897
    %v2899 = vadd.f32 %v2898, 1.0
    %v2900 = vrcp.pop %v2899
    %v2901 = vmul.f32 %v2899, %v2900
    %v2902 = vsub.f32 1.0, %v2901
    %v2903 = vmul.f32 %v2900, %v2902
    %v2904 = vadd.f32 %v2900, %v2903
    %vm2905 = vweird.f32 %v2899
    %vm2906 = vweird.f32 %v2900
    %vm2907 = vmor %vm2905, %vm2906
    %v2908 = vsel %vm2907, %v2900, %v2904
    %v2909 = vand.u32 2147483647, %v2899
    %vm2910 = vcmp.eq.f32.partialorder %v2909, 8.507059e+37
    %v2911 = vand.u32 %v2899, 2147483648
    %v2912 = vor.u32 1.1754944e-38, %v2911
    %v2913 = vsel %vm2910, %v2912, %v2908
    %v2914 = vmul.f32 1.0, %v2913
    %v2915 = vadd.f32 %v2869, %v1931
    %2917 = vrot.lane.b32.xlu0 %v2915, 118
    %v2918 = vpop.permute.xlu0 %2917
    %v2920 = vmul.f32 %v2914, %v2918
    %2922 = vrot.lane.b32.xlu0 %v2920, 10
    %v2923 = vpop.permute.xlu0 %2922
    %v2925 = vadd.f32 %v2894, %v2923
    %v2926 = vtanh.pop %v2925
    %v2927 = vsub.f32 1.0, %v2914
    %2929 = vrot.lane.b32.xlu0 %v2926, 123
    %v2930 = vpop.permute.xlu0 %2929
    %v2932 = vmul.f32 %v2927, %v2930
    %v2933 = vmul.f32 %v2914, %v2794
    %v2934 = vadd.f32 %v2932, %v2933
    %s2935 = scalar_lea.vmem [#allocation3], 16
    %v2936 = vld [vmem:[%s2935] sm:$0xff]
    %v2937 = vadd.f32 %v2936, %v2891
    %v2938 = vxor.u32 %v2937, 2147483648
    %v2939 = vmul.f32 %v2938, 1.442695
    %v2940 = vpow.pop %v2939
    %v2941 = vadd.f32 %v2940, 1.0
    %v2942 = vrcp.pop %v2941
    %v2943 = vmul.f32 %v2941, %v2942
    %v2944 = vsub.f32 1.0, %v2943
    %v2945 = vmul.f32 %v2942, %v2944
    %v2946 = vadd.f32 %v2942, %v2945
    %vm2947 = vweird.f32 %v2941
    %vm2948 = vweird.f32 %v2942
    %vm2949 = vmor %vm2947, %vm2948
    %v2950 = vsel %vm2949, %v2942, %v2946
    %v2951 = vand.u32 2147483647, %v2941
    %vm2952 = vcmp.eq.f32.partialorder %v2951, 8.507059e+37
    %v2953 = vand.u32 %v2941, 2147483648
    %v2954 = vor.u32 1.1754944e-38, %v2953
    %v2955 = vsel %vm2952, %v2954, %v2950
    %v2956 = vmul.f32 1.0, %v2955
    %v2957 = vadd.f32 %v2891, %v1976
    %2959 = vrot.lane.b32.xlu0 %v2957, 118
    %v2960 = vpop.permute.xlu0 %2959
    %v2962 = vmul.f32 %v2956, %v2960
    %2964 = vrot.lane.b32.xlu0 %v2962, 10
    %v2965 = vpop.permute.xlu0 %2964
    %v2967 = vadd.f32 %v2936, %v2965
    %v2968 = vtanh.pop %v2967
    %v2969 = vsub.f32 1.0, %v2956
    %2971 = vrot.lane.b32.xlu0 %v2968, 123
    %v2972 = vpop.permute.xlu0 %2971
    %v2974 = vmul.f32 %v2969, %v2972
    %v2975 = vmul.f32 %v2956, %v2836
    %v2976 = vadd.f32 %v2974, %v2975
    %2978 = vrot.lane.b32.xlu0 %v2934, 123
    %v2979 = vpop.permute.xlu0 %2978
    %s2981 = scalar_lea.vmem [#allocation4], 56
    %2982 = vst.msk [vmem:[%s2981] sm:$0xff] %vm1858, %v2979
    %2984 = vrot.lane.b32.xlu0 %v2976, 123
    %v2985 = vpop.permute.xlu0 %2984
    %s2987 = scalar_lea.vmem [#allocation5], 16
    %2988 = vst.msk [vmem:[%s2987] sm:$0xff] %vm1858, %v2985
    %v2989 = vsel %vm1858, %v2979, 0
    %2991 = vmatpush.msra.mxu0 0.0
    %2992 = vmatpush.msra.mxu0 0.0
    %2993 = vmatpush.msra.mxu0 0.0
    %2994 = vmatpush.msra.mxu0 0.0
    %2995 = vmatpush.msra.mxu0 0.0
    %2996 = vmatpush.msra.mxu0 0.0
    %2997 = vmatpush.msra.mxu0 0.0
    %2998 = vmatpush.msra.mxu0 0.0
    %2999 = vmatpush.msra.mxu0 0.0
    %3000 = vmatpush.msra.mxu0 0.0
    %3001 = vmatpush.msra.mxu0 0.0
    %3002 = vmatpush.msra.mxu0 0.0
    %3003 = vmatpush.msra.mxu0 0.0
    %3004 = vmatpush.msra.mxu0 0.0
    %3005 = vmatpush.msra.mxu0 0.0
    %3006 = vmatpush.msra.mxu0 %v1864
    %3007 = vmatmul.f32.gmra.mxu0 %v2989
    %v3008 = vpop.f32.mrf.mxu0
    %v3009 = vadd.f32 0.0, %v3008
    %3010 = vdwg.mxu0
    %v3011 = vsel %vm1858, %v2985, 0
    %3013 = vmatpush.msra.mxu0 0.0
    %3014 = vmatpush.msra.mxu0 0.0
    %3015 = vmatpush.msra.mxu0 0.0
    %3016 = vmatpush.msra.mxu0 0.0
    %3017 = vmatpush.msra.mxu0 0.0
    %3018 = vmatpush.msra.mxu0 0.0
    %3019 = vmatpush.msra.mxu0 0.0
    %3020 = vmatpush.msra.mxu0 0.0
    %3021 = vmatpush.msra.mxu0 0.0
    %3022 = vmatpush.msra.mxu0 0.0
    %3023 = vmatpush.msra.mxu0 0.0
    %3024 = vmatpush.msra.mxu0 0.0
    %3025 = vmatpush.msra.mxu0 0.0
    %3026 = vmatpush.msra.mxu0 0.0
    %3027 = vmatpush.msra.mxu0 0.0
    %3028 = vmatpush.msra.mxu0 %v1887
    %3029 = vmatmul.f32.gmra.mxu0 %v3011
    %v3030 = vpop.f32.mrf.mxu0
    %v3031 = vadd.f32 0.0, %v3030
    %3032 = vdwg.mxu0
    %s3033 = scalar_lea.vmem [#allocation2], 64
    %v3034 = vld [vmem:[%s3033] sm:$0xff]
    %v3035 = vadd.f32 %v3034, %v3009
    %v3036 = vxor.u32 %v3035, 2147483648
    %v3037 = vmul.f32 %v3036, 1.442695
    %v3038 = vpow.pop %v3037
    %v3039 = vadd.f32 %v3038, 1.0
    %v3040 = vrcp.pop %v3039
    %v3041 = vmul.f32 %v3039, %v3040
    %v3042 = vsub.f32 1.0, %v3041
    %v3043 = vmul.f32 %v3040, %v3042
    %v3044 = vadd.f32 %v3040, %v3043
    %vm3045 = vweird.f32 %v3039
    %vm3046 = vweird.f32 %v3040
    %vm3047 = vmor %vm3045, %vm3046
    %v3048 = vsel %vm3047, %v3040, %v3044
    %v3049 = vand.u32 2147483647, %v3039
    %vm3050 = vcmp.eq.f32.partialorder %v3049, 8.507059e+37
    %v3051 = vand.u32 %v3039, 2147483648
    %v3052 = vor.u32 1.1754944e-38, %v3051
    %v3053 = vsel %vm3050, %v3052, %v3048
    %v3054 = vmul.f32 1.0, %v3053
    %v3055 = vadd.f32 %v3009, %v1931
    %3057 = vrot.lane.b32.xlu0 %v3055, 118
    %v3058 = vpop.permute.xlu0 %3057
    %v3060 = vmul.f32 %v3054, %v3058
    %3062 = vrot.lane.b32.xlu0 %v3060, 10
    %v3063 = vpop.permute.xlu0 %3062
    %v3065 = vadd.f32 %v3034, %v3063
    %v3066 = vtanh.pop %v3065
    %v3067 = vsub.f32 1.0, %v3054
    %3069 = vrot.lane.b32.xlu0 %v3066, 123
    %v3070 = vpop.permute.xlu0 %3069
    %v3072 = vmul.f32 %v3067, %v3070
    %v3073 = vmul.f32 %v3054, %v2934
    %v3074 = vadd.f32 %v3072, %v3073
    %s3075 = scalar_lea.vmem [#allocation3], 8
    %v3076 = vld [vmem:[%s3075] sm:$0xff]
    %v3077 = vadd.f32 %v3076, %v3031
    %v3078 = vxor.u32 %v3077, 2147483648
    %v3079 = vmul.f32 %v3078, 1.442695
    %v3080 = vpow.pop %v3079
    %v3081 = vadd.f32 %v3080, 1.0
    %v3082 = vrcp.pop %v3081
    %v3083 = vmul.f32 %v3081, %v3082
    %v3084 = vsub.f32 1.0, %v3083
    %v3085 = vmul.f32 %v3082, %v3084
    %v3086 = vadd.f32 %v3082, %v3085
    %vm3087 = vweird.f32 %v3081
    %vm3088 = vweird.f32 %v3082
    %vm3089 = vmor %vm3087, %vm3088
    %v3090 = vsel %vm3089, %v3082, %v3086
    %v3091 = vand.u32 2147483647, %v3081
    %vm3092 = vcmp.eq.f32.partialorder %v3091, 8.507059e+37
    %v3093 = vand.u32 %v3081, 2147483648
    %v3094 = vor.u32 1.1754944e-38, %v3093
    %v3095 = vsel %vm3092, %v3094, %v3090
    %v3096 = vmul.f32 1.0, %v3095
    %v3097 = vadd.f32 %v3031, %v1976
    %3099 = vrot.lane.b32.xlu0 %v3097, 118
    %v3100 = vpop.permute.xlu0 %3099
    %v3102 = vmul.f32 %v3096, %v3100
    %3104 = vrot.lane.b32.xlu0 %v3102, 10
    %v3105 = vpop.permute.xlu0 %3104
    %v3107 = vadd.f32 %v3076, %v3105
    %v3108 = vtanh.pop %v3107
    %v3109 = vsub.f32 1.0, %v3096
    %3111 = vrot.lane.b32.xlu0 %v3108, 123
    %v3112 = vpop.permute.xlu0 %3111
    %v3114 = vmul.f32 %v3109, %v3112
    %v3115 = vmul.f32 %v3096, %v2976
    %v3116 = vadd.f32 %v3114, %v3115
    %3118 = vrot.lane.b32.xlu0 %v3074, 123
    %v3119 = vpop.permute.xlu0 %3118
    %s3121 = scalar_lea.vmem [#allocation4], 64
    %3122 = vst.msk [vmem:[%s3121] sm:$0xff] %vm1858, %v3119
    %3124 = vrot.lane.b32.xlu0 %v3116, 123
    %v3125 = vpop.permute.xlu0 %3124
    %s3127 = scalar_lea.vmem [#allocation5], 8
    %3128 = vst.msk [vmem:[%s3127] sm:$0xff] %vm1858, %v3125
    %v3129 = vsel %vm1858, %v3119, 0
    %3131 = vmatpush.msra.mxu0 0.0
    %3132 = vmatpush.msra.mxu0 0.0
    %3133 = vmatpush.msra.mxu0 0.0
    %3134 = vmatpush.msra.mxu0 0.0
    %3135 = vmatpush.msra.mxu0 0.0
    %3136 = vmatpush.msra.mxu0 0.0
    %3137 = vmatpush.msra.mxu0 0.0
    %3138 = vmatpush.msra.mxu0 0.0
    %3139 = vmatpush.msra.mxu0 0.0
    %3140 = vmatpush.msra.mxu0 0.0
    %3141 = vmatpush.msra.mxu0 0.0
    %3142 = vmatpush.msra.mxu0 0.0
    %3143 = vmatpush.msra.mxu0 0.0
    %3144 = vmatpush.msra.mxu0 0.0
    %3145 = vmatpush.msra.mxu0 0.0
    %3146 = vmatpush.msra.mxu0 %v1864
    %3147 = vmatmul.f32.gmra.mxu0 %v3129
    %v3148 = vpop.f32.mrf.mxu0
    %v3149 = vadd.f32 0.0, %v3148
    %3150 = vdwg.mxu0
    %v3151 = vsel %vm1858, %v3125, 0
    %3153 = vmatpush.msra.mxu0 0.0
    %3154 = vmatpush.msra.mxu0 0.0
    %3155 = vmatpush.msra.mxu0 0.0
    %3156 = vmatpush.msra.mxu0 0.0
    %3157 = vmatpush.msra.mxu0 0.0
    %3158 = vmatpush.msra.mxu0 0.0
    %3159 = vmatpush.msra.mxu0 0.0
    %3160 = vmatpush.msra.mxu0 0.0
    %3161 = vmatpush.msra.mxu0 0.0
    %3162 = vmatpush.msra.mxu0 0.0
    %3163 = vmatpush.msra.mxu0 0.0
    %3164 = vmatpush.msra.mxu0 0.0
    %3165 = vmatpush.msra.mxu0 0.0
    %3166 = vmatpush.msra.mxu0 0.0
    %3167 = vmatpush.msra.mxu0 0.0
    %3168 = vmatpush.msra.mxu0 %v1887
    %3169 = vmatmul.f32.gmra.mxu0 %v3151
    %v3170 = vpop.f32.mrf.mxu0
    %v3171 = vadd.f32 0.0, %v3170
    %3172 = vdwg.mxu0
    %s3173 = scalar_lea.vmem [#allocation2], 72
    %v3174 = vld [vmem:[%s3173] sm:$0xff]
    %v3175 = vadd.f32 %v3174, %v3149
    %v3176 = vxor.u32 %v3175, 2147483648
    %v3177 = vmul.f32 %v3176, 1.442695
    %v3178 = vpow.pop %v3177
    %v3179 = vadd.f32 %v3178, 1.0
    %v3180 = vrcp.pop %v3179
    %v3181 = vmul.f32 %v3179, %v3180
    %v3182 = vsub.f32 1.0, %v3181
    %v3183 = vmul.f32 %v3180, %v3182
    %v3184 = vadd.f32 %v3180, %v3183
    %vm3185 = vweird.f32 %v3179
    %vm3186 = vweird.f32 %v3180
    %vm3187 = vmor %vm3185, %vm3186
    %v3188 = vsel %vm3187, %v3180, %v3184
    %v3189 = vand.u32 2147483647, %v3179
    %vm3190 = vcmp.eq.f32.partialorder %v3189, 8.507059e+37
    %v3191 = vand.u32 %v3179, 2147483648
    %v3192 = vor.u32 1.1754944e-38, %v3191
    %v3193 = vsel %vm3190, %v3192, %v3188
    %v3194 = vmul.f32 1.0, %v3193
    %v3195 = vadd.f32 %v3149, %v1931
    %3197 = vrot.lane.b32.xlu0 %v3195, 118
    %v3198 = vpop.permute.xlu0 %3197
    %v3200 = vmul.f32 %v3194, %v3198
    %3202 = vrot.lane.b32.xlu0 %v3200, 10
    %v3203 = vpop.permute.xlu0 %3202
    %v3205 = vadd.f32 %v3174, %v3203
    %v3206 = vtanh.pop %v3205
    %v3207 = vsub.f32 1.0, %v3194
    %3209 = vrot.lane.b32.xlu0 %v3206, 123
    %v3210 = vpop.permute.xlu0 %3209
    %v3212 = vmul.f32 %v3207, %v3210
    %v3213 = vmul.f32 %v3194, %v3074
    %v3214 = vadd.f32 %v3212, %v3213
    %v3215 = vld [vmem:[#allocation3] sm:$0xff]
    %v3216 = vadd.f32 %v3215, %v3171
    %v3217 = vxor.u32 %v3216, 2147483648
    %v3218 = vmul.f32 %v3217, 1.442695
    %v3219 = vpow.pop %v3218
    %v3220 = vadd.f32 %v3219, 1.0
    %v3221 = vrcp.pop %v3220
    %v3222 = vmul.f32 %v3220, %v3221
    %v3223 = vsub.f32 1.0, %v3222
    %v3224 = vmul.f32 %v3221, %v3223
    %v3225 = vadd.f32 %v3221, %v3224
    %vm3226 = vweird.f32 %v3220
    %vm3227 = vweird.f32 %v3221
    %vm3228 = vmor %vm3226, %vm3227
    %v3229 = vsel %vm3228, %v3221, %v3225
    %v3230 = vand.u32 2147483647, %v3220
    %vm3231 = vcmp.eq.f32.partialorder %v3230, 8.507059e+37
    %v3232 = vand.u32 %v3220, 2147483648
    %v3233 = vor.u32 1.1754944e-38, %v3232
    %v3234 = vsel %vm3231, %v3233, %v3229
    %v3235 = vmul.f32 1.0, %v3234
    %v3236 = vadd.f32 %v3171, %v1976
    %3238 = vrot.lane.b32.xlu0 %v3236, 118
    %v3239 = vpop.permute.xlu0 %3238
    %v3241 = vmul.f32 %v3235, %v3239
    %3243 = vrot.lane.b32.xlu0 %v3241, 10
    %v3244 = vpop.permute.xlu0 %3243
    %v3246 = vadd.f32 %v3215, %v3244
    %v3247 = vtanh.pop %v3246
    %v3248 = vsub.f32 1.0, %v3235
    %3250 = vrot.lane.b32.xlu0 %v3247, 123
    %v3251 = vpop.permute.xlu0 %3250
    %v3253 = vmul.f32 %v3248, %v3251
    %v3254 = vmul.f32 %v3235, %v3116
    %v3255 = vadd.f32 %v3253, %v3254
    %3257 = vrot.lane.b32.xlu0 %v3214, 123
    %v3258 = vpop.permute.xlu0 %3257
    %s3260 = scalar_lea.vmem [#allocation4], 72
    %3261 = vst.msk [vmem:[%s3260] sm:$0xff] %vm1858, %v3258
    %3263 = vrot.lane.b32.xlu0 %v3255, 123
    %v3264 = vpop.permute.xlu0 %3263
    %3266 = vst.msk [vmem:[#allocation5] sm:$0xff] %vm1858, %v3264
    %v3267 = vld [vmem:[%s16] sm:$0x1]
    %v3268 = vld [vmem:[%s17] sm:$0x1]
    %v3269 = vld [vmem:[#allocation4] sm:$0xff]
    %v3270 = vld [vmem:[#allocation4 + $0x8] sm:$0xff]
    %v3271 = vld [vmem:[#allocation4 + $0x10] sm:$0xff]
    %v3272 = vld [vmem:[#allocation4 + $0x18] sm:$0xff]
    %v3273 = vld [vmem:[#allocation4 + $0x20] sm:$0xff]
    %v3274 = vld [vmem:[#allocation4 + $0x28] sm:$0xff]
    %v3275 = vld [vmem:[#allocation4 + $0x30] sm:$0xff]
    %v3276 = vld [vmem:[#allocation4 + $0x38] sm:$0xff]
    %v3277 = vld [vmem:[#allocation4 + $0x40] sm:$0xff]
    %v3278 = vld [vmem:[#allocation4 + $0x48] sm:$0xff]
    %v3279 = vsel %vm1858, %v3269, 0.0
    %v3280 = vsel %vm1858, %v3270, 0.0
    %v3281 = vadd.f32 %v3279, %v3280
    %v3282 = vsel %vm1858, %v3271, 0.0
    %v3283 = vadd.f32 %v3281, %v3282
    %v3284 = vsel %vm1858, %v3272, 0.0
    %v3285 = vadd.f32 %v3283, %v3284
    %v3286 = vsel %vm1858, %v3273, 0.0
    %v3287 = vadd.f32 %v3285, %v3286
    %v3288 = vsel %vm1858, %v3274, 0.0
    %v3289 = vadd.f32 %v3287, %v3288
    %v3290 = vsel %vm1858, %v3275, 0.0
    %v3291 = vadd.f32 %v3289, %v3290
    %v3292 = vsel %vm1858, %v3276, 0.0
    %v3293 = vadd.f32 %v3291, %v3292
    %v3294 = vsel %vm1858, %v3277, 0.0
    %v3295 = vadd.f32 %v3293, %v3294
    %v3296 = vsel %vm1858, %v3278, 0.0
    %v3297 = vadd.f32 %v3295, %v3296
    %v3298 = vrot.slane %v3297, 4
    %v3299 = vadd.f32 %v3297, %v3298
    %v3300 = vrot.slane %v3299, 2
    %v3301 = vadd.f32 %v3299, %v3300
    %v3302 = vrot.slane %v3301, 1
    %v3303 = vadd.f32 %v3301, %v3302
    %v3304 = vrcp.pop 80.0
    %v3305 = vmul.f32 80.0, %v3304
    %v3306 = vsub.f32 1.0, %v3305
    %v3307 = vmul.f32 %v3304, %v3306
    %v3308 = vadd.f32 %v3304, %v3307
    %vm3309 = vweird.f32 %v3304
    %v3310 = vsel %vm3309, %v3304, %v3308
    %v3311 = vmul.f32 %v3303, %v3310
    %v3312 = vsub.f32 %v3269, %v3311
    %v3313 = vsub.f32 %v3270, %v3311
    %v3314 = vsub.f32 %v3271, %v3311
    %v3315 = vsub.f32 %v3272, %v3311
    %v3316 = vsub.f32 %v3273, %v3311
    %v3317 = vsub.f32 %v3274, %v3311
    %v3318 = vsub.f32 %v3275, %v3311
    %v3319 = vsub.f32 %v3276, %v3311
    %v3320 = vsub.f32 %v3277, %v3311
    %v3321 = vsub.f32 %v3278, %v3311
    %v3322 = vmul.f32 %v3312, %v3312
    %v3323 = vmul.f32 %v3313, %v3313
    %v3324 = vmul.f32 %v3314, %v3314
    %v3325 = vmul.f32 %v3315, %v3315
    %v3326 = vmul.f32 %v3316, %v3316
    %v3327 = vmul.f32 %v3317, %v3317
    %v3328 = vmul.f32 %v3318, %v3318
    %v3329 = vmul.f32 %v3319, %v3319
    %v3330 = vmul.f32 %v3320, %v3320
    %v3331 = vmul.f32 %v3321, %v3321
    %v3332 = vsel %vm1858, %v3322, 0.0
    %v3333 = vsel %vm1858, %v3323, 0.0
    %v3334 = vadd.f32 %v3332, %v3333
    %v3335 = vsel %vm1858, %v3324, 0.0
    %v3336 = vadd.f32 %v3334, %v3335
    %v3337 = vsel %vm1858, %v3325, 0.0
    %v3338 = vadd.f32 %v3336, %v3337
    %v3339 = vsel %vm1858, %v3326, 0.0
    %v3340 = vadd.f32 %v3338, %v3339
    %v3341 = vsel %vm1858, %v3327, 0.0
    %v3342 = vadd.f32 %v3340, %v3341
    %v3343 = vsel %vm1858, %v3328, 0.0
    %v3344 = vadd.f32 %v3342, %v3343
    %v3345 = vsel %vm1858, %v3329, 0.0
    %v3346 = vadd.f32 %v3344, %v3345
    %v3347 = vsel %vm1858, %v3330, 0.0
    %v3348 = vadd.f32 %v3346, %v3347
    %v3349 = vsel %vm1858, %v3331, 0.0
    %v3350 = vadd.f32 %v3348, %v3349
    %v3351 = vrot.slane %v3350, 4
    %v3352 = vadd.f32 %v3350, %v3351
    %v3353 = vrot.slane %v3352, 2
    %v3354 = vadd.f32 %v3352, %v3353
    %v3355 = vrot.slane %v3354, 1
    %v3356 = vadd.f32 %v3354, %v3355
    %v3357 = vmul.f32 %v3356, %v3310
    %v3358 = vadd.f32 %v3357, 0.001
    %v3359 = vrsqrt.pop %v3358
    %v3360 = vmul.f32 %v3359, %v3358
    %v3361 = vmul.f32 %v3360, %v3359
    %v3362 = vmul.f32 0.5, %v3361
    %v3363 = vsub.f32 1.5, %v3362
    %v3364 = vmul.f32 %v3359, %v3363
    %vm3365 = vweird.f32 %v3358
    %vm3366 = vweird.f32 %v3359
    %vm3367 = vmor %vm3365, %vm3366
    %v3368 = vsel %vm3367, %v3359, %v3364
    %v3369 = vmul.f32 %v3312, %v3368
    %v3370 = vmul.f32 %v3313, %v3368
    %v3371 = vmul.f32 %v3314, %v3368
    %v3372 = vmul.f32 %v3315, %v3368
    %v3373 = vmul.f32 %v3316, %v3368
    %v3374 = vmul.f32 %v3317, %v3368
    %v3375 = vmul.f32 %v3318, %v3368
    %v3376 = vmul.f32 %v3319, %v3368
    %v3377 = vmul.f32 %v3320, %v3368
    %v3378 = vmul.f32 %v3321, %v3368
    %v3380 = vperm.slane %v3267, 0
    %v3382 = vmul.f32 %v3369, %v3380
    %v3383 = vmul.f32 %v3370, %v3380
    %v3384 = vmul.f32 %v3371, %v3380
    %v3385 = vmul.f32 %v3372, %v3380
    %v3386 = vmul.f32 %v3373, %v3380
    %v3387 = vmul.f32 %v3374, %v3380
    %v3388 = vmul.f32 %v3375, %v3380
    %v3389 = vmul.f32 %v3376, %v3380
    %v3390 = vmul.f32 %v3377, %v3380
    %v3391 = vmul.f32 %v3378, %v3380
    %v3393 = vperm.slane %v3268, 0
    %v3395 = vadd.f32 %v3382, %v3393
    %v3396 = vadd.f32 %v3383, %v3393
    %v3397 = vadd.f32 %v3384, %v3393
    %v3398 = vadd.f32 %v3385, %v3393
    %v3399 = vadd.f32 %v3386, %v3393
    %v3400 = vadd.f32 %v3387, %v3393
    %v3401 = vadd.f32 %v3388, %v3393
    %v3402 = vadd.f32 %v3389, %v3393
    %v3403 = vadd.f32 %v3390, %v3393
    %v3404 = vadd.f32 %v3391, %v3393
    %v3405 = vld [vmem:[#allocation5] sm:$0xff]
    %v3406 = vld [vmem:[#allocation5 + $0x8] sm:$0xff]
    %v3407 = vld [vmem:[#allocation5 + $0x10] sm:$0xff]
    %v3408 = vld [vmem:[#allocation5 + $0x18] sm:$0xff]
    %v3409 = vld [vmem:[#allocation5 + $0x20] sm:$0xff]
    %v3410 = vld [vmem:[#allocation5 + $0x28] sm:$0xff]
    %v3411 = vld [vmem:[#allocation5 + $0x30] sm:$0xff]
    %v3412 = vld [vmem:[#allocation5 + $0x38] sm:$0xff]
    %v3413 = vld [vmem:[#allocation5 + $0x40] sm:$0xff]
    %v3414 = vld [vmem:[#allocation5 + $0x48] sm:$0xff]
    %v3415 = vsel %vm1858, %v3405, 0.0
    %v3416 = vsel %vm1858, %v3406, 0.0
    %v3417 = vadd.f32 %v3415, %v3416
    %v3418 = vsel %vm1858, %v3407, 0.0
    %v3419 = vadd.f32 %v3417, %v3418
    %v3420 = vsel %vm1858, %v3408, 0.0
    %v3421 = vadd.f32 %v3419, %v3420
    %v3422 = vsel %vm1858, %v3409, 0.0
    %v3423 = vadd.f32 %v3421, %v3422
    %v3424 = vsel %vm1858, %v3410, 0.0
    %v3425 = vadd.f32 %v3423, %v3424
    %v3426 = vsel %vm1858, %v3411, 0.0
    %v3427 = vadd.f32 %v3425, %v3426
    %v3428 = vsel %vm1858, %v3412, 0.0
    %v3429 = vadd.f32 %v3427, %v3428
    %v3430 = vsel %vm1858, %v3413, 0.0
    %v3431 = vadd.f32 %v3429, %v3430
    %v3432 = vsel %vm1858, %v3414, 0.0
    %v3433 = vadd.f32 %v3431, %v3432
    %v3434 = vrot.slane %v3433, 4
    %v3435 = vadd.f32 %v3433, %v3434
    %v3436 = vrot.slane %v3435, 2
    %v3437 = vadd.f32 %v3435, %v3436
    %v3438 = vrot.slane %v3437, 1
    %v3439 = vadd.f32 %v3437, %v3438
    %v3440 = vmul.f32 %v3439, %v3310
    %v3441 = vsub.f32 %v3405, %v3440
    %v3442 = vsub.f32 %v3406, %v3440
    %v3443 = vsub.f32 %v3407, %v3440
    %v3444 = vsub.f32 %v3408, %v3440
    %v3445 = vsub.f32 %v3409, %v3440
    %v3446 = vsub.f32 %v3410, %v3440
    %v3447 = vsub.f32 %v3411, %v3440
    %v3448 = vsub.f32 %v3412, %v3440
    %v3449 = vsub.f32 %v3413, %v3440
    %v3450 = vsub.f32 %v3414, %v3440
    %v3451 = vmul.f32 %v3441, %v3441
    %v3452 = vmul.f32 %v3442, %v3442
    %v3453 = vmul.f32 %v3443, %v3443
    %v3454 = vmul.f32 %v3444, %v3444
    %v3455 = vmul.f32 %v3445, %v3445
    %v3456 = vmul.f32 %v3446, %v3446
    %v3457 = vmul.f32 %v3447, %v3447
    %v3458 = vmul.f32 %v3448, %v3448
    %v3459 = vmul.f32 %v3449, %v3449
    %v3460 = vmul.f32 %v3450, %v3450
    %v3461 = vsel %vm1858, %v3451, 0.0
    %v3462 = vsel %vm1858, %v3452, 0.0
    %v3463 = vadd.f32 %v3461, %v3462
    %v3464 = vsel %vm1858, %v3453, 0.0
    %v3465 = vadd.f32 %v3463, %v3464
    %v3466 = vsel %vm1858, %v3454, 0.0
    %v3467 = vadd.f32 %v3465, %v3466
    %v3468 = vsel %vm1858, %v3455, 0.0
    %v3469 = vadd.f32 %v3467, %v3468
    %v3470 = vsel %vm1858, %v3456, 0.0
    %v3471 = vadd.f32 %v3469, %v3470
    %v3472 = vsel %vm1858, %v3457, 0.0
    %v3473 = vadd.f32 %v3471, %v3472
    %v3474 = vsel %vm1858, %v3458, 0.0
    %v3475 = vadd.f32 %v3473, %v3474
    %v3476 = vsel %vm1858, %v3459, 0.0
    %v3477 = vadd.f32 %v3475, %v3476
    %v3478 = vsel %vm1858, %v3460, 0.0
    %v3479 = vadd.f32 %v3477, %v3478
    %v3480 = vrot.slane %v3479, 4
    %v3481 = vadd.f32 %v3479, %v3480
    %v3482 = vrot.slane %v3481, 2
    %v3483 = vadd.f32 %v3481, %v3482
    %v3484 = vrot.slane %v3483, 1
    %v3485 = vadd.f32 %v3483, %v3484
    %v3486 = vmul.f32 %v3485, %v3310
    %v3487 = vadd.f32 %v3486, 0.001
    %v3488 = vrsqrt.pop %v3487
    %v3489 = vmul.f32 %v3488, %v3487
    %v3490 = vmul.f32 %v3489, %v3488
    %v3491 = vmul.f32 0.5, %v3490
    %v3492 = vsub.f32 1.5, %v3491
    %v3493 = vmul.f32 %v3488, %v3492
    %vm3494 = vweird.f32 %v3487
    %vm3495 = vweird.f32 %v3488
    %vm3496 = vmor %vm3494, %vm3495
    %v3497 = vsel %vm3496, %v3488, %v3493
    %v3498 = vmul.f32 %v3441, %v3497
    %v3499 = vmul.f32 %v3442, %v3497
    %v3500 = vmul.f32 %v3443, %v3497
    %v3501 = vmul.f32 %v3444, %v3497
    %v3502 = vmul.f32 %v3445, %v3497
    %v3503 = vmul.f32 %v3446, %v3497
    %v3504 = vmul.f32 %v3447, %v3497
    %v3505 = vmul.f32 %v3448, %v3497
    %v3506 = vmul.f32 %v3449, %v3497
    %v3507 = vmul.f32 %v3450, %v3497
    %3508 = vrot.lane.b32.xlu0 %v3380, 123
    %v3509 = vpop.permute.xlu0 %3508
    %v3511 = vmul.f32 %v3498, %v3509
    %v3512 = vmul.f32 %v3499, %v3509
    %v3513 = vmul.f32 %v3500, %v3509
    %v3514 = vmul.f32 %v3501, %v3509
    %v3515 = vmul.f32 %v3502, %v3509
    %v3516 = vmul.f32 %v3503, %v3509
    %v3517 = vmul.f32 %v3504, %v3509
    %v3518 = vmul.f32 %v3505, %v3509
    %v3519 = vmul.f32 %v3506, %v3509
    %v3520 = vmul.f32 %v3507, %v3509
    %3521 = vrot.lane.b32.xlu0 %v3393, 123
    %v3522 = vpop.permute.xlu0 %3521
    %v3524 = vadd.f32 %v3511, %v3522
    %v3525 = vadd.f32 %v3512, %v3522
    %v3526 = vadd.f32 %v3513, %v3522
    %v3527 = vadd.f32 %v3514, %v3522
    %v3528 = vadd.f32 %v3515, %v3522
    %v3529 = vadd.f32 %v3516, %v3522
    %v3530 = vadd.f32 %v3517, %v3522
    %v3531 = vadd.f32 %v3518, %v3522
    %v3532 = vadd.f32 %v3519, %v3522
    %v3533 = vadd.f32 %v3520, %v3522
    %v3534 = vld [vmem:[%s12] sm:$0xff]
    %v3535 = vld [vmem:[%s12 + $0x8] sm:$0x3]
    %s3536 = scalar_lea.vmem %s12, 16
    %v3537 = vld [vmem:[%s3536] sm:$0xff]
    %v3538 = vld [vmem:[%s3536 + $0x8] sm:$0x3]
    %v3539 = vld [vmem:[%s15] sm:$0x1]
    %s3540 = scalar_lea.vmem %s15, 1
    %v3541 = vld [vmem:[%s3540] sm:$0x1]
    %v3544 = vrot.slane %v3534, 5
    %v3545 = vrot.slane %v3535, 5
    %v3546 = vsel %vm1724, %v3544, %v3545
    %v3548 = vsel %vm1858, %v3524, 0
    %v3551 = vsel %vm1858, %v3525, 0
    %v3554 = vsel %vm1858, %v3526, 0
    %v3557 = vsel %vm1858, %v3527, 0
    %v3560 = vsel %vm1858, %v3528, 0
    %v3563 = vsel %vm1858, %v3529, 0
    %v3566 = vsel %vm1858, %v3530, 0
    %v3569 = vsel %vm1858, %v3531, 0
    %v3572 = vsel %vm1858, %v3532, 0
    %v3575 = vsel %vm1858, %v3533, 0
    %v3577 = vsel %vm1862, %v3546, 0
    %3579 = vmatpush.msra.mxu0 0.0
    %3580 = vmatpush.msra.mxu0 0.0
    %3581 = vmatpush.msra.mxu0 0.0
    %3582 = vmatpush.msra.mxu0 0.0
    %3583 = vmatpush.msra.mxu0 0.0
    %3584 = vmatpush.msra.mxu0 0.0
    %3585 = vmatpush.msra.mxu0 0.0
    %3586 = vmatpush.msra.mxu0 0.0
    %3587 = vmatpush.msra.mxu0 0.0
    %3588 = vmatpush.msra.mxu0 0.0
    %3589 = vmatpush.msra.mxu0 0.0
    %3590 = vmatpush.msra.mxu0 0.0
    %3591 = vmatpush.msra.mxu0 0.0
    %3592 = vmatpush.msra.mxu0 0.0
    %3593 = vmatpush.msra.mxu0 0.0
    %3594 = vmatpush.msra.mxu0 %v3577
    %3595 = vmatmul.f32.gmra.mxu0 %v3548
    %v3596 = vpop.f32.mrf.mxu0
    %v3597 = vadd.f32 0.0, %v3596
    %3598 = vmatmul.f32.gmra.mxu0 %v3551
    %v3599 = vpop.f32.mrf.mxu0
    %v3600 = vadd.f32 0.0, %v3599
    %3601 = vmatmul.f32.gmra.mxu0 %v3554
    %v3602 = vpop.f32.mrf.mxu0
    %v3603 = vadd.f32 0.0, %v3602
    %3604 = vmatmul.f32.gmra.mxu0 %v3557
    %v3605 = vpop.f32.mrf.mxu0
    %v3606 = vadd.f32 0.0, %v3605
    %3607 = vmatmul.f32.gmra.mxu0 %v3560
    %v3608 = vpop.f32.mrf.mxu0
    %v3609 = vadd.f32 0.0, %v3608
    %3610 = vmatmul.f32.gmra.mxu0 %v3563
    %v3611 = vpop.f32.mrf.mxu0
    %v3612 = vadd.f32 0.0, %v3611
    %3613 = vmatmul.f32.gmra.mxu0 %v3566
    %v3614 = vpop.f32.mrf.mxu0
    %v3615 = vadd.f32 0.0, %v3614
    %3616 = vmatmul.f32.gmra.mxu0 %v3569
    %v3617 = vpop.f32.mrf.mxu0
    %v3618 = vadd.f32 0.0, %v3617
    %3619 = vmatmul.f32.gmra.mxu0 %v3572
    %v3620 = vpop.f32.mrf.mxu0
    %v3621 = vadd.f32 0.0, %v3620
    %3622 = vmatmul.f32.gmra.mxu0 %v3575
    %v3623 = vpop.f32.mrf.mxu0
    %v3624 = vadd.f32 0.0, %v3623
    %3625 = vdwg.mxu0
    %v3627 = vsel %vm1858, %v3395, 0
    %v3630 = vsel %vm1858, %v3396, 0
    %v3633 = vsel %vm1858, %v3397, 0
    %v3636 = vsel %vm1858, %v3398, 0
    %v3639 = vsel %vm1858, %v3399, 0
    %v3642 = vsel %vm1858, %v3400, 0
    %v3645 = vsel %vm1858, %v3401, 0
    %v3648 = vsel %vm1858, %v3402, 0
    %v3651 = vsel %vm1858, %v3403, 0
    %v3654 = vsel %vm1858, %v3404, 0
    %v3656 = vsel %vm1862, %v3534, 0
    %3658 = vmatpush.msra.mxu0 0.0
    %3659 = vmatpush.msra.mxu0 0.0
    %3660 = vmatpush.msra.mxu0 0.0
    %3661 = vmatpush.msra.mxu0 0.0
    %3662 = vmatpush.msra.mxu0 0.0
    %3663 = vmatpush.msra.mxu0 0.0
    %3664 = vmatpush.msra.mxu0 0.0
    %3665 = vmatpush.msra.mxu0 0.0
    %3666 = vmatpush.msra.mxu0 0.0
    %3667 = vmatpush.msra.mxu0 0.0
    %3668 = vmatpush.msra.mxu0 0.0
    %3669 = vmatpush.msra.mxu0 0.0
    %3670 = vmatpush.msra.mxu0 0.0
    %3671 = vmatpush.msra.mxu0 0.0
    %3672 = vmatpush.msra.mxu0 0.0
    %3673 = vmatpush.msra.mxu0 %v3656
    %3674 = vmatmul.f32.gmra.mxu0 %v3627
    %v3675 = vpop.f32.mrf.mxu0
    %v3676 = vadd.f32 %v3597, %v3675
    %3677 = vmatmul.f32.gmra.mxu0 %v3630
    %v3678 = vpop.f32.mrf.mxu0
    %v3679 = vadd.f32 %v3600, %v3678
    %3680 = vmatmul.f32.gmra.mxu0 %v3633
    %v3681 = vpop.f32.mrf.mxu0
    %v3682 = vadd.f32 %v3603, %v3681
    %3683 = vmatmul.f32.gmra.mxu0 %v3636
    %v3684 = vpop.f32.mrf.mxu0
    %v3685 = vadd.f32 %v3606, %v3684
    %3686 = vmatmul.f32.gmra.mxu0 %v3639
    %v3687 = vpop.f32.mrf.mxu0
    %v3688 = vadd.f32 %v3609, %v3687
    %3689 = vmatmul.f32.gmra.mxu0 %v3642
    %v3690 = vpop.f32.mrf.mxu0
    %v3691 = vadd.f32 %v3612, %v3690
    %3692 = vmatmul.f32.gmra.mxu0 %v3645
    %v3693 = vpop.f32.mrf.mxu0
    %v3694 = vadd.f32 %v3615, %v3693
    %3695 = vmatmul.f32.gmra.mxu0 %v3648
    %v3696 = vpop.f32.mrf.mxu0
    %v3697 = vadd.f32 %v3618, %v3696
    %3698 = vmatmul.f32.gmra.mxu0 %v3651
    %v3699 = vpop.f32.mrf.mxu0
    %v3700 = vadd.f32 %v3621, %v3699
    %3701 = vmatmul.f32.gmra.mxu0 %v3654
    %v3702 = vpop.f32.mrf.mxu0
    %v3703 = vadd.f32 %v3624, %v3702
    %3704 = vdwg.mxu0
    %v3705 = vld [vmem:[%s14] sm:$0x1]
    %v3706 = vsel %vm1688, %v3539, 0.0
    %v3707 = vadd.f32 %v3705, %v3706
    %v3709 = vperm.slane %v3707, 0
    %v3711 = vadd.f32 %v3676, %v3709
    %v3712 = vadd.f32 %v3679, %v3709
    %v3713 = vadd.f32 %v3682, %v3709
    %v3714 = vadd.f32 %v3685, %v3709
    %v3715 = vadd.f32 %v3688, %v3709
    %v3716 = vadd.f32 %v3691, %v3709
    %v3717 = vadd.f32 %v3694, %v3709
    %v3718 = vadd.f32 %v3697, %v3709
    %v3719 = vadd.f32 %v3700, %v3709
    %v3720 = vadd.f32 %v3703, %v3709
    %3721 = vst.msk [vmem:[#allocation2] sm:$0xff] %vm1775, %v3711
    %3722 = vst.msk [vmem:[#allocation2 + $0x8] sm:$0xff] %vm1775, %v3712
    %3723 = vst.msk [vmem:[#allocation2 + $0x10] sm:$0xff] %vm1775, %v3713
    %3724 = vst.msk [vmem:[#allocation2 + $0x18] sm:$0xff] %vm1775, %v3714
    %3725 = vst.msk [vmem:[#allocation2 + $0x20] sm:$0xff] %vm1775, %v3715
    %3726 = vst.msk [vmem:[#allocation2 + $0x28] sm:$0xff] %vm1775, %v3716
    %3727 = vst.msk [vmem:[#allocation2 + $0x30] sm:$0xff] %vm1775, %v3717
    %3728 = vst.msk [vmem:[#allocation2 + $0x38] sm:$0xff] %vm1775, %v3718
    %3729 = vst.msk [vmem:[#allocation2 + $0x40] sm:$0xff] %vm1775, %v3719
    %3730 = vst.msk [vmem:[#allocation2 + $0x48] sm:$0xff] %vm1775, %v3720
    %v3733 = vrot.slane %v3537, 5
    %v3734 = vrot.slane %v3538, 5
    %v3735 = vsel %vm1724, %v3733, %v3734
    %v3736 = vsel %vm1862, %v3735, 0
    %3738 = vmatpush.msra.mxu0 0.0
    %3739 = vmatpush.msra.mxu0 0.0
    %3740 = vmatpush.msra.mxu0 0.0
    %3741 = vmatpush.msra.mxu0 0.0
    %3742 = vmatpush.msra.mxu0 0.0
    %3743 = vmatpush.msra.mxu0 0.0
    %3744 = vmatpush.msra.mxu0 0.0
    %3745 = vmatpush.msra.mxu0 0.0
    %3746 = vmatpush.msra.mxu0 0.0
    %3747 = vmatpush.msra.mxu0 0.0
    %3748 = vmatpush.msra.mxu0 0.0
    %3749 = vmatpush.msra.mxu0 0.0
    %3750 = vmatpush.msra.mxu0 0.0
    %3751 = vmatpush.msra.mxu0 0.0
    %3752 = vmatpush.msra.mxu0 0.0
    %3753 = vmatpush.msra.mxu0 %v3736
    %3754 = vmatmul.f32.gmra.mxu0 %v3548
    %v3755 = vpop.f32.mrf.mxu0
    %v3756 = vadd.f32 0.0, %v3755
    %3757 = vmatmul.f32.gmra.mxu0 %v3551
    %v3758 = vpop.f32.mrf.mxu0
    %v3759 = vadd.f32 0.0, %v3758
    %3760 = vmatmul.f32.gmra.mxu0 %v3554
    %v3761 = vpop.f32.mrf.mxu0
    %v3762 = vadd.f32 0.0, %v3761
    %3763 = vmatmul.f32.gmra.mxu0 %v3557
    %v3764 = vpop.f32.mrf.mxu0
    %v3765 = vadd.f32 0.0, %v3764
    %3766 = vmatmul.f32.gmra.mxu0 %v3560
    %v3767 = vpop.f32.mrf.mxu0
    %v3768 = vadd.f32 0.0, %v3767
    %3769 = vmatmul.f32.gmra.mxu0 %v3563
    %v3770 = vpop.f32.mrf.mxu0
    %v3771 = vadd.f32 0.0, %v3770
    %3772 = vmatmul.f32.gmra.mxu0 %v3566
    %v3773 = vpop.f32.mrf.mxu0
    %v3774 = vadd.f32 0.0, %v3773
    %3775 = vmatmul.f32.gmra.mxu0 %v3569
    %v3776 = vpop.f32.mrf.mxu0
    %v3777 = vadd.f32 0.0, %v3776
    %3778 = vmatmul.f32.gmra.mxu0 %v3572
    %v3779 = vpop.f32.mrf.mxu0
    %v3780 = vadd.f32 0.0, %v3779
    %3781 = vmatmul.f32.gmra.mxu0 %v3575
    %v3782 = vpop.f32.mrf.mxu0
    %v3783 = vadd.f32 0.0, %v3782
    %3784 = vdwg.mxu0
    %v3785 = vsel %vm1862, %v3537, 0
    %3787 = vmatpush.msra.mxu0 0.0
    %3788 = vmatpush.msra.mxu0 0.0
    %3789 = vmatpush.msra.mxu0 0.0
    %3790 = vmatpush.msra.mxu0 0.0
    %3791 = vmatpush.msra.mxu0 0.0
    %3792 = vmatpush.msra.mxu0 0.0
    %3793 = vmatpush.msra.mxu0 0.0
    %3794 = vmatpush.msra.mxu0 0.0
    %3795 = vmatpush.msra.mxu0 0.0
    %3796 = vmatpush.msra.mxu0 0.0
    %3797 = vmatpush.msra.mxu0 0.0
    %3798 = vmatpush.msra.mxu0 0.0
    %3799 = vmatpush.msra.mxu0 0.0
    %3800 = vmatpush.msra.mxu0 0.0
    %3801 = vmatpush.msra.mxu0 0.0
    %3802 = vmatpush.msra.mxu0 %v3785
    %3803 = vmatmul.f32.gmra.mxu0 %v3627
    %v3804 = vpop.f32.mrf.mxu0
    %v3805 = vadd.f32 %v3756, %v3804
    %3806 = vmatmul.f32.gmra.mxu0 %v3630
    %v3807 = vpop.f32.mrf.mxu0
    %v3808 = vadd.f32 %v3759, %v3807
    %3809 = vmatmul.f32.gmra.mxu0 %v3633
    %v3810 = vpop.f32.mrf.mxu0
    %v3811 = vadd.f32 %v3762, %v3810
    %3812 = vmatmul.f32.gmra.mxu0 %v3636
    %v3813 = vpop.f32.mrf.mxu0
    %v3814 = vadd.f32 %v3765, %v3813
    %3815 = vmatmul.f32.gmra.mxu0 %v3639
    %v3816 = vpop.f32.mrf.mxu0
    %v3817 = vadd.f32 %v3768, %v3816
    %3818 = vmatmul.f32.gmra.mxu0 %v3642
    %v3819 = vpop.f32.mrf.mxu0
    %v3820 = vadd.f32 %v3771, %v3819
    %3821 = vmatmul.f32.gmra.mxu0 %v3645
    %v3822 = vpop.f32.mrf.mxu0
    %v3823 = vadd.f32 %v3774, %v3822
    %3824 = vmatmul.f32.gmra.mxu0 %v3648
    %v3825 = vpop.f32.mrf.mxu0
    %v3826 = vadd.f32 %v3777, %v3825
    %3827 = vmatmul.f32.gmra.mxu0 %v3651
    %v3828 = vpop.f32.mrf.mxu0
    %v3829 = vadd.f32 %v3780, %v3828
    %3830 = vmatmul.f32.gmra.mxu0 %v3654
    %v3831 = vpop.f32.mrf.mxu0
    %v3832 = vadd.f32 %v3783, %v3831
    %3833 = vdwg.mxu0
    %s3834 = scalar_lea.vmem %s14, 1
    %v3835 = vld [vmem:[%s3834] sm:$0x1]
    %v3836 = vsel %vm1688, %v3541, 0.0
    %v3837 = vadd.f32 %v3835, %v3836
    %v3839 = vperm.slane %v3837, 0
    %v3841 = vadd.f32 %v3805, %v3839
    %v3842 = vadd.f32 %v3808, %v3839
    %v3843 = vadd.f32 %v3811, %v3839
    %v3844 = vadd.f32 %v3814, %v3839
    %v3845 = vadd.f32 %v3817, %v3839
    %v3846 = vadd.f32 %v3820, %v3839
    %v3847 = vadd.f32 %v3823, %v3839
    %v3848 = vadd.f32 %v3826, %v3839
    %v3849 = vadd.f32 %v3829, %v3839
    %v3850 = vadd.f32 %v3832, %v3839
    %3851 = vst.msk [vmem:[#allocation3] sm:$0xff] %vm1775, %v3841
    %3852 = vst.msk [vmem:[#allocation3 + $0x8] sm:$0xff] %vm1775, %v3842
    %3853 = vst.msk [vmem:[#allocation3 + $0x10] sm:$0xff] %vm1775, %v3843
    %3854 = vst.msk [vmem:[#allocation3 + $0x18] sm:$0xff] %vm1775, %v3844
    %3855 = vst.msk [vmem:[#allocation3 + $0x20] sm:$0xff] %vm1775, %v3845
    %3856 = vst.msk [vmem:[#allocation3 + $0x28] sm:$0xff] %vm1775, %v3846
    %3857 = vst.msk [vmem:[#allocation3 + $0x30] sm:$0xff] %vm1775, %v3847
    %3858 = vst.msk [vmem:[#allocation3 + $0x38] sm:$0xff] %vm1775, %v3848
    %3859 = vst.msk [vmem:[#allocation3 + $0x40] sm:$0xff] %vm1775, %v3849
    %3860 = vst.msk [vmem:[#allocation3 + $0x48] sm:$0xff] %vm1775, %v3850
    %v3861 = vld [vmem:[%s13] sm:$0x1f]
    %s3862 = scalar_lea.vmem %s13, 8
    %v3863 = vld [vmem:[%s3862] sm:$0x1f]
    %v3865 = vsel %vm1862, %v3861, 0
    %3867 = vmatpush.msra.mxu0 0.0
    %3868 = vmatpush.msra.mxu0 0.0
    %3869 = vmatpush.msra.mxu0 0.0
    %3870 = vmatpush.msra.mxu0 0.0
    %3871 = vmatpush.msra.mxu0 0.0
    %3872 = vmatpush.msra.mxu0 0.0
    %3873 = vmatpush.msra.mxu0 0.0
    %3874 = vmatpush.msra.mxu0 0.0
    %3875 = vmatpush.msra.mxu0 0.0
    %3876 = vmatpush.msra.mxu0 0.0
    %3877 = vmatpush.msra.mxu0 0.0
    %3878 = vmatpush.msra.mxu0 0.0
    %3879 = vmatpush.msra.mxu0 0.0
    %3880 = vmatpush.msra.mxu0 0.0
    %3881 = vmatpush.msra.mxu0 0.0
    %3882 = vmatpush.msra.mxu0 %v3865
    %3883 = vmatmul.f32.gmra.mxu0 %v1860
    %v3884 = vpop.f32.mrf.mxu0
    %v3885 = vadd.f32 0.0, %v3884
    %3886 = vdwg.mxu0
    %v3888 = vsel %vm1862, %v3863, 0
    %3890 = vmatpush.msra.mxu0 0.0
    %3891 = vmatpush.msra.mxu0 0.0
    %3892 = vmatpush.msra.mxu0 0.0
    %3893 = vmatpush.msra.mxu0 0.0
    %3894 = vmatpush.msra.mxu0 0.0
    %3895 = vmatpush.msra.mxu0 0.0
    %3896 = vmatpush.msra.mxu0 0.0
    %3897 = vmatpush.msra.mxu0 0.0
    %3898 = vmatpush.msra.mxu0 0.0
    %3899 = vmatpush.msra.mxu0 0.0
    %3900 = vmatpush.msra.mxu0 0.0
    %3901 = vmatpush.msra.mxu0 0.0
    %3902 = vmatpush.msra.mxu0 0.0
    %3903 = vmatpush.msra.mxu0 0.0
    %3904 = vmatpush.msra.mxu0 0.0
    %3905 = vmatpush.msra.mxu0 %v3888
    %3906 = vmatmul.f32.gmra.mxu0 %v1860
    %v3907 = vpop.f32.mrf.mxu0
    %v3908 = vadd.f32 0.0, %v3907
    %3909 = vdwg.mxu0
    %v3910 = vld [vmem:[#allocation2] sm:$0xff]
    %v3911 = vadd.f32 %v3910, %v3885
    %v3912 = vxor.u32 %v3911, 2147483648
    %v3913 = vmul.f32 %v3912, 1.442695
    %v3914 = vpow.pop %v3913
    %v3915 = vadd.f32 %v3914, 1.0
    %v3916 = vrcp.pop %v3915
    %v3917 = vmul.f32 %v3915, %v3916
    %v3918 = vsub.f32 1.0, %v3917
    %v3919 = vmul.f32 %v3916, %v3918
    %v3920 = vadd.f32 %v3916, %v3919
    %vm3921 = vweird.f32 %v3915
    %vm3922 = vweird.f32 %v3916
    %vm3923 = vmor %vm3921, %vm3922
    %v3924 = vsel %vm3923, %v3916, %v3920
    %v3925 = vand.u32 2147483647, %v3915
    %vm3926 = vcmp.eq.f32.partialorder %v3925, 8.507059e+37
    %v3927 = vand.u32 %v3915, 2147483648
    %v3928 = vor.u32 1.1754944e-38, %v3927
    %v3929 = vsel %vm3926, %v3928, %v3924
    %v3930 = vmul.f32 1.0, %v3929
    %v3932 = vperm.slane %v3539, 0
    %v3934 = vadd.f32 %v3885, %v3932
    %3936 = vrot.lane.b32.xlu0 %v3934, 118
    %v3937 = vpop.permute.xlu0 %3936
    %v3939 = vmul.f32 %v3930, %v3937
    %3941 = vrot.lane.b32.xlu0 %v3939, 10
    %v3942 = vpop.permute.xlu0 %3941
    %v3944 = vadd.f32 %v3910, %v3942
    %v3945 = vtanh.pop %v3944
    %v3946 = vsub.f32 1.0, %v3930
    %3948 = vrot.lane.b32.xlu0 %v3945, 123
    %v3949 = vpop.permute.xlu0 %3948
    %v3951 = vmul.f32 %v3946, %v3949
    %v3952 = vmul.f32 %v3930, 0.0
    %v3953 = vadd.f32 %v3951, %v3952
    %v3954 = vld [vmem:[%s1953] sm:$0xff]
    %v3955 = vadd.f32 %v3954, %v3908
    %v3956 = vxor.u32 %v3955, 2147483648
    %v3957 = vmul.f32 %v3956, 1.442695
    %v3958 = vpow.pop %v3957
    %v3959 = vadd.f32 %v3958, 1.0
    %v3960 = vrcp.pop %v3959
    %v3961 = vmul.f32 %v3959, %v3960
    %v3962 = vsub.f32 1.0, %v3961
    %v3963 = vmul.f32 %v3960, %v3962
    %v3964 = vadd.f32 %v3960, %v3963
    %vm3965 = vweird.f32 %v3959
    %vm3966 = vweird.f32 %v3960
    %vm3967 = vmor %vm3965, %vm3966
    %v3968 = vsel %vm3967, %v3960, %v3964
    %v3969 = vand.u32 2147483647, %v3959
    %vm3970 = vcmp.eq.f32.partialorder %v3969, 8.507059e+37
    %v3971 = vand.u32 %v3959, 2147483648
    %v3972 = vor.u32 1.1754944e-38, %v3971
    %v3973 = vsel %vm3970, %v3972, %v3968
    %v3974 = vmul.f32 1.0, %v3973
    %v3976 = vperm.slane %v3541, 0
    %v3978 = vadd.f32 %v3908, %v3976
    %3980 = vrot.lane.b32.xlu0 %v3978, 118
    %v3981 = vpop.permute.xlu0 %3980
    %v3983 = vmul.f32 %v3974, %v3981
    %3985 = vrot.lane.b32.xlu0 %v3983, 10
    %v3986 = vpop.permute.xlu0 %3985
    %v3988 = vadd.f32 %v3954, %v3986
    %v3989 = vtanh.pop %v3988
    %v3990 = vsub.f32 1.0, %v3974
    %3992 = vrot.lane.b32.xlu0 %v3989, 123
    %v3993 = vpop.permute.xlu0 %3992
    %v3995 = vmul.f32 %v3990, %v3993
    %v3996 = vmul.f32 %v3974, 0.0
    %v3997 = vadd.f32 %v3995, %v3996
    %3999 = vrot.lane.b32.xlu0 %v3953, 123
    %v4000 = vpop.permute.xlu0 %3999
    %4002 = vst.msk [vmem:[#allocation6] sm:$0xff] %vm1858, %v4000
    %4004 = vrot.lane.b32.xlu0 %v3997, 123
    %v4005 = vpop.permute.xlu0 %4004
    %s4007 = scalar_lea.vmem [#allocation7], 72
    %4008 = vst.msk [vmem:[%s4007] sm:$0xff] %vm1858, %v4005
    %v4009 = vsel %vm1858, %v4000, 0
    %4011 = vmatpush.msra.mxu0 0.0
    %4012 = vmatpush.msra.mxu0 0.0
    %4013 = vmatpush.msra.mxu0 0.0
    %4014 = vmatpush.msra.mxu0 0.0
    %4015 = vmatpush.msra.mxu0 0.0
    %4016 = vmatpush.msra.mxu0 0.0
    %4017 = vmatpush.msra.mxu0 0.0
    %4018 = vmatpush.msra.mxu0 0.0
    %4019 = vmatpush.msra.mxu0 0.0
    %4020 = vmatpush.msra.mxu0 0.0
    %4021 = vmatpush.msra.mxu0 0.0
    %4022 = vmatpush.msra.mxu0 0.0
    %4023 = vmatpush.msra.mxu0 0.0
    %4024 = vmatpush.msra.mxu0 0.0
    %4025 = vmatpush.msra.mxu0 0.0
    %4026 = vmatpush.msra.mxu0 %v3865
    %4027 = vmatmul.f32.gmra.mxu0 %v4009
    %v4028 = vpop.f32.mrf.mxu0
    %v4029 = vadd.f32 0.0, %v4028
    %4030 = vdwg.mxu0
    %v4031 = vsel %vm1858, %v4005, 0
    %4033 = vmatpush.msra.mxu0 0.0
    %4034 = vmatpush.msra.mxu0 0.0
    %4035 = vmatpush.msra.mxu0 0.0
    %4036 = vmatpush.msra.mxu0 0.0
    %4037 = vmatpush.msra.mxu0 0.0
    %4038 = vmatpush.msra.mxu0 0.0
    %4039 = vmatpush.msra.mxu0 0.0
    %4040 = vmatpush.msra.mxu0 0.0
    %4041 = vmatpush.msra.mxu0 0.0
    %4042 = vmatpush.msra.mxu0 0.0
    %4043 = vmatpush.msra.mxu0 0.0
    %4044 = vmatpush.msra.mxu0 0.0
    %4045 = vmatpush.msra.mxu0 0.0
    %4046 = vmatpush.msra.mxu0 0.0
    %4047 = vmatpush.msra.mxu0 0.0
    %4048 = vmatpush.msra.mxu0 %v3888
    %4049 = vmatmul.f32.gmra.mxu0 %v4031
    %v4050 = vpop.f32.mrf.mxu0
    %v4051 = vadd.f32 0.0, %v4050
    %4052 = vdwg.mxu0
    %v4053 = vld [vmem:[%s2053] sm:$0xff]
    %v4054 = vadd.f32 %v4053, %v4029
    %v4055 = vxor.u32 %v4054, 2147483648
    %v4056 = vmul.f32 %v4055, 1.442695
    %v4057 = vpow.pop %v4056
    %v4058 = vadd.f32 %v4057, 1.0
    %v4059 = vrcp.pop %v4058
    %v4060 = vmul.f32 %v4058, %v4059
    %v4061 = vsub.f32 1.0, %v4060
    %v4062 = vmul.f32 %v4059, %v4061
    %v4063 = vadd.f32 %v4059, %v4062
    %vm4064 = vweird.f32 %v4058
    %vm4065 = vweird.f32 %v4059
    %vm4066 = vmor %vm4064, %vm4065
    %v4067 = vsel %vm4066, %v4059, %v4063
    %v4068 = vand.u32 2147483647, %v4058
    %vm4069 = vcmp.eq.f32.partialorder %v4068, 8.507059e+37
    %v4070 = vand.u32 %v4058, 2147483648
    %v4071 = vor.u32 1.1754944e-38, %v4070
    %v4072 = vsel %vm4069, %v4071, %v4067
    %v4073 = vmul.f32 1.0, %v4072
    %v4074 = vadd.f32 %v4029, %v3932
    %4076 = vrot.lane.b32.xlu0 %v4074, 118
    %v4077 = vpop.permute.xlu0 %4076
    %v4079 = vmul.f32 %v4073, %v4077
    %4081 = vrot.lane.b32.xlu0 %v4079, 10
    %v4082 = vpop.permute.xlu0 %4081
    %v4084 = vadd.f32 %v4053, %v4082
    %v4085 = vtanh.pop %v4084
    %v4086 = vsub.f32 1.0, %v4073
    %4088 = vrot.lane.b32.xlu0 %v4085, 123
    %v4089 = vpop.permute.xlu0 %4088
    %v4091 = vmul.f32 %v4086, %v4089
    %v4092 = vmul.f32 %v4073, %v3953
    %v4093 = vadd.f32 %v4091, %v4092
    %v4094 = vld [vmem:[%s2095] sm:$0xff]
    %v4095 = vadd.f32 %v4094, %v4051
    %v4096 = vxor.u32 %v4095, 2147483648
    %v4097 = vmul.f32 %v4096, 1.442695
    %v4098 = vpow.pop %v4097
    %v4099 = vadd.f32 %v4098, 1.0
    %v4100 = vrcp.pop %v4099
    %v4101 = vmul.f32 %v4099, %v4100
    %v4102 = vsub.f32 1.0, %v4101
    %v4103 = vmul.f32 %v4100, %v4102
    %v4104 = vadd.f32 %v4100, %v4103
    %vm4105 = vweird.f32 %v4099
    %vm4106 = vweird.f32 %v4100
    %vm4107 = vmor %vm4105, %vm4106
    %v4108 = vsel %vm4107, %v4100, %v4104
    %v4109 = vand.u32 2147483647, %v4099
    %vm4110 = vcmp.eq.f32.partialorder %v4109, 8.507059e+37
    %v4111 = vand.u32 %v4099, 2147483648
    %v4112 = vor.u32 1.1754944e-38, %v4111
    %v4113 = vsel %vm4110, %v4112, %v4108
    %v4114 = vmul.f32 1.0, %v4113
    %v4115 = vadd.f32 %v4051, %v3976
    %4117 = vrot.lane.b32.xlu0 %v4115, 118
    %v4118 = vpop.permute.xlu0 %4117
    %v4120 = vmul.f32 %v4114, %v4118
    %4122 = vrot.lane.b32.xlu0 %v4120, 10
    %v4123 = vpop.permute.xlu0 %4122
    %v4125 = vadd.f32 %v4094, %v4123
    %v4126 = vtanh.pop %v4125
    %v4127 = vsub.f32 1.0, %v4114
    %4129 = vrot.lane.b32.xlu0 %v4126, 123
    %v4130 = vpop.permute.xlu0 %4129
    %v4132 = vmul.f32 %v4127, %v4130
    %v4133 = vmul.f32 %v4114, %v3997
    %v4134 = vadd.f32 %v4132, %v4133
    %4136 = vrot.lane.b32.xlu0 %v4093, 123
    %v4137 = vpop.permute.xlu0 %4136
    %s4139 = scalar_lea.vmem [#allocation6], 8
    %4140 = vst.msk [vmem:[%s4139] sm:$0xff] %vm1858, %v4137
    %4142 = vrot.lane.b32.xlu0 %v4134, 123
    %v4143 = vpop.permute.xlu0 %4142
    %s4145 = scalar_lea.vmem [#allocation7], 64
    %4146 = vst.msk [vmem:[%s4145] sm:$0xff] %vm1858, %v4143
    %v4147 = vsel %vm1858, %v4137, 0
    %4149 = vmatpush.msra.mxu0 0.0
    %4150 = vmatpush.msra.mxu0 0.0
    %4151 = vmatpush.msra.mxu0 0.0
    %4152 = vmatpush.msra.mxu0 0.0
    %4153 = vmatpush.msra.mxu0 0.0
    %4154 = vmatpush.msra.mxu0 0.0
    %4155 = vmatpush.msra.mxu0 0.0
    %4156 = vmatpush.msra.mxu0 0.0
    %4157 = vmatpush.msra.mxu0 0.0
    %4158 = vmatpush.msra.mxu0 0.0
    %4159 = vmatpush.msra.mxu0 0.0
    %4160 = vmatpush.msra.mxu0 0.0
    %4161 = vmatpush.msra.mxu0 0.0
    %4162 = vmatpush.msra.mxu0 0.0
    %4163 = vmatpush.msra.mxu0 0.0
    %4164 = vmatpush.msra.mxu0 %v3865
    %4165 = vmatmul.f32.gmra.mxu0 %v4147
    %v4166 = vpop.f32.mrf.mxu0
    %v4167 = vadd.f32 0.0, %v4166
    %4168 = vdwg.mxu0
    %v4169 = vsel %vm1858, %v4143, 0
    %4171 = vmatpush.msra.mxu0 0.0
    %4172 = vmatpush.msra.mxu0 0.0
    %4173 = vmatpush.msra.mxu0 0.0
    %4174 = vmatpush.msra.mxu0 0.0
    %4175 = vmatpush.msra.mxu0 0.0
    %4176 = vmatpush.msra.mxu0 0.0
    %4177 = vmatpush.msra.mxu0 0.0
    %4178 = vmatpush.msra.mxu0 0.0
    %4179 = vmatpush.msra.mxu0 0.0
    %4180 = vmatpush.msra.mxu0 0.0
    %4181 = vmatpush.msra.mxu0 0.0
    %4182 = vmatpush.msra.mxu0 0.0
    %4183 = vmatpush.msra.mxu0 0.0
    %4184 = vmatpush.msra.mxu0 0.0
    %4185 = vmatpush.msra.mxu0 0.0
    %4186 = vmatpush.msra.mxu0 %v3888
    %4187 = vmatmul.f32.gmra.mxu0 %v4169
    %v4188 = vpop.f32.mrf.mxu0
    %v4189 = vadd.f32 0.0, %v4188
    %4190 = vdwg.mxu0
    %v4191 = vld [vmem:[%s2193] sm:$0xff]
    %v4192 = vadd.f32 %v4191, %v4167
    %v4193 = vxor.u32 %v4192, 2147483648
    %v4194 = vmul.f32 %v4193, 1.442695
    %v4195 = vpow.pop %v4194
    %v4196 = vadd.f32 %v4195, 1.0
    %v4197 = vrcp.pop %v4196
    %v4198 = vmul.f32 %v4196, %v4197
    %v4199 = vsub.f32 1.0, %v4198
    %v4200 = vmul.f32 %v4197, %v4199
    %v4201 = vadd.f32 %v4197, %v4200
    %vm4202 = vweird.f32 %v4196
    %vm4203 = vweird.f32 %v4197
    %vm4204 = vmor %vm4202, %vm4203
    %v4205 = vsel %vm4204, %v4197, %v4201
    %v4206 = vand.u32 2147483647, %v4196
    %vm4207 = vcmp.eq.f32.partialorder %v4206, 8.507059e+37
    %v4208 = vand.u32 %v4196, 2147483648
    %v4209 = vor.u32 1.1754944e-38, %v4208
    %v4210 = vsel %vm4207, %v4209, %v4205
    %v4211 = vmul.f32 1.0, %v4210
    %v4212 = vadd.f32 %v4167, %v3932
    %4214 = vrot.lane.b32.xlu0 %v4212, 118
    %v4215 = vpop.permute.xlu0 %4214
    %v4217 = vmul.f32 %v4211, %v4215
    %4219 = vrot.lane.b32.xlu0 %v4217, 10
    %v4220 = vpop.permute.xlu0 %4219
    %v4222 = vadd.f32 %v4191, %v4220
    %v4223 = vtanh.pop %v4222
    %v4224 = vsub.f32 1.0, %v4211
    %4226 = vrot.lane.b32.xlu0 %v4223, 123
    %v4227 = vpop.permute.xlu0 %4226
    %v4229 = vmul.f32 %v4224, %v4227
    %v4230 = vmul.f32 %v4211, %v4093
    %v4231 = vadd.f32 %v4229, %v4230
    %v4232 = vld [vmem:[%s2235] sm:$0xff]
    %v4233 = vadd.f32 %v4232, %v4189
    %v4234 = vxor.u32 %v4233, 2147483648
    %v4235 = vmul.f32 %v4234, 1.442695
    %v4236 = vpow.pop %v4235
    %v4237 = vadd.f32 %v4236, 1.0
    %v4238 = vrcp.pop %v4237
    %v4239 = vmul.f32 %v4237, %v4238
    %v4240 = vsub.f32 1.0, %v4239
    %v4241 = vmul.f32 %v4238, %v4240
    %v4242 = vadd.f32 %v4238, %v4241
    %vm4243 = vweird.f32 %v4237
    %vm4244 = vweird.f32 %v4238
    %vm4245 = vmor %vm4243, %vm4244
    %v4246 = vsel %vm4245, %v4238, %v4242
    %v4247 = vand.u32 2147483647, %v4237
    %vm4248 = vcmp.eq.f32.partialorder %v4247, 8.507059e+37
    %v4249 = vand.u32 %v4237, 2147483648
    %v4250 = vor.u32 1.1754944e-38, %v4249
    %v4251 = vsel %vm4248, %v4250, %v4246
    %v4252 = vmul.f32 1.0, %v4251
    %v4253 = vadd.f32 %v4189, %v3976
    %4255 = vrot.lane.b32.xlu0 %v4253, 118
    %v4256 = vpop.permute.xlu0 %4255
    %v4258 = vmul.f32 %v4252, %v4256
    %4260 = vrot.lane.b32.xlu0 %v4258, 10
    %v4261 = vpop.permute.xlu0 %4260
    %v4263 = vadd.f32 %v4232, %v4261
    %v4264 = vtanh.pop %v4263
    %v4265 = vsub.f32 1.0, %v4252
    %4267 = vrot.lane.b32.xlu0 %v4264, 123
    %v4268 = vpop.permute.xlu0 %4267
    %v4270 = vmul.f32 %v4265, %v4268
    %v4271 = vmul.f32 %v4252, %v4134
    %v4272 = vadd.f32 %v4270, %v4271
    %4274 = vrot.lane.b32.xlu0 %v4231, 123
    %v4275 = vpop.permute.xlu0 %4274
    %s4277 = scalar_lea.vmem [#allocation6], 16
    %4278 = vst.msk [vmem:[%s4277] sm:$0xff] %vm1858, %v4275
    %4280 = vrot.lane.b32.xlu0 %v4272, 123
    %v4281 = vpop.permute.xlu0 %4280
    %s4283 = scalar_lea.vmem [#allocation7], 56
    %4284 = vst.msk [vmem:[%s4283] sm:$0xff] %vm1858, %v4281
    %v4285 = vsel %vm1858, %v4275, 0
    %4287 = vmatpush.msra.mxu0 0.0
    %4288 = vmatpush.msra.mxu0 0.0
    %4289 = vmatpush.msra.mxu0 0.0
    %4290 = vmatpush.msra.mxu0 0.0
    %4291 = vmatpush.msra.mxu0 0.0
    %4292 = vmatpush.msra.mxu0 0.0
    %4293 = vmatpush.msra.mxu0 0.0
    %4294 = vmatpush.msra.mxu0 0.0
    %4295 = vmatpush.msra.mxu0 0.0
    %4296 = vmatpush.msra.mxu0 0.0
    %4297 = vmatpush.msra.mxu0 0.0
    %4298 = vmatpush.msra.mxu0 0.0
    %4299 = vmatpush.msra.mxu0 0.0
    %4300 = vmatpush.msra.mxu0 0.0
    %4301 = vmatpush.msra.mxu0 0.0
    %4302 = vmatpush.msra.mxu0 %v3865
    %4303 = vmatmul.f32.gmra.mxu0 %v4285
    %v4304 = vpop.f32.mrf.mxu0
    %v4305 = vadd.f32 0.0, %v4304
    %4306 = vdwg.mxu0
    %v4307 = vsel %vm1858, %v4281, 0
    %4309 = vmatpush.msra.mxu0 0.0
    %4310 = vmatpush.msra.mxu0 0.0
    %4311 = vmatpush.msra.mxu0 0.0
    %4312 = vmatpush.msra.mxu0 0.0
    %4313 = vmatpush.msra.mxu0 0.0
    %4314 = vmatpush.msra.mxu0 0.0
    %4315 = vmatpush.msra.mxu0 0.0
    %4316 = vmatpush.msra.mxu0 0.0
    %4317 = vmatpush.msra.mxu0 0.0
    %4318 = vmatpush.msra.mxu0 0.0
    %4319 = vmatpush.msra.mxu0 0.0
    %4320 = vmatpush.msra.mxu0 0.0
    %4321 = vmatpush.msra.mxu0 0.0
    %4322 = vmatpush.msra.mxu0 0.0
    %4323 = vmatpush.msra.mxu0 0.0
    %4324 = vmatpush.msra.mxu0 %v3888
    %4325 = vmatmul.f32.gmra.mxu0 %v4307
    %v4326 = vpop.f32.mrf.mxu0
    %v4327 = vadd.f32 0.0, %v4326
    %4328 = vdwg.mxu0
    %v4329 = vld [vmem:[%s2333] sm:$0xff]
    %v4330 = vadd.f32 %v4329, %v4305
    %v4331 = vxor.u32 %v4330, 2147483648
    %v4332 = vmul.f32 %v4331, 1.442695
    %v4333 = vpow.pop %v4332
    %v4334 = vadd.f32 %v4333, 1.0
    %v4335 = vrcp.pop %v4334
    %v4336 = vmul.f32 %v4334, %v4335
    %v4337 = vsub.f32 1.0, %v4336
    %v4338 = vmul.f32 %v4335, %v4337
    %v4339 = vadd.f32 %v4335, %v4338
    %vm4340 = vweird.f32 %v4334
    %vm4341 = vweird.f32 %v4335
    %vm4342 = vmor %vm4340, %vm4341
    %v4343 = vsel %vm4342, %v4335, %v4339
    %v4344 = vand.u32 2147483647, %v4334
    %vm4345 = vcmp.eq.f32.partialorder %v4344, 8.507059e+37
    %v4346 = vand.u32 %v4334, 2147483648
    %v4347 = vor.u32 1.1754944e-38, %v4346
    %v4348 = vsel %vm4345, %v4347, %v4343
    %v4349 = vmul.f32 1.0, %v4348
    %v4350 = vadd.f32 %v4305, %v3932
    %4352 = vrot.lane.b32.xlu0 %v4350, 118
    %v4353 = vpop.permute.xlu0 %4352
    %v4355 = vmul.f32 %v4349, %v4353
    %4357 = vrot.lane.b32.xlu0 %v4355, 10
    %v4358 = vpop.permute.xlu0 %4357
    %v4360 = vadd.f32 %v4329, %v4358
    %v4361 = vtanh.pop %v4360
    %v4362 = vsub.f32 1.0, %v4349
    %4364 = vrot.lane.b32.xlu0 %v4361, 123
    %v4365 = vpop.permute.xlu0 %4364
    %v4367 = vmul.f32 %v4362, %v4365
    %v4368 = vmul.f32 %v4349, %v4231
    %v4369 = vadd.f32 %v4367, %v4368
    %v4370 = vld [vmem:[%s2375] sm:$0xff]
    %v4371 = vadd.f32 %v4370, %v4327
    %v4372 = vxor.u32 %v4371, 2147483648
    %v4373 = vmul.f32 %v4372, 1.442695
    %v4374 = vpow.pop %v4373
    %v4375 = vadd.f32 %v4374, 1.0
    %v4376 = vrcp.pop %v4375
    %v4377 = vmul.f32 %v4375, %v4376
    %v4378 = vsub.f32 1.0, %v4377
    %v4379 = vmul.f32 %v4376, %v4378
    %v4380 = vadd.f32 %v4376, %v4379
    %vm4381 = vweird.f32 %v4375
    %vm4382 = vweird.f32 %v4376
    %vm4383 = vmor %vm4381, %vm4382
    %v4384 = vsel %vm4383, %v4376, %v4380
    %v4385 = vand.u32 2147483647, %v4375
    %vm4386 = vcmp.eq.f32.partialorder %v4385, 8.507059e+37
    %v4387 = vand.u32 %v4375, 2147483648
    %v4388 = vor.u32 1.1754944e-38, %v4387
    %v4389 = vsel %vm4386, %v4388, %v4384
    %v4390 = vmul.f32 1.0, %v4389
    %v4391 = vadd.f32 %v4327, %v3976
    %4393 = vrot.lane.b32.xlu0 %v4391, 118
    %v4394 = vpop.permute.xlu0 %4393
    %v4396 = vmul.f32 %v4390, %v4394
    %4398 = vrot.lane.b32.xlu0 %v4396, 10
    %v4399 = vpop.permute.xlu0 %4398
    %v4401 = vadd.f32 %v4370, %v4399
    %v4402 = vtanh.pop %v4401
    %v4403 = vsub.f32 1.0, %v4390
    %4405 = vrot.lane.b32.xlu0 %v4402, 123
    %v4406 = vpop.permute.xlu0 %4405
    %v4408 = vmul.f32 %v4403, %v4406
    %v4409 = vmul.f32 %v4390, %v4272
    %v4410 = vadd.f32 %v4408, %v4409
    %4412 = vrot.lane.b32.xlu0 %v4369, 123
    %v4413 = vpop.permute.xlu0 %4412
    %s4415 = scalar_lea.vmem [#allocation6], 24
    %4416 = vst.msk [vmem:[%s4415] sm:$0xff] %vm1858, %v4413
    %4418 = vrot.lane.b32.xlu0 %v4410, 123
    %v4419 = vpop.permute.xlu0 %4418
    %s4421 = scalar_lea.vmem [#allocation7], 48
    %4422 = vst.msk [vmem:[%s4421] sm:$0xff] %vm1858, %v4419
    %v4423 = vsel %vm1858, %v4413, 0
    %4425 = vmatpush.msra.mxu0 0.0
    %4426 = vmatpush.msra.mxu0 0.0
    %4427 = vmatpush.msra.mxu0 0.0
    %4428 = vmatpush.msra.mxu0 0.0
    %4429 = vmatpush.msra.mxu0 0.0
    %4430 = vmatpush.msra.mxu0 0.0
    %4431 = vmatpush.msra.mxu0 0.0
    %4432 = vmatpush.msra.mxu0 0.0
    %4433 = vmatpush.msra.mxu0 0.0
    %4434 = vmatpush.msra.mxu0 0.0
    %4435 = vmatpush.msra.mxu0 0.0
    %4436 = vmatpush.msra.mxu0 0.0
    %4437 = vmatpush.msra.mxu0 0.0
    %4438 = vmatpush.msra.mxu0 0.0
    %4439 = vmatpush.msra.mxu0 0.0
    %4440 = vmatpush.msra.mxu0 %v3865
    %4441 = vmatmul.f32.gmra.mxu0 %v4423
    %v4442 = vpop.f32.mrf.mxu0
    %v4443 = vadd.f32 0.0, %v4442
    %4444 = vdwg.mxu0
    %v4445 = vsel %vm1858, %v4419, 0
    %4447 = vmatpush.msra.mxu0 0.0
    %4448 = vmatpush.msra.mxu0 0.0
    %4449 = vmatpush.msra.mxu0 0.0
    %4450 = vmatpush.msra.mxu0 0.0
    %4451 = vmatpush.msra.mxu0 0.0
    %4452 = vmatpush.msra.mxu0 0.0
    %4453 = vmatpush.msra.mxu0 0.0
    %4454 = vmatpush.msra.mxu0 0.0
    %4455 = vmatpush.msra.mxu0 0.0
    %4456 = vmatpush.msra.mxu0 0.0
    %4457 = vmatpush.msra.mxu0 0.0
    %4458 = vmatpush.msra.mxu0 0.0
    %4459 = vmatpush.msra.mxu0 0.0
    %4460 = vmatpush.msra.mxu0 0.0
    %4461 = vmatpush.msra.mxu0 0.0
    %4462 = vmatpush.msra.mxu0 %v3888
    %4463 = vmatmul.f32.gmra.mxu0 %v4445
    %v4464 = vpop.f32.mrf.mxu0
    %v4465 = vadd.f32 0.0, %v4464
    %4466 = vdwg.mxu0
    %v4467 = vld [vmem:[%s2473] sm:$0xff]
    %v4468 = vadd.f32 %v4467, %v4443
    %v4469 = vxor.u32 %v4468, 2147483648
    %v4470 = vmul.f32 %v4469, 1.442695
    %v4471 = vpow.pop %v4470
    %v4472 = vadd.f32 %v4471, 1.0
    %v4473 = vrcp.pop %v4472
    %v4474 = vmul.f32 %v4472, %v4473
    %v4475 = vsub.f32 1.0, %v4474
    %v4476 = vmul.f32 %v4473, %v4475
    %v4477 = vadd.f32 %v4473, %v4476
    %vm4478 = vweird.f32 %v4472
    %vm4479 = vweird.f32 %v4473
    %vm4480 = vmor %vm4478, %vm4479
    %v4481 = vsel %vm4480, %v4473, %v4477
    %v4482 = vand.u32 2147483647, %v4472
    %vm4483 = vcmp.eq.f32.partialorder %v4482, 8.507059e+37
    %v4484 = vand.u32 %v4472, 2147483648
    %v4485 = vor.u32 1.1754944e-38, %v4484
    %v4486 = vsel %vm4483, %v4485, %v4481
    %v4487 = vmul.f32 1.0, %v4486
    %v4488 = vadd.f32 %v4443, %v3932
    %4490 = vrot.lane.b32.xlu0 %v4488, 118
    %v4491 = vpop.permute.xlu0 %4490
    %v4493 = vmul.f32 %v4487, %v4491
    %4495 = vrot.lane.b32.xlu0 %v4493, 10
    %v4496 = vpop.permute.xlu0 %4495
    %v4498 = vadd.f32 %v4467, %v4496
    %v4499 = vtanh.pop %v4498
    %v4500 = vsub.f32 1.0, %v4487
    %4502 = vrot.lane.b32.xlu0 %v4499, 123
    %v4503 = vpop.permute.xlu0 %4502
    %v4505 = vmul.f32 %v4500, %v4503
    %v4506 = vmul.f32 %v4487, %v4369
    %v4507 = vadd.f32 %v4505, %v4506
    %v4508 = vld [vmem:[%s2515] sm:$0xff]
    %v4509 = vadd.f32 %v4508, %v4465
    %v4510 = vxor.u32 %v4509, 2147483648
    %v4511 = vmul.f32 %v4510, 1.442695
    %v4512 = vpow.pop %v4511
    %v4513 = vadd.f32 %v4512, 1.0
    %v4514 = vrcp.pop %v4513
    %v4515 = vmul.f32 %v4513, %v4514
    %v4516 = vsub.f32 1.0, %v4515
    %v4517 = vmul.f32 %v4514, %v4516
    %v4518 = vadd.f32 %v4514, %v4517
    %vm4519 = vweird.f32 %v4513
    %vm4520 = vweird.f32 %v4514
    %vm4521 = vmor %vm4519, %vm4520
    %v4522 = vsel %vm4521, %v4514, %v4518
    %v4523 = vand.u32 2147483647, %v4513
    %vm4524 = vcmp.eq.f32.partialorder %v4523, 8.507059e+37
    %v4525 = vand.u32 %v4513, 2147483648
    %v4526 = vor.u32 1.1754944e-38, %v4525
    %v4527 = vsel %vm4524, %v4526, %v4522
    %v4528 = vmul.f32 1.0, %v4527
    %v4529 = vadd.f32 %v4465, %v3976
    %4531 = vrot.lane.b32.xlu0 %v4529, 118
    %v4532 = vpop.permute.xlu0 %4531
    %v4534 = vmul.f32 %v4528, %v4532
    %4536 = vrot.lane.b32.xlu0 %v4534, 10
    %v4537 = vpop.permute.xlu0 %4536
    %v4539 = vadd.f32 %v4508, %v4537
    %v4540 = vtanh.pop %v4539
    %v4541 = vsub.f32 1.0, %v4528
    %4543 = vrot.lane.b32.xlu0 %v4540, 123
    %v4544 = vpop.permute.xlu0 %4543
    %v4546 = vmul.f32 %v4541, %v4544
    %v4547 = vmul.f32 %v4528, %v4410
    %v4548 = vadd.f32 %v4546, %v4547
    %4550 = vrot.lane.b32.xlu0 %v4507, 123
    %v4551 = vpop.permute.xlu0 %4550
    %s4553 = scalar_lea.vmem [#allocation6], 32
    %4554 = vst.msk [vmem:[%s4553] sm:$0xff] %vm1858, %v4551
    %4556 = vrot.lane.b32.xlu0 %v4548, 123
    %v4557 = vpop.permute.xlu0 %4556
    %s4559 = scalar_lea.vmem [#allocation7], 40
    %4560 = vst.msk [vmem:[%s4559] sm:$0xff] %vm1858, %v4557
    %v4561 = vsel %vm1858, %v4551, 0
    %4563 = vmatpush.msra.mxu0 0.0
    %4564 = vmatpush.msra.mxu0 0.0
    %4565 = vmatpush.msra.mxu0 0.0
    %4566 = vmatpush.msra.mxu0 0.0
    %4567 = vmatpush.msra.mxu0 0.0
    %4568 = vmatpush.msra.mxu0 0.0
    %4569 = vmatpush.msra.mxu0 0.0
    %4570 = vmatpush.msra.mxu0 0.0
    %4571 = vmatpush.msra.mxu0 0.0
    %4572 = vmatpush.msra.mxu0 0.0
    %4573 = vmatpush.msra.mxu0 0.0
    %4574 = vmatpush.msra.mxu0 0.0
    %4575 = vmatpush.msra.mxu0 0.0
    %4576 = vmatpush.msra.mxu0 0.0
    %4577 = vmatpush.msra.mxu0 0.0
    %4578 = vmatpush.msra.mxu0 %v3865
    %4579 = vmatmul.f32.gmra.mxu0 %v4561
    %v4580 = vpop.f32.mrf.mxu0
    %v4581 = vadd.f32 0.0, %v4580
    %4582 = vdwg.mxu0
    %v4583 = vsel %vm1858, %v4557, 0
    %4585 = vmatpush.msra.mxu0 0.0
    %4586 = vmatpush.msra.mxu0 0.0
    %4587 = vmatpush.msra.mxu0 0.0
    %4588 = vmatpush.msra.mxu0 0.0
    %4589 = vmatpush.msra.mxu0 0.0
    %4590 = vmatpush.msra.mxu0 0.0
    %4591 = vmatpush.msra.mxu0 0.0
    %4592 = vmatpush.msra.mxu0 0.0
    %4593 = vmatpush.msra.mxu0 0.0
    %4594 = vmatpush.msra.mxu0 0.0
    %4595 = vmatpush.msra.mxu0 0.0
    %4596 = vmatpush.msra.mxu0 0.0
    %4597 = vmatpush.msra.mxu0 0.0
    %4598 = vmatpush.msra.mxu0 0.0
    %4599 = vmatpush.msra.mxu0 0.0
    %4600 = vmatpush.msra.mxu0 %v3888
    %4601 = vmatmul.f32.gmra.mxu0 %v4583
    %v4602 = vpop.f32.mrf.mxu0
    %v4603 = vadd.f32 0.0, %v4602
    %4604 = vdwg.mxu0
    %v4605 = vld [vmem:[%s2613] sm:$0xff]
    %v4606 = vadd.f32 %v4605, %v4581
    %v4607 = vxor.u32 %v4606, 2147483648
    %v4608 = vmul.f32 %v4607, 1.442695
    %v4609 = vpow.pop %v4608
    %v4610 = vadd.f32 %v4609, 1.0
    %v4611 = vrcp.pop %v4610
    %v4612 = vmul.f32 %v4610, %v4611
    %v4613 = vsub.f32 1.0, %v4612
    %v4614 = vmul.f32 %v4611, %v4613
    %v4615 = vadd.f32 %v4611, %v4614
    %vm4616 = vweird.f32 %v4610
    %vm4617 = vweird.f32 %v4611
    %vm4618 = vmor %vm4616, %vm4617
    %v4619 = vsel %vm4618, %v4611, %v4615
    %v4620 = vand.u32 2147483647, %v4610
    %vm4621 = vcmp.eq.f32.partialorder %v4620, 8.507059e+37
    %v4622 = vand.u32 %v4610, 2147483648
    %v4623 = vor.u32 1.1754944e-38, %v4622
    %v4624 = vsel %vm4621, %v4623, %v4619
    %v4625 = vmul.f32 1.0, %v4624
    %v4626 = vadd.f32 %v4581, %v3932
    %4628 = vrot.lane.b32.xlu0 %v4626, 118
    %v4629 = vpop.permute.xlu0 %4628
    %v4631 = vmul.f32 %v4625, %v4629
    %4633 = vrot.lane.b32.xlu0 %v4631, 10
    %v4634 = vpop.permute.xlu0 %4633
    %v4636 = vadd.f32 %v4605, %v4634
    %v4637 = vtanh.pop %v4636
    %v4638 = vsub.f32 1.0, %v4625
    %4640 = vrot.lane.b32.xlu0 %v4637, 123
    %v4641 = vpop.permute.xlu0 %4640
    %v4643 = vmul.f32 %v4638, %v4641
    %v4644 = vmul.f32 %v4625, %v4507
    %v4645 = vadd.f32 %v4643, %v4644
    %v4646 = vld [vmem:[%s2655] sm:$0xff]
    %v4647 = vadd.f32 %v4646, %v4603
    %v4648 = vxor.u32 %v4647, 2147483648
    %v4649 = vmul.f32 %v4648, 1.442695
    %v4650 = vpow.pop %v4649
    %v4651 = vadd.f32 %v4650, 1.0
    %v4652 = vrcp.pop %v4651
    %v4653 = vmul.f32 %v4651, %v4652
    %v4654 = vsub.f32 1.0, %v4653
    %v4655 = vmul.f32 %v4652, %v4654
    %v4656 = vadd.f32 %v4652, %v4655
    %vm4657 = vweird.f32 %v4651
    %vm4658 = vweird.f32 %v4652
    %vm4659 = vmor %vm4657, %vm4658
    %v4660 = vsel %vm4659, %v4652, %v4656
    %v4661 = vand.u32 2147483647, %v4651
    %vm4662 = vcmp.eq.f32.partialorder %v4661, 8.507059e+37
    %v4663 = vand.u32 %v4651, 2147483648
    %v4664 = vor.u32 1.1754944e-38, %v4663
    %v4665 = vsel %vm4662, %v4664, %v4660
    %v4666 = vmul.f32 1.0, %v4665
    %v4667 = vadd.f32 %v4603, %v3976
    %4669 = vrot.lane.b32.xlu0 %v4667, 118
    %v4670 = vpop.permute.xlu0 %4669
    %v4672 = vmul.f32 %v4666, %v4670
    %4674 = vrot.lane.b32.xlu0 %v4672, 10
    %v4675 = vpop.permute.xlu0 %4674
    %v4677 = vadd.f32 %v4646, %v4675
    %v4678 = vtanh.pop %v4677
    %v4679 = vsub.f32 1.0, %v4666
    %4681 = vrot.lane.b32.xlu0 %v4678, 123
    %v4682 = vpop.permute.xlu0 %4681
    %v4684 = vmul.f32 %v4679, %v4682
    %v4685 = vmul.f32 %v4666, %v4548
    %v4686 = vadd.f32 %v4684, %v4685
    %4688 = vrot.lane.b32.xlu0 %v4645, 123
    %v4689 = vpop.permute.xlu0 %4688
    %s4691 = scalar_lea.vmem [#allocation6], 40
    %4692 = vst.msk [vmem:[%s4691] sm:$0xff] %vm1858, %v4689
    %4694 = vrot.lane.b32.xlu0 %v4686, 123
    %v4695 = vpop.permute.xlu0 %4694
    %s4697 = scalar_lea.vmem [#allocation7], 32
    %4698 = vst.msk [vmem:[%s4697] sm:$0xff] %vm1858, %v4695
    %v4699 = vsel %vm1858, %v4689, 0
    %4701 = vmatpush.msra.mxu0 0.0
    %4702 = vmatpush.msra.mxu0 0.0
    %4703 = vmatpush.msra.mxu0 0.0
    %4704 = vmatpush.msra.mxu0 0.0
    %4705 = vmatpush.msra.mxu0 0.0
    %4706 = vmatpush.msra.mxu0 0.0
    %4707 = vmatpush.msra.mxu0 0.0
    %4708 = vmatpush.msra.mxu0 0.0
    %4709 = vmatpush.msra.mxu0 0.0
    %4710 = vmatpush.msra.mxu0 0.0
    %4711 = vmatpush.msra.mxu0 0.0
    %4712 = vmatpush.msra.mxu0 0.0
    %4713 = vmatpush.msra.mxu0 0.0
    %4714 = vmatpush.msra.mxu0 0.0
    %4715 = vmatpush.msra.mxu0 0.0
    %4716 = vmatpush.msra.mxu0 %v3865
    %4717 = vmatmul.f32.gmra.mxu0 %v4699
    %v4718 = vpop.f32.mrf.mxu0
    %v4719 = vadd.f32 0.0, %v4718
    %4720 = vdwg.mxu0
    %v4721 = vsel %vm1858, %v4695, 0
    %4723 = vmatpush.msra.mxu0 0.0
    %4724 = vmatpush.msra.mxu0 0.0
    %4725 = vmatpush.msra.mxu0 0.0
    %4726 = vmatpush.msra.mxu0 0.0
    %4727 = vmatpush.msra.mxu0 0.0
    %4728 = vmatpush.msra.mxu0 0.0
    %4729 = vmatpush.msra.mxu0 0.0
    %4730 = vmatpush.msra.mxu0 0.0
    %4731 = vmatpush.msra.mxu0 0.0
    %4732 = vmatpush.msra.mxu0 0.0
    %4733 = vmatpush.msra.mxu0 0.0
    %4734 = vmatpush.msra.mxu0 0.0
    %4735 = vmatpush.msra.mxu0 0.0
    %4736 = vmatpush.msra.mxu0 0.0
    %4737 = vmatpush.msra.mxu0 0.0
    %4738 = vmatpush.msra.mxu0 %v3888
    %4739 = vmatmul.f32.gmra.mxu0 %v4721
    %v4740 = vpop.f32.mrf.mxu0
    %v4741 = vadd.f32 0.0, %v4740
    %4742 = vdwg.mxu0
    %v4743 = vld [vmem:[%s2753] sm:$0xff]
    %v4744 = vadd.f32 %v4743, %v4719
    %v4745 = vxor.u32 %v4744, 2147483648
    %v4746 = vmul.f32 %v4745, 1.442695
    %v4747 = vpow.pop %v4746
    %v4748 = vadd.f32 %v4747, 1.0
    %v4749 = vrcp.pop %v4748
    %v4750 = vmul.f32 %v4748, %v4749
    %v4751 = vsub.f32 1.0, %v4750
    %v4752 = vmul.f32 %v4749, %v4751
    %v4753 = vadd.f32 %v4749, %v4752
    %vm4754 = vweird.f32 %v4748
    %vm4755 = vweird.f32 %v4749
    %vm4756 = vmor %vm4754, %vm4755
    %v4757 = vsel %vm4756, %v4749, %v4753
    %v4758 = vand.u32 2147483647, %v4748
    %vm4759 = vcmp.eq.f32.partialorder %v4758, 8.507059e+37
    %v4760 = vand.u32 %v4748, 2147483648
    %v4761 = vor.u32 1.1754944e-38, %v4760
    %v4762 = vsel %vm4759, %v4761, %v4757
    %v4763 = vmul.f32 1.0, %v4762
    %v4764 = vadd.f32 %v4719, %v3932
    %4766 = vrot.lane.b32.xlu0 %v4764, 118
    %v4767 = vpop.permute.xlu0 %4766
    %v4769 = vmul.f32 %v4763, %v4767
    %4771 = vrot.lane.b32.xlu0 %v4769, 10
    %v4772 = vpop.permute.xlu0 %4771
    %v4774 = vadd.f32 %v4743, %v4772
    %v4775 = vtanh.pop %v4774
    %v4776 = vsub.f32 1.0, %v4763
    %4778 = vrot.lane.b32.xlu0 %v4775, 123
    %v4779 = vpop.permute.xlu0 %4778
    %v4781 = vmul.f32 %v4776, %v4779
    %v4782 = vmul.f32 %v4763, %v4645
    %v4783 = vadd.f32 %v4781, %v4782
    %v4784 = vld [vmem:[%s2795] sm:$0xff]
    %v4785 = vadd.f32 %v4784, %v4741
    %v4786 = vxor.u32 %v4785, 2147483648
    %v4787 = vmul.f32 %v4786, 1.442695
    %v4788 = vpow.pop %v4787
    %v4789 = vadd.f32 %v4788, 1.0
    %v4790 = vrcp.pop %v4789
    %v4791 = vmul.f32 %v4789, %v4790
    %v4792 = vsub.f32 1.0, %v4791
    %v4793 = vmul.f32 %v4790, %v4792
    %v4794 = vadd.f32 %v4790, %v4793
    %vm4795 = vweird.f32 %v4789
    %vm4796 = vweird.f32 %v4790
    %vm4797 = vmor %vm4795, %vm4796
    %v4798 = vsel %vm4797, %v4790, %v4794
    %v4799 = vand.u32 2147483647, %v4789
    %vm4800 = vcmp.eq.f32.partialorder %v4799, 8.507059e+37
    %v4801 = vand.u32 %v4789, 2147483648
    %v4802 = vor.u32 1.1754944e-38, %v4801
    %v4803 = vsel %vm4800, %v4802, %v4798
    %v4804 = vmul.f32 1.0, %v4803
    %v4805 = vadd.f32 %v4741, %v3976
    %4807 = vrot.lane.b32.xlu0 %v4805, 118
    %v4808 = vpop.permute.xlu0 %4807
    %v4810 = vmul.f32 %v4804, %v4808
    %4812 = vrot.lane.b32.xlu0 %v4810, 10
    %v4813 = vpop.permute.xlu0 %4812
    %v4815 = vadd.f32 %v4784, %v4813
    %v4816 = vtanh.pop %v4815
    %v4817 = vsub.f32 1.0, %v4804
    %4819 = vrot.lane.b32.xlu0 %v4816, 123
    %v4820 = vpop.permute.xlu0 %4819
    %v4822 = vmul.f32 %v4817, %v4820
    %v4823 = vmul.f32 %v4804, %v4686
    %v4824 = vadd.f32 %v4822, %v4823
    %4826 = vrot.lane.b32.xlu0 %v4783, 123
    %v4827 = vpop.permute.xlu0 %4826
    %s4829 = scalar_lea.vmem [#allocation6], 48
    %4830 = vst.msk [vmem:[%s4829] sm:$0xff] %vm1858, %v4827
    %4832 = vrot.lane.b32.xlu0 %v4824, 123
    %v4833 = vpop.permute.xlu0 %4832
    %s4835 = scalar_lea.vmem [#allocation7], 24
    %4836 = vst.msk [vmem:[%s4835] sm:$0xff] %vm1858, %v4833
    %v4837 = vsel %vm1858, %v4827, 0
    %4839 = vmatpush.msra.mxu0 0.0
    %4840 = vmatpush.msra.mxu0 0.0
    %4841 = vmatpush.msra.mxu0 0.0
    %4842 = vmatpush.msra.mxu0 0.0
    %4843 = vmatpush.msra.mxu0 0.0
    %4844 = vmatpush.msra.mxu0 0.0
    %4845 = vmatpush.msra.mxu0 0.0
    %4846 = vmatpush.msra.mxu0 0.0
    %4847 = vmatpush.msra.mxu0 0.0
    %4848 = vmatpush.msra.mxu0 0.0
    %4849 = vmatpush.msra.mxu0 0.0
    %4850 = vmatpush.msra.mxu0 0.0
    %4851 = vmatpush.msra.mxu0 0.0
    %4852 = vmatpush.msra.mxu0 0.0
    %4853 = vmatpush.msra.mxu0 0.0
    %4854 = vmatpush.msra.mxu0 %v3865
    %4855 = vmatmul.f32.gmra.mxu0 %v4837
    %v4856 = vpop.f32.mrf.mxu0
    %v4857 = vadd.f32 0.0, %v4856
    %4858 = vdwg.mxu0
    %v4859 = vsel %vm1858, %v4833, 0
    %4861 = vmatpush.msra.mxu0 0.0
    %4862 = vmatpush.msra.mxu0 0.0
    %4863 = vmatpush.msra.mxu0 0.0
    %4864 = vmatpush.msra.mxu0 0.0
    %4865 = vmatpush.msra.mxu0 0.0
    %4866 = vmatpush.msra.mxu0 0.0
    %4867 = vmatpush.msra.mxu0 0.0
    %4868 = vmatpush.msra.mxu0 0.0
    %4869 = vmatpush.msra.mxu0 0.0
    %4870 = vmatpush.msra.mxu0 0.0
    %4871 = vmatpush.msra.mxu0 0.0
    %4872 = vmatpush.msra.mxu0 0.0
    %4873 = vmatpush.msra.mxu0 0.0
    %4874 = vmatpush.msra.mxu0 0.0
    %4875 = vmatpush.msra.mxu0 0.0
    %4876 = vmatpush.msra.mxu0 %v3888
    %4877 = vmatmul.f32.gmra.mxu0 %v4859
    %v4878 = vpop.f32.mrf.mxu0
    %v4879 = vadd.f32 0.0, %v4878
    %4880 = vdwg.mxu0
    %v4881 = vld [vmem:[%s2893] sm:$0xff]
    %v4882 = vadd.f32 %v4881, %v4857
    %v4883 = vxor.u32 %v4882, 2147483648
    %v4884 = vmul.f32 %v4883, 1.442695
    %v4885 = vpow.pop %v4884
    %v4886 = vadd.f32 %v4885, 1.0
    %v4887 = vrcp.pop %v4886
    %v4888 = vmul.f32 %v4886, %v4887
    %v4889 = vsub.f32 1.0, %v4888
    %v4890 = vmul.f32 %v4887, %v4889
    %v4891 = vadd.f32 %v4887, %v4890
    %vm4892 = vweird.f32 %v4886
    %vm4893 = vweird.f32 %v4887
    %vm4894 = vmor %vm4892, %vm4893
    %v4895 = vsel %vm4894, %v4887, %v4891
    %v4896 = vand.u32 2147483647, %v4886
    %vm4897 = vcmp.eq.f32.partialorder %v4896, 8.507059e+37
    %v4898 = vand.u32 %v4886, 2147483648
    %v4899 = vor.u32 1.1754944e-38, %v4898
    %v4900 = vsel %vm4897, %v4899, %v4895
    %v4901 = vmul.f32 1.0, %v4900
    %v4902 = vadd.f32 %v4857, %v3932
    %4904 = vrot.lane.b32.xlu0 %v4902, 118
    %v4905 = vpop.permute.xlu0 %4904
    %v4907 = vmul.f32 %v4901, %v4905
    %4909 = vrot.lane.b32.xlu0 %v4907, 10
    %v4910 = vpop.permute.xlu0 %4909
    %v4912 = vadd.f32 %v4881, %v4910
    %v4913 = vtanh.pop %v4912
    %v4914 = vsub.f32 1.0, %v4901
    %4916 = vrot.lane.b32.xlu0 %v4913, 123
    %v4917 = vpop.permute.xlu0 %4916
    %v4919 = vmul.f32 %v4914, %v4917
    %v4920 = vmul.f32 %v4901, %v4783
    %v4921 = vadd.f32 %v4919, %v4920
    %v4922 = vld [vmem:[%s2935] sm:$0xff]
    %v4923 = vadd.f32 %v4922, %v4879
    %v4924 = vxor.u32 %v4923, 2147483648
    %v4925 = vmul.f32 %v4924, 1.442695
    %v4926 = vpow.pop %v4925
    %v4927 = vadd.f32 %v4926, 1.0
    %v4928 = vrcp.pop %v4927
    %v4929 = vmul.f32 %v4927, %v4928
    %v4930 = vsub.f32 1.0, %v4929
    %v4931 = vmul.f32 %v4928, %v4930
    %v4932 = vadd.f32 %v4928, %v4931
    %vm4933 = vweird.f32 %v4927
    %vm4934 = vweird.f32 %v4928
    %vm4935 = vmor %vm4933, %vm4934
    %v4936 = vsel %vm4935, %v4928, %v4932
    %v4937 = vand.u32 2147483647, %v4927
    %vm4938 = vcmp.eq.f32.partialorder %v4937, 8.507059e+37
    %v4939 = vand.u32 %v4927, 2147483648
    %v4940 = vor.u32 1.1754944e-38, %v4939
    %v4941 = vsel %vm4938, %v4940, %v4936
    %v4942 = vmul.f32 1.0, %v4941
    %v4943 = vadd.f32 %v4879, %v3976
    %4945 = vrot.lane.b32.xlu0 %v4943, 118
    %v4946 = vpop.permute.xlu0 %4945
    %v4948 = vmul.f32 %v4942, %v4946
    %4950 = vrot.lane.b32.xlu0 %v4948, 10
    %v4951 = vpop.permute.xlu0 %4950
    %v4953 = vadd.f32 %v4922, %v4951
    %v4954 = vtanh.pop %v4953
    %v4955 = vsub.f32 1.0, %v4942
    %4957 = vrot.lane.b32.xlu0 %v4954, 123
    %v4958 = vpop.permute.xlu0 %4957
    %v4960 = vmul.f32 %v4955, %v4958
    %v4961 = vmul.f32 %v4942, %v4824
    %v4962 = vadd.f32 %v4960, %v4961
    %4964 = vrot.lane.b32.xlu0 %v4921, 123
    %v4965 = vpop.permute.xlu0 %4964
    %s4967 = scalar_lea.vmem [#allocation6], 56
    %4968 = vst.msk [vmem:[%s4967] sm:$0xff] %vm1858, %v4965
    %4970 = vrot.lane.b32.xlu0 %v4962, 123
    %v4971 = vpop.permute.xlu0 %4970
    %s4973 = scalar_lea.vmem [#allocation7], 16
    %4974 = vst.msk [vmem:[%s4973] sm:$0xff] %vm1858, %v4971
    %v4975 = vsel %vm1858, %v4965, 0
    %4977 = vmatpush.msra.mxu0 0.0
    %4978 = vmatpush.msra.mxu0 0.0
    %4979 = vmatpush.msra.mxu0 0.0
    %4980 = vmatpush.msra.mxu0 0.0
    %4981 = vmatpush.msra.mxu0 0.0
    %4982 = vmatpush.msra.mxu0 0.0
    %4983 = vmatpush.msra.mxu0 0.0
    %4984 = vmatpush.msra.mxu0 0.0
    %4985 = vmatpush.msra.mxu0 0.0
    %4986 = vmatpush.msra.mxu0 0.0
    %4987 = vmatpush.msra.mxu0 0.0
    %4988 = vmatpush.msra.mxu0 0.0
    %4989 = vmatpush.msra.mxu0 0.0
    %4990 = vmatpush.msra.mxu0 0.0
    %4991 = vmatpush.msra.mxu0 0.0
    %4992 = vmatpush.msra.mxu0 %v3865
    %4993 = vmatmul.f32.gmra.mxu0 %v4975
    %v4994 = vpop.f32.mrf.mxu0
    %v4995 = vadd.f32 0.0, %v4994
    %4996 = vdwg.mxu0
    %v4997 = vsel %vm1858, %v4971, 0
    %4999 = vmatpush.msra.mxu0 0.0
    %5000 = vmatpush.msra.mxu0 0.0
    %5001 = vmatpush.msra.mxu0 0.0
    %5002 = vmatpush.msra.mxu0 0.0
    %5003 = vmatpush.msra.mxu0 0.0
    %5004 = vmatpush.msra.mxu0 0.0
    %5005 = vmatpush.msra.mxu0 0.0
    %5006 = vmatpush.msra.mxu0 0.0
    %5007 = vmatpush.msra.mxu0 0.0
    %5008 = vmatpush.msra.mxu0 0.0
    %5009 = vmatpush.msra.mxu0 0.0
    %5010 = vmatpush.msra.mxu0 0.0
    %5011 = vmatpush.msra.mxu0 0.0
    %5012 = vmatpush.msra.mxu0 0.0
    %5013 = vmatpush.msra.mxu0 0.0
    %5014 = vmatpush.msra.mxu0 %v3888
    %5015 = vmatmul.f32.gmra.mxu0 %v4997
    %v5016 = vpop.f32.mrf.mxu0
    %v5017 = vadd.f32 0.0, %v5016
    %5018 = vdwg.mxu0
    %v5019 = vld [vmem:[%s3033] sm:$0xff]
    %v5020 = vadd.f32 %v5019, %v4995
    %v5021 = vxor.u32 %v5020, 2147483648
    %v5022 = vmul.f32 %v5021, 1.442695
    %v5023 = vpow.pop %v5022
    %v5024 = vadd.f32 %v5023, 1.0
    %v5025 = vrcp.pop %v5024
    %v5026 = vmul.f32 %v5024, %v5025
    %v5027 = vsub.f32 1.0, %v5026
    %v5028 = vmul.f32 %v5025, %v5027
    %v5029 = vadd.f32 %v5025, %v5028
    %vm5030 = vweird.f32 %v5024
    %vm5031 = vweird.f32 %v5025
    %vm5032 = vmor %vm5030, %vm5031
    %v5033 = vsel %vm5032, %v5025, %v5029
    %v5034 = vand.u32 2147483647, %v5024
    %vm5035 = vcmp.eq.f32.partialorder %v5034, 8.507059e+37
    %v5036 = vand.u32 %v5024, 2147483648
    %v5037 = vor.u32 1.1754944e-38, %v5036
    %v5038 = vsel %vm5035, %v5037, %v5033
    %v5039 = vmul.f32 1.0, %v5038
    %v5040 = vadd.f32 %v4995, %v3932
    %5042 = vrot.lane.b32.xlu0 %v5040, 118
    %v5043 = vpop.permute.xlu0 %5042
    %v5045 = vmul.f32 %v5039, %v5043
    %5047 = vrot.lane.b32.xlu0 %v5045, 10
    %v5048 = vpop.permute.xlu0 %5047
    %v5050 = vadd.f32 %v5019, %v5048
    %v5051 = vtanh.pop %v5050
    %v5052 = vsub.f32 1.0, %v5039
    %5054 = vrot.lane.b32.xlu0 %v5051, 123
    %v5055 = vpop.permute.xlu0 %5054
    %v5057 = vmul.f32 %v5052, %v5055
    %v5058 = vmul.f32 %v5039, %v4921
    %v5059 = vadd.f32 %v5057, %v5058
    %v5060 = vld [vmem:[%s3075] sm:$0xff]
    %v5061 = vadd.f32 %v5060, %v5017
    %v5062 = vxor.u32 %v5061, 2147483648
    %v5063 = vmul.f32 %v5062, 1.442695
    %v5064 = vpow.pop %v5063
    %v5065 = vadd.f32 %v5064, 1.0
    %v5066 = vrcp.pop %v5065
    %v5067 = vmul.f32 %v5065, %v5066
    %v5068 = vsub.f32 1.0, %v5067
    %v5069 = vmul.f32 %v5066, %v5068
    %v5070 = vadd.f32 %v5066, %v5069
    %vm5071 = vweird.f32 %v5065
    %vm5072 = vweird.f32 %v5066
    %vm5073 = vmor %vm5071, %vm5072
    %v5074 = vsel %vm5073, %v5066, %v5070
    %v5075 = vand.u32 2147483647, %v5065
    %vm5076 = vcmp.eq.f32.partialorder %v5075, 8.507059e+37
    %v5077 = vand.u32 %v5065, 2147483648
    %v5078 = vor.u32 1.1754944e-38, %v5077
    %v5079 = vsel %vm5076, %v5078, %v5074
    %v5080 = vmul.f32 1.0, %v5079
    %v5081 = vadd.f32 %v5017, %v3976
    %5083 = vrot.lane.b32.xlu0 %v5081, 118
    %v5084 = vpop.permute.xlu0 %5083
    %v5086 = vmul.f32 %v5080, %v5084
    %5088 = vrot.lane.b32.xlu0 %v5086, 10
    %v5089 = vpop.permute.xlu0 %5088
    %v5091 = vadd.f32 %v5060, %v5089
    %v5092 = vtanh.pop %v5091
    %v5093 = vsub.f32 1.0, %v5080
    %5095 = vrot.lane.b32.xlu0 %v5092, 123
    %v5096 = vpop.permute.xlu0 %5095
    %v5098 = vmul.f32 %v5093, %v5096
    %v5099 = vmul.f32 %v5080, %v4962
    %v5100 = vadd.f32 %v5098, %v5099
    %5102 = vrot.lane.b32.xlu0 %v5059, 123
    %v5103 = vpop.permute.xlu0 %5102
    %s5105 = scalar_lea.vmem [#allocation6], 64
    %5106 = vst.msk [vmem:[%s5105] sm:$0xff] %vm1858, %v5103
    %5108 = vrot.lane.b32.xlu0 %v5100, 123
    %v5109 = vpop.permute.xlu0 %5108
    %s5111 = scalar_lea.vmem [#allocation7], 8
    %5112 = vst.msk [vmem:[%s5111] sm:$0xff] %vm1858, %v5109
    %v5113 = vsel %vm1858, %v5103, 0
    %5115 = vmatpush.msra.mxu0 0.0
    %5116 = vmatpush.msra.mxu0 0.0
    %5117 = vmatpush.msra.mxu0 0.0
    %5118 = vmatpush.msra.mxu0 0.0
    %5119 = vmatpush.msra.mxu0 0.0
    %5120 = vmatpush.msra.mxu0 0.0
    %5121 = vmatpush.msra.mxu0 0.0
    %5122 = vmatpush.msra.mxu0 0.0
    %5123 = vmatpush.msra.mxu0 0.0
    %5124 = vmatpush.msra.mxu0 0.0
    %5125 = vmatpush.msra.mxu0 0.0
    %5126 = vmatpush.msra.mxu0 0.0
    %5127 = vmatpush.msra.mxu0 0.0
    %5128 = vmatpush.msra.mxu0 0.0
    %5129 = vmatpush.msra.mxu0 0.0
    %5130 = vmatpush.msra.mxu0 %v3865
    %5131 = vmatmul.f32.gmra.mxu0 %v5113
    %v5132 = vpop.f32.mrf.mxu0
    %v5133 = vadd.f32 0.0, %v5132
    %5134 = vdwg.mxu0
    %v5135 = vsel %vm1858, %v5109, 0
    %5137 = vmatpush.msra.mxu0 0.0
    %5138 = vmatpush.msra.mxu0 0.0
    %5139 = vmatpush.msra.mxu0 0.0
    %5140 = vmatpush.msra.mxu0 0.0
    %5141 = vmatpush.msra.mxu0 0.0
    %5142 = vmatpush.msra.mxu0 0.0
    %5143 = vmatpush.msra.mxu0 0.0
    %5144 = vmatpush.msra.mxu0 0.0
    %5145 = vmatpush.msra.mxu0 0.0
    %5146 = vmatpush.msra.mxu0 0.0
    %5147 = vmatpush.msra.mxu0 0.0
    %5148 = vmatpush.msra.mxu0 0.0
    %5149 = vmatpush.msra.mxu0 0.0
    %5150 = vmatpush.msra.mxu0 0.0
    %5151 = vmatpush.msra.mxu0 0.0
    %5152 = vmatpush.msra.mxu0 %v3888
    %5153 = vmatmul.f32.gmra.mxu0 %v5135
    %v5154 = vpop.f32.mrf.mxu0
    %v5155 = vadd.f32 0.0, %v5154
    %5156 = vdwg.mxu0
    %v5157 = vld [vmem:[%s3173] sm:$0xff]
    %v5158 = vadd.f32 %v5157, %v5133
    %v5159 = vxor.u32 %v5158, 2147483648
    %v5160 = vmul.f32 %v5159, 1.442695
    %v5161 = vpow.pop %v5160
    %v5162 = vadd.f32 %v5161, 1.0
    %v5163 = vrcp.pop %v5162
    %v5164 = vmul.f32 %v5162, %v5163
    %v5165 = vsub.f32 1.0, %v5164
    %v5166 = vmul.f32 %v5163, %v5165
    %v5167 = vadd.f32 %v5163, %v5166
    %vm5168 = vweird.f32 %v5162
    %vm5169 = vweird.f32 %v5163
    %vm5170 = vmor %vm5168, %vm5169
    %v5171 = vsel %vm5170, %v5163, %v5167
    %v5172 = vand.u32 2147483647, %v5162
    %vm5173 = vcmp.eq.f32.partialorder %v5172, 8.507059e+37
    %v5174 = vand.u32 %v5162, 2147483648
    %v5175 = vor.u32 1.1754944e-38, %v5174
    %v5176 = vsel %vm5173, %v5175, %v5171
    %v5177 = vmul.f32 1.0, %v5176
    %v5178 = vadd.f32 %v5133, %v3932
    %5180 = vrot.lane.b32.xlu0 %v5178, 118
    %v5181 = vpop.permute.xlu0 %5180
    %v5183 = vmul.f32 %v5177, %v5181
    %5185 = vrot.lane.b32.xlu0 %v5183, 10
    %v5186 = vpop.permute.xlu0 %5185
    %v5188 = vadd.f32 %v5157, %v5186
    %v5189 = vtanh.pop %v5188
    %v5190 = vsub.f32 1.0, %v5177
    %5192 = vrot.lane.b32.xlu0 %v5189, 123
    %v5193 = vpop.permute.xlu0 %5192
    %v5195 = vmul.f32 %v5190, %v5193
    %v5196 = vmul.f32 %v5177, %v5059
    %v5197 = vadd.f32 %v5195, %v5196
    %v5198 = vld [vmem:[#allocation3] sm:$0xff]
    %v5199 = vadd.f32 %v5198, %v5155
    %v5200 = vxor.u32 %v5199, 2147483648
    %v5201 = vmul.f32 %v5200, 1.442695
    %v5202 = vpow.pop %v5201
    %v5203 = vadd.f32 %v5202, 1.0
    %v5204 = vrcp.pop %v5203
    %v5205 = vmul.f32 %v5203, %v5204
    %v5206 = vsub.f32 1.0, %v5205
    %v5207 = vmul.f32 %v5204, %v5206
    %v5208 = vadd.f32 %v5204, %v5207
    %vm5209 = vweird.f32 %v5203
    %vm5210 = vweird.f32 %v5204
    %vm5211 = vmor %vm5209, %vm5210
    %v5212 = vsel %vm5211, %v5204, %v5208
    %v5213 = vand.u32 2147483647, %v5203
    %vm5214 = vcmp.eq.f32.partialorder %v5213, 8.507059e+37
    %v5215 = vand.u32 %v5203, 2147483648
    %v5216 = vor.u32 1.1754944e-38, %v5215
    %v5217 = vsel %vm5214, %v5216, %v5212
    %v5218 = vmul.f32 1.0, %v5217
    %v5219 = vadd.f32 %v5155, %v3976
    %5221 = vrot.lane.b32.xlu0 %v5219, 118
    %v5222 = vpop.permute.xlu0 %5221
    %v5224 = vmul.f32 %v5218, %v5222
    %5226 = vrot.lane.b32.xlu0 %v5224, 10
    %v5227 = vpop.permute.xlu0 %5226
    %v5229 = vadd.f32 %v5198, %v5227
    %v5230 = vtanh.pop %v5229
    %v5231 = vsub.f32 1.0, %v5218
    %5233 = vrot.lane.b32.xlu0 %v5230, 123
    %v5234 = vpop.permute.xlu0 %5233
    %v5236 = vmul.f32 %v5231, %v5234
    %v5237 = vmul.f32 %v5218, %v5100
    %v5238 = vadd.f32 %v5236, %v5237
    %5240 = vrot.lane.b32.xlu0 %v5197, 123
    %v5241 = vpop.permute.xlu0 %5240
    %s5243 = scalar_lea.vmem [#allocation6], 72
    %5244 = vst.msk [vmem:[%s5243] sm:$0xff] %vm1858, %v5241
    %5246 = vrot.lane.b32.xlu0 %v5238, 123
    %v5247 = vpop.permute.xlu0 %5246
    %5249 = vst.msk [vmem:[#allocation7] sm:$0xff] %vm1858, %v5247
    %v5250 = vld [vmem:[%s18] sm:$0x1]
    %v5251 = vld [vmem:[%s19] sm:$0x1]
    %v5252 = vld [vmem:[#allocation6] sm:$0xff]
    %v5253 = vld [vmem:[#allocation6 + $0x8] sm:$0xff]
    %v5254 = vld [vmem:[#allocation6 + $0x10] sm:$0xff]
    %v5255 = vld [vmem:[#allocation6 + $0x18] sm:$0xff]
    %v5256 = vld [vmem:[#allocation6 + $0x20] sm:$0xff]
    %v5257 = vld [vmem:[#allocation6 + $0x28] sm:$0xff]
    %v5258 = vld [vmem:[#allocation6 + $0x30] sm:$0xff]
    %v5259 = vld [vmem:[#allocation6 + $0x38] sm:$0xff]
    %v5260 = vld [vmem:[#allocation6 + $0x40] sm:$0xff]
    %v5261 = vld [vmem:[#allocation6 + $0x48] sm:$0xff]
    %v5262 = vsel %vm1858, %v5252, 0.0
    %v5263 = vsel %vm1858, %v5253, 0.0
    %v5264 = vadd.f32 %v5262, %v5263
    %v5265 = vsel %vm1858, %v5254, 0.0
    %v5266 = vadd.f32 %v5264, %v5265
    %v5267 = vsel %vm1858, %v5255, 0.0
    %v5268 = vadd.f32 %v5266, %v5267
    %v5269 = vsel %vm1858, %v5256, 0.0
    %v5270 = vadd.f32 %v5268, %v5269
    %v5271 = vsel %vm1858, %v5257, 0.0
    %v5272 = vadd.f32 %v5270, %v5271
    %v5273 = vsel %vm1858, %v5258, 0.0
    %v5274 = vadd.f32 %v5272, %v5273
    %v5275 = vsel %vm1858, %v5259, 0.0
    %v5276 = vadd.f32 %v5274, %v5275
    %v5277 = vsel %vm1858, %v5260, 0.0
    %v5278 = vadd.f32 %v5276, %v5277
    %v5279 = vsel %vm1858, %v5261, 0.0
    %v5280 = vadd.f32 %v5278, %v5279
    %v5281 = vrot.slane %v5280, 4
    %v5282 = vadd.f32 %v5280, %v5281
    %v5283 = vrot.slane %v5282, 2
    %v5284 = vadd.f32 %v5282, %v5283
    %v5285 = vrot.slane %v5284, 1
    %v5286 = vadd.f32 %v5284, %v5285
    %v5287 = vmul.f32 %v5286, %v3310
    %v5288 = vsub.f32 %v5252, %v5287
    %v5289 = vsub.f32 %v5253, %v5287
    %v5290 = vsub.f32 %v5254, %v5287
    %v5291 = vsub.f32 %v5255, %v5287
    %v5292 = vsub.f32 %v5256, %v5287
    %v5293 = vsub.f32 %v5257, %v5287
    %v5294 = vsub.f32 %v5258, %v5287
    %v5295 = vsub.f32 %v5259, %v5287
    %v5296 = vsub.f32 %v5260, %v5287
    %v5297 = vsub.f32 %v5261, %v5287
    %v5298 = vmul.f32 %v5288, %v5288
    %v5299 = vmul.f32 %v5289, %v5289
    %v5300 = vmul.f32 %v5290, %v5290
    %v5301 = vmul.f32 %v5291, %v5291
    %v5302 = vmul.f32 %v5292, %v5292
    %v5303 = vmul.f32 %v5293, %v5293
    %v5304 = vmul.f32 %v5294, %v5294
    %v5305 = vmul.f32 %v5295, %v5295
    %v5306 = vmul.f32 %v5296, %v5296
    %v5307 = vmul.f32 %v5297, %v5297
    %v5308 = vsel %vm1858, %v5298, 0.0
    %v5309 = vsel %vm1858, %v5299, 0.0
    %v5310 = vadd.f32 %v5308, %v5309
    %v5311 = vsel %vm1858, %v5300, 0.0
    %v5312 = vadd.f32 %v5310, %v5311
    %v5313 = vsel %vm1858, %v5301, 0.0
    %v5314 = vadd.f32 %v5312, %v5313
    %v5315 = vsel %vm1858, %v5302, 0.0
    %v5316 = vadd.f32 %v5314, %v5315
    %v5317 = vsel %vm1858, %v5303, 0.0
    %v5318 = vadd.f32 %v5316, %v5317
    %v5319 = vsel %vm1858, %v5304, 0.0
    %v5320 = vadd.f32 %v5318, %v5319
    %v5321 = vsel %vm1858, %v5305, 0.0
    %v5322 = vadd.f32 %v5320, %v5321
    %v5323 = vsel %vm1858, %v5306, 0.0
    %v5324 = vadd.f32 %v5322, %v5323
    %v5325 = vsel %vm1858, %v5307, 0.0
    %v5326 = vadd.f32 %v5324, %v5325
    %v5327 = vrot.slane %v5326, 4
    %v5328 = vadd.f32 %v5326, %v5327
    %v5329 = vrot.slane %v5328, 2
    %v5330 = vadd.f32 %v5328, %v5329
    %v5331 = vrot.slane %v5330, 1
    %v5332 = vadd.f32 %v5330, %v5331
    %v5333 = vmul.f32 %v5332, %v3310
    %v5334 = vadd.f32 %v5333, 0.001
    %v5335 = vrsqrt.pop %v5334
    %v5336 = vmul.f32 %v5335, %v5334
    %v5337 = vmul.f32 %v5336, %v5335
    %v5338 = vmul.f32 0.5, %v5337
    %v5339 = vsub.f32 1.5, %v5338
    %v5340 = vmul.f32 %v5335, %v5339
    %vm5341 = vweird.f32 %v5334
    %vm5342 = vweird.f32 %v5335
    %vm5343 = vmor %vm5341, %vm5342
    %v5344 = vsel %vm5343, %v5335, %v5340
    %v5345 = vmul.f32 %v5288, %v5344
    %v5346 = vmul.f32 %v5289, %v5344
    %v5347 = vmul.f32 %v5290, %v5344
    %v5348 = vmul.f32 %v5291, %v5344
    %v5349 = vmul.f32 %v5292, %v5344
    %v5350 = vmul.f32 %v5293, %v5344
    %v5351 = vmul.f32 %v5294, %v5344
    %v5352 = vmul.f32 %v5295, %v5344
    %v5353 = vmul.f32 %v5296, %v5344
    %v5354 = vmul.f32 %v5297, %v5344
    %v5356 = vperm.slane %v5250, 0
    %v5358 = vmul.f32 %v5345, %v5356
    %v5359 = vmul.f32 %v5346, %v5356
    %v5360 = vmul.f32 %v5347, %v5356
    %v5361 = vmul.f32 %v5348, %v5356
    %v5362 = vmul.f32 %v5349, %v5356
    %v5363 = vmul.f32 %v5350, %v5356
    %v5364 = vmul.f32 %v5351, %v5356
    %v5365 = vmul.f32 %v5352, %v5356
    %v5366 = vmul.f32 %v5353, %v5356
    %v5367 = vmul.f32 %v5354, %v5356
    %v5369 = vperm.slane %v5251, 0
    %v5371 = vadd.f32 %v5358, %v5369
    %v5372 = vadd.f32 %v5359, %v5369
    %v5373 = vadd.f32 %v5360, %v5369
    %v5374 = vadd.f32 %v5361, %v5369
    %v5375 = vadd.f32 %v5362, %v5369
    %v5376 = vadd.f32 %v5363, %v5369
    %v5377 = vadd.f32 %v5364, %v5369
    %v5378 = vadd.f32 %v5365, %v5369
    %v5379 = vadd.f32 %v5366, %v5369
    %v5380 = vadd.f32 %v5367, %v5369
    %v5381 = vld [vmem:[#allocation7] sm:$0xff]
    %v5382 = vld [vmem:[#allocation7 + $0x8] sm:$0xff]
    %v5383 = vld [vmem:[#allocation7 + $0x10] sm:$0xff]
    %v5384 = vld [vmem:[#allocation7 + $0x18] sm:$0xff]
    %v5385 = vld [vmem:[#allocation7 + $0x20] sm:$0xff]
    %v5386 = vld [vmem:[#allocation7 + $0x28] sm:$0xff]
    %v5387 = vld [vmem:[#allocation7 + $0x30] sm:$0xff]
    %v5388 = vld [vmem:[#allocation7 + $0x38] sm:$0xff]
    %v5389 = vld [vmem:[#allocation7 + $0x40] sm:$0xff]
    %v5390 = vld [vmem:[#allocation7 + $0x48] sm:$0xff]
    %v5391 = vsel %vm1858, %v5381, 0.0
    %v5392 = vsel %vm1858, %v5382, 0.0
    %v5393 = vadd.f32 %v5391, %v5392
    %v5394 = vsel %vm1858, %v5383, 0.0
    %v5395 = vadd.f32 %v5393, %v5394
    %v5396 = vsel %vm1858, %v5384, 0.0
    %v5397 = vadd.f32 %v5395, %v5396
    %v5398 = vsel %vm1858, %v5385, 0.0
    %v5399 = vadd.f32 %v5397, %v5398
    %v5400 = vsel %vm1858, %v5386, 0.0
    %v5401 = vadd.f32 %v5399, %v5400
    %v5402 = vsel %vm1858, %v5387, 0.0
    %v5403 = vadd.f32 %v5401, %v5402
    %v5404 = vsel %vm1858, %v5388, 0.0
    %v5405 = vadd.f32 %v5403, %v5404
    %v5406 = vsel %vm1858, %v5389, 0.0
    %v5407 = vadd.f32 %v5405, %v5406
    %v5408 = vsel %vm1858, %v5390, 0.0
    %v5409 = vadd.f32 %v5407, %v5408
    %v5410 = vrot.slane %v5409, 4
    %v5411 = vadd.f32 %v5409, %v5410
    %v5412 = vrot.slane %v5411, 2
    %v5413 = vadd.f32 %v5411, %v5412
    %v5414 = vrot.slane %v5413, 1
    %v5415 = vadd.f32 %v5413, %v5414
    %v5416 = vmul.f32 %v5415, %v3310
    %v5417 = vsub.f32 %v5381, %v5416
    %v5418 = vsub.f32 %v5382, %v5416
    %v5419 = vsub.f32 %v5383, %v5416
    %v5420 = vsub.f32 %v5384, %v5416
    %v5421 = vsub.f32 %v5385, %v5416
    %v5422 = vsub.f32 %v5386, %v5416
    %v5423 = vsub.f32 %v5387, %v5416
    %v5424 = vsub.f32 %v5388, %v5416
    %v5425 = vsub.f32 %v5389, %v5416
    %v5426 = vsub.f32 %v5390, %v5416
    %v5427 = vmul.f32 %v5417, %v5417
    %v5428 = vmul.f32 %v5418, %v5418
    %v5429 = vmul.f32 %v5419, %v5419
    %v5430 = vmul.f32 %v5420, %v5420
    %v5431 = vmul.f32 %v5421, %v5421
    %v5432 = vmul.f32 %v5422, %v5422
    %v5433 = vmul.f32 %v5423, %v5423
    %v5434 = vmul.f32 %v5424, %v5424
    %v5435 = vmul.f32 %v5425, %v5425
    %v5436 = vmul.f32 %v5426, %v5426
    %v5437 = vsel %vm1858, %v5427, 0.0
    %v5438 = vsel %vm1858, %v5428, 0.0
    %v5439 = vadd.f32 %v5437, %v5438
    %v5440 = vsel %vm1858, %v5429, 0.0
    %v5441 = vadd.f32 %v5439, %v5440
    %v5442 = vsel %vm1858, %v5430, 0.0
    %v5443 = vadd.f32 %v5441, %v5442
    %v5444 = vsel %vm1858, %v5431, 0.0
    %v5445 = vadd.f32 %v5443, %v5444
    %v5446 = vsel %vm1858, %v5432, 0.0
    %v5447 = vadd.f32 %v5445, %v5446
    %v5448 = vsel %vm1858, %v5433, 0.0
    %v5449 = vadd.f32 %v5447, %v5448
    %v5450 = vsel %vm1858, %v5434, 0.0
    %v5451 = vadd.f32 %v5449, %v5450
    %v5452 = vsel %vm1858, %v5435, 0.0
    %v5453 = vadd.f32 %v5451, %v5452
    %v5454 = vsel %vm1858, %v5436, 0.0
    %v5455 = vadd.f32 %v5453, %v5454
    %v5456 = vrot.slane %v5455, 4
    %v5457 = vadd.f32 %v5455, %v5456
    %v5458 = vrot.slane %v5457, 2
    %v5459 = vadd.f32 %v5457, %v5458
    %v5460 = vrot.slane %v5459, 1
    %v5461 = vadd.f32 %v5459, %v5460
    %v5462 = vmul.f32 %v5461, %v3310
    %v5463 = vadd.f32 %v5462, 0.001
    %v5464 = vrsqrt.pop %v5463
    %v5465 = vmul.f32 %v5464, %v5463
    %v5466 = vmul.f32 %v5465, %v5464
    %v5467 = vmul.f32 0.5, %v5466
    %v5468 = vsub.f32 1.5, %v5467
    %v5469 = vmul.f32 %v5464, %v5468
    %vm5470 = vweird.f32 %v5463
    %vm5471 = vweird.f32 %v5464
    %vm5472 = vmor %vm5470, %vm5471
    %v5473 = vsel %vm5472, %v5464, %v5469
    %v5474 = vmul.f32 %v5417, %v5473
    %v5475 = vmul.f32 %v5418, %v5473
    %v5476 = vmul.f32 %v5419, %v5473
    %v5477 = vmul.f32 %v5420, %v5473
    %v5478 = vmul.f32 %v5421, %v5473
    %v5479 = vmul.f32 %v5422, %v5473
    %v5480 = vmul.f32 %v5423, %v5473
    %v5481 = vmul.f32 %v5424, %v5473
    %v5482 = vmul.f32 %v5425, %v5473
    %v5483 = vmul.f32 %v5426, %v5473
    %5484 = vrot.lane.b32.xlu0 %v5356, 123
    %v5485 = vpop.permute.xlu0 %5484
    %v5487 = vmul.f32 %v5474, %v5485
    %v5488 = vmul.f32 %v5475, %v5485
    %v5489 = vmul.f32 %v5476, %v5485
    %v5490 = vmul.f32 %v5477, %v5485
    %v5491 = vmul.f32 %v5478, %v5485
    %v5492 = vmul.f32 %v5479, %v5485
    %v5493 = vmul.f32 %v5480, %v5485
    %v5494 = vmul.f32 %v5481, %v5485
    %v5495 = vmul.f32 %v5482, %v5485
    %v5496 = vmul.f32 %v5483, %v5485
    %5497 = vrot.lane.b32.xlu0 %v5369, 123
    %v5498 = vpop.permute.xlu0 %5497
    %v5500 = vadd.f32 %v5487, %v5498
    %v5501 = vadd.f32 %v5488, %v5498
    %v5502 = vadd.f32 %v5489, %v5498
    %v5503 = vadd.f32 %v5490, %v5498
    %v5504 = vadd.f32 %v5491, %v5498
    %v5505 = vadd.f32 %v5492, %v5498
    %v5506 = vadd.f32 %v5493, %v5498
    %v5507 = vadd.f32 %v5494, %v5498
    %v5508 = vadd.f32 %v5495, %v5498
    %v5509 = vadd.f32 %v5496, %v5498
    %v5510 = vld [vmem:[%s20] sm:$0x1]
    %v5512 = vperm.slane %v5510, 0
    %v5514 = vmul.f32 %v5371, %v5512
    %v5515 = vmul.f32 %v5372, %v5512
    %v5516 = vmul.f32 %v5373, %v5512
    %v5517 = vmul.f32 %v5374, %v5512
    %v5518 = vmul.f32 %v5375, %v5512
    %v5519 = vmul.f32 %v5376, %v5512
    %v5520 = vmul.f32 %v5377, %v5512
    %v5521 = vmul.f32 %v5378, %v5512
    %v5522 = vmul.f32 %v5379, %v5512
    %v5523 = vmul.f32 %v5380, %v5512
    %v5524 = vsel %vm1858, %v5514, 0.0
    %5525 = vadd.xlane.f32.xlu0 %v5524
    %v5526 = vpop.xlane.xlu0 %5525
    %v5527 = vsel %vm1858, %v5515, 0.0
    %5528 = vadd.xlane.f32.xlu0 %v5527
    %v5529 = vpop.xlane.xlu0 %5528
    %v5530 = vsel %vm1858, %v5516, 0.0
    %5531 = vadd.xlane.f32.xlu0 %v5530
    %v5532 = vpop.xlane.xlu0 %5531
    %v5533 = vsel %vm1858, %v5517, 0.0
    %5534 = vadd.xlane.f32.xlu0 %v5533
    %v5535 = vpop.xlane.xlu0 %5534
    %v5536 = vsel %vm1858, %v5518, 0.0
    %5537 = vadd.xlane.f32.xlu0 %v5536
    %v5538 = vpop.xlane.xlu0 %5537
    %v5539 = vsel %vm1858, %v5519, 0.0
    %5540 = vadd.xlane.f32.xlu0 %v5539
    %v5541 = vpop.xlane.xlu0 %5540
    %v5542 = vsel %vm1858, %v5520, 0.0
    %5543 = vadd.xlane.f32.xlu0 %v5542
    %v5544 = vpop.xlane.xlu0 %5543
    %v5545 = vsel %vm1858, %v5521, 0.0
    %5546 = vadd.xlane.f32.xlu0 %v5545
    %v5547 = vpop.xlane.xlu0 %5546
    %v5548 = vsel %vm1858, %v5522, 0.0
    %5549 = vadd.xlane.f32.xlu0 %v5548
    %v5550 = vpop.xlane.xlu0 %5549
    %v5551 = vsel %vm1858, %v5523, 0.0
    %5552 = vadd.xlane.f32.xlu0 %v5551
    %v5553 = vpop.xlane.xlu0 %5552
    %5554 = vrot.lane.b32.xlu0 %v5512, 123
    %v5555 = vpop.permute.xlu0 %5554
    %v5557 = vmul.f32 %v5500, %v5555
    %v5558 = vmul.f32 %v5501, %v5555
    %v5559 = vmul.f32 %v5502, %v5555
    %v5560 = vmul.f32 %v5503, %v5555
    %v5561 = vmul.f32 %v5504, %v5555
    %v5562 = vmul.f32 %v5505, %v5555
    %v5563 = vmul.f32 %v5506, %v5555
    %v5564 = vmul.f32 %v5507, %v5555
    %v5565 = vmul.f32 %v5508, %v5555
    %v5566 = vmul.f32 %v5509, %v5555
    %v5567 = vsel %vm1858, %v5557, 0.0
    %5568 = vadd.xlane.f32.xlu0 %v5567
    %v5569 = vpop.xlane.xlu0 %5568
    %v5570 = vsel %vm1858, %v5558, 0.0
    %5571 = vadd.xlane.f32.xlu0 %v5570
    %v5572 = vpop.xlane.xlu0 %5571
    %v5573 = vsel %vm1858, %v5559, 0.0
    %5574 = vadd.xlane.f32.xlu0 %v5573
    %v5575 = vpop.xlane.xlu0 %5574
    %v5576 = vsel %vm1858, %v5560, 0.0
    %5577 = vadd.xlane.f32.xlu0 %v5576
    %v5578 = vpop.xlane.xlu0 %5577
    %v5579 = vsel %vm1858, %v5561, 0.0
    %5580 = vadd.xlane.f32.xlu0 %v5579
    %v5581 = vpop.xlane.xlu0 %5580
    %v5582 = vsel %vm1858, %v5562, 0.0
    %5583 = vadd.xlane.f32.xlu0 %v5582
    %v5584 = vpop.xlane.xlu0 %5583
    %v5585 = vsel %vm1858, %v5563, 0.0
    %5586 = vadd.xlane.f32.xlu0 %v5585
    %v5587 = vpop.xlane.xlu0 %5586
    %v5588 = vsel %vm1858, %v5564, 0.0
    %5589 = vadd.xlane.f32.xlu0 %v5588
    %v5590 = vpop.xlane.xlu0 %5589
    %v5591 = vsel %vm1858, %v5565, 0.0
    %5592 = vadd.xlane.f32.xlu0 %v5591
    %v5593 = vpop.xlane.xlu0 %5592
    %v5594 = vsel %vm1858, %v5566, 0.0
    %5595 = vadd.xlane.f32.xlu0 %v5594
    %v5596 = vpop.xlane.xlu0 %5595
    %v5597 = vadd.f32 %v5526, %v5569
    %v5598 = vadd.f32 %v5529, %v5572
    %v5599 = vadd.f32 %v5532, %v5575
    %v5600 = vadd.f32 %v5535, %v5578
    %v5601 = vadd.f32 %v5538, %v5581
    %v5602 = vadd.f32 %v5541, %v5584
    %v5603 = vadd.f32 %v5544, %v5587
    %v5604 = vadd.f32 %v5547, %v5590
    %v5605 = vadd.f32 %v5550, %v5593
    %v5606 = vadd.f32 %v5553, %v5596
    %s5607 = sld [smem:[#allocation8]]
    %v5608 = vstv %s5607
    %v5609 = vadd.f32 %v5597, %v5608
    %v5610 = vadd.f32 %v5598, %v5608
    %v5611 = vadd.f32 %v5599, %v5608
    %v5612 = vadd.f32 %v5600, %v5608
    %v5613 = vadd.f32 %v5601, %v5608
    %v5614 = vadd.f32 %v5602, %v5608
    %v5615 = vadd.f32 %v5603, %v5608
    %v5616 = vadd.f32 %v5604, %v5608
    %v5617 = vadd.f32 %v5605, %v5608
    %v5618 = vadd.f32 %v5606, %v5608
    %v5619 = vxor.u32 %v5609, 2147483648
    %v5620 = vxor.u32 %v5610, 2147483648
    %v5621 = vxor.u32 %v5611, 2147483648
    %v5622 = vxor.u32 %v5612, 2147483648
    %v5623 = vxor.u32 %v5613, 2147483648
    %v5624 = vxor.u32 %v5614, 2147483648
    %v5625 = vxor.u32 %v5615, 2147483648
    %v5626 = vxor.u32 %v5616, 2147483648
    %v5627 = vxor.u32 %v5617, 2147483648
    %v5628 = vxor.u32 %v5618, 2147483648
    %v5629 = vmul.f32 %v5619, 1.442695
    %v5630 = vpow.pop %v5629
    %v5631 = vmul.f32 %v5620, 1.442695
    %v5632 = vpow.pop %v5631
    %v5633 = vmul.f32 %v5621, 1.442695
    %v5634 = vpow.pop %v5633
    %v5635 = vmul.f32 %v5622, 1.442695
    %v5636 = vpow.pop %v5635
    %v5637 = vmul.f32 %v5623, 1.442695
    %v5638 = vpow.pop %v5637
    %v5639 = vmul.f32 %v5624, 1.442695
    %v5640 = vpow.pop %v5639
    %v5641 = vmul.f32 %v5625, 1.442695
    %v5642 = vpow.pop %v5641
    %v5643 = vmul.f32 %v5626, 1.442695
    %v5644 = vpow.pop %v5643
    %v5645 = vmul.f32 %v5627, 1.442695
    %v5646 = vpow.pop %v5645
    %v5647 = vmul.f32 %v5628, 1.442695
    %v5648 = vpow.pop %v5647
    %v5649 = vadd.f32 %v5630, 1.0
    %v5650 = vadd.f32 %v5632, 1.0
    %v5651 = vadd.f32 %v5634, 1.0
    %v5652 = vadd.f32 %v5636, 1.0
    %v5653 = vadd.f32 %v5638, 1.0
    %v5654 = vadd.f32 %v5640, 1.0
    %v5655 = vadd.f32 %v5642, 1.0
    %v5656 = vadd.f32 %v5644, 1.0
    %v5657 = vadd.f32 %v5646, 1.0
    %v5658 = vadd.f32 %v5648, 1.0
    %v5659 = vrcp.pop %v5649
    %v5660 = vmul.f32 %v5649, %v5659
    %v5661 = vsub.f32 1.0, %v5660
    %v5662 = vmul.f32 %v5659, %v5661
    %v5663 = vadd.f32 %v5659, %v5662
    %vm5664 = vweird.f32 %v5649
    %vm5665 = vweird.f32 %v5659
    %vm5666 = vmor %vm5664, %vm5665
    %v5667 = vsel %vm5666, %v5659, %v5663
    %v5668 = vand.u32 2147483647, %v5649
    %vm5669 = vcmp.eq.f32.partialorder %v5668, 8.507059e+37
    %v5670 = vand.u32 %v5649, 2147483648
    %v5671 = vor.u32 1.1754944e-38, %v5670
    %v5672 = vsel %vm5669, %v5671, %v5667
    %v5673 = vmul.f32 1.0, %v5672
    %v5674 = vrcp.pop %v5650
    %v5675 = vmul.f32 %v5650, %v5674
    %v5676 = vsub.f32 1.0, %v5675
    %v5677 = vmul.f32 %v5674, %v5676
    %v5678 = vadd.f32 %v5674, %v5677
    %vm5679 = vweird.f32 %v5650
    %vm5680 = vweird.f32 %v5674
    %vm5681 = vmor %vm5679, %vm5680
    %v5682 = vsel %vm5681, %v5674, %v5678
    %v5683 = vand.u32 2147483647, %v5650
    %vm5684 = vcmp.eq.f32.partialorder %v5683, 8.507059e+37
    %v5685 = vand.u32 %v5650, 2147483648
    %v5686 = vor.u32 1.1754944e-38, %v5685
    %v5687 = vsel %vm5684, %v5686, %v5682
    %v5688 = vmul.f32 1.0, %v5687
    %v5689 = vrcp.pop %v5651
    %v5690 = vmul.f32 %v5651, %v5689
    %v5691 = vsub.f32 1.0, %v5690
    %v5692 = vmul.f32 %v5689, %v5691
    %v5693 = vadd.f32 %v5689, %v5692
    %vm5694 = vweird.f32 %v5651
    %vm5695 = vweird.f32 %v5689
    %vm5696 = vmor %vm5694, %vm5695
    %v5697 = vsel %vm5696, %v5689, %v5693
    %v5698 = vand.u32 2147483647, %v5651
    %vm5699 = vcmp.eq.f32.partialorder %v5698, 8.507059e+37
    %v5700 = vand.u32 %v5651, 2147483648
    %v5701 = vor.u32 1.1754944e-38, %v5700
    %v5702 = vsel %vm5699, %v5701, %v5697
    %v5703 = vmul.f32 1.0, %v5702
    %v5704 = vrcp.pop %v5652
    %v5705 = vmul.f32 %v5652, %v5704
    %v5706 = vsub.f32 1.0, %v5705
    %v5707 = vmul.f32 %v5704, %v5706
    %v5708 = vadd.f32 %v5704, %v5707
    %vm5709 = vweird.f32 %v5652
    %vm5710 = vweird.f32 %v5704
    %vm5711 = vmor %vm5709, %vm5710
    %v5712 = vsel %vm5711, %v5704, %v5708
    %v5713 = vand.u32 2147483647, %v5652
    %vm5714 = vcmp.eq.f32.partialorder %v5713, 8.507059e+37
    %v5715 = vand.u32 %v5652, 2147483648
    %v5716 = vor.u32 1.1754944e-38, %v5715
    %v5717 = vsel %vm5714, %v5716, %v5712
    %v5718 = vmul.f32 1.0, %v5717
    %v5719 = vrcp.pop %v5653
    %v5720 = vmul.f32 %v5653, %v5719
    %v5721 = vsub.f32 1.0, %v5720
    %v5722 = vmul.f32 %v5719, %v5721
    %v5723 = vadd.f32 %v5719, %v5722
    %vm5724 = vweird.f32 %v5653
    %vm5725 = vweird.f32 %v5719
    %vm5726 = vmor %vm5724, %vm5725
    %v5727 = vsel %vm5726, %v5719, %v5723
    %v5728 = vand.u32 2147483647, %v5653
    %vm5729 = vcmp.eq.f32.partialorder %v5728, 8.507059e+37
    %v5730 = vand.u32 %v5653, 2147483648
    %v5731 = vor.u32 1.1754944e-38, %v5730
    %v5732 = vsel %vm5729, %v5731, %v5727
    %v5733 = vmul.f32 1.0, %v5732
    %v5734 = vrcp.pop %v5654
    %v5735 = vmul.f32 %v5654, %v5734
    %v5736 = vsub.f32 1.0, %v5735
    %v5737 = vmul.f32 %v5734, %v5736
    %v5738 = vadd.f32 %v5734, %v5737
    %vm5739 = vweird.f32 %v5654
    %vm5740 = vweird.f32 %v5734
    %vm5741 = vmor %vm5739, %vm5740
    %v5742 = vsel %vm5741, %v5734, %v5738
    %v5743 = vand.u32 2147483647, %v5654
    %vm5744 = vcmp.eq.f32.partialorder %v5743, 8.507059e+37
    %v5745 = vand.u32 %v5654, 2147483648
    %v5746 = vor.u32 1.1754944e-38, %v5745
    %v5747 = vsel %vm5744, %v5746, %v5742
    %v5748 = vmul.f32 1.0, %v5747
    %v5749 = vrcp.pop %v5655
    %v5750 = vmul.f32 %v5655, %v5749
    %v5751 = vsub.f32 1.0, %v5750
    %v5752 = vmul.f32 %v5749, %v5751
    %v5753 = vadd.f32 %v5749, %v5752
    %vm5754 = vweird.f32 %v5655
    %vm5755 = vweird.f32 %v5749
    %vm5756 = vmor %vm5754, %vm5755
    %v5757 = vsel %vm5756, %v5749, %v5753
    %v5758 = vand.u32 2147483647, %v5655
    %vm5759 = vcmp.eq.f32.partialorder %v5758, 8.507059e+37
    %v5760 = vand.u32 %v5655, 2147483648
    %v5761 = vor.u32 1.1754944e-38, %v5760
    %v5762 = vsel %vm5759, %v5761, %v5757
    %v5763 = vmul.f32 1.0, %v5762
    %v5764 = vrcp.pop %v5656
    %v5765 = vmul.f32 %v5656, %v5764
    %v5766 = vsub.f32 1.0, %v5765
    %v5767 = vmul.f32 %v5764, %v5766
    %v5768 = vadd.f32 %v5764, %v5767
    %vm5769 = vweird.f32 %v5656
    %vm5770 = vweird.f32 %v5764
    %vm5771 = vmor %vm5769, %vm5770
    %v5772 = vsel %vm5771, %v5764, %v5768
    %v5773 = vand.u32 2147483647, %v5656
    %vm5774 = vcmp.eq.f32.partialorder %v5773, 8.507059e+37
    %v5775 = vand.u32 %v5656, 2147483648
    %v5776 = vor.u32 1.1754944e-38, %v5775
    %v5777 = vsel %vm5774, %v5776, %v5772
    %v5778 = vmul.f32 1.0, %v5777
    %v5779 = vrcp.pop %v5657
    %v5780 = vmul.f32 %v5657, %v5779
    %v5781 = vsub.f32 1.0, %v5780
    %v5782 = vmul.f32 %v5779, %v5781
    %v5783 = vadd.f32 %v5779, %v5782
    %vm5784 = vweird.f32 %v5657
    %vm5785 = vweird.f32 %v5779
    %vm5786 = vmor %vm5784, %vm5785
    %v5787 = vsel %vm5786, %v5779, %v5783
    %v5788 = vand.u32 2147483647, %v5657
    %vm5789 = vcmp.eq.f32.partialorder %v5788, 8.507059e+37
    %v5790 = vand.u32 %v5657, 2147483648
    %v5791 = vor.u32 1.1754944e-38, %v5790
    %v5792 = vsel %vm5789, %v5791, %v5787
    %v5793 = vmul.f32 1.0, %v5792
    %v5794 = vrcp.pop %v5658
    %v5795 = vmul.f32 %v5658, %v5794
    %v5796 = vsub.f32 1.0, %v5795
    %v5797 = vmul.f32 %v5794, %v5796
    %v5798 = vadd.f32 %v5794, %v5797
    %vm5799 = vweird.f32 %v5658
    %vm5800 = vweird.f32 %v5794
    %vm5801 = vmor %vm5799, %vm5800
    %v5802 = vsel %vm5801, %v5794, %v5798
    %v5803 = vand.u32 2147483647, %v5658
    %vm5804 = vcmp.eq.f32.partialorder %v5803, 8.507059e+37
    %v5805 = vand.u32 %v5658, 2147483648
    %v5806 = vor.u32 1.1754944e-38, %v5805
    %v5807 = vsel %vm5804, %v5806, %v5802
    %v5808 = vmul.f32 1.0, %v5807
    %5809 = vst.msk [vmem:[%s22] sm:$0xff] %vm525, %v5673
    %5810 = vst.msk [vmem:[%s22 + $0x8] sm:$0xff] %vm525, %v5688
    %5811 = vst.msk [vmem:[%s22 + $0x10] sm:$0xff] %vm525, %v5703
    %5812 = vst.msk [vmem:[%s22 + $0x18] sm:$0xff] %vm525, %v5718
    %5813 = vst.msk [vmem:[%s22 + $0x20] sm:$0xff] %vm525, %v5733
    %5814 = vst.msk [vmem:[%s22 + $0x28] sm:$0xff] %vm525, %v5748
    %5815 = vst.msk [vmem:[%s22 + $0x30] sm:$0xff] %vm525, %v5763
    %5816 = vst.msk [vmem:[%s22 + $0x38] sm:$0xff] %vm525, %v5778
    %5817 = vst.msk [vmem:[%s22 + $0x40] sm:$0xff] %vm525, %v5793
    %5818 = vst.msk [vmem:[%s22 + $0x48] sm:$0xff] %vm525, %v5808
    // Predicated region
    $region94: #{ae_forward.1} parent=1 // pred_check
      _
    $region95: #{ae_forward.1} parent=1 // pred_check_branch
      %5820 = sbr.rel (0) target = $region97
    $region96: #{ae_forward.1} parent=1 // pred_region
      _
    $region97: #{ae_forward.1} parent=1 // pred_fallthru
      _
    // Predicated region
    $region98: #{ae_forward.1} parent=1 // pred_check
      _
    $region99: #{ae_forward.1} parent=1 // pred_check_branch
      %5822 = sbr.rel (0) target = $region101
    $region100: #{ae_forward.1} parent=1 // pred_region
      _
    $region101: #{ae_forward.1} parent=1 // pred_fallthru
      _
    // Predicated region
    $region102: #{ae_forward.1} parent=1 // pred_check
      _
    $region103: #{ae_forward.1} parent=1 // pred_check_branch
      %5824 = sbr.rel (0) target = $region105
    $region104: #{ae_forward.1} parent=1 // pred_region
      _
    $region105: #{ae_forward.1} parent=1 // pred_fallthru
      _
    // Predicated region
    $region106: #{ae_forward.1} parent=1 // pred_check
      _
    $region107: #{ae_forward.1} parent=1 // pred_check_branch
      %5826 = sbr.rel (0) target = $region109
    $region108: #{ae_forward.1} parent=1 // pred_region
      _
    $region109: #{ae_forward.1} parent=1 // pred_fallthru
      _
    %5827 = vsyncpa [#allocation10], 1
    %5828 = vsyncpa [#allocation12], 1

</llo_original>
